<compile_context>
chip_gen: v6e
topology: v6e:2x2x1
jax: 0.10.0
libtpu: 0.0.40
codegen_flags: <defaults>
</compile_context>

<pallas_src>
import jax
import jax.numpy as jnp
from jax import lax
from jax.experimental import pallas as pl
from jax.experimental.pallas import tpu as pltpu


def _upsample_kernel(top_ref, mid_ref, bot_ref, w_ref, o_ref):
    """Fused 3x3 conv (single im2col MXU matmul) + PixelShuffle(2) for one H-tile.

    top_ref/bot_ref : (1, Cin, 8, W)    8-row slabs; the needed halo row sits at a
                                        static offset (7 for top, 0 for bottom).
    mid_ref         : (1, Cin, TH*W)    tile body (flat, lane-dense view of NCHW input).
    w_ref           : (9*Cin, Cout_pad) im2col weights, rows (dh, dw, ci); columns
                                        permuted to sub-pixel-major order + zero pad.
    o_ref           : (1, C, 4*TH*W)    pixel-shuffled NCHW output rows, flattened.
    """
    cin = top_ref.shape[1]
    wd = top_ref.shape[3]
    thw = mid_ref.shape[2]
    th = thw // wd
    c = o_ref.shape[1]

    ht = pl.program_id(1)
    last = pl.num_programs(1) - 1

    # ---- assemble zero-padded channels-last input tile: (TH+2, W+2, Cin) ------------
    top = top_ref[0, :, 7, :]                                  # (Cin, W) == row ht*TH - 1
    bot = bot_ref[0, :, 0, :]                                  # (Cin, W) == row ht*TH + TH
    top = jnp.where(ht == 0, jnp.zeros_like(top), top)         # fused conv zero-pad (top)
    bot = jnp.where(ht == last, jnp.zeros_like(bot), bot)      # fused conv zero-pad (bottom)

    rows = jnp.concatenate(
        [jnp.transpose(top), jnp.transpose(mid_ref[0]), jnp.transpose(bot)],
        axis=0).reshape(th + 2, wd, cin)                       # channels on lanes
    zcol = jnp.zeros((th + 2, 1, cin), rows.dtype)
    xp = jnp.concatenate([zcol, rows, zcol], axis=1)           # (TH+2, W+2, Cin)

    # ---- one im2col matmul on the MXU (K = 9*Cin) ------------------------------------
    taps = [xp[dh:dh + th, dw:dw + wd, :] for dh in range(3) for dw in range(3)]
    patches = jnp.concatenate(taps, axis=-1).reshape(th * wd, 9 * cin)
    y = jnp.dot(patches, w_ref[...], preferred_element_type=jnp.float32)
    # y: (TH*W, Cout_pad); rows ordered (h, w); column block s*C:(s+1)*C is sub-pixel
    # s = 2*i + j (weight columns were pre-permuted in the wrapper).

    # ---- fused PixelShuffle(2): leading-dim row interleaves + one 2-D transpose ------
    sub = [y[:, s * c:(s + 1) * c] for s in range(4)]          # each (TH*W, C)

    def _rowzip(a, b):                                         # interleave rows of a, b
        r = a.shape[0]
        ab = jnp.concatenate([a.reshape(r, 1, c), b.reshape(r, 1, c)], axis=1)
        return ab.reshape(2 * r, c)

    r0 = _rowzip(sub[0], sub[1]).reshape(th, 2 * wd, c)        # i = 0 rows: (h, (w, j))
    r1 = _rowzip(sub[2], sub[3]).reshape(th, 2 * wd, c)        # i = 1 rows
    full = jnp.concatenate([r0.reshape(th, 1, 2 * wd, c),
                            r1.reshape(th, 1, 2 * wd, c)], axis=1)   # (TH, 2, 2W, C)
    full = full.reshape(4 * th * wd, c)                        # rows ordered (h, i, w, j)

    # channels-major, lane-dense (last dim = 4*TH*W) store of the shuffled tile.
    o_ref[0] = jnp.transpose(full).astype(o_ref.dtype)


def _pick_tile_h(H, W, cin, itemsize):
    """Largest H-tile (divisor of H, multiple of 8, lane-aligned flat block) whose
    im2col patch matrix stays within a comfortable VMEM budget."""
    cap_rows = max(256, (8 * 1024 * 1024) // (9 * cin * itemsize))   # ~8 MiB of patches
    if H * W <= cap_rows:
        return H
    cands = [t for t in range(8, H, 8) if H % t == 0 and (t * W) % 128 == 0]
    fitting = [t for t in cands if t * W <= cap_rows]
    if fitting:
        return max(fitting)
    if cands:
        return min(cands)
    # TODO(synk): no W-tiling; awkward H falls back to whole-image tiles (VMEM-heavy).
    return H


@jax.jit
def upsample_forward(x_nchw, weight_oihw):
    """Equivalent of Upsample.forward: NCHW in, NCHW out: (N, n_feat//2, 2H, 2W)."""
    N, Cin, H, W = x_nchw.shape
    Cout, wc, kh, kw = weight_oihw.shape
    assert (wc, kh, kw) == (Cin, 3, 3)
    assert Cout % 4 == 0, "PixelShuffle(2) needs conv output channels divisible by 4"
    C = Cout // 4

    TH = _pick_tile_h(H, W, Cin, jnp.dtype(x_nchw.dtype).itemsize)
    HT = H // TH
    THW = TH * W

    # Weight prep (tiny): OIHW -> (9*Cin, Cout) with rows (dh, dw, ci) matching the
    # kernel's im2col order; columns permuted so sub-pixel s = 2i+j owns the contiguous
    # block s*C:(s+1)*C (PyTorch PixelShuffle reads conv channel c*4 + 2i + j); then
    # zero-padded to a lane-dense multiple of 128.
    w = jnp.transpose(weight_oihw, (2, 3, 1, 0)).reshape(9 * Cin, Cout)
    perm = jnp.arange(Cout).reshape(C, 4).T.reshape(-1)
    w = jnp.take(w, perm, axis=1)
    Cout_pad = ((Cout + 127) // 128) * 128
    if Cout_pad != Cout:
        w = jnp.pad(w, ((0, 0), (0, Cout_pad - Cout)))

    x4 = x_nchw                                  # 4-D view for the halo slabs
    xf = x_nchw.reshape(N, Cin, H * W)           # free reshape: lane-dense tile-body view

    ts8 = TH // 8
    top_map = lambda n, ht: (n, 0, jnp.maximum(ht * ts8 - 1, 0), 0)
    bot_map = lambda n, ht: (
        n, 0, jnp.maximum(jnp.minimum((ht + 1) * ts8, H // 8 - 1), 0), 0)

    out_flat = pl.pallas_call(
        _upsample_kernel,
        out_shape=jax.ShapeDtypeStruct((N, C, 4 * H * W), x_nchw.dtype),
        grid_spec=pltpu.PrefetchScalarGridSpec(
            num_scalar_prefetch=0,
            grid=(N, HT),
            in_specs=[
                pl.BlockSpec((1, Cin, 8, W), top_map),                    # top halo slab
                pl.BlockSpec((1, Cin, THW), lambda n, ht: (n, 0, ht)),    # tile body
                pl.BlockSpec((1, Cin, 8, W), bot_map),                    # bottom halo slab
                pl.BlockSpec((9 * Cin, Cout_pad), lambda n, ht: (0, 0)),  # resident weights
            ],
            out_specs=pl.BlockSpec((1, C, 4 * THW), lambda n, ht: (n, 0, ht)),
        ),
        compiler_params=pltpu.CompilerParams(
            dimension_semantics=("parallel", "parallel"),
            vmem_limit_bytes=48 * 1024 * 1024),
    )(x4, xf, x4, w)

    # Row-major reshape only (no data movement): (N, C, 4*H*W) -> (N, C, 2H, 2W).
    return out_flat.reshape(N, C, 2 * H, 2 * W)


def _reference_forward(x_nchw, weight_oihw):
    """Pure-JAX reference (lax.conv + PyTorch-ordered pixel shuffle) for validation."""
    y = lax.conv_general_dilated(
        x_nchw.astype(jnp.float32), weight_oihw.astype(jnp.float32),
        window_strides=(1, 1), padding=((1, 1), (1, 1)),
        dimension_numbers=("NCHW", "OIHW", "NCHW"))
    N, Crr, H, W = y.shape
    r = 2
    C = Crr // (r * r)
    y = y.reshape(N, C, r, r, H, W)
    y = jnp.transpose(y, (0, 1, 4, 2, 5, 3))
    return y.reshape(N, C, H * r, W * r)


if __name__ == "__main__":
    key = jax.random.PRNGKey(0)
    k_x, k_w = jax.random.split(key)

    N, n_feat, H, W = 2, 4, 16, 16
    x = jax.random.normal(k_x, (N, n_feat, H, W), dtype=jnp.float32)
    # Conv2d(n_feat, 2*n_feat, 3, 3) weight, OIHW, deterministic init.
    weight = 0.1 * jax.random.normal(k_w, (2 * n_feat, n_feat, 3, 3),
                                     dtype=jnp.float32)

    out = jax.block_until_ready(upsample_forward(x, weight))
    assert out.shape == (N, n_feat // 2, 2 * H, 2 * W), out.shape

    ref = jax.block_until_ready(_reference_forward(x, weight))
    assert jnp.allclose(out, ref, atol=1e-4, rtol=1e-4), \
        float(jnp.max(jnp.abs(out - ref)))

    print("KERNEL_OK")
</pallas_src>

<mosaic_0001>
module attributes {stable_mosaic.version = 11 : i64} {
  func.func @_upsample_kernel(%arg0: i32, %arg1: i32, %arg2: memref<1x4x8x16xf32, #tpu.memory_space<vmem>>, %arg3: memref<1x4x256xf32, #tpu.memory_space<vmem>>, %arg4: memref<1x4x8x16xf32, #tpu.memory_space<vmem>>, %arg5: memref<36x128xf32, #tpu.memory_space<vmem>>, %arg6: memref<1x2x1024xf32, #tpu.memory_space<vmem>>) attributes {dimension_semantics = [#tpu.dimension_semantics<parallel>, #tpu.dimension_semantics<parallel>], iteration_bounds = array<i64: 2, 1>, scalar_prefetch = 0 : i64, scratch_operands = 0 : i64, tpu.core_type = #tpu.core_type<tc>, window_params = [{transform_indices = @transform_0, window_bounds = array<i64: 1, 4, 8, 16>}, {transform_indices = @transform_1, window_bounds = array<i64: 1, 4, 256>}, {transform_indices = @transform_2, window_bounds = array<i64: 1, 4, 8, 16>}, {pipeline_mode = #tpu.pipeline_mode<synchronous>, transform_indices = @transform_3, window_bounds = array<i64: 36, 128>}, {transform_indices = @transform_4, window_bounds = array<i64: 1, 2, 1024>}]} {
    %c0 = arith.constant 0 : index
    %c0_0 = arith.constant 0 : index
    %c7 = arith.constant 7 : index
    %c0_1 = arith.constant 0 : index
    %0 = vector.load %arg2[%c0, %c0_0, %c7, %c0_1] : memref<1x4x8x16xf32, #tpu.memory_space<vmem>>, vector<1x4x1x16xf32>
    %1 = vector.shape_cast %0 : vector<1x4x1x16xf32> to vector<4x16xf32>
    %c0_2 = arith.constant 0 : index
    %c0_3 = arith.constant 0 : index
    %c0_4 = arith.constant 0 : index
    %c0_5 = arith.constant 0 : index
    %2 = vector.load %arg4[%c0_2, %c0_3, %c0_4, %c0_5] : memref<1x4x8x16xf32, #tpu.memory_space<vmem>>, vector<1x4x1x16xf32>
    %3 = vector.shape_cast %2 : vector<1x4x1x16xf32> to vector<4x16xf32>
    %c0_i32 = arith.constant 0 : i32
    %4 = arith.cmpi eq, %arg1, %c0_i32 : i32
    %cst = arith.constant 0.000000e+00 : f32
    %5 = vector.broadcast %cst : f32 to vector<4x16xf32>
    %6 = arith.select %4, %5, %1 : vector<4x16xf32>
    %c0_i32_6 = arith.constant 0 : i32
    %7 = arith.cmpi eq, %arg1, %c0_i32_6 : i32
    %cst_7 = arith.constant 0.000000e+00 : f32
    %8 = vector.broadcast %cst_7 : f32 to vector<4x16xf32>
    %9 = arith.select %7, %8, %3 : vector<4x16xf32>
    %10 = tpu.transpose %6, [1, 0] : vector<4x16xf32> -> vector<16x4xf32>
    %c0_8 = arith.constant 0 : index
    %c0_9 = arith.constant 0 : index
    %c0_10 = arith.constant 0 : index
    %11 = vector.load %arg3[%c0_8, %c0_9, %c0_10] : memref<1x4x256xf32, #tpu.memory_space<vmem>>, vector<1x4x256xf32>
    %12 = vector.shape_cast %11 : vector<1x4x256xf32> to vector<4x256xf32>
    %13 = tpu.transpose %12, [1, 0] : vector<4x256xf32> -> vector<256x4xf32>
    %14 = tpu.transpose %9, [1, 0] : vector<4x16xf32> -> vector<16x4xf32>
    %15 = tpu.concatenate %10, %13, %14 in 0 : vector<16x4xf32>, vector<256x4xf32>, vector<16x4xf32> -> vector<288x4xf32>
    %16 = vector.shape_cast %15 : vector<288x4xf32> to vector<18x16x4xf32>
    %cst_11 = arith.constant 0.000000e+00 : f32
    %17 = vector.broadcast %cst_11 : f32 to vector<18x1x4xf32>
    %18 = tpu.concatenate %17, %16, %17 in 1 : vector<18x1x4xf32>, vector<18x16x4xf32>, vector<18x1x4xf32> -> vector<18x18x4xf32>
    %19 = vector.extract_strided_slice %18 {offsets = [0, 0, 0], sizes = [16, 16, 4], strides = [1, 1, 1]} : vector<18x18x4xf32> to vector<16x16x4xf32>
    %20 = vector.extract_strided_slice %18 {offsets = [0, 1, 0], sizes = [16, 16, 4], strides = [1, 1, 1]} : vector<18x18x4xf32> to vector<16x16x4xf32>
    %21 = vector.extract_strided_slice %18 {offsets = [0, 2, 0], sizes = [16, 16, 4], strides = [1, 1, 1]} : vector<18x18x4xf32> to vector<16x16x4xf32>
    %22 = vector.extract_strided_slice %18 {offsets = [1, 0, 0], sizes = [16, 16, 4], strides = [1, 1, 1]} : vector<18x18x4xf32> to vector<16x16x4xf32>
    %23 = vector.extract_strided_slice %18 {offsets = [1, 1, 0], sizes = [16, 16, 4], strides = [1, 1, 1]} : vector<18x18x4xf32> to vector<16x16x4xf32>
    %24 = vector.extract_strided_slice %18 {offsets = [1, 2, 0], sizes = [16, 16, 4], strides = [1, 1, 1]} : vector<18x18x4xf32> to vector<16x16x4xf32>
    %25 = vector.extract_strided_slice %18 {offsets = [2, 0, 0], sizes = [16, 16, 4], strides = [1, 1, 1]} : vector<18x18x4xf32> to vector<16x16x4xf32>
    %26 = vector.extract_strided_slice %18 {offsets = [2, 1, 0], sizes = [16, 16, 4], strides = [1, 1, 1]} : vector<18x18x4xf32> to vector<16x16x4xf32>
    %27 = vector.extract_strided_slice %18 {offsets = [2, 2, 0], sizes = [16, 16, 4], strides = [1, 1, 1]} : vector<18x18x4xf32> to vector<16x16x4xf32>
    %28 = tpu.concatenate %19, %20, %21, %22, %23, %24, %25, %26, %27 in 2 : vector<16x16x4xf32>, vector<16x16x4xf32>, vector<16x16x4xf32>, vector<16x16x4xf32>, vector<16x16x4xf32>, vector<16x16x4xf32>, vector<16x16x4xf32>, vector<16x16x4xf32>, vector<16x16x4xf32> -> vector<16x16x36xf32>
    %29 = vector.shape_cast %28 : vector<16x16x36xf32> to vector<256x36xf32>
    %c0_12 = arith.constant 0 : index
    %c0_13 = arith.constant 0 : index
    %30 = vector.load %arg5[%c0_12, %c0_13] : memref<36x128xf32, #tpu.memory_space<vmem>>, vector<36x128xf32>
    %cst_14 = arith.constant dense<0.000000e+00> : vector<256x128xf32>
    %31 = tpu.matmul %29, %30, %cst_14 {dimension_numbers = #tpu.dot_dimension_numbers<[1], [0], [0], [1], [0, 0, 1, 1], [], []>} : vector<256x36xf32>, vector<36x128xf32>, vector<256x128xf32> -> vector<256x128xf32>
    %32 = vector.extract_strided_slice %31 {offsets = [0, 0], sizes = [256, 2], strides = [1, 1]} : vector<256x128xf32> to vector<256x2xf32>
    %33 = vector.extract_strided_slice %31 {offsets = [0, 2], sizes = [256, 2], strides = [1, 1]} : vector<256x128xf32> to vector<256x2xf32>
    %34 = vector.extract_strided_slice %31 {offsets = [0, 4], sizes = [256, 2], strides = [1, 1]} : vector<256x128xf32> to vector<256x2xf32>
    %35 = vector.extract_strided_slice %31 {offsets = [0, 6], sizes = [256, 2], strides = [1, 1]} : vector<256x128xf32> to vector<256x2xf32>
    %36 = vector.shape_cast %32 : vector<256x2xf32> to vector<256x1x2xf32>
    %37 = vector.shape_cast %33 : vector<256x2xf32> to vector<256x1x2xf32>
    %38 = tpu.concatenate %36, %37 in 1 : vector<256x1x2xf32>, vector<256x1x2xf32> -> vector<256x2x2xf32>
    %39 = vector.shape_cast %38 : vector<256x2x2xf32> to vector<512x2xf32>
    %40 = vector.shape_cast %39 : vector<512x2xf32> to vector<16x32x2xf32>
    %41 = vector.shape_cast %34 : vector<256x2xf32> to vector<256x1x2xf32>
    %42 = vector.shape_cast %35 : vector<256x2xf32> to vector<256x1x2xf32>
    %43 = tpu.concatenate %41, %42 in 1 : vector<256x1x2xf32>, vector<256x1x2xf32> -> vector<256x2x2xf32>
    %44 = vector.shape_cast %43 : vector<256x2x2xf32> to vector<512x2xf32>
    %45 = vector.shape_cast %44 : vector<512x2xf32> to vector<16x32x2xf32>
    %46 = vector.shape_cast %40 : vector<16x32x2xf32> to vector<16x1x32x2xf32>
    %47 = vector.shape_cast %45 : vector<16x32x2xf32> to vector<16x1x32x2xf32>
    %48 = tpu.concatenate %46, %47 in 1 : vector<16x1x32x2xf32>, vector<16x1x32x2xf32> -> vector<16x2x32x2xf32>
    %49 = vector.shape_cast %48 : vector<16x2x32x2xf32> to vector<1024x2xf32>
    %50 = tpu.transpose %49, [1, 0] : vector<1024x2xf32> -> vector<2x1024xf32>
    %c0_15 = arith.constant 0 : index
    %c0_16 = arith.constant 0 : index
    %c0_17 = arith.constant 0 : index
    %51 = vector.load %arg6[%c0_15, %c0_16, %c0_17] : memref<1x2x1024xf32, #tpu.memory_space<vmem>>, vector<1x2x1024xf32>
    %52 = vector.shape_cast %51 : vector<1x2x1024xf32> to vector<2x1024xf32>
    %53 = vector.shape_cast %50 : vector<2x1024xf32> to vector<1x2x1024xf32>
    tpu.vector_store %arg6[%c0_15, %c0_16, %c0_17], %53 {strides = array<i32>} : memref<1x2x1024xf32, #tpu.memory_space<vmem>>, vector<1x2x1024xf32>,
    return
  }
  func.func @transform_0(%arg0: i32, %arg1: i32) -> (i32, i32, i32, i32) {
    %c2_i32 = arith.constant 2 : i32
    %0 = arith.muli %arg1, %c2_i32 : i32
    %c1_i32 = arith.constant 1 : i32
    %1 = arith.subi %0, %c1_i32 : i32
    %c0_i32 = arith.constant 0 : i32
    %2 = arith.maxsi %1, %c0_i32 : i32
    %c0_i32_0 = arith.constant 0 : i32
    %c0_i32_1 = arith.constant 0 : i32
    %c0_i32_2 = arith.constant 0 : i32
    return %arg0, %c0_i32_0, %2, %c0_i32_1 : i32, i32, i32, i32
  }
  func.func @transform_1(%arg0: i32, %arg1: i32) -> (i32, i32, i32) {
    %c0_i32 = arith.constant 0 : i32
    %c0_i32_0 = arith.constant 0 : i32
    return %arg0, %c0_i32, %arg1 : i32, i32, i32
  }
  func.func @transform_2(%arg0: i32, %arg1: i32) -> (i32, i32, i32, i32) {
    %c1_i32 = arith.constant 1 : i32
    %0 = arith.addi %arg1, %c1_i32 : i32
    %c2_i32 = arith.constant 2 : i32
    %1 = arith.muli %0, %c2_i32 : i32
    %c1_i32_0 = arith.constant 1 : i32
    %2 = arith.minsi %1, %c1_i32_0 : i32
    %c0_i32 = arith.constant 0 : i32
    %3 = arith.maxsi %2, %c0_i32 : i32
    %c0_i32_1 = arith.constant 0 : i32
    %c0_i32_2 = arith.constant 0 : i32
    %c0_i32_3 = arith.constant 0 : i32
    return %arg0, %c0_i32_1, %3, %c0_i32_2 : i32, i32, i32, i32
  }
  func.func @transform_3(%arg0: i32, %arg1: i32) -> (i32, i32) {
    %c0_i32 = arith.constant 0 : i32
    %c0_i32_0 = arith.constant 0 : i32
    %c0_i32_1 = arith.constant 0 : i32
    return %c0_i32, %c0_i32_0 : i32, i32
  }
  func.func @transform_4(%arg0: i32, %arg1: i32) -> (i32, i32, i32) {
    %c0_i32 = arith.constant 0 : i32
    %c0_i32_0 = arith.constant 0 : i32
    return %arg0, %c0_i32, %arg1 : i32, i32, i32
  }
}

</mosaic_0001>

<llo_original>
// kernel: upsample_forward.1
$region0: #{upsample_forward.1}
  #allocation0 [shape = 'u32[]', space=smem, size = 0x4, offset = 0x4, fixed_abs, tag = 'smem constant byte address 0x4 - core index']
  #allocation1 [shape = 'u32[144,128]{1,0:T(1,128)}', space=vmem, size = 0x12000, scoped, tag = 'internal scratch']
  %s0 = inlined_call_operand.vmem [shape: f32[2,4,16,16], index: 0, kind: input, shape index: {}, may-alias: {0,2}]
  %s1 = inlined_call_operand.vmem [shape: f32[2,4,256], index: 1, kind: input, shape index: {}]
  %s2 = inlined_call_operand.vmem [shape: f32[2,4,16,16], index: 2, kind: input, shape index: {}, may-alias: {0,2}]
  %s3 = inlined_call_operand.vmem [shape: f32[36,128], index: 3, kind: input, shape index: {}]
  %s4 = inlined_call_operand.vmem [shape: f32[2,2,1024], index: 4, kind: output, shape index: {}]
  %s5 = sld [smem:[#allocation0]]
  $region125: #{upsample_forward.1} parent=0
    _
  %s7 = ssub.s32 1, %s5
  %s8 = scalar_select 0, %s7, %s5
  $region1: #{upsample_forward.1} parent=0
    #allocation2 [shape = 'u8[32768]{0}', space=vmem, size = 0x8000, scoped, tag = 'input window, operand 0']
    #allocation3 [shape = 'u8[32768]{0}', space=vmem, size = 0x8000, scoped, tag = 'input window, operand 2']
    loop: start=0, step=1, limit=4
    $region2: #{upsample_forward.1} parent=1 // loop_pre_header
      _
    $region3: #{upsample_forward.1} parent=1 // loop_header
      %s10 = sphi 0, %s14
      %p11 = scmp.ge.s32.totalorder %s10, 4
      %s17 = sphi 0, %s29
      %s18 = sphi 0, %s25
      %s19 = sphi 0, %s17
      %s20 = sphi 0, %s18
      %s21 = sphi 0, %s19
      %s22 = sphi 0, %s20
      %s42 = sphi 0, %s44
      %s45 = sphi 0, %s42
      %s46 = sphi 0, %s45
      %s62 = sphi 0, %s46
      %s70 = sphi 0, %s72
      %s73 = sphi 0, %s70
      %s74 = sphi 0, %s73
      %s90 = sphi 0, %s74
      %s110 = sphi 0, %s112
      %s113 = sphi 0, %s110
      %s114 = sphi 0, %s113
      %s130 = sphi 0, %s114
      %s134 = sphi 0, %s134
      %s136 = sphi 0, %s134
      %s137 = sphi 0, %s136
      %s151 = sphi 0, %s137
      %s159 = sphi 0, %s161
      %s162 = sphi 0, %s159
      %s163 = sphi 0, %s162
      %s179 = sphi 0, %s163
    $region4: #{upsample_forward.1} parent=1 // loop_header_branch
      %13 = sbr.rel (%p11) target = $region8
    $region5: #{upsample_forward.1} parent=1 // loop_body
      %s15 = ssub.s32 %s10, 1
      %s16 = ssub.s32 %s10, 2
      %s23 = sadd.s32 1, %s18
      %p24 = scmp.ge.s32.totalorder %s23, 1
      %s25 = scalar_select %p24, 0, %s23
      %s26 = sadd.s32 1, %s17
      %s27 = scalar_select %p24, %s26, %s17
      %p28 = scmp.ge.s32.totalorder %s27, 2
      %s29 = scalar_select %p28, 0, %s27
      %s30 = smul.u32 %s18, 2
      %s31 = ssub.s32 %s30, 1
      %p32 = scmp.gt.s32.totalorder %s31, 0
      %s33 = scalar_select %p32, %s31, 0
      %s34 = smul.u32 %s25, 2
      %s35 = ssub.s32 %s34, 1
      %p36 = scmp.gt.s32.totalorder %s35, 0
      %s37 = scalar_select %p36, %s35, 0
      %s38 = ssub.s32 %s17, %s29
      %s39 = ssub.s32 %s33, %s37
      %s40 = sor.u32 %s38, %s39
      %p41 = scmp.eq.s32.totalorder %s40, 0
      %s43 = sadd.s32 %s42, 1
      %s44 = scalar_select %p41, %s42, %s43
      %p47 = pneg %p41
      %p48 = scmp.eq.s32.totalorder %s10, 1
      %p49 = por %p47, %p48
      %p50 = scmp.ne.s32.totalorder %s42, %s45
      %p51 = scmp.eq.s32.totalorder %s10, 0
      %p52 = por %p50, %p51
      %p53 = scmp.ne.s32.totalorder %s42, %s45
      %p54 = scmp.eq.s32.totalorder %s15, 1
      %p55 = por %p53, %p54
      %p56 = scmp.ne.s32.totalorder %s45, %s46
      %p57 = scmp.eq.s32.totalorder %s15, 0
      %p58 = por %p56, %p57
      %p59 = scmp.ne.s32.totalorder %s45, %s46
      %p60 = scmp.eq.s32.totalorder %s16, 1
      %p61 = por %p59, %p60
      %p63 = scmp.ne.s32.totalorder %s46, %s62
      %p64 = scmp.eq.s32.totalorder %s16, 0
      %p65 = por %p63, %p64
      %s66 = ssub.s32 %s17, %s29
      %s67 = ssub.s32 %s18, %s25
      %s68 = sor.u32 %s66, %s67
      %p69 = scmp.eq.s32.totalorder %s68, 0
      %s71 = sadd.s32 %s70, 1
      %s72 = scalar_select %p69, %s70, %s71
      %p75 = pneg %p69
      %p76 = scmp.eq.s32.totalorder %s10, 1
      %p77 = por %p75, %p76
      %p78 = scmp.ne.s32.totalorder %s70, %s73
      %p79 = scmp.eq.s32.totalorder %s10, 0
      %p80 = por %p78, %p79
      %p81 = scmp.ne.s32.totalorder %s70, %s73
      %p82 = scmp.eq.s32.totalorder %s15, 1
      %p83 = por %p81, %p82
      %p84 = scmp.ne.s32.totalorder %s73, %s74
      %p85 = scmp.eq.s32.totalorder %s15, 0
      %p86 = por %p84, %p85
      %p87 = scmp.ne.s32.totalorder %s73, %s74
      %p88 = scmp.eq.s32.totalorder %s16, 1
      %p89 = por %p87, %p88
      %p91 = scmp.ne.s32.totalorder %s74, %s90
      %p92 = scmp.eq.s32.totalorder %s16, 0
      %p93 = por %p91, %p92
      %s94 = sadd.s32 %s18, 1
      %s95 = smul.u32 %s94, 2
      %p96 = scmp.lt.s32.totalorder %s95, 1
      %s97 = scalar_select %p96, %s95, 1
      %p98 = scmp.gt.s32.totalorder %s97, 0
      %s99 = scalar_select %p98, %s97, 0
      %s100 = sadd.s32 %s25, 1
      %s101 = smul.u32 %s100, 2
      %p102 = scmp.lt.s32.totalorder %s101, 1
      %s103 = scalar_select %p102, %s101, 1
      %p104 = scmp.gt.s32.totalorder %s103, 0
      %s105 = scalar_select %p104, %s103, 0
      %s106 = ssub.s32 %s17, %s29
      %s107 = ssub.s32 %s99, %s105
      %s108 = sor.u32 %s106, %s107
      %p109 = scmp.eq.s32.totalorder %s108, 0
      %s111 = sadd.s32 %s110, 1
      %s112 = scalar_select %p109, %s110, %s111
      %p115 = pneg %p109
      %p116 = scmp.eq.s32.totalorder %s10, 1
      %p117 = por %p115, %p116
      %p118 = scmp.ne.s32.totalorder %s110, %s113
      %p119 = scmp.eq.s32.totalorder %s10, 0
      %p120 = por %p118, %p119
      %p121 = scmp.ne.s32.totalorder %s110, %s113
      %p122 = scmp.eq.s32.totalorder %s15, 1
      %p123 = por %p121, %p122
      %p124 = scmp.ne.s32.totalorder %s113, %s114
      %p125 = scmp.eq.s32.totalorder %s15, 0
      %p126 = por %p124, %p125
      %p127 = scmp.ne.s32.totalorder %s113, %s114
      %p128 = scmp.eq.s32.totalorder %s16, 1
      %p129 = por %p127, %p128
      %p131 = scmp.ne.s32.totalorder %s114, %s130
      %p132 = scmp.eq.s32.totalorder %s16, 0
      %p133 = por %p131, %p132
      %s135 = sadd.s32 %s134, 1
      %p138 = scmp.eq.s32.totalorder %s10, 1
      %p139 = scmp.ne.s32.totalorder %s134, %s136
      %p140 = scmp.eq.s32.totalorder %s10, 0
      %p141 = por %p139, %p140
      %p142 = scmp.ne.s32.totalorder %s134, %s136
      %p143 = scmp.eq.s32.totalorder %s15, 1
      %p144 = por %p142, %p143
      %p145 = scmp.ne.s32.totalorder %s136, %s137
      %p146 = scmp.eq.s32.totalorder %s15, 0
      %p147 = por %p145, %p146
      %p148 = scmp.ne.s32.totalorder %s136, %s137
      %p149 = scmp.eq.s32.totalorder %s16, 1
      %p150 = por %p148, %p149
      %p152 = scmp.ne.s32.totalorder %s137, %s151
      %p153 = scmp.eq.s32.totalorder %s16, 0
      %p154 = por %p152, %p153
      %s155 = ssub.s32 %s17, %s29
      %s156 = ssub.s32 %s18, %s25
      %s157 = sor.u32 %s155, %s156
      %p158 = scmp.eq.s32.totalorder %s157, 0
      %s160 = sadd.s32 %s159, 1
      %s161 = scalar_select %p158, %s159, %s160
      %p164 = pneg %p158
      %p165 = scmp.eq.s32.totalorder %s10, 1
      %p166 = por %p164, %p165
      %p167 = scmp.ne.s32.totalorder %s159, %s162
      %p168 = scmp.eq.s32.totalorder %s10, 0
      %p169 = por %p167, %p168
      %p170 = scmp.ne.s32.totalorder %s159, %s162
      %p171 = scmp.eq.s32.totalorder %s15, 1
      %p172 = por %p170, %p171
      %p173 = scmp.ne.s32.totalorder %s162, %s163
      %p174 = scmp.eq.s32.totalorder %s15, 0
      %p175 = por %p173, %p174
      %p176 = scmp.ne.s32.totalorder %s162, %s163
      %p177 = scmp.eq.s32.totalorder %s16, 1
      %p178 = por %p176, %p177
      %p180 = scmp.ne.s32.totalorder %s163, %s179
      %p181 = scmp.eq.s32.totalorder %s16, 0
      %p182 = por %p180, %p181
      %p183 = scmp.le.s32.totalorder 1, %s10
      %p184 = scmp.lt.s32.totalorder %s10, 3
      %p185 = pnand %p183, %p184
      %p186 = pneg %p185
      // Predicated region
      $region9: #{upsample_forward.1} parent=5 // pred_check
        _
      $region10: #{upsample_forward.1} parent=5 // pred_check_branch
        %188 = sbr.rel (%p185) target = $region12
      $region11: #{upsample_forward.1} parent=5 // pred_region
        %s189 = ssub.s32 %s10, 1
        // Predicated region
        $region13: #{upsample_forward.1} parent=11 // pred_check
          %p190 = pneg %p147
        $region14: #{upsample_forward.1} parent=11 // pred_check_branch
          %192 = sbr.rel (%p190) target = $region16
        $region15: #{upsample_forward.1} parent=11 // pred_region
          _
        $region16: #{upsample_forward.1} parent=11 // pred_fallthru
          _
      $region12: #{upsample_forward.1} parent=5 // pred_fallthru
        _
      %p193 = scmp.lt.s32.totalorder %s10, 2
      // Predicated region
      $region17: #{upsample_forward.1} parent=5 // pred_check
        %p194 = pneg %p193
      $region18: #{upsample_forward.1} parent=5 // pred_check_branch
        %196 = sbr.rel (%p194) target = $region20
      $region19: #{upsample_forward.1} parent=5 // pred_region
        // Predicated region
        $region21: #{upsample_forward.1} parent=19 // pred_check
          %p197 = pneg %p52
        $region22: #{upsample_forward.1} parent=19 // pred_check_branch
          %199 = sbr.rel (%p197) target = $region24
        $region23: #{upsample_forward.1} parent=19 // pred_region
          %s200 = sand.u32 %s42, 1
          %s201 = sand.u32 %s42, 1
          %s202 = smul.addr %s201, 32
          %s203 = scalar_lea.vmem [#allocation2], %s202
          %s204 = smul.u32 %s18, 2
          %s205 = ssub.s32 %s204, 1
          %p206 = scmp.gt.s32.totalorder %s205, 0
          %s207 = scalar_select %p206, %s205, 0
          %s208 = smul.addr %s17, 8
          %s209 = sadd.s32 %s207, %s208
          %s210 = smul.addr %s209, 8
          %s211 = scalar_lea.vmem %s0, %s210
          // Predicated region
          $region25: #{upsample_forward.1} parent=23 // pred_check
            _
          $region26: #{upsample_forward.1} parent=23 // pred_check_branch
            %213 = sbr.rel (0) target = $region28
          $region27: #{upsample_forward.1} parent=23 // pred_region
            // Predicated region
            $region29: #{upsample_forward.1} parent=27 // pred_check
              _
            $region30: #{upsample_forward.1} parent=27 // pred_check_branch
              %215 = sbr.rel (0) target = $region32
            $region31: #{upsample_forward.1} parent=27 // pred_region
              // Predicated region
              $region44: #{upsample_forward.1} parent=31 // pred_check
                _
              $region45: #{upsample_forward.1} parent=31 // pred_check_branch
                %237 = sbr.rel (0) target = $region47
              $region46: #{upsample_forward.1} parent=31 // pred_region
                loop: start=0, step=1, limit=1
                $region48: #{upsample_forward.1} parent=46 // loop_pre_header
                  _
                $region49: #{upsample_forward.1} parent=46 // loop_header
                  %s239 = sphi 0, %s243
                  %p240 = scmp.ge.s32.totalorder %s239, 1
                  %s244 = sphi %s211, %s211
                  %s245 = sphi %s203, %s203
                $region50: #{upsample_forward.1} parent=46 // loop_header_branch
                  %242 = sbr.rel (%p240) target = $region54
                $region51: #{upsample_forward.1} parent=46 // loop_body
                  %v246 = vld [vmem:[%s244] sm:$0xff]
                  %247 = vst [vmem:[%s245] sm:$0xff] %v246
                  %v248 = vld [vmem:[%s244 + $0x10] sm:$0xff]
                  %249 = vst [vmem:[%s245 + $0x8] sm:$0xff] %v248
                  %v250 = vld [vmem:[%s244 + $0x20] sm:$0xff]
                  %251 = vst [vmem:[%s245 + $0x10] sm:$0xff] %v250
                  %v252 = vld [vmem:[%s244 + $0x30] sm:$0xff]
                  %253 = vst [vmem:[%s245 + $0x18] sm:$0xff] %v252
                $region52: #{upsample_forward.1} parent=46 // loop_footer
                  %s243 = sadd.s32 1, %s239
                $region53: #{upsample_forward.1} parent=46 // loop_footer_branch
                  %238 = sbr.rel target = $region49
                $region54: #{upsample_forward.1} parent=46 // loop_exit
                  _
              $region47: #{upsample_forward.1} parent=31 // pred_fallthru
                _
              // Predicated region
              $region55: #{upsample_forward.1} parent=31 // pred_check
                _
              $region56: #{upsample_forward.1} parent=31 // pred_check_branch
                %255 = sbr.rel target = $region58
              $region57: #{upsample_forward.1} parent=31 // pred_region
                _
              $region58: #{upsample_forward.1} parent=31 // pred_fallthru
                _
            $region32: #{upsample_forward.1} parent=27 // pred_fallthru
              _
            // Predicated region
            $region33: #{upsample_forward.1} parent=27 // pred_check
              _
            $region34: #{upsample_forward.1} parent=27 // pred_check_branch
              %217 = sbr.rel target = $region36
            $region35: #{upsample_forward.1} parent=27 // pred_region
              %s219 = ssub.s32 256, 1
              loop: start=0, step=1, limit=1
              $region37: #{upsample_forward.1} parent=35 // loop_pre_header
                _
              $region38: #{upsample_forward.1} parent=35 // loop_header
                %s221 = sphi 0, %s225
                %p222 = scmp.ge.s32.totalorder %s221, 1
                %s226 = sphi %s211, %s211
                %s227 = sphi %s203, %s203
              $region39: #{upsample_forward.1} parent=35 // loop_header_branch
                %224 = sbr.rel (%p222) target = $region43
              $region40: #{upsample_forward.1} parent=35 // loop_body
                %v228 = vld [vmem:[%s226] sm:%s219]
                %229 = vst [vmem:[%s227] sm:%s219] %v228
                %v230 = vld [vmem:[%s226 + $0x10] sm:%s219]
                %231 = vst [vmem:[%s227 + $0x8] sm:%s219] %v230
                %v232 = vld [vmem:[%s226 + $0x20] sm:%s219]
                %233 = vst [vmem:[%s227 + $0x10] sm:%s219] %v232
                %v234 = vld [vmem:[%s226 + $0x30] sm:%s219]
                %235 = vst [vmem:[%s227 + $0x18] sm:%s219] %v234
              $region41: #{upsample_forward.1} parent=35 // loop_footer
                %s225 = sadd.s32 1, %s221
              $region42: #{upsample_forward.1} parent=35 // loop_footer_branch
                %220 = sbr.rel target = $region38
              $region43: #{upsample_forward.1} parent=35 // loop_exit
                _
            $region36: #{upsample_forward.1} parent=27 // pred_fallthru
              _
          $region28: #{upsample_forward.1} parent=23 // pred_fallthru
            _
          %256 = vnop
        $region24: #{upsample_forward.1} parent=19 // pred_fallthru
          _
        // Predicated region
        $region59: #{upsample_forward.1} parent=19 // pred_check
          %p257 = pneg %p80
        $region60: #{upsample_forward.1} parent=19 // pred_check_branch
          %259 = sbr.rel (%p257) target = $region62
        $region61: #{upsample_forward.1} parent=19 // pred_region
          %s260 = smul.u32 2, %s18
          %p261 = scmp.lt.s32.totalorder %s17, 1
          %s262 = scalar_select %p261, %s17, 1
          %p263 = scmp.lt.s32.totalorder %s260, 1
          %s264 = scalar_select %p263, %s260, 1
          %s265 = smul.addr %s262, 2
          %s266 = sadd.s32 %s264, %s265
          %s267 = smul.addr %s266, 4
          %s268 = scalar_lea.vmem %s1, %s267
          %s269 = smul.u32 2, %s18
        $region62: #{upsample_forward.1} parent=19 // pred_fallthru
          _
        // Predicated region
        $region63: #{upsample_forward.1} parent=19 // pred_check
          %p270 = pneg %p120
        $region64: #{upsample_forward.1} parent=19 // pred_check_branch
          %272 = sbr.rel (%p270) target = $region66
        $region65: #{upsample_forward.1} parent=19 // pred_region
          %s273 = sand.u32 %s110, 1
          %s274 = sand.u32 %s110, 1
          %s275 = smul.addr %s274, 32
          %s276 = scalar_lea.vmem [#allocation3], %s275
          %s277 = sadd.s32 %s18, 1
          %s278 = smul.u32 %s277, 2
          %p279 = scmp.lt.s32.totalorder %s278, 1
          %s280 = scalar_select %p279, %s278, 1
          %p281 = scmp.gt.s32.totalorder %s280, 0
          %s282 = scalar_select %p281, %s280, 0
          %s283 = smul.addr %s17, 8
          %s284 = sadd.s32 %s282, %s283
          %s285 = smul.addr %s284, 8
          %s286 = scalar_lea.vmem %s2, %s285
          // Predicated region
          $region67: #{upsample_forward.1} parent=65 // pred_check
            _
          $region68: #{upsample_forward.1} parent=65 // pred_check_branch
            %288 = sbr.rel (0) target = $region70
          $region69: #{upsample_forward.1} parent=65 // pred_region
            // Predicated region
            $region71: #{upsample_forward.1} parent=69 // pred_check
              _
            $region72: #{upsample_forward.1} parent=69 // pred_check_branch
              %290 = sbr.rel (0) target = $region74
            $region73: #{upsample_forward.1} parent=69 // pred_region
              // Predicated region
              $region86: #{upsample_forward.1} parent=73 // pred_check
                _
              $region87: #{upsample_forward.1} parent=73 // pred_check_branch
                %312 = sbr.rel (0) target = $region89
              $region88: #{upsample_forward.1} parent=73 // pred_region
                loop: start=0, step=1, limit=1
                $region90: #{upsample_forward.1} parent=88 // loop_pre_header
                  _
                $region91: #{upsample_forward.1} parent=88 // loop_header
                  %s314 = sphi 0, %s318
                  %p315 = scmp.ge.s32.totalorder %s314, 1
                  %s319 = sphi %s286, %s286
                  %s320 = sphi %s276, %s276
                $region92: #{upsample_forward.1} parent=88 // loop_header_branch
                  %317 = sbr.rel (%p315) target = $region96
                $region93: #{upsample_forward.1} parent=88 // loop_body
                  %v321 = vld [vmem:[%s319] sm:$0xff]
                  %322 = vst [vmem:[%s320] sm:$0xff] %v321
                  %v323 = vld [vmem:[%s319 + $0x10] sm:$0xff]
                  %324 = vst [vmem:[%s320 + $0x8] sm:$0xff] %v323
                  %v325 = vld [vmem:[%s319 + $0x20] sm:$0xff]
                  %326 = vst [vmem:[%s320 + $0x10] sm:$0xff] %v325
                  %v327 = vld [vmem:[%s319 + $0x30] sm:$0xff]
                  %328 = vst [vmem:[%s320 + $0x18] sm:$0xff] %v327
                $region94: #{upsample_forward.1} parent=88 // loop_footer
                  %s318 = sadd.s32 1, %s314
                $region95: #{upsample_forward.1} parent=88 // loop_footer_branch
                  %313 = sbr.rel target = $region91
                $region96: #{upsample_forward.1} parent=88 // loop_exit
                  _
              $region89: #{upsample_forward.1} parent=73 // pred_fallthru
                _
              // Predicated region
              $region97: #{upsample_forward.1} parent=73 // pred_check
                _
              $region98: #{upsample_forward.1} parent=73 // pred_check_branch
                %330 = sbr.rel target = $region100
              $region99: #{upsample_forward.1} parent=73 // pred_region
                _
              $region100: #{upsample_forward.1} parent=73 // pred_fallthru
                _
            $region74: #{upsample_forward.1} parent=69 // pred_fallthru
              _
            // Predicated region
            $region75: #{upsample_forward.1} parent=69 // pred_check
              _
            $region76: #{upsample_forward.1} parent=69 // pred_check_branch
              %292 = sbr.rel target = $region78
            $region77: #{upsample_forward.1} parent=69 // pred_region
              %s294 = ssub.s32 256, 1
              loop: start=0, step=1, limit=1
              $region79: #{upsample_forward.1} parent=77 // loop_pre_header
                _
              $region80: #{upsample_forward.1} parent=77 // loop_header
                %s296 = sphi 0, %s300
                %p297 = scmp.ge.s32.totalorder %s296, 1
                %s301 = sphi %s286, %s286
                %s302 = sphi %s276, %s276
              $region81: #{upsample_forward.1} parent=77 // loop_header_branch
                %299 = sbr.rel (%p297) target = $region85
              $region82: #{upsample_forward.1} parent=77 // loop_body
                %v303 = vld [vmem:[%s301] sm:%s294]
                %304 = vst [vmem:[%s302] sm:%s294] %v303
                %v305 = vld [vmem:[%s301 + $0x10] sm:%s294]
                %306 = vst [vmem:[%s302 + $0x8] sm:%s294] %v305
                %v307 = vld [vmem:[%s301 + $0x20] sm:%s294]
                %308 = vst [vmem:[%s302 + $0x10] sm:%s294] %v307
                %v309 = vld [vmem:[%s301 + $0x30] sm:%s294]
                %310 = vst [vmem:[%s302 + $0x18] sm:%s294] %v309
              $region83: #{upsample_forward.1} parent=77 // loop_footer
                %s300 = sadd.s32 1, %s296
              $region84: #{upsample_forward.1} parent=77 // loop_footer_branch
                %295 = sbr.rel target = $region80
              $region85: #{upsample_forward.1} parent=77 // loop_exit
                _
            $region78: #{upsample_forward.1} parent=69 // pred_fallthru
              _
          $region70: #{upsample_forward.1} parent=65 // pred_fallthru
            _
          %331 = vnop
        $region66: #{upsample_forward.1} parent=19 // pred_fallthru
          _
      $region20: #{upsample_forward.1} parent=5 // pred_fallthru
        _
      %p332 = scmp.le.s32.totalorder 1, %s10
      %p333 = scmp.lt.s32.totalorder %s10, 3
      %p334 = pnand %p332, %p333
      %p335 = pneg %p334
      // Predicated region
      $region101: #{upsample_forward.1} parent=5 // pred_check
        _
      $region102: #{upsample_forward.1} parent=5 // pred_check_branch
        %337 = sbr.rel (%p334) target = $region104
      $region103: #{upsample_forward.1} parent=5 // pred_region
        %s338 = ssub.s32 %s10, 1
        %s339 = sand.u32 %s45, 1
        %s340 = sand.u32 %s45, 1
        %s341 = smul.addr %s340, 32
        %s342 = scalar_lea.vmem [#allocation2], %s341
        // Predicated region
        $region105: #{upsample_forward.1} parent=103 // pred_check
          %p343 = pneg %p58
        $region106: #{upsample_forward.1} parent=103 // pred_check_branch
          %345 = sbr.rel (%p343) target = $region108
        $region107: #{upsample_forward.1} parent=103 // pred_region
          _
        $region108: #{upsample_forward.1} parent=103 // pred_fallthru
          _
        %s346 = sand.u32 %s113, 1
        %s347 = sand.u32 %s113, 1
        %s348 = smul.addr %s347, 32
        %s349 = scalar_lea.vmem [#allocation3], %s348
        // Predicated region
        $region109: #{upsample_forward.1} parent=103 // pred_check
          %p350 = pneg %p126
        $region110: #{upsample_forward.1} parent=103 // pred_check_branch
          %352 = sbr.rel (%p350) target = $region112
        $region111: #{upsample_forward.1} parent=103 // pred_region
          _
        $region112: #{upsample_forward.1} parent=103 // pred_fallthru
          _
        %s353 = sand.u32 %s45, 1
        %s354 = sand.u32 %s45, 1
        %s355 = smul.addr %s354, 32
        %s356 = scalar_lea.vmem [#allocation2], %s355
        %p357 = pneg %p58
        %p358 = pneg %p55
        %s359 = smul.u32 2, %s20
        %p360 = scmp.lt.s32.totalorder %s19, 1
        %s361 = scalar_select %p360, %s19, 1
        %p362 = scmp.lt.s32.totalorder %s359, 1
        %s363 = scalar_select %p362, %s359, 1
        %s364 = smul.addr %s361, 2
        %s365 = sadd.s32 %s363, %s364
        %s366 = smul.addr %s365, 4
        %s367 = scalar_lea.vmem %s1, %s366
        %p368 = pneg %p86
        %p369 = pneg %p83
        %s370 = sand.u32 %s113, 1
        %s371 = sand.u32 %s113, 1
        %s372 = smul.addr %s371, 32
        %s373 = scalar_lea.vmem [#allocation3], %s372
        %p374 = pneg %p126
        %p375 = pneg %p123
        %p376 = pneg %p147
        %p377 = pneg %p144
        %p378 = pneg %p175
        %p379 = pneg %p172
        %s380 = smul.u32 8, %s20
        %p381 = scmp.lt.s32.totalorder %s19, 1
        %s382 = scalar_select %p381, %s19, 1
        %p383 = scmp.lt.s32.totalorder %s380, 7
        %s384 = scalar_select %p383, %s380, 7
        %s385 = smul.addr %s382, 8
        %s386 = sadd.s32 %s384, %s385
        %s387 = smul.addr %s386, 2
        %s388 = scalar_lea.vmem %s4, %s387
        %s389 = smul.u32 %s20, 2
        %s390 = ssub.s32 %s389, 1
        %p391 = scmp.gt.s32.totalorder %s390, 0
        %s392 = scalar_select %p391, %s390, 0
        %s393 = smul.u32 2, %s20
        %p394 = scmp.lt.s32.totalorder %s19, 1
        %s395 = scalar_select %p394, %s19, 1
        %p396 = scmp.lt.s32.totalorder %s393, 1
        %s397 = scalar_select %p396, %s393, 1
        %s398 = smul.addr %s395, 2
        %s399 = sadd.s32 %s397, %s398
        %s400 = smul.addr %s399, 4
        %s401 = scalar_lea.vmem %s1, %s400
        %s402 = smul.u32 2, %s20
        %s403 = sadd.s32 %s20, 1
        %s404 = smul.u32 %s403, 2
        %p405 = scmp.lt.s32.totalorder %s404, 1
        %s406 = scalar_select %p405, %s404, 1
        %p407 = scmp.gt.s32.totalorder %s406, 0
        %s408 = scalar_select %p407, %s406, 0
        %s409 = smul.u32 8, %s20
        %p410 = scmp.lt.s32.totalorder %s19, 1
        %s411 = scalar_select %p410, %s19, 1
        %p412 = scmp.lt.s32.totalorder %s409, 7
        %s413 = scalar_select %p412, %s409, 7
        %s414 = smul.addr %s411, 8
        %s415 = sadd.s32 %s413, %s414
        %s416 = smul.addr %s415, 2
        %s417 = scalar_lea.vmem %s4, %s416
        %s418 = smul.u32 8, %s20
        %v419 = vld [vmem:[%s342 + $0x7] sm:$0x1]
        %v420 = vld [vmem:[%s342 + $0xf] sm:$0x1]
        %v421 = vld [vmem:[%s342 + $0x17] sm:$0x1]
        %v422 = vld [vmem:[%s342 + $0x1f] sm:$0x1]
        %v423 = vld [vmem:[%s349] sm:$0x1]
        %v424 = vld [vmem:[%s349 + $0x8] sm:$0x1]
        %v425 = vld [vmem:[%s349 + $0x10] sm:$0x1]
        %v426 = vld [vmem:[%s349 + $0x18] sm:$0x1]
        %p427 = scmp.eq.s32.totalorder %s20, 0
        %s428 = scalar_select %p427, 1, 0
        %v429 = vstv %s428
        %vm430 = vcmp.eq.s32.totalorder %v429, 1
        %v431 = vsel %vm430, 0.0, %v419
        %v432 = vsel %vm430, 0.0, %v420
        %v433 = vsel %vm430, 0.0, %v421
        %v434 = vsel %vm430, 0.0, %v422
        %v435 = vsel %vm430, 0.0, %v423
        %v436 = vsel %vm430, 0.0, %v424
        %v437 = vsel %vm430, 0.0, %v425
        %v438 = vsel %vm430, 0.0, %v426
        %v443 = vrot.slane %v432, 7
        %vm444 = vcmask 1041409
        %v445 = vsel %vm444, %v443, %v431
        %v446 = vrot.slane %v433, 6
        %vm447 = vcmask 1042434
        %v448 = vsel %vm447, %v446, %v445
        %v449 = vrot.slane %v434, 5
        %vm450 = vcmask 1043459
        %v451 = vsel %vm450, %v449, %v448
        %453 = vxpose.xlu0.b32.start [1/16] %v451, 128
        %454 = vxpose.xlu0.b32.cont [2/16] 0.0, 128
        %455 = vxpose.xlu0.b32.cont [3/16] 0.0, 128
        %456 = vxpose.xlu0.b32.cont [4/16] 0.0, 128
        %457 = vxpose.xlu0.b32.cont [5/16] 0.0, 128
        %458 = vxpose.xlu0.b32.cont [6/16] 0.0, 128
        %459 = vxpose.xlu0.b32.cont [7/16] 0.0, 128
        %460 = vxpose.xlu0.b32.cont [8/16] 0.0, 128
        %461 = vxpose.xlu0.b32.cont [9/16] 0.0, 128
        %462 = vxpose.xlu0.b32.cont [10/16] 0.0, 128
        %463 = vxpose.xlu0.b32.cont [11/16] 0.0, 128
        %464 = vxpose.xlu0.b32.cont [12/16] 0.0, 128
        %465 = vxpose.xlu0.b32.cont [13/16] 0.0, 128
        %466 = vxpose.xlu0.b32.cont [14/16] 0.0, 128
        %467 = vxpose.xlu0.b32.cont [15/16] 0.0, 128
        %468 = vxpose.xlu0.b32.end [16/16] 0.0, 128
        %v469 = vpop.trf.xlu0
        %v470 = vpop.trf.xlu0
        %v471 = vpop.trf.xlu0
        %v472 = vpop.trf.xlu0
        %v473 = vpop.trf.xlu0
        %v474 = vpop.trf.xlu0
        %v475 = vpop.trf.xlu0
        %v476 = vpop.trf.xlu0
        %v477 = vpop.trf.xlu0
        %v478 = vpop.trf.xlu0
        %v479 = vpop.trf.xlu0
        %v480 = vpop.trf.xlu0
        %v481 = vpop.trf.xlu0
        %v482 = vpop.trf.xlu0
        %v483 = vpop.trf.xlu0
        %v484 = vpop.trf.xlu0
        %v485 = vld [vmem:[%s401] sm:$0xff]
        %v487 = vcombine.high %v485, %v485
        %489 = vxpose.xlu0.b32.start [1/16] %v485, 128
        %490 = vxpose.xlu0.b32.cont [2/16] 0.0, 128
        %491 = vxpose.xlu0.b32.cont [3/16] 0.0, 128
        %492 = vxpose.xlu0.b32.cont [4/16] 0.0, 128
        %493 = vxpose.xlu0.b32.cont [5/16] 0.0, 128
        %494 = vxpose.xlu0.b32.cont [6/16] 0.0, 128
        %495 = vxpose.xlu0.b32.cont [7/16] 0.0, 128
        %496 = vxpose.xlu0.b32.cont [8/16] 0.0, 128
        %497 = vxpose.xlu0.b32.cont [9/16] 0.0, 128
        %498 = vxpose.xlu0.b32.cont [10/16] 0.0, 128
        %499 = vxpose.xlu0.b32.cont [11/16] 0.0, 128
        %500 = vxpose.xlu0.b32.cont [12/16] 0.0, 128
        %501 = vxpose.xlu0.b32.cont [13/16] 0.0, 128
        %502 = vxpose.xlu0.b32.cont [14/16] 0.0, 128
        %503 = vxpose.xlu0.b32.cont [15/16] 0.0, 128
        %504 = vxpose.xlu0.b32.end [16/16] 0.0, 128
        %v505 = vpop.trf.xlu0
        %v506 = vpop.trf.xlu0
        %v507 = vpop.trf.xlu0
        %v508 = vpop.trf.xlu0
        %v509 = vpop.trf.xlu0
        %v510 = vpop.trf.xlu0
        %v511 = vpop.trf.xlu0
        %v512 = vpop.trf.xlu0
        %v513 = vpop.trf.xlu0
        %v514 = vpop.trf.xlu0
        %v515 = vpop.trf.xlu0
        %v516 = vpop.trf.xlu0
        %v517 = vpop.trf.xlu0
        %v518 = vpop.trf.xlu0
        %v519 = vpop.trf.xlu0
        %v520 = vpop.trf.xlu0
        %521 = vxpose.xlu0.b32.start [1/16] %v487, 128
        %522 = vxpose.xlu0.b32.cont [2/16] 0.0, 128
        %523 = vxpose.xlu0.b32.cont [3/16] 0.0, 128
        %524 = vxpose.xlu0.b32.cont [4/16] 0.0, 128
        %525 = vxpose.xlu0.b32.cont [5/16] 0.0, 128
        %526 = vxpose.xlu0.b32.cont [6/16] 0.0, 128
        %527 = vxpose.xlu0.b32.cont [7/16] 0.0, 128
        %528 = vxpose.xlu0.b32.cont [8/16] 0.0, 128
        %529 = vxpose.xlu0.b32.cont [9/16] 0.0, 128
        %530 = vxpose.xlu0.b32.cont [10/16] 0.0, 128
        %531 = vxpose.xlu0.b32.cont [11/16] 0.0, 128
        %532 = vxpose.xlu0.b32.cont [12/16] 0.0, 128
        %533 = vxpose.xlu0.b32.cont [13/16] 0.0, 128
        %534 = vxpose.xlu0.b32.cont [14/16] 0.0, 128
        %535 = vxpose.xlu0.b32.cont [15/16] 0.0, 128
        %536 = vxpose.xlu0.b32.end [16/16] 0.0, 128
        %v537 = vpop.trf.xlu0
        %v538 = vpop.trf.xlu0
        %v539 = vpop.trf.xlu0
        %v540 = vpop.trf.xlu0
        %v541 = vpop.trf.xlu0
        %v542 = vpop.trf.xlu0
        %v543 = vpop.trf.xlu0
        %v544 = vpop.trf.xlu0
        %v545 = vpop.trf.xlu0
        %v546 = vpop.trf.xlu0
        %v547 = vpop.trf.xlu0
        %v548 = vpop.trf.xlu0
        %v549 = vpop.trf.xlu0
        %v550 = vpop.trf.xlu0
        %v551 = vpop.trf.xlu0
        %v552 = vpop.trf.xlu0
        %v557 = vrot.slane %v436, 7
        %v558 = vsel %vm444, %v557, %v435
        %v559 = vrot.slane %v437, 6
        %v560 = vsel %vm447, %v559, %v558
        %v561 = vrot.slane %v438, 5
        %v562 = vsel %vm450, %v561, %v560
        %564 = vxpose.xlu0.b32.start [1/16] %v562, 128
        %565 = vxpose.xlu0.b32.cont [2/16] 0.0, 128
        %566 = vxpose.xlu0.b32.cont [3/16] 0.0, 128
        %567 = vxpose.xlu0.b32.cont [4/16] 0.0, 128
        %568 = vxpose.xlu0.b32.cont [5/16] 0.0, 128
        %569 = vxpose.xlu0.b32.cont [6/16] 0.0, 128
        %570 = vxpose.xlu0.b32.cont [7/16] 0.0, 128
        %571 = vxpose.xlu0.b32.cont [8/16] 0.0, 128
        %572 = vxpose.xlu0.b32.cont [9/16] 0.0, 128
        %573 = vxpose.xlu0.b32.cont [10/16] 0.0, 128
        %574 = vxpose.xlu0.b32.cont [11/16] 0.0, 128
        %575 = vxpose.xlu0.b32.cont [12/16] 0.0, 128
        %576 = vxpose.xlu0.b32.cont [13/16] 0.0, 128
        %577 = vxpose.xlu0.b32.cont [14/16] 0.0, 128
        %578 = vxpose.xlu0.b32.cont [15/16] 0.0, 128
        %579 = vxpose.xlu0.b32.end [16/16] 0.0, 128
        %v580 = vpop.trf.xlu0
        %v581 = vpop.trf.xlu0
        %v582 = vpop.trf.xlu0
        %v583 = vpop.trf.xlu0
        %v584 = vpop.trf.xlu0
        %v585 = vpop.trf.xlu0
        %v586 = vpop.trf.xlu0
        %v587 = vpop.trf.xlu0
        %v588 = vpop.trf.xlu0
        %v589 = vpop.trf.xlu0
        %v590 = vpop.trf.xlu0
        %v591 = vpop.trf.xlu0
        %v592 = vpop.trf.xlu0
        %v593 = vpop.trf.xlu0
        %v594 = vpop.trf.xlu0
        %v595 = vpop.trf.xlu0
        %vm632 = vcmask 1040384
        %v633 = vrot.slane %v469, 7
        %v634 = vrot.slane %v470, 7
        %v635 = vsel %vm632, %v633, %v634
        %v636 = vrot.slane %v505, 7
        %v637 = vrot.slane %v506, 7
        %v638 = vsel %vm632, %v636, %v637
        %v639 = vrot.slane %v507, 7
        %v640 = vrot.slane %v508, 7
        %v641 = vsel %vm632, %v639, %v640
        %v642 = vrot.slane %v509, 7
        %v643 = vrot.slane %v510, 7
        %v644 = vsel %vm632, %v642, %v643
        %v645 = vrot.slane %v511, 7
        %v646 = vrot.slane %v512, 7
        %v647 = vsel %vm632, %v645, %v646
        %v648 = vrot.slane %v513, 7
        %v649 = vrot.slane %v514, 7
        %v650 = vsel %vm632, %v648, %v649
        %v651 = vrot.slane %v515, 7
        %v652 = vrot.slane %v516, 7
        %v653 = vsel %vm632, %v651, %v652
        %v654 = vrot.slane %v517, 7
        %v655 = vrot.slane %v518, 7
        %v656 = vsel %vm632, %v654, %v655
        %v657 = vrot.slane %v519, 7
        %v658 = vrot.slane %v520, 7
        %v659 = vsel %vm632, %v657, %v658
        %v660 = vrot.slane %v537, 7
        %v661 = vrot.slane %v538, 7
        %v662 = vsel %vm632, %v660, %v661
        %v663 = vrot.slane %v539, 7
        %v664 = vrot.slane %v540, 7
        %v665 = vsel %vm632, %v663, %v664
        %v666 = vrot.slane %v541, 7
        %v667 = vrot.slane %v542, 7
        %v668 = vsel %vm632, %v666, %v667
        %v669 = vrot.slane %v543, 7
        %v670 = vrot.slane %v544, 7
        %v671 = vsel %vm632, %v669, %v670
        %v672 = vrot.slane %v545, 7
        %v673 = vrot.slane %v546, 7
        %v674 = vsel %vm632, %v672, %v673
        %v675 = vrot.slane %v547, 7
        %v676 = vrot.slane %v548, 7
        %v677 = vsel %vm632, %v675, %v676
        %v678 = vrot.slane %v549, 7
        %v679 = vrot.slane %v550, 7
        %v680 = vsel %vm632, %v678, %v679
        %v681 = vrot.slane %v551, 7
        %v682 = vrot.slane %v552, 7
        %v683 = vsel %vm632, %v681, %v682
        %v684 = vrot.slane %v580, 7
        %v685 = vrot.slane %v581, 7
        %v686 = vsel %vm632, %v684, %v685
        %v739 = vsel %vm632, 0.0, %v633
        %v740 = vsel %vm632, 0.0, %v636
        %v741 = vsel %vm632, 0.0, %v639
        %v742 = vsel %vm632, 0.0, %v642
        %v743 = vsel %vm632, 0.0, %v645
        %v744 = vsel %vm632, 0.0, %v648
        %v745 = vsel %vm632, 0.0, %v651
        %v746 = vsel %vm632, 0.0, %v654
        %v747 = vsel %vm632, 0.0, %v657
        %v748 = vsel %vm632, 0.0, %v660
        %v749 = vsel %vm632, 0.0, %v663
        %v750 = vsel %vm632, 0.0, %v666
        %v751 = vsel %vm632, 0.0, %v669
        %v752 = vsel %vm632, 0.0, %v672
        %v753 = vsel %vm632, 0.0, %v675
        %v754 = vsel %vm632, 0.0, %v678
        %v755 = vsel %vm632, 0.0, %v681
        %v756 = vsel %vm632, 0.0, %v684
        %v757 = vsel %vm632, %v634, 0.0
        %v758 = vsel %vm632, %v637, 0.0
        %v759 = vsel %vm632, %v640, 0.0
        %v760 = vsel %vm632, %v643, 0.0
        %v761 = vsel %vm632, %v646, 0.0
        %v762 = vsel %vm632, %v649, 0.0
        %v763 = vsel %vm632, %v652, 0.0
        %v764 = vsel %vm632, %v655, 0.0
        %v765 = vsel %vm632, %v658, 0.0
        %v766 = vsel %vm632, %v661, 0.0
        %v767 = vsel %vm632, %v664, 0.0
        %v768 = vsel %vm632, %v667, 0.0
        %v769 = vsel %vm632, %v670, 0.0
        %v770 = vsel %vm632, %v673, 0.0
        %v771 = vsel %vm632, %v676, 0.0
        %v772 = vsel %vm632, %v679, 0.0
        %v773 = vsel %vm632, %v682, 0.0
        %v774 = vsel %vm632, %v685, 0.0
        %vm807 = vcmask 1046528
        %v808 = vrot.slane %v739, 1
        %v809 = vrot.slane %v635, 1
        %v810 = vsel %vm807, %v808, %v809
        %v811 = vrot.slane %v757, 1
        %v812 = vsel %vm807, %v809, %v811
        %v813 = vrot.slane %v740, 1
        %v814 = vrot.slane %v638, 1
        %v815 = vsel %vm807, %v813, %v814
        %v816 = vrot.slane %v758, 1
        %v817 = vsel %vm807, %v814, %v816
        %v818 = vrot.slane %v741, 1
        %v819 = vrot.slane %v641, 1
        %v820 = vsel %vm807, %v818, %v819
        %v821 = vrot.slane %v759, 1
        %v822 = vsel %vm807, %v819, %v821
        %v823 = vrot.slane %v742, 1
        %v824 = vrot.slane %v644, 1
        %v825 = vsel %vm807, %v823, %v824
        %v826 = vrot.slane %v760, 1
        %v827 = vsel %vm807, %v824, %v826
        %v828 = vrot.slane %v743, 1
        %v829 = vrot.slane %v647, 1
        %v830 = vsel %vm807, %v828, %v829
        %v831 = vrot.slane %v761, 1
        %v832 = vsel %vm807, %v829, %v831
        %v833 = vrot.slane %v744, 1
        %v834 = vrot.slane %v650, 1
        %v835 = vsel %vm807, %v833, %v834
        %v836 = vrot.slane %v762, 1
        %v837 = vsel %vm807, %v834, %v836
        %v838 = vrot.slane %v745, 1
        %v839 = vrot.slane %v653, 1
        %v840 = vsel %vm807, %v838, %v839
        %v841 = vrot.slane %v763, 1
        %v842 = vsel %vm807, %v839, %v841
        %v843 = vrot.slane %v746, 1
        %v844 = vrot.slane %v656, 1
        %v845 = vsel %vm807, %v843, %v844
        %v846 = vrot.slane %v764, 1
        %v847 = vsel %vm807, %v844, %v846
        %v848 = vrot.slane %v747, 1
        %v849 = vrot.slane %v659, 1
        %v850 = vsel %vm807, %v848, %v849
        %v851 = vrot.slane %v765, 1
        %v852 = vsel %vm807, %v849, %v851
        %v853 = vrot.slane %v748, 1
        %v854 = vrot.slane %v662, 1
        %v855 = vsel %vm807, %v853, %v854
        %v856 = vrot.slane %v766, 1
        %v857 = vsel %vm807, %v854, %v856
        %v858 = vrot.slane %v749, 1
        %v859 = vrot.slane %v665, 1
        %v860 = vsel %vm807, %v858, %v859
        %v861 = vrot.slane %v767, 1
        %v862 = vsel %vm807, %v859, %v861
        %v863 = vrot.slane %v750, 1
        %v864 = vrot.slane %v668, 1
        %v865 = vsel %vm807, %v863, %v864
        %v866 = vrot.slane %v768, 1
        %v867 = vsel %vm807, %v864, %v866
        %v868 = vrot.slane %v751, 1
        %v869 = vrot.slane %v671, 1
        %v870 = vsel %vm807, %v868, %v869
        %v871 = vrot.slane %v769, 1
        %v872 = vsel %vm807, %v869, %v871
        %v873 = vrot.slane %v752, 1
        %v874 = vrot.slane %v674, 1
        %v875 = vsel %vm807, %v873, %v874
        %v876 = vrot.slane %v770, 1
        %v877 = vsel %vm807, %v874, %v876
        %v878 = vrot.slane %v753, 1
        %v879 = vrot.slane %v677, 1
        %v880 = vsel %vm807, %v878, %v879
        %v881 = vrot.slane %v771, 1
        %v882 = vsel %vm807, %v879, %v881
        %v883 = vrot.slane %v754, 1
        %v884 = vrot.slane %v680, 1
        %v885 = vsel %vm807, %v883, %v884
        %v886 = vrot.slane %v772, 1
        %v887 = vsel %vm807, %v884, %v886
        %888 = vrot.lane.b32.xlu0 %v810, 4
        %v889 = vpop.permute.xlu0 %888
        %890 = vrot.lane.b32.xlu0 %v812, 4
        %v891 = vpop.permute.xlu0 %890
        %892 = vrot.lane.b32.xlu0 %v815, 4
        %v893 = vpop.permute.xlu0 %892
        %894 = vrot.lane.b32.xlu0 %v817, 4
        %v895 = vpop.permute.xlu0 %894
        %896 = vrot.lane.b32.xlu0 %v820, 4
        %v897 = vpop.permute.xlu0 %896
        %898 = vrot.lane.b32.xlu0 %v822, 4
        %v899 = vpop.permute.xlu0 %898
        %900 = vrot.lane.b32.xlu0 %v825, 4
        %v901 = vpop.permute.xlu0 %900
        %902 = vrot.lane.b32.xlu0 %v827, 4
        %v903 = vpop.permute.xlu0 %902
        %904 = vrot.lane.b32.xlu0 %v830, 4
        %v905 = vpop.permute.xlu0 %904
        %906 = vrot.lane.b32.xlu0 %v832, 4
        %v907 = vpop.permute.xlu0 %906
        %908 = vrot.lane.b32.xlu0 %v835, 4
        %v909 = vpop.permute.xlu0 %908
        %910 = vrot.lane.b32.xlu0 %v837, 4
        %v911 = vpop.permute.xlu0 %910
        %912 = vrot.lane.b32.xlu0 %v840, 4
        %v913 = vpop.permute.xlu0 %912
        %914 = vrot.lane.b32.xlu0 %v842, 4
        %v915 = vpop.permute.xlu0 %914
        %916 = vrot.lane.b32.xlu0 %v845, 4
        %v917 = vpop.permute.xlu0 %916
        %918 = vrot.lane.b32.xlu0 %v847, 4
        %v919 = vpop.permute.xlu0 %918
        %920 = vrot.lane.b32.xlu0 %v850, 4
        %v921 = vpop.permute.xlu0 %920
        %922 = vrot.lane.b32.xlu0 %v852, 4
        %v923 = vpop.permute.xlu0 %922
        %924 = vrot.lane.b32.xlu0 %v855, 4
        %v925 = vpop.permute.xlu0 %924
        %926 = vrot.lane.b32.xlu0 %v857, 4
        %v927 = vpop.permute.xlu0 %926
        %928 = vrot.lane.b32.xlu0 %v860, 4
        %v929 = vpop.permute.xlu0 %928
        %930 = vrot.lane.b32.xlu0 %v862, 4
        %v931 = vpop.permute.xlu0 %930
        %932 = vrot.lane.b32.xlu0 %v865, 4
        %v933 = vpop.permute.xlu0 %932
        %934 = vrot.lane.b32.xlu0 %v867, 4
        %v935 = vpop.permute.xlu0 %934
        %936 = vrot.lane.b32.xlu0 %v870, 4
        %v937 = vpop.permute.xlu0 %936
        %938 = vrot.lane.b32.xlu0 %v872, 4
        %v939 = vpop.permute.xlu0 %938
        %940 = vrot.lane.b32.xlu0 %v875, 4
        %v941 = vpop.permute.xlu0 %940
        %942 = vrot.lane.b32.xlu0 %v877, 4
        %v943 = vpop.permute.xlu0 %942
        %944 = vrot.lane.b32.xlu0 %v880, 4
        %v945 = vpop.permute.xlu0 %944
        %946 = vrot.lane.b32.xlu0 %v882, 4
        %v947 = vpop.permute.xlu0 %946
        %948 = vrot.lane.b32.xlu0 %v885, 4
        %v949 = vpop.permute.xlu0 %948
        %950 = vrot.lane.b32.xlu0 %v887, 4
        %v951 = vpop.permute.xlu0 %950
        %vm984 = vcmask 1045504
        %v985 = vrot.slane %v739, 2
        %v986 = vrot.slane %v635, 2
        %v987 = vsel %vm984, %v985, %v986
        %v988 = vrot.slane %v757, 2
        %v989 = vsel %vm984, %v986, %v988
        %v990 = vrot.slane %v740, 2
        %v991 = vrot.slane %v638, 2
        %v992 = vsel %vm984, %v990, %v991
        %v993 = vrot.slane %v758, 2
        %v994 = vsel %vm984, %v991, %v993
        %v995 = vrot.slane %v741, 2
        %v996 = vrot.slane %v641, 2
        %v997 = vsel %vm984, %v995, %v996
        %v998 = vrot.slane %v759, 2
        %v999 = vsel %vm984, %v996, %v998
        %v1000 = vrot.slane %v742, 2
        %v1001 = vrot.slane %v644, 2
        %v1002 = vsel %vm984, %v1000, %v1001
        %v1003 = vrot.slane %v760, 2
        %v1004 = vsel %vm984, %v1001, %v1003
        %v1005 = vrot.slane %v743, 2
        %v1006 = vrot.slane %v647, 2
        %v1007 = vsel %vm984, %v1005, %v1006
        %v1008 = vrot.slane %v761, 2
        %v1009 = vsel %vm984, %v1006, %v1008
        %v1010 = vrot.slane %v744, 2
        %v1011 = vrot.slane %v650, 2
        %v1012 = vsel %vm984, %v1010, %v1011
        %v1013 = vrot.slane %v762, 2
        %v1014 = vsel %vm984, %v1011, %v1013
        %v1015 = vrot.slane %v745, 2
        %v1016 = vrot.slane %v653, 2
        %v1017 = vsel %vm984, %v1015, %v1016
        %v1018 = vrot.slane %v763, 2
        %v1019 = vsel %vm984, %v1016, %v1018
        %v1020 = vrot.slane %v746, 2
        %v1021 = vrot.slane %v656, 2
        %v1022 = vsel %vm984, %v1020, %v1021
        %v1023 = vrot.slane %v764, 2
        %v1024 = vsel %vm984, %v1021, %v1023
        %v1025 = vrot.slane %v747, 2
        %v1026 = vrot.slane %v659, 2
        %v1027 = vsel %vm984, %v1025, %v1026
        %v1028 = vrot.slane %v765, 2
        %v1029 = vsel %vm984, %v1026, %v1028
        %v1030 = vrot.slane %v748, 2
        %v1031 = vrot.slane %v662, 2
        %v1032 = vsel %vm984, %v1030, %v1031
        %v1033 = vrot.slane %v766, 2
        %v1034 = vsel %vm984, %v1031, %v1033
        %v1035 = vrot.slane %v749, 2
        %v1036 = vrot.slane %v665, 2
        %v1037 = vsel %vm984, %v1035, %v1036
        %v1038 = vrot.slane %v767, 2
        %v1039 = vsel %vm984, %v1036, %v1038
        %v1040 = vrot.slane %v750, 2
        %v1041 = vrot.slane %v668, 2
        %v1042 = vsel %vm984, %v1040, %v1041
        %v1043 = vrot.slane %v768, 2
        %v1044 = vsel %vm984, %v1041, %v1043
        %v1045 = vrot.slane %v751, 2
        %v1046 = vrot.slane %v671, 2
        %v1047 = vsel %vm984, %v1045, %v1046
        %v1048 = vrot.slane %v769, 2
        %v1049 = vsel %vm984, %v1046, %v1048
        %v1050 = vrot.slane %v752, 2
        %v1051 = vrot.slane %v674, 2
        %v1052 = vsel %vm984, %v1050, %v1051
        %v1053 = vrot.slane %v770, 2
        %v1054 = vsel %vm984, %v1051, %v1053
        %v1055 = vrot.slane %v753, 2
        %v1056 = vrot.slane %v677, 2
        %v1057 = vsel %vm984, %v1055, %v1056
        %v1058 = vrot.slane %v771, 2
        %v1059 = vsel %vm984, %v1056, %v1058
        %v1060 = vrot.slane %v754, 2
        %v1061 = vrot.slane %v680, 2
        %v1062 = vsel %vm984, %v1060, %v1061
        %v1063 = vrot.slane %v772, 2
        %v1064 = vsel %vm984, %v1061, %v1063
        %1065 = vrot.lane.b32.xlu0 %v987, 8
        %v1066 = vpop.permute.xlu0 %1065
        %1067 = vrot.lane.b32.xlu0 %v989, 8
        %v1068 = vpop.permute.xlu0 %1067
        %1069 = vrot.lane.b32.xlu0 %v992, 8
        %v1070 = vpop.permute.xlu0 %1069
        %1071 = vrot.lane.b32.xlu0 %v994, 8
        %v1072 = vpop.permute.xlu0 %1071
        %1073 = vrot.lane.b32.xlu0 %v997, 8
        %v1074 = vpop.permute.xlu0 %1073
        %1075 = vrot.lane.b32.xlu0 %v999, 8
        %v1076 = vpop.permute.xlu0 %1075
        %1077 = vrot.lane.b32.xlu0 %v1002, 8
        %v1078 = vpop.permute.xlu0 %1077
        %1079 = vrot.lane.b32.xlu0 %v1004, 8
        %v1080 = vpop.permute.xlu0 %1079
        %1081 = vrot.lane.b32.xlu0 %v1007, 8
        %v1082 = vpop.permute.xlu0 %1081
        %1083 = vrot.lane.b32.xlu0 %v1009, 8
        %v1084 = vpop.permute.xlu0 %1083
        %1085 = vrot.lane.b32.xlu0 %v1012, 8
        %v1086 = vpop.permute.xlu0 %1085
        %1087 = vrot.lane.b32.xlu0 %v1014, 8
        %v1088 = vpop.permute.xlu0 %1087
        %1089 = vrot.lane.b32.xlu0 %v1017, 8
        %v1090 = vpop.permute.xlu0 %1089
        %1091 = vrot.lane.b32.xlu0 %v1019, 8
        %v1092 = vpop.permute.xlu0 %1091
        %1093 = vrot.lane.b32.xlu0 %v1022, 8
        %v1094 = vpop.permute.xlu0 %1093
        %1095 = vrot.lane.b32.xlu0 %v1024, 8
        %v1096 = vpop.permute.xlu0 %1095
        %1097 = vrot.lane.b32.xlu0 %v1027, 8
        %v1098 = vpop.permute.xlu0 %1097
        %1099 = vrot.lane.b32.xlu0 %v1029, 8
        %v1100 = vpop.permute.xlu0 %1099
        %1101 = vrot.lane.b32.xlu0 %v1032, 8
        %v1102 = vpop.permute.xlu0 %1101
        %1103 = vrot.lane.b32.xlu0 %v1034, 8
        %v1104 = vpop.permute.xlu0 %1103
        %1105 = vrot.lane.b32.xlu0 %v1037, 8
        %v1106 = vpop.permute.xlu0 %1105
        %1107 = vrot.lane.b32.xlu0 %v1039, 8
        %v1108 = vpop.permute.xlu0 %1107
        %1109 = vrot.lane.b32.xlu0 %v1042, 8
        %v1110 = vpop.permute.xlu0 %1109
        %1111 = vrot.lane.b32.xlu0 %v1044, 8
        %v1112 = vpop.permute.xlu0 %1111
        %1113 = vrot.lane.b32.xlu0 %v1047, 8
        %v1114 = vpop.permute.xlu0 %1113
        %1115 = vrot.lane.b32.xlu0 %v1049, 8
        %v1116 = vpop.permute.xlu0 %1115
        %1117 = vrot.lane.b32.xlu0 %v1052, 8
        %v1118 = vpop.permute.xlu0 %1117
        %1119 = vrot.lane.b32.xlu0 %v1054, 8
        %v1120 = vpop.permute.xlu0 %1119
        %1121 = vrot.lane.b32.xlu0 %v1057, 8
        %v1122 = vpop.permute.xlu0 %1121
        %1123 = vrot.lane.b32.xlu0 %v1059, 8
        %v1124 = vpop.permute.xlu0 %1123
        %1125 = vrot.lane.b32.xlu0 %v1062, 8
        %v1126 = vpop.permute.xlu0 %1125
        %1127 = vrot.lane.b32.xlu0 %v1064, 8
        %v1128 = vpop.permute.xlu0 %1127
        %1162 = vrot.lane.b32.xlu0 %v740, 12
        %v1163 = vpop.permute.xlu0 %1162
        %1164 = vrot.lane.b32.xlu0 %v638, 12
        %v1165 = vpop.permute.xlu0 %1164
        %1166 = vrot.lane.b32.xlu0 %v741, 12
        %v1167 = vpop.permute.xlu0 %1166
        %1168 = vrot.lane.b32.xlu0 %v641, 12
        %v1169 = vpop.permute.xlu0 %1168
        %1170 = vrot.lane.b32.xlu0 %v742, 12
        %v1171 = vpop.permute.xlu0 %1170
        %1172 = vrot.lane.b32.xlu0 %v644, 12
        %v1173 = vpop.permute.xlu0 %1172
        %1174 = vrot.lane.b32.xlu0 %v743, 12
        %v1175 = vpop.permute.xlu0 %1174
        %1176 = vrot.lane.b32.xlu0 %v647, 12
        %v1177 = vpop.permute.xlu0 %1176
        %1178 = vrot.lane.b32.xlu0 %v744, 12
        %v1179 = vpop.permute.xlu0 %1178
        %1180 = vrot.lane.b32.xlu0 %v650, 12
        %v1181 = vpop.permute.xlu0 %1180
        %1182 = vrot.lane.b32.xlu0 %v745, 12
        %v1183 = vpop.permute.xlu0 %1182
        %1184 = vrot.lane.b32.xlu0 %v653, 12
        %v1185 = vpop.permute.xlu0 %1184
        %1186 = vrot.lane.b32.xlu0 %v746, 12
        %v1187 = vpop.permute.xlu0 %1186
        %1188 = vrot.lane.b32.xlu0 %v656, 12
        %v1189 = vpop.permute.xlu0 %1188
        %1190 = vrot.lane.b32.xlu0 %v747, 12
        %v1191 = vpop.permute.xlu0 %1190
        %1192 = vrot.lane.b32.xlu0 %v659, 12
        %v1193 = vpop.permute.xlu0 %1192
        %1194 = vrot.lane.b32.xlu0 %v748, 12
        %v1195 = vpop.permute.xlu0 %1194
        %1196 = vrot.lane.b32.xlu0 %v662, 12
        %v1197 = vpop.permute.xlu0 %1196
        %1198 = vrot.lane.b32.xlu0 %v749, 12
        %v1199 = vpop.permute.xlu0 %1198
        %1200 = vrot.lane.b32.xlu0 %v665, 12
        %v1201 = vpop.permute.xlu0 %1200
        %1202 = vrot.lane.b32.xlu0 %v750, 12
        %v1203 = vpop.permute.xlu0 %1202
        %1204 = vrot.lane.b32.xlu0 %v668, 12
        %v1205 = vpop.permute.xlu0 %1204
        %1206 = vrot.lane.b32.xlu0 %v751, 12
        %v1207 = vpop.permute.xlu0 %1206
        %1208 = vrot.lane.b32.xlu0 %v671, 12
        %v1209 = vpop.permute.xlu0 %1208
        %1210 = vrot.lane.b32.xlu0 %v752, 12
        %v1211 = vpop.permute.xlu0 %1210
        %1212 = vrot.lane.b32.xlu0 %v674, 12
        %v1213 = vpop.permute.xlu0 %1212
        %1214 = vrot.lane.b32.xlu0 %v753, 12
        %v1215 = vpop.permute.xlu0 %1214
        %1216 = vrot.lane.b32.xlu0 %v677, 12
        %v1217 = vpop.permute.xlu0 %1216
        %1218 = vrot.lane.b32.xlu0 %v754, 12
        %v1219 = vpop.permute.xlu0 %1218
        %1220 = vrot.lane.b32.xlu0 %v680, 12
        %v1221 = vpop.permute.xlu0 %1220
        %1222 = vrot.lane.b32.xlu0 %v755, 12
        %v1223 = vpop.permute.xlu0 %1222
        %1224 = vrot.lane.b32.xlu0 %v683, 12
        %v1225 = vpop.permute.xlu0 %1224
        %v1259 = vrot.slane %v755, 1
        %v1260 = vrot.slane %v683, 1
        %v1261 = vsel %vm807, %v1259, %v1260
        %v1262 = vrot.slane %v773, 1
        %v1263 = vsel %vm807, %v1260, %v1262
        %1264 = vrot.lane.b32.xlu0 %v815, 16
        %v1265 = vpop.permute.xlu0 %1264
        %1266 = vrot.lane.b32.xlu0 %v817, 16
        %v1267 = vpop.permute.xlu0 %1266
        %1268 = vrot.lane.b32.xlu0 %v820, 16
        %v1269 = vpop.permute.xlu0 %1268
        %1270 = vrot.lane.b32.xlu0 %v822, 16
        %v1271 = vpop.permute.xlu0 %1270
        %1272 = vrot.lane.b32.xlu0 %v825, 16
        %v1273 = vpop.permute.xlu0 %1272
        %1274 = vrot.lane.b32.xlu0 %v827, 16
        %v1275 = vpop.permute.xlu0 %1274
        %1276 = vrot.lane.b32.xlu0 %v830, 16
        %v1277 = vpop.permute.xlu0 %1276
        %1278 = vrot.lane.b32.xlu0 %v832, 16
        %v1279 = vpop.permute.xlu0 %1278
        %1280 = vrot.lane.b32.xlu0 %v835, 16
        %v1281 = vpop.permute.xlu0 %1280
        %1282 = vrot.lane.b32.xlu0 %v837, 16
        %v1283 = vpop.permute.xlu0 %1282
        %1284 = vrot.lane.b32.xlu0 %v840, 16
        %v1285 = vpop.permute.xlu0 %1284
        %1286 = vrot.lane.b32.xlu0 %v842, 16
        %v1287 = vpop.permute.xlu0 %1286
        %1288 = vrot.lane.b32.xlu0 %v845, 16
        %v1289 = vpop.permute.xlu0 %1288
        %1290 = vrot.lane.b32.xlu0 %v847, 16
        %v1291 = vpop.permute.xlu0 %1290
        %1292 = vrot.lane.b32.xlu0 %v850, 16
        %v1293 = vpop.permute.xlu0 %1292
        %1294 = vrot.lane.b32.xlu0 %v852, 16
        %v1295 = vpop.permute.xlu0 %1294
        %1296 = vrot.lane.b32.xlu0 %v855, 16
        %v1297 = vpop.permute.xlu0 %1296
        %1298 = vrot.lane.b32.xlu0 %v857, 16
        %v1299 = vpop.permute.xlu0 %1298
        %1300 = vrot.lane.b32.xlu0 %v860, 16
        %v1301 = vpop.permute.xlu0 %1300
        %1302 = vrot.lane.b32.xlu0 %v862, 16
        %v1303 = vpop.permute.xlu0 %1302
        %1304 = vrot.lane.b32.xlu0 %v865, 16
        %v1305 = vpop.permute.xlu0 %1304
        %1306 = vrot.lane.b32.xlu0 %v867, 16
        %v1307 = vpop.permute.xlu0 %1306
        %1308 = vrot.lane.b32.xlu0 %v870, 16
        %v1309 = vpop.permute.xlu0 %1308
        %1310 = vrot.lane.b32.xlu0 %v872, 16
        %v1311 = vpop.permute.xlu0 %1310
        %1312 = vrot.lane.b32.xlu0 %v875, 16
        %v1313 = vpop.permute.xlu0 %1312
        %1314 = vrot.lane.b32.xlu0 %v877, 16
        %v1315 = vpop.permute.xlu0 %1314
        %1316 = vrot.lane.b32.xlu0 %v880, 16
        %v1317 = vpop.permute.xlu0 %1316
        %1318 = vrot.lane.b32.xlu0 %v882, 16
        %v1319 = vpop.permute.xlu0 %1318
        %1320 = vrot.lane.b32.xlu0 %v885, 16
        %v1321 = vpop.permute.xlu0 %1320
        %1322 = vrot.lane.b32.xlu0 %v887, 16
        %v1323 = vpop.permute.xlu0 %1322
        %1324 = vrot.lane.b32.xlu0 %v1261, 16
        %v1325 = vpop.permute.xlu0 %1324
        %1326 = vrot.lane.b32.xlu0 %v1263, 16
        %v1327 = vpop.permute.xlu0 %1326
        %v1360 = vrot.slane %v755, 2
        %v1361 = vrot.slane %v683, 2
        %v1362 = vsel %vm984, %v1360, %v1361
        %v1363 = vrot.slane %v773, 2
        %v1364 = vsel %vm984, %v1361, %v1363
        %1365 = vrot.lane.b32.xlu0 %v992, 20
        %v1366 = vpop.permute.xlu0 %1365
        %1367 = vrot.lane.b32.xlu0 %v994, 20
        %v1368 = vpop.permute.xlu0 %1367
        %1369 = vrot.lane.b32.xlu0 %v997, 20
        %v1370 = vpop.permute.xlu0 %1369
        %1371 = vrot.lane.b32.xlu0 %v999, 20
        %v1372 = vpop.permute.xlu0 %1371
        %1373 = vrot.lane.b32.xlu0 %v1002, 20
        %v1374 = vpop.permute.xlu0 %1373
        %1375 = vrot.lane.b32.xlu0 %v1004, 20
        %v1376 = vpop.permute.xlu0 %1375
        %1377 = vrot.lane.b32.xlu0 %v1007, 20
        %v1378 = vpop.permute.xlu0 %1377
        %1379 = vrot.lane.b32.xlu0 %v1009, 20
        %v1380 = vpop.permute.xlu0 %1379
        %1381 = vrot.lane.b32.xlu0 %v1012, 20
        %v1382 = vpop.permute.xlu0 %1381
        %1383 = vrot.lane.b32.xlu0 %v1014, 20
        %v1384 = vpop.permute.xlu0 %1383
        %1385 = vrot.lane.b32.xlu0 %v1017, 20
        %v1386 = vpop.permute.xlu0 %1385
        %1387 = vrot.lane.b32.xlu0 %v1019, 20
        %v1388 = vpop.permute.xlu0 %1387
        %1389 = vrot.lane.b32.xlu0 %v1022, 20
        %v1390 = vpop.permute.xlu0 %1389
        %1391 = vrot.lane.b32.xlu0 %v1024, 20
        %v1392 = vpop.permute.xlu0 %1391
        %1393 = vrot.lane.b32.xlu0 %v1027, 20
        %v1394 = vpop.permute.xlu0 %1393
        %1395 = vrot.lane.b32.xlu0 %v1029, 20
        %v1396 = vpop.permute.xlu0 %1395
        %1397 = vrot.lane.b32.xlu0 %v1032, 20
        %v1398 = vpop.permute.xlu0 %1397
        %1399 = vrot.lane.b32.xlu0 %v1034, 20
        %v1400 = vpop.permute.xlu0 %1399
        %1401 = vrot.lane.b32.xlu0 %v1037, 20
        %v1402 = vpop.permute.xlu0 %1401
        %1403 = vrot.lane.b32.xlu0 %v1039, 20
        %v1404 = vpop.permute.xlu0 %1403
        %1405 = vrot.lane.b32.xlu0 %v1042, 20
        %v1406 = vpop.permute.xlu0 %1405
        %1407 = vrot.lane.b32.xlu0 %v1044, 20
        %v1408 = vpop.permute.xlu0 %1407
        %1409 = vrot.lane.b32.xlu0 %v1047, 20
        %v1410 = vpop.permute.xlu0 %1409
        %1411 = vrot.lane.b32.xlu0 %v1049, 20
        %v1412 = vpop.permute.xlu0 %1411
        %1413 = vrot.lane.b32.xlu0 %v1052, 20
        %v1414 = vpop.permute.xlu0 %1413
        %1415 = vrot.lane.b32.xlu0 %v1054, 20
        %v1416 = vpop.permute.xlu0 %1415
        %1417 = vrot.lane.b32.xlu0 %v1057, 20
        %v1418 = vpop.permute.xlu0 %1417
        %1419 = vrot.lane.b32.xlu0 %v1059, 20
        %v1420 = vpop.permute.xlu0 %1419
        %1421 = vrot.lane.b32.xlu0 %v1062, 20
        %v1422 = vpop.permute.xlu0 %1421
        %1423 = vrot.lane.b32.xlu0 %v1064, 20
        %v1424 = vpop.permute.xlu0 %1423
        %1425 = vrot.lane.b32.xlu0 %v1362, 20
        %v1426 = vpop.permute.xlu0 %1425
        %1427 = vrot.lane.b32.xlu0 %v1364, 20
        %v1428 = vpop.permute.xlu0 %1427
        %1462 = vrot.lane.b32.xlu0 %v741, 24
        %v1463 = vpop.permute.xlu0 %1462
        %1464 = vrot.lane.b32.xlu0 %v641, 24
        %v1465 = vpop.permute.xlu0 %1464
        %1466 = vrot.lane.b32.xlu0 %v742, 24
        %v1467 = vpop.permute.xlu0 %1466
        %1468 = vrot.lane.b32.xlu0 %v644, 24
        %v1469 = vpop.permute.xlu0 %1468
        %1470 = vrot.lane.b32.xlu0 %v743, 24
        %v1471 = vpop.permute.xlu0 %1470
        %1472 = vrot.lane.b32.xlu0 %v647, 24
        %v1473 = vpop.permute.xlu0 %1472
        %1474 = vrot.lane.b32.xlu0 %v744, 24
        %v1475 = vpop.permute.xlu0 %1474
        %1476 = vrot.lane.b32.xlu0 %v650, 24
        %v1477 = vpop.permute.xlu0 %1476
        %1478 = vrot.lane.b32.xlu0 %v745, 24
        %v1479 = vpop.permute.xlu0 %1478
        %1480 = vrot.lane.b32.xlu0 %v653, 24
        %v1481 = vpop.permute.xlu0 %1480
        %1482 = vrot.lane.b32.xlu0 %v746, 24
        %v1483 = vpop.permute.xlu0 %1482
        %1484 = vrot.lane.b32.xlu0 %v656, 24
        %v1485 = vpop.permute.xlu0 %1484
        %1486 = vrot.lane.b32.xlu0 %v747, 24
        %v1487 = vpop.permute.xlu0 %1486
        %1488 = vrot.lane.b32.xlu0 %v659, 24
        %v1489 = vpop.permute.xlu0 %1488
        %1490 = vrot.lane.b32.xlu0 %v748, 24
        %v1491 = vpop.permute.xlu0 %1490
        %1492 = vrot.lane.b32.xlu0 %v662, 24
        %v1493 = vpop.permute.xlu0 %1492
        %1494 = vrot.lane.b32.xlu0 %v749, 24
        %v1495 = vpop.permute.xlu0 %1494
        %1496 = vrot.lane.b32.xlu0 %v665, 24
        %v1497 = vpop.permute.xlu0 %1496
        %1498 = vrot.lane.b32.xlu0 %v750, 24
        %v1499 = vpop.permute.xlu0 %1498
        %1500 = vrot.lane.b32.xlu0 %v668, 24
        %v1501 = vpop.permute.xlu0 %1500
        %1502 = vrot.lane.b32.xlu0 %v751, 24
        %v1503 = vpop.permute.xlu0 %1502
        %1504 = vrot.lane.b32.xlu0 %v671, 24
        %v1505 = vpop.permute.xlu0 %1504
        %1506 = vrot.lane.b32.xlu0 %v752, 24
        %v1507 = vpop.permute.xlu0 %1506
        %1508 = vrot.lane.b32.xlu0 %v674, 24
        %v1509 = vpop.permute.xlu0 %1508
        %1510 = vrot.lane.b32.xlu0 %v753, 24
        %v1511 = vpop.permute.xlu0 %1510
        %1512 = vrot.lane.b32.xlu0 %v677, 24
        %v1513 = vpop.permute.xlu0 %1512
        %1514 = vrot.lane.b32.xlu0 %v754, 24
        %v1515 = vpop.permute.xlu0 %1514
        %1516 = vrot.lane.b32.xlu0 %v680, 24
        %v1517 = vpop.permute.xlu0 %1516
        %1518 = vrot.lane.b32.xlu0 %v755, 24
        %v1519 = vpop.permute.xlu0 %1518
        %1520 = vrot.lane.b32.xlu0 %v683, 24
        %v1521 = vpop.permute.xlu0 %1520
        %1522 = vrot.lane.b32.xlu0 %v756, 24
        %v1523 = vpop.permute.xlu0 %1522
        %1524 = vrot.lane.b32.xlu0 %v686, 24
        %v1525 = vpop.permute.xlu0 %1524
        %v1559 = vrot.slane %v756, 1
        %v1560 = vrot.slane %v686, 1
        %v1561 = vsel %vm807, %v1559, %v1560
        %v1562 = vrot.slane %v774, 1
        %v1563 = vsel %vm807, %v1560, %v1562
        %1564 = vrot.lane.b32.xlu0 %v820, 28
        %v1565 = vpop.permute.xlu0 %1564
        %1566 = vrot.lane.b32.xlu0 %v822, 28
        %v1567 = vpop.permute.xlu0 %1566
        %1568 = vrot.lane.b32.xlu0 %v825, 28
        %v1569 = vpop.permute.xlu0 %1568
        %1570 = vrot.lane.b32.xlu0 %v827, 28
        %v1571 = vpop.permute.xlu0 %1570
        %1572 = vrot.lane.b32.xlu0 %v830, 28
        %v1573 = vpop.permute.xlu0 %1572
        %1574 = vrot.lane.b32.xlu0 %v832, 28
        %v1575 = vpop.permute.xlu0 %1574
        %1576 = vrot.lane.b32.xlu0 %v835, 28
        %v1577 = vpop.permute.xlu0 %1576
        %1578 = vrot.lane.b32.xlu0 %v837, 28
        %v1579 = vpop.permute.xlu0 %1578
        %1580 = vrot.lane.b32.xlu0 %v840, 28
        %v1581 = vpop.permute.xlu0 %1580
        %1582 = vrot.lane.b32.xlu0 %v842, 28
        %v1583 = vpop.permute.xlu0 %1582
        %1584 = vrot.lane.b32.xlu0 %v845, 28
        %v1585 = vpop.permute.xlu0 %1584
        %1586 = vrot.lane.b32.xlu0 %v847, 28
        %v1587 = vpop.permute.xlu0 %1586
        %1588 = vrot.lane.b32.xlu0 %v850, 28
        %v1589 = vpop.permute.xlu0 %1588
        %1590 = vrot.lane.b32.xlu0 %v852, 28
        %v1591 = vpop.permute.xlu0 %1590
        %1592 = vrot.lane.b32.xlu0 %v855, 28
        %v1593 = vpop.permute.xlu0 %1592
        %1594 = vrot.lane.b32.xlu0 %v857, 28
        %v1595 = vpop.permute.xlu0 %1594
        %1596 = vrot.lane.b32.xlu0 %v860, 28
        %v1597 = vpop.permute.xlu0 %1596
        %1598 = vrot.lane.b32.xlu0 %v862, 28
        %v1599 = vpop.permute.xlu0 %1598
        %1600 = vrot.lane.b32.xlu0 %v865, 28
        %v1601 = vpop.permute.xlu0 %1600
        %1602 = vrot.lane.b32.xlu0 %v867, 28
        %v1603 = vpop.permute.xlu0 %1602
        %1604 = vrot.lane.b32.xlu0 %v870, 28
        %v1605 = vpop.permute.xlu0 %1604
        %1606 = vrot.lane.b32.xlu0 %v872, 28
        %v1607 = vpop.permute.xlu0 %1606
        %1608 = vrot.lane.b32.xlu0 %v875, 28
        %v1609 = vpop.permute.xlu0 %1608
        %1610 = vrot.lane.b32.xlu0 %v877, 28
        %v1611 = vpop.permute.xlu0 %1610
        %1612 = vrot.lane.b32.xlu0 %v880, 28
        %v1613 = vpop.permute.xlu0 %1612
        %1614 = vrot.lane.b32.xlu0 %v882, 28
        %v1615 = vpop.permute.xlu0 %1614
        %1616 = vrot.lane.b32.xlu0 %v885, 28
        %v1617 = vpop.permute.xlu0 %1616
        %1618 = vrot.lane.b32.xlu0 %v887, 28
        %v1619 = vpop.permute.xlu0 %1618
        %1620 = vrot.lane.b32.xlu0 %v1261, 28
        %v1621 = vpop.permute.xlu0 %1620
        %1622 = vrot.lane.b32.xlu0 %v1263, 28
        %v1623 = vpop.permute.xlu0 %1622
        %1624 = vrot.lane.b32.xlu0 %v1561, 28
        %v1625 = vpop.permute.xlu0 %1624
        %1626 = vrot.lane.b32.xlu0 %v1563, 28
        %v1627 = vpop.permute.xlu0 %1626
        %v1660 = vrot.slane %v756, 2
        %v1661 = vrot.slane %v686, 2
        %v1662 = vsel %vm984, %v1660, %v1661
        %v1663 = vrot.slane %v774, 2
        %v1664 = vsel %vm984, %v1661, %v1663
        %1665 = vrot.lane.b32.xlu0 %v997, 32
        %v1666 = vpop.permute.xlu0 %1665
        %1667 = vrot.lane.b32.xlu0 %v999, 32
        %v1668 = vpop.permute.xlu0 %1667
        %1669 = vrot.lane.b32.xlu0 %v1002, 32
        %v1670 = vpop.permute.xlu0 %1669
        %1671 = vrot.lane.b32.xlu0 %v1004, 32
        %v1672 = vpop.permute.xlu0 %1671
        %1673 = vrot.lane.b32.xlu0 %v1007, 32
        %v1674 = vpop.permute.xlu0 %1673
        %1675 = vrot.lane.b32.xlu0 %v1009, 32
        %v1676 = vpop.permute.xlu0 %1675
        %1677 = vrot.lane.b32.xlu0 %v1012, 32
        %v1678 = vpop.permute.xlu0 %1677
        %1679 = vrot.lane.b32.xlu0 %v1014, 32
        %v1680 = vpop.permute.xlu0 %1679
        %1681 = vrot.lane.b32.xlu0 %v1017, 32
        %v1682 = vpop.permute.xlu0 %1681
        %1683 = vrot.lane.b32.xlu0 %v1019, 32
        %v1684 = vpop.permute.xlu0 %1683
        %1685 = vrot.lane.b32.xlu0 %v1022, 32
        %v1686 = vpop.permute.xlu0 %1685
        %1687 = vrot.lane.b32.xlu0 %v1024, 32
        %v1688 = vpop.permute.xlu0 %1687
        %1689 = vrot.lane.b32.xlu0 %v1027, 32
        %v1690 = vpop.permute.xlu0 %1689
        %1691 = vrot.lane.b32.xlu0 %v1029, 32
        %v1692 = vpop.permute.xlu0 %1691
        %1693 = vrot.lane.b32.xlu0 %v1032, 32
        %v1694 = vpop.permute.xlu0 %1693
        %1695 = vrot.lane.b32.xlu0 %v1034, 32
        %v1696 = vpop.permute.xlu0 %1695
        %1697 = vrot.lane.b32.xlu0 %v1037, 32
        %v1698 = vpop.permute.xlu0 %1697
        %1699 = vrot.lane.b32.xlu0 %v1039, 32
        %v1700 = vpop.permute.xlu0 %1699
        %1701 = vrot.lane.b32.xlu0 %v1042, 32
        %v1702 = vpop.permute.xlu0 %1701
        %1703 = vrot.lane.b32.xlu0 %v1044, 32
        %v1704 = vpop.permute.xlu0 %1703
        %1705 = vrot.lane.b32.xlu0 %v1047, 32
        %v1706 = vpop.permute.xlu0 %1705
        %1707 = vrot.lane.b32.xlu0 %v1049, 32
        %v1708 = vpop.permute.xlu0 %1707
        %1709 = vrot.lane.b32.xlu0 %v1052, 32
        %v1710 = vpop.permute.xlu0 %1709
        %1711 = vrot.lane.b32.xlu0 %v1054, 32
        %v1712 = vpop.permute.xlu0 %1711
        %1713 = vrot.lane.b32.xlu0 %v1057, 32
        %v1714 = vpop.permute.xlu0 %1713
        %1715 = vrot.lane.b32.xlu0 %v1059, 32
        %v1716 = vpop.permute.xlu0 %1715
        %1717 = vrot.lane.b32.xlu0 %v1062, 32
        %v1718 = vpop.permute.xlu0 %1717
        %1719 = vrot.lane.b32.xlu0 %v1064, 32
        %v1720 = vpop.permute.xlu0 %1719
        %1721 = vrot.lane.b32.xlu0 %v1362, 32
        %v1722 = vpop.permute.xlu0 %1721
        %1723 = vrot.lane.b32.xlu0 %v1364, 32
        %v1724 = vpop.permute.xlu0 %1723
        %1725 = vrot.lane.b32.xlu0 %v1662, 32
        %v1726 = vpop.permute.xlu0 %1725
        %1727 = vrot.lane.b32.xlu0 %v1664, 32
        %v1728 = vpop.permute.xlu0 %1727
        %vm1761 = vcmask 31744
        %v1762 = vsel %vm1761, %v739, %v889
        %v1763 = vsel %vm1761, %v635, %v891
        %v1764 = vsel %vm1761, %v740, %v893
        %v1765 = vsel %vm1761, %v638, %v895
        %v1766 = vsel %vm1761, %v741, %v897
        %v1767 = vsel %vm1761, %v641, %v899
        %v1768 = vsel %vm1761, %v742, %v901
        %v1769 = vsel %vm1761, %v644, %v903
        %v1770 = vsel %vm1761, %v743, %v905
        %v1771 = vsel %vm1761, %v647, %v907
        %v1772 = vsel %vm1761, %v744, %v909
        %v1773 = vsel %vm1761, %v650, %v911
        %v1774 = vsel %vm1761, %v745, %v913
        %v1775 = vsel %vm1761, %v653, %v915
        %v1776 = vsel %vm1761, %v746, %v917
        %v1777 = vsel %vm1761, %v656, %v919
        %v1778 = vsel %vm1761, %v747, %v921
        %v1779 = vsel %vm1761, %v659, %v923
        %v1780 = vsel %vm1761, %v748, %v925
        %v1781 = vsel %vm1761, %v662, %v927
        %v1782 = vsel %vm1761, %v749, %v929
        %v1783 = vsel %vm1761, %v665, %v931
        %v1784 = vsel %vm1761, %v750, %v933
        %v1785 = vsel %vm1761, %v668, %v935
        %v1786 = vsel %vm1761, %v751, %v937
        %v1787 = vsel %vm1761, %v671, %v939
        %v1788 = vsel %vm1761, %v752, %v941
        %v1789 = vsel %vm1761, %v674, %v943
        %v1790 = vsel %vm1761, %v753, %v945
        %v1791 = vsel %vm1761, %v677, %v947
        %v1792 = vsel %vm1761, %v754, %v949
        %v1793 = vsel %vm1761, %v680, %v951
        %vm1794 = vcmask 64512
        %v1795 = vsel %vm1794, %v1762, %v1066
        %v1796 = vsel %vm1794, %v1763, %v1068
        %v1797 = vsel %vm1794, %v1764, %v1070
        %v1798 = vsel %vm1794, %v1765, %v1072
        %v1799 = vsel %vm1794, %v1766, %v1074
        %v1800 = vsel %vm1794, %v1767, %v1076
        %v1801 = vsel %vm1794, %v1768, %v1078
        %v1802 = vsel %vm1794, %v1769, %v1080
        %v1803 = vsel %vm1794, %v1770, %v1082
        %v1804 = vsel %vm1794, %v1771, %v1084
        %v1805 = vsel %vm1794, %v1772, %v1086
        %v1806 = vsel %vm1794, %v1773, %v1088
        %v1807 = vsel %vm1794, %v1774, %v1090
        %v1808 = vsel %vm1794, %v1775, %v1092
        %v1809 = vsel %vm1794, %v1776, %v1094
        %v1810 = vsel %vm1794, %v1777, %v1096
        %v1811 = vsel %vm1794, %v1778, %v1098
        %v1812 = vsel %vm1794, %v1779, %v1100
        %v1813 = vsel %vm1794, %v1780, %v1102
        %v1814 = vsel %vm1794, %v1781, %v1104
        %v1815 = vsel %vm1794, %v1782, %v1106
        %v1816 = vsel %vm1794, %v1783, %v1108
        %v1817 = vsel %vm1794, %v1784, %v1110
        %v1818 = vsel %vm1794, %v1785, %v1112
        %v1819 = vsel %vm1794, %v1786, %v1114
        %v1820 = vsel %vm1794, %v1787, %v1116
        %v1821 = vsel %vm1794, %v1788, %v1118
        %v1822 = vsel %vm1794, %v1789, %v1120
        %v1823 = vsel %vm1794, %v1790, %v1122
        %v1824 = vsel %vm1794, %v1791, %v1124
        %v1825 = vsel %vm1794, %v1792, %v1126
        %v1826 = vsel %vm1794, %v1793, %v1128
        %vm1827 = vcmask 97280
        %v1828 = vsel %vm1827, %v1795, %v1163
        %v1829 = vsel %vm1827, %v1796, %v1165
        %v1830 = vsel %vm1827, %v1797, %v1167
        %v1831 = vsel %vm1827, %v1798, %v1169
        %v1832 = vsel %vm1827, %v1799, %v1171
        %v1833 = vsel %vm1827, %v1800, %v1173
        %v1834 = vsel %vm1827, %v1801, %v1175
        %v1835 = vsel %vm1827, %v1802, %v1177
        %v1836 = vsel %vm1827, %v1803, %v1179
        %v1837 = vsel %vm1827, %v1804, %v1181
        %v1838 = vsel %vm1827, %v1805, %v1183
        %v1839 = vsel %vm1827, %v1806, %v1185
        %v1840 = vsel %vm1827, %v1807, %v1187
        %v1841 = vsel %vm1827, %v1808, %v1189
        %v1842 = vsel %vm1827, %v1809, %v1191
        %v1843 = vsel %vm1827, %v1810, %v1193
        %v1844 = vsel %vm1827, %v1811, %v1195
        %v1845 = vsel %vm1827, %v1812, %v1197
        %v1846 = vsel %vm1827, %v1813, %v1199
        %v1847 = vsel %vm1827, %v1814, %v1201
        %v1848 = vsel %vm1827, %v1815, %v1203
        %v1849 = vsel %vm1827, %v1816, %v1205
        %v1850 = vsel %vm1827, %v1817, %v1207
        %v1851 = vsel %vm1827, %v1818, %v1209
        %v1852 = vsel %vm1827, %v1819, %v1211
        %v1853 = vsel %vm1827, %v1820, %v1213
        %v1854 = vsel %vm1827, %v1821, %v1215
        %v1855 = vsel %vm1827, %v1822, %v1217
        %v1856 = vsel %vm1827, %v1823, %v1219
        %v1857 = vsel %vm1827, %v1824, %v1221
        %v1858 = vsel %vm1827, %v1825, %v1223
        %v1859 = vsel %vm1827, %v1826, %v1225
        %vm1860 = vcmask 130048
        %v1861 = vsel %vm1860, %v1828, %v1265
        %v1862 = vsel %vm1860, %v1829, %v1267
        %v1863 = vsel %vm1860, %v1830, %v1269
        %v1864 = vsel %vm1860, %v1831, %v1271
        %v1865 = vsel %vm1860, %v1832, %v1273
        %v1866 = vsel %vm1860, %v1833, %v1275
        %v1867 = vsel %vm1860, %v1834, %v1277
        %v1868 = vsel %vm1860, %v1835, %v1279
        %v1869 = vsel %vm1860, %v1836, %v1281
        %v1870 = vsel %vm1860, %v1837, %v1283
        %v1871 = vsel %vm1860, %v1838, %v1285
        %v1872 = vsel %vm1860, %v1839, %v1287
        %v1873 = vsel %vm1860, %v1840, %v1289
        %v1874 = vsel %vm1860, %v1841, %v1291
        %v1875 = vsel %vm1860, %v1842, %v1293
        %v1876 = vsel %vm1860, %v1843, %v1295
        %v1877 = vsel %vm1860, %v1844, %v1297
        %v1878 = vsel %vm1860, %v1845, %v1299
        %v1879 = vsel %vm1860, %v1846, %v1301
        %v1880 = vsel %vm1860, %v1847, %v1303
        %v1881 = vsel %vm1860, %v1848, %v1305
        %v1882 = vsel %vm1860, %v1849, %v1307
        %v1883 = vsel %vm1860, %v1850, %v1309
        %v1884 = vsel %vm1860, %v1851, %v1311
        %v1885 = vsel %vm1860, %v1852, %v1313
        %v1886 = vsel %vm1860, %v1853, %v1315
        %v1887 = vsel %vm1860, %v1854, %v1317
        %v1888 = vsel %vm1860, %v1855, %v1319
        %v1889 = vsel %vm1860, %v1856, %v1321
        %v1890 = vsel %vm1860, %v1857, %v1323
        %v1891 = vsel %vm1860, %v1858, %v1325
        %v1892 = vsel %vm1860, %v1859, %v1327
        %vm1893 = vcmask 162816
        %v1894 = vsel %vm1893, %v1861, %v1366
        %v1895 = vsel %vm1893, %v1862, %v1368
        %v1896 = vsel %vm1893, %v1863, %v1370
        %v1897 = vsel %vm1893, %v1864, %v1372
        %v1898 = vsel %vm1893, %v1865, %v1374
        %v1899 = vsel %vm1893, %v1866, %v1376
        %v1900 = vsel %vm1893, %v1867, %v1378
        %v1901 = vsel %vm1893, %v1868, %v1380
        %v1902 = vsel %vm1893, %v1869, %v1382
        %v1903 = vsel %vm1893, %v1870, %v1384
        %v1904 = vsel %vm1893, %v1871, %v1386
        %v1905 = vsel %vm1893, %v1872, %v1388
        %v1906 = vsel %vm1893, %v1873, %v1390
        %v1907 = vsel %vm1893, %v1874, %v1392
        %v1908 = vsel %vm1893, %v1875, %v1394
        %v1909 = vsel %vm1893, %v1876, %v1396
        %v1910 = vsel %vm1893, %v1877, %v1398
        %v1911 = vsel %vm1893, %v1878, %v1400
        %v1912 = vsel %vm1893, %v1879, %v1402
        %v1913 = vsel %vm1893, %v1880, %v1404
        %v1914 = vsel %vm1893, %v1881, %v1406
        %v1915 = vsel %vm1893, %v1882, %v1408
        %v1916 = vsel %vm1893, %v1883, %v1410
        %v1917 = vsel %vm1893, %v1884, %v1412
        %v1918 = vsel %vm1893, %v1885, %v1414
        %v1919 = vsel %vm1893, %v1886, %v1416
        %v1920 = vsel %vm1893, %v1887, %v1418
        %v1921 = vsel %vm1893, %v1888, %v1420
        %v1922 = vsel %vm1893, %v1889, %v1422
        %v1923 = vsel %vm1893, %v1890, %v1424
        %v1924 = vsel %vm1893, %v1891, %v1426
        %v1925 = vsel %vm1893, %v1892, %v1428
        %vm1926 = vcmask 195584
        %v1927 = vsel %vm1926, %v1894, %v1463
        %v1928 = vsel %vm1926, %v1895, %v1465
        %v1929 = vsel %vm1926, %v1896, %v1467
        %v1930 = vsel %vm1926, %v1897, %v1469
        %v1931 = vsel %vm1926, %v1898, %v1471
        %v1932 = vsel %vm1926, %v1899, %v1473
        %v1933 = vsel %vm1926, %v1900, %v1475
        %v1934 = vsel %vm1926, %v1901, %v1477
        %v1935 = vsel %vm1926, %v1902, %v1479
        %v1936 = vsel %vm1926, %v1903, %v1481
        %v1937 = vsel %vm1926, %v1904, %v1483
        %v1938 = vsel %vm1926, %v1905, %v1485
        %v1939 = vsel %vm1926, %v1906, %v1487
        %v1940 = vsel %vm1926, %v1907, %v1489
        %v1941 = vsel %vm1926, %v1908, %v1491
        %v1942 = vsel %vm1926, %v1909, %v1493
        %v1943 = vsel %vm1926, %v1910, %v1495
        %v1944 = vsel %vm1926, %v1911, %v1497
        %v1945 = vsel %vm1926, %v1912, %v1499
        %v1946 = vsel %vm1926, %v1913, %v1501
        %v1947 = vsel %vm1926, %v1914, %v1503
        %v1948 = vsel %vm1926, %v1915, %v1505
        %v1949 = vsel %vm1926, %v1916, %v1507
        %v1950 = vsel %vm1926, %v1917, %v1509
        %v1951 = vsel %vm1926, %v1918, %v1511
        %v1952 = vsel %vm1926, %v1919, %v1513
        %v1953 = vsel %vm1926, %v1920, %v1515
        %v1954 = vsel %vm1926, %v1921, %v1517
        %v1955 = vsel %vm1926, %v1922, %v1519
        %v1956 = vsel %vm1926, %v1923, %v1521
        %v1957 = vsel %vm1926, %v1924, %v1523
        %v1958 = vsel %vm1926, %v1925, %v1525
        %vm1959 = vcmask 228352
        %v1960 = vsel %vm1959, %v1927, %v1565
        %v1961 = vsel %vm1959, %v1928, %v1567
        %v1962 = vsel %vm1959, %v1929, %v1569
        %v1963 = vsel %vm1959, %v1930, %v1571
        %v1964 = vsel %vm1959, %v1931, %v1573
        %v1965 = vsel %vm1959, %v1932, %v1575
        %v1966 = vsel %vm1959, %v1933, %v1577
        %v1967 = vsel %vm1959, %v1934, %v1579
        %v1968 = vsel %vm1959, %v1935, %v1581
        %v1969 = vsel %vm1959, %v1936, %v1583
        %v1970 = vsel %vm1959, %v1937, %v1585
        %v1971 = vsel %vm1959, %v1938, %v1587
        %v1972 = vsel %vm1959, %v1939, %v1589
        %v1973 = vsel %vm1959, %v1940, %v1591
        %v1974 = vsel %vm1959, %v1941, %v1593
        %v1975 = vsel %vm1959, %v1942, %v1595
        %v1976 = vsel %vm1959, %v1943, %v1597
        %v1977 = vsel %vm1959, %v1944, %v1599
        %v1978 = vsel %vm1959, %v1945, %v1601
        %v1979 = vsel %vm1959, %v1946, %v1603
        %v1980 = vsel %vm1959, %v1947, %v1605
        %v1981 = vsel %vm1959, %v1948, %v1607
        %v1982 = vsel %vm1959, %v1949, %v1609
        %v1983 = vsel %vm1959, %v1950, %v1611
        %v1984 = vsel %vm1959, %v1951, %v1613
        %v1985 = vsel %vm1959, %v1952, %v1615
        %v1986 = vsel %vm1959, %v1953, %v1617
        %v1987 = vsel %vm1959, %v1954, %v1619
        %v1988 = vsel %vm1959, %v1955, %v1621
        %v1989 = vsel %vm1959, %v1956, %v1623
        %v1990 = vsel %vm1959, %v1957, %v1625
        %v1991 = vsel %vm1959, %v1958, %v1627
        %vm1992 = vcmask 261120
        %v1993 = vsel %vm1992, %v1960, %v1666
        %v1994 = vsel %vm1992, %v1961, %v1668
        %v1995 = vsel %vm1992, %v1962, %v1670
        %v1996 = vsel %vm1992, %v1963, %v1672
        %v1997 = vsel %vm1992, %v1964, %v1674
        %v1998 = vsel %vm1992, %v1965, %v1676
        %v1999 = vsel %vm1992, %v1966, %v1678
        %v2000 = vsel %vm1992, %v1967, %v1680
        %v2001 = vsel %vm1992, %v1968, %v1682
        %v2002 = vsel %vm1992, %v1969, %v1684
        %v2003 = vsel %vm1992, %v1970, %v1686
        %v2004 = vsel %vm1992, %v1971, %v1688
        %v2005 = vsel %vm1992, %v1972, %v1690
        %v2006 = vsel %vm1992, %v1973, %v1692
        %v2007 = vsel %vm1992, %v1974, %v1694
        %v2008 = vsel %vm1992, %v1975, %v1696
        %v2009 = vsel %vm1992, %v1976, %v1698
        %v2010 = vsel %vm1992, %v1977, %v1700
        %v2011 = vsel %vm1992, %v1978, %v1702
        %v2012 = vsel %vm1992, %v1979, %v1704
        %v2013 = vsel %vm1992, %v1980, %v1706
        %v2014 = vsel %vm1992, %v1981, %v1708
        %v2015 = vsel %vm1992, %v1982, %v1710
        %v2016 = vsel %vm1992, %v1983, %v1712
        %v2017 = vsel %vm1992, %v1984, %v1714
        %v2018 = vsel %vm1992, %v1985, %v1716
        %v2019 = vsel %vm1992, %v1986, %v1718
        %v2020 = vsel %vm1992, %v1987, %v1720
        %v2021 = vsel %vm1992, %v1988, %v1722
        %v2022 = vsel %vm1992, %v1989, %v1724
        %v2023 = vsel %vm1992, %v1990, %v1726
        %v2024 = vsel %vm1992, %v1991, %v1728
        %v2025 = vld [vmem:[%s3] sm:$0xff]
        %v2026 = vld [vmem:[%s3 + $0x8] sm:$0xff]
        %v2027 = vld [vmem:[%s3 + $0x10] sm:$0xff]
        %v2028 = vld [vmem:[%s3 + $0x18] sm:$0xff]
        %v2029 = vld [vmem:[%s3 + $0x20] sm:$0xf]
        %vm2030 = vcmask 293888
        %v2032 = vsel %vm2030, %v1993, 0
        %v2035 = vsel %vm2030, %v1994, 0
        %v2038 = vsel %vm2030, %v1995, 0
        %v2041 = vsel %vm2030, %v1996, 0
        %v2044 = vsel %vm2030, %v1997, 0
        %v2047 = vsel %vm2030, %v1998, 0
        %v2050 = vsel %vm2030, %v1999, 0
        %v2053 = vsel %vm2030, %v2000, 0
        %v2056 = vsel %vm2030, %v2001, 0
        %v2059 = vsel %vm2030, %v2002, 0
        %v2062 = vsel %vm2030, %v2003, 0
        %v2065 = vsel %vm2030, %v2004, 0
        %v2068 = vsel %vm2030, %v2005, 0
        %v2071 = vsel %vm2030, %v2006, 0
        %v2074 = vsel %vm2030, %v2007, 0
        %v2077 = vsel %vm2030, %v2008, 0
        %v2080 = vsel %vm2030, %v2009, 0
        %v2083 = vsel %vm2030, %v2010, 0
        %v2086 = vsel %vm2030, %v2011, 0
        %v2089 = vsel %vm2030, %v2012, 0
        %v2092 = vsel %vm2030, %v2013, 0
        %v2095 = vsel %vm2030, %v2014, 0
        %v2098 = vsel %vm2030, %v2015, 0
        %v2101 = vsel %vm2030, %v2016, 0
        %v2104 = vsel %vm2030, %v2017, 0
        %v2107 = vsel %vm2030, %v2018, 0
        %v2110 = vsel %vm2030, %v2019, 0
        %v2113 = vsel %vm2030, %v2020, 0
        %v2116 = vsel %vm2030, %v2021, 0
        %v2119 = vsel %vm2030, %v2022, 0
        %v2122 = vsel %vm2030, %v2023, 0
        %v2125 = vsel %vm2030, %v2024, 0
        %vm2127 = vcmask 1043456
        %v2129 = vsel %vm2127, %v2029, 0
        %2131 = vmatprep.subr.mxu0 0.0
        %2132 = vmatpush1.msra.mxu0 0.0
        %2133 = vmatprep.subr.mxu0 0.0
        %2134 = vmatpush1.msra.mxu0 0.0
        %2135 = vmatprep.subr.mxu0 0.0
        %2136 = vmatpush1.msra.mxu0 0.0
        %2137 = vmatprep.subr.mxu0 0.0
        %2138 = vmatpush1.msra.mxu0 0.0
        %2139 = vmatprep.subr.mxu0 0.0
        %2140 = vmatpush1.msra.mxu0 0.0
        %2141 = vmatprep.subr.mxu0 0.0
        %2142 = vmatpush1.msra.mxu0 0.0
        %2143 = vmatprep.subr.mxu0 0.0
        %2144 = vmatpush1.msra.mxu0 0.0
        %2145 = vmatprep.subr.mxu0 0.0
        %2146 = vmatpush1.msra.mxu0 0.0
        %2147 = vmatprep.subr.mxu0 0.0
        %2148 = vmatpush1.msra.mxu0 0.0
        %2149 = vmatprep.subr.mxu0 0.0
        %2150 = vmatpush1.msra.mxu0 0.0
        %2151 = vmatprep.subr.mxu0 0.0
        %2152 = vmatpush1.msra.mxu0 0.0
        %2153 = vmatprep.subr.mxu0 0.0
        %2154 = vmatpush1.msra.mxu0 %v2129
        %2155 = vmatprep.subr.mxu0 0.0
        %2156 = vmatpush1.msra.mxu0 %v2028
        %2157 = vmatprep.subr.mxu0 0.0
        %2158 = vmatpush1.msra.mxu0 %v2027
        %2159 = vmatprep.subr.mxu0 0.0
        %2160 = vmatpush1.msra.mxu0 %v2026
        %2161 = vmatprep.subr.mxu0 0.0
        %2162 = vmatpush1.msra.mxu0 %v2025
        %2163 = vmatprep.subr.mxu0 0.0
        %2164 = vmatpush2.msra.mxu0 0.0
        %2165 = vmatprep.subr.mxu0 0.0
        %2166 = vmatpush2.msra.mxu0 0.0
        %2167 = vmatprep.subr.mxu0 0.0
        %2168 = vmatpush2.msra.mxu0 0.0
        %2169 = vmatprep.subr.mxu0 0.0
        %2170 = vmatpush2.msra.mxu0 0.0
        %2171 = vmatprep.subr.mxu0 0.0
        %2172 = vmatpush2.msra.mxu0 0.0
        %2173 = vmatprep.subr.mxu0 0.0
        %2174 = vmatpush2.msra.mxu0 0.0
        %2175 = vmatprep.subr.mxu0 0.0
        %2176 = vmatpush2.msra.mxu0 0.0
        %2177 = vmatprep.subr.mxu0 0.0
        %2178 = vmatpush2.msra.mxu0 0.0
        %2179 = vmatprep.subr.mxu0 0.0
        %2180 = vmatpush2.msra.mxu0 0.0
        %2181 = vmatprep.subr.mxu0 0.0
        %2182 = vmatpush2.msra.mxu0 0.0
        %2183 = vmatprep.subr.mxu0 0.0
        %2184 = vmatpush2.msra.mxu0 0.0
        %2185 = vmatprep.subr.mxu0 0.0
        %2186 = vmatpush2.msra.mxu0 0.0
        %2187 = vmatprep.subr.mxu0 0.0
        %2188 = vmatpush2.msra.mxu0 0.0
        %2189 = vmatprep.subr.mxu0 0.0
        %2190 = vmatpush2.msra.mxu0 0.0
        %2191 = vmatprep.subr.mxu0 0.0
        %2192 = vmatpush2.msra.mxu0 0.0
        %2193 = vmatprep.subr.mxu0 0.0
        %2194 = vmatpush2.msra.mxu0 0.0
        %2195 = vmatprep.mubr.f32.mxu0 0.0
        %2196 = vmatmul.mubr.f32.gmra.mxu0 %v2032
        %v2197 = vpop.f32.mrf.mxu0
        %v2198 = vadd.f32 0.0, %v2197
        %v2199 = vpop.f32.mrf.mxu0
        %2200 = vmatprep.mubr.f32.mxu0 0.0
        %2201 = vmatmul.mubr.f32.gmra.mxu0 %v2035
        %v2202 = vpop.f32.mrf.mxu0
        %v2203 = vadd.f32 0.0, %v2202
        %v2204 = vpop.f32.mrf.mxu0
        %2205 = vmatprep.mubr.f32.mxu0 0.0
        %2206 = vmatmul.mubr.f32.gmra.mxu0 %v2038
        %v2207 = vpop.f32.mrf.mxu0
        %v2208 = vadd.f32 0.0, %v2207
        %v2209 = vpop.f32.mrf.mxu0
        %2210 = vmatprep.mubr.f32.mxu0 0.0
        %2211 = vmatmul.mubr.f32.gmra.mxu0 %v2041
        %v2212 = vpop.f32.mrf.mxu0
        %v2213 = vadd.f32 0.0, %v2212
        %v2214 = vpop.f32.mrf.mxu0
        %2215 = vmatprep.mubr.f32.mxu0 0.0
        %2216 = vmatmul.mubr.f32.gmra.mxu0 %v2044
        %v2217 = vpop.f32.mrf.mxu0
        %v2218 = vadd.f32 0.0, %v2217
        %v2219 = vpop.f32.mrf.mxu0
        %2220 = vmatprep.mubr.f32.mxu0 0.0
        %2221 = vmatmul.mubr.f32.gmra.mxu0 %v2047
        %v2222 = vpop.f32.mrf.mxu0
        %v2223 = vadd.f32 0.0, %v2222
        %v2224 = vpop.f32.mrf.mxu0
        %2225 = vmatprep.mubr.f32.mxu0 0.0
        %2226 = vmatmul.mubr.f32.gmra.mxu0 %v2050
        %v2227 = vpop.f32.mrf.mxu0
        %v2228 = vadd.f32 0.0, %v2227
        %v2229 = vpop.f32.mrf.mxu0
        %2230 = vmatprep.mubr.f32.mxu0 0.0
        %2231 = vmatmul.mubr.f32.gmra.mxu0 %v2053
        %v2232 = vpop.f32.mrf.mxu0
        %v2233 = vadd.f32 0.0, %v2232
        %v2234 = vpop.f32.mrf.mxu0
        %2235 = vmatprep.mubr.f32.mxu0 0.0
        %2236 = vmatmul.mubr.f32.gmra.mxu0 %v2056
        %v2237 = vpop.f32.mrf.mxu0
        %v2238 = vadd.f32 0.0, %v2237
        %v2239 = vpop.f32.mrf.mxu0
        %2240 = vmatprep.mubr.f32.mxu0 0.0
        %2241 = vmatmul.mubr.f32.gmra.mxu0 %v2059
        %v2242 = vpop.f32.mrf.mxu0
        %v2243 = vadd.f32 0.0, %v2242
        %v2244 = vpop.f32.mrf.mxu0
        %2245 = vmatprep.mubr.f32.mxu0 0.0
        %2246 = vmatmul.mubr.f32.gmra.mxu0 %v2062
        %v2247 = vpop.f32.mrf.mxu0
        %v2248 = vadd.f32 0.0, %v2247
        %v2249 = vpop.f32.mrf.mxu0
        %2250 = vmatprep.mubr.f32.mxu0 0.0
        %2251 = vmatmul.mubr.f32.gmra.mxu0 %v2065
        %v2252 = vpop.f32.mrf.mxu0
        %v2253 = vadd.f32 0.0, %v2252
        %v2254 = vpop.f32.mrf.mxu0
        %2255 = vmatprep.mubr.f32.mxu0 0.0
        %2256 = vmatmul.mubr.f32.gmra.mxu0 %v2068
        %v2257 = vpop.f32.mrf.mxu0
        %v2258 = vadd.f32 0.0, %v2257
        %v2259 = vpop.f32.mrf.mxu0
        %2260 = vmatprep.mubr.f32.mxu0 0.0
        %2261 = vmatmul.mubr.f32.gmra.mxu0 %v2071
        %v2262 = vpop.f32.mrf.mxu0
        %v2263 = vadd.f32 0.0, %v2262
        %v2264 = vpop.f32.mrf.mxu0
        %2265 = vmatprep.mubr.f32.mxu0 0.0
        %2266 = vmatmul.mubr.f32.gmra.mxu0 %v2074
        %v2267 = vpop.f32.mrf.mxu0
        %v2268 = vadd.f32 0.0, %v2267
        %v2269 = vpop.f32.mrf.mxu0
        %2270 = vmatprep.mubr.f32.mxu0 0.0
        %2271 = vmatmul.mubr.f32.gmra.mxu0 %v2077
        %v2272 = vpop.f32.mrf.mxu0
        %v2273 = vadd.f32 0.0, %v2272
        %v2274 = vpop.f32.mrf.mxu0
        %2275 = vmatprep.mubr.f32.mxu0 0.0
        %2276 = vmatmul.mubr.f32.gmra.mxu0 %v2080
        %v2277 = vpop.f32.mrf.mxu0
        %v2278 = vadd.f32 0.0, %v2277
        %v2279 = vpop.f32.mrf.mxu0
        %2280 = vmatprep.mubr.f32.mxu0 0.0
        %2281 = vmatmul.mubr.f32.gmra.mxu0 %v2083
        %v2282 = vpop.f32.mrf.mxu0
        %v2283 = vadd.f32 0.0, %v2282
        %v2284 = vpop.f32.mrf.mxu0
        %2285 = vmatprep.mubr.f32.mxu0 0.0
        %2286 = vmatmul.mubr.f32.gmra.mxu0 %v2086
        %v2287 = vpop.f32.mrf.mxu0
        %v2288 = vadd.f32 0.0, %v2287
        %v2289 = vpop.f32.mrf.mxu0
        %2290 = vmatprep.mubr.f32.mxu0 0.0
        %2291 = vmatmul.mubr.f32.gmra.mxu0 %v2089
        %v2292 = vpop.f32.mrf.mxu0
        %v2293 = vadd.f32 0.0, %v2292
        %v2294 = vpop.f32.mrf.mxu0
        %2295 = vmatprep.mubr.f32.mxu0 0.0
        %2296 = vmatmul.mubr.f32.gmra.mxu0 %v2092
        %v2297 = vpop.f32.mrf.mxu0
        %v2298 = vadd.f32 0.0, %v2297
        %v2299 = vpop.f32.mrf.mxu0
        %2300 = vmatprep.mubr.f32.mxu0 0.0
        %2301 = vmatmul.mubr.f32.gmra.mxu0 %v2095
        %v2302 = vpop.f32.mrf.mxu0
        %v2303 = vadd.f32 0.0, %v2302
        %v2304 = vpop.f32.mrf.mxu0
        %2305 = vmatprep.mubr.f32.mxu0 0.0
        %2306 = vmatmul.mubr.f32.gmra.mxu0 %v2098
        %v2307 = vpop.f32.mrf.mxu0
        %v2308 = vadd.f32 0.0, %v2307
        %v2309 = vpop.f32.mrf.mxu0
        %2310 = vmatprep.mubr.f32.mxu0 0.0
        %2311 = vmatmul.mubr.f32.gmra.mxu0 %v2101
        %v2312 = vpop.f32.mrf.mxu0
        %v2313 = vadd.f32 0.0, %v2312
        %v2314 = vpop.f32.mrf.mxu0
        %2315 = vmatprep.mubr.f32.mxu0 0.0
        %2316 = vmatmul.mubr.f32.gmra.mxu0 %v2104
        %v2317 = vpop.f32.mrf.mxu0
        %v2318 = vadd.f32 0.0, %v2317
        %v2319 = vpop.f32.mrf.mxu0
        %2320 = vmatprep.mubr.f32.mxu0 0.0
        %2321 = vmatmul.mubr.f32.gmra.mxu0 %v2107
        %v2322 = vpop.f32.mrf.mxu0
        %v2323 = vadd.f32 0.0, %v2322
        %v2324 = vpop.f32.mrf.mxu0
        %2325 = vmatprep.mubr.f32.mxu0 0.0
        %2326 = vmatmul.mubr.f32.gmra.mxu0 %v2110
        %v2327 = vpop.f32.mrf.mxu0
        %v2328 = vadd.f32 0.0, %v2327
        %v2329 = vpop.f32.mrf.mxu0
        %2330 = vmatprep.mubr.f32.mxu0 0.0
        %2331 = vmatmul.mubr.f32.gmra.mxu0 %v2113
        %v2332 = vpop.f32.mrf.mxu0
        %v2333 = vadd.f32 0.0, %v2332
        %v2334 = vpop.f32.mrf.mxu0
        %2335 = vmatprep.mubr.f32.mxu0 0.0
        %2336 = vmatmul.mubr.f32.gmra.mxu0 %v2116
        %v2337 = vpop.f32.mrf.mxu0
        %v2338 = vadd.f32 0.0, %v2337
        %v2339 = vpop.f32.mrf.mxu0
        %2340 = vmatprep.mubr.f32.mxu0 0.0
        %2341 = vmatmul.mubr.f32.gmra.mxu0 %v2119
        %v2342 = vpop.f32.mrf.mxu0
        %v2343 = vadd.f32 0.0, %v2342
        %v2344 = vpop.f32.mrf.mxu0
        %2345 = vmatprep.mubr.f32.mxu0 0.0
        %2346 = vmatmul.mubr.f32.gmra.mxu0 %v2122
        %v2347 = vpop.f32.mrf.mxu0
        %v2348 = vadd.f32 0.0, %v2347
        %v2349 = vpop.f32.mrf.mxu0
        %2350 = vmatprep.mubr.f32.mxu0 0.0
        %2351 = vmatmul.mubr.f32.gmra.mxu0 %v2125
        %v2352 = vpop.f32.mrf.mxu0
        %v2353 = vadd.f32 0.0, %v2352
        %v2354 = vpop.f32.mrf.mxu0
        %2355 = vdwg.mxu0
        %v2388 = vcombine.high %v2198, %v2198
        %v2390 = vunpack.c.l.s4 1966171168
        %v2391 = vunpack.c.0.s8 %v2390
        %v2392 = vlaneseq
        %v2393 = vshrl.u32 %v2392, 7
        %v2394 = vsub.s32 %v2391, %v2393
        %v2395 = vrot.slane %v2198, %v2394
        %v2397 = vunpack.c.l.s4 1966171168
        %v2398 = vunpack.c.0.s8 %v2397
        %v2399 = vlaneseq
        %v2400 = vshrl.u32 %v2399, 7
        %v2401 = vsub.s32 %v2398, %v2400
        %v2402 = vrot.slane %v2388, %v2401
        %v2403 = vcombine.high %v2395, %v2395
        %v2404 = vcombine.high %v2402, %v2402
        %v2406 = vunpack.c.l.s4 1966171168
        %v2407 = vunpack.c.0.s8 %v2406
        %v2408 = vlaneseq
        %v2409 = vshrl.u32 %v2408, 7
        %v2410 = vsub.s32 %v2407, %v2409
        %v2411 = vrot.slane %v2395, %v2410
        %v2413 = vunpack.c.l.s4 1966171168
        %v2414 = vunpack.c.0.s8 %v2413
        %v2415 = vlaneseq
        %v2416 = vshrl.u32 %v2415, 7
        %v2417 = vsub.s32 %v2414, %v2416
        %v2418 = vrot.slane %v2402, %v2417
        %v2420 = vunpack.c.l.s4 1966171168
        %v2421 = vunpack.c.0.s8 %v2420
        %v2422 = vlaneseq
        %v2423 = vshrl.u32 %v2422, 7
        %v2424 = vsub.s32 %v2421, %v2423
        %v2425 = vrot.slane %v2403, %v2424
        %v2427 = vunpack.c.l.s4 1966171168
        %v2428 = vunpack.c.0.s8 %v2427
        %v2429 = vlaneseq
        %v2430 = vshrl.u32 %v2429, 7
        %v2431 = vsub.s32 %v2428, %v2430
        %v2432 = vrot.slane %v2404, %v2431
        %v2433 = vcombine.high %v2411, %v2411
        %v2434 = vcombine.high %v2418, %v2418
        %v2435 = vcombine.high %v2425, %v2425
        %v2436 = vcombine.high %v2432, %v2432
        %v2437 = vcombine.high %v2203, %v2203
        %v2439 = vunpack.c.l.s4 1966171168
        %v2440 = vunpack.c.0.s8 %v2439
        %v2441 = vlaneseq
        %v2442 = vshrl.u32 %v2441, 7
        %v2443 = vsub.s32 %v2440, %v2442
        %v2444 = vrot.slane %v2203, %v2443
        %v2446 = vunpack.c.l.s4 1966171168
        %v2447 = vunpack.c.0.s8 %v2446
        %v2448 = vlaneseq
        %v2449 = vshrl.u32 %v2448, 7
        %v2450 = vsub.s32 %v2447, %v2449
        %v2451 = vrot.slane %v2437, %v2450
        %v2452 = vcombine.high %v2444, %v2444
        %v2453 = vcombine.high %v2451, %v2451
        %v2455 = vunpack.c.l.s4 1966171168
        %v2456 = vunpack.c.0.s8 %v2455
        %v2457 = vlaneseq
        %v2458 = vshrl.u32 %v2457, 7
        %v2459 = vsub.s32 %v2456, %v2458
        %v2460 = vrot.slane %v2444, %v2459
        %v2462 = vunpack.c.l.s4 1966171168
        %v2463 = vunpack.c.0.s8 %v2462
        %v2464 = vlaneseq
        %v2465 = vshrl.u32 %v2464, 7
        %v2466 = vsub.s32 %v2463, %v2465
        %v2467 = vrot.slane %v2451, %v2466
        %v2469 = vunpack.c.l.s4 1966171168
        %v2470 = vunpack.c.0.s8 %v2469
        %v2471 = vlaneseq
        %v2472 = vshrl.u32 %v2471, 7
        %v2473 = vsub.s32 %v2470, %v2472
        %v2474 = vrot.slane %v2452, %v2473
        %v2476 = vunpack.c.l.s4 1966171168
        %v2477 = vunpack.c.0.s8 %v2476
        %v2478 = vlaneseq
        %v2479 = vshrl.u32 %v2478, 7
        %v2480 = vsub.s32 %v2477, %v2479
        %v2481 = vrot.slane %v2453, %v2480
        %v2482 = vcombine.high %v2460, %v2460
        %v2483 = vcombine.high %v2467, %v2467
        %v2484 = vcombine.high %v2474, %v2474
        %v2485 = vcombine.high %v2481, %v2481
        %v2486 = vcombine.high %v2208, %v2208
        %v2488 = vunpack.c.l.s4 1966171168
        %v2489 = vunpack.c.0.s8 %v2488
        %v2490 = vlaneseq
        %v2491 = vshrl.u32 %v2490, 7
        %v2492 = vsub.s32 %v2489, %v2491
        %v2493 = vrot.slane %v2208, %v2492
        %v2495 = vunpack.c.l.s4 1966171168
        %v2496 = vunpack.c.0.s8 %v2495
        %v2497 = vlaneseq
        %v2498 = vshrl.u32 %v2497, 7
        %v2499 = vsub.s32 %v2496, %v2498
        %v2500 = vrot.slane %v2486, %v2499
        %v2501 = vcombine.high %v2493, %v2493
        %v2502 = vcombine.high %v2500, %v2500
        %v2504 = vunpack.c.l.s4 1966171168
        %v2505 = vunpack.c.0.s8 %v2504
        %v2506 = vlaneseq
        %v2507 = vshrl.u32 %v2506, 7
        %v2508 = vsub.s32 %v2505, %v2507
        %v2509 = vrot.slane %v2493, %v2508
        %v2511 = vunpack.c.l.s4 1966171168
        %v2512 = vunpack.c.0.s8 %v2511
        %v2513 = vlaneseq
        %v2514 = vshrl.u32 %v2513, 7
        %v2515 = vsub.s32 %v2512, %v2514
        %v2516 = vrot.slane %v2500, %v2515
        %v2518 = vunpack.c.l.s4 1966171168
        %v2519 = vunpack.c.0.s8 %v2518
        %v2520 = vlaneseq
        %v2521 = vshrl.u32 %v2520, 7
        %v2522 = vsub.s32 %v2519, %v2521
        %v2523 = vrot.slane %v2501, %v2522
        %v2525 = vunpack.c.l.s4 1966171168
        %v2526 = vunpack.c.0.s8 %v2525
        %v2527 = vlaneseq
        %v2528 = vshrl.u32 %v2527, 7
        %v2529 = vsub.s32 %v2526, %v2528
        %v2530 = vrot.slane %v2502, %v2529
        %v2531 = vcombine.high %v2509, %v2509
        %v2532 = vcombine.high %v2516, %v2516
        %v2533 = vcombine.high %v2523, %v2523
        %v2534 = vcombine.high %v2530, %v2530
        %v2535 = vcombine.high %v2213, %v2213
        %v2537 = vunpack.c.l.s4 1966171168
        %v2538 = vunpack.c.0.s8 %v2537
        %v2539 = vlaneseq
        %v2540 = vshrl.u32 %v2539, 7
        %v2541 = vsub.s32 %v2538, %v2540
        %v2542 = vrot.slane %v2213, %v2541
        %v2544 = vunpack.c.l.s4 1966171168
        %v2545 = vunpack.c.0.s8 %v2544
        %v2546 = vlaneseq
        %v2547 = vshrl.u32 %v2546, 7
        %v2548 = vsub.s32 %v2545, %v2547
        %v2549 = vrot.slane %v2535, %v2548
        %v2550 = vcombine.high %v2542, %v2542
        %v2551 = vcombine.high %v2549, %v2549
        %v2553 = vunpack.c.l.s4 1966171168
        %v2554 = vunpack.c.0.s8 %v2553
        %v2555 = vlaneseq
        %v2556 = vshrl.u32 %v2555, 7
        %v2557 = vsub.s32 %v2554, %v2556
        %v2558 = vrot.slane %v2542, %v2557
        %v2560 = vunpack.c.l.s4 1966171168
        %v2561 = vunpack.c.0.s8 %v2560
        %v2562 = vlaneseq
        %v2563 = vshrl.u32 %v2562, 7
        %v2564 = vsub.s32 %v2561, %v2563
        %v2565 = vrot.slane %v2549, %v2564
        %v2567 = vunpack.c.l.s4 1966171168
        %v2568 = vunpack.c.0.s8 %v2567
        %v2569 = vlaneseq
        %v2570 = vshrl.u32 %v2569, 7
        %v2571 = vsub.s32 %v2568, %v2570
        %v2572 = vrot.slane %v2550, %v2571
        %v2574 = vunpack.c.l.s4 1966171168
        %v2575 = vunpack.c.0.s8 %v2574
        %v2576 = vlaneseq
        %v2577 = vshrl.u32 %v2576, 7
        %v2578 = vsub.s32 %v2575, %v2577
        %v2579 = vrot.slane %v2551, %v2578
        %v2580 = vcombine.high %v2558, %v2558
        %v2581 = vcombine.high %v2565, %v2565
        %v2582 = vcombine.high %v2572, %v2572
        %v2583 = vcombine.high %v2579, %v2579
        %v2584 = vcombine.high %v2218, %v2218
        %v2586 = vunpack.c.l.s4 1966171168
        %v2587 = vunpack.c.0.s8 %v2586
        %v2588 = vlaneseq
        %v2589 = vshrl.u32 %v2588, 7
        %v2590 = vsub.s32 %v2587, %v2589
        %v2591 = vrot.slane %v2218, %v2590
        %v2593 = vunpack.c.l.s4 1966171168
        %v2594 = vunpack.c.0.s8 %v2593
        %v2595 = vlaneseq
        %v2596 = vshrl.u32 %v2595, 7
        %v2597 = vsub.s32 %v2594, %v2596
        %v2598 = vrot.slane %v2584, %v2597
        %v2599 = vcombine.high %v2591, %v2591
        %v2600 = vcombine.high %v2598, %v2598
        %v2602 = vunpack.c.l.s4 1966171168
        %v2603 = vunpack.c.0.s8 %v2602
        %v2604 = vlaneseq
        %v2605 = vshrl.u32 %v2604, 7
        %v2606 = vsub.s32 %v2603, %v2605
        %v2607 = vrot.slane %v2591, %v2606
        %v2609 = vunpack.c.l.s4 1966171168
        %v2610 = vunpack.c.0.s8 %v2609
        %v2611 = vlaneseq
        %v2612 = vshrl.u32 %v2611, 7
        %v2613 = vsub.s32 %v2610, %v2612
        %v2614 = vrot.slane %v2598, %v2613
        %v2616 = vunpack.c.l.s4 1966171168
        %v2617 = vunpack.c.0.s8 %v2616
        %v2618 = vlaneseq
        %v2619 = vshrl.u32 %v2618, 7
        %v2620 = vsub.s32 %v2617, %v2619
        %v2621 = vrot.slane %v2599, %v2620
        %v2623 = vunpack.c.l.s4 1966171168
        %v2624 = vunpack.c.0.s8 %v2623
        %v2625 = vlaneseq
        %v2626 = vshrl.u32 %v2625, 7
        %v2627 = vsub.s32 %v2624, %v2626
        %v2628 = vrot.slane %v2600, %v2627
        %v2629 = vcombine.high %v2607, %v2607
        %v2630 = vcombine.high %v2614, %v2614
        %v2631 = vcombine.high %v2621, %v2621
        %v2632 = vcombine.high %v2628, %v2628
        %v2633 = vcombine.high %v2223, %v2223
        %v2635 = vunpack.c.l.s4 1966171168
        %v2636 = vunpack.c.0.s8 %v2635
        %v2637 = vlaneseq
        %v2638 = vshrl.u32 %v2637, 7
        %v2639 = vsub.s32 %v2636, %v2638
        %v2640 = vrot.slane %v2223, %v2639
        %v2642 = vunpack.c.l.s4 1966171168
        %v2643 = vunpack.c.0.s8 %v2642
        %v2644 = vlaneseq
        %v2645 = vshrl.u32 %v2644, 7
        %v2646 = vsub.s32 %v2643, %v2645
        %v2647 = vrot.slane %v2633, %v2646
        %v2648 = vcombine.high %v2640, %v2640
        %v2649 = vcombine.high %v2647, %v2647
        %v2651 = vunpack.c.l.s4 1966171168
        %v2652 = vunpack.c.0.s8 %v2651
        %v2653 = vlaneseq
        %v2654 = vshrl.u32 %v2653, 7
        %v2655 = vsub.s32 %v2652, %v2654
        %v2656 = vrot.slane %v2640, %v2655
        %v2658 = vunpack.c.l.s4 1966171168
        %v2659 = vunpack.c.0.s8 %v2658
        %v2660 = vlaneseq
        %v2661 = vshrl.u32 %v2660, 7
        %v2662 = vsub.s32 %v2659, %v2661
        %v2663 = vrot.slane %v2647, %v2662
        %v2665 = vunpack.c.l.s4 1966171168
        %v2666 = vunpack.c.0.s8 %v2665
        %v2667 = vlaneseq
        %v2668 = vshrl.u32 %v2667, 7
        %v2669 = vsub.s32 %v2666, %v2668
        %v2670 = vrot.slane %v2648, %v2669
        %v2672 = vunpack.c.l.s4 1966171168
        %v2673 = vunpack.c.0.s8 %v2672
        %v2674 = vlaneseq
        %v2675 = vshrl.u32 %v2674, 7
        %v2676 = vsub.s32 %v2673, %v2675
        %v2677 = vrot.slane %v2649, %v2676
        %v2678 = vcombine.high %v2656, %v2656
        %v2679 = vcombine.high %v2663, %v2663
        %v2680 = vcombine.high %v2670, %v2670
        %v2681 = vcombine.high %v2677, %v2677
        %v2682 = vcombine.high %v2228, %v2228
        %v2684 = vunpack.c.l.s4 1966171168
        %v2685 = vunpack.c.0.s8 %v2684
        %v2686 = vlaneseq
        %v2687 = vshrl.u32 %v2686, 7
        %v2688 = vsub.s32 %v2685, %v2687
        %v2689 = vrot.slane %v2228, %v2688
        %v2691 = vunpack.c.l.s4 1966171168
        %v2692 = vunpack.c.0.s8 %v2691
        %v2693 = vlaneseq
        %v2694 = vshrl.u32 %v2693, 7
        %v2695 = vsub.s32 %v2692, %v2694
        %v2696 = vrot.slane %v2682, %v2695
        %v2697 = vcombine.high %v2689, %v2689
        %v2698 = vcombine.high %v2696, %v2696
        %v2700 = vunpack.c.l.s4 1966171168
        %v2701 = vunpack.c.0.s8 %v2700
        %v2702 = vlaneseq
        %v2703 = vshrl.u32 %v2702, 7
        %v2704 = vsub.s32 %v2701, %v2703
        %v2705 = vrot.slane %v2689, %v2704
        %v2707 = vunpack.c.l.s4 1966171168
        %v2708 = vunpack.c.0.s8 %v2707
        %v2709 = vlaneseq
        %v2710 = vshrl.u32 %v2709, 7
        %v2711 = vsub.s32 %v2708, %v2710
        %v2712 = vrot.slane %v2696, %v2711
        %v2714 = vunpack.c.l.s4 1966171168
        %v2715 = vunpack.c.0.s8 %v2714
        %v2716 = vlaneseq
        %v2717 = vshrl.u32 %v2716, 7
        %v2718 = vsub.s32 %v2715, %v2717
        %v2719 = vrot.slane %v2697, %v2718
        %v2721 = vunpack.c.l.s4 1966171168
        %v2722 = vunpack.c.0.s8 %v2721
        %v2723 = vlaneseq
        %v2724 = vshrl.u32 %v2723, 7
        %v2725 = vsub.s32 %v2722, %v2724
        %v2726 = vrot.slane %v2698, %v2725
        %v2727 = vcombine.high %v2705, %v2705
        %v2728 = vcombine.high %v2712, %v2712
        %v2729 = vcombine.high %v2719, %v2719
        %v2730 = vcombine.high %v2726, %v2726
        %v2731 = vcombine.high %v2233, %v2233
        %v2733 = vunpack.c.l.s4 1966171168
        %v2734 = vunpack.c.0.s8 %v2733
        %v2735 = vlaneseq
        %v2736 = vshrl.u32 %v2735, 7
        %v2737 = vsub.s32 %v2734, %v2736
        %v2738 = vrot.slane %v2233, %v2737
        %v2740 = vunpack.c.l.s4 1966171168
        %v2741 = vunpack.c.0.s8 %v2740
        %v2742 = vlaneseq
        %v2743 = vshrl.u32 %v2742, 7
        %v2744 = vsub.s32 %v2741, %v2743
        %v2745 = vrot.slane %v2731, %v2744
        %v2746 = vcombine.high %v2738, %v2738
        %v2747 = vcombine.high %v2745, %v2745
        %v2749 = vunpack.c.l.s4 1966171168
        %v2750 = vunpack.c.0.s8 %v2749
        %v2751 = vlaneseq
        %v2752 = vshrl.u32 %v2751, 7
        %v2753 = vsub.s32 %v2750, %v2752
        %v2754 = vrot.slane %v2738, %v2753
        %v2756 = vunpack.c.l.s4 1966171168
        %v2757 = vunpack.c.0.s8 %v2756
        %v2758 = vlaneseq
        %v2759 = vshrl.u32 %v2758, 7
        %v2760 = vsub.s32 %v2757, %v2759
        %v2761 = vrot.slane %v2745, %v2760
        %v2763 = vunpack.c.l.s4 1966171168
        %v2764 = vunpack.c.0.s8 %v2763
        %v2765 = vlaneseq
        %v2766 = vshrl.u32 %v2765, 7
        %v2767 = vsub.s32 %v2764, %v2766
        %v2768 = vrot.slane %v2746, %v2767
        %v2770 = vunpack.c.l.s4 1966171168
        %v2771 = vunpack.c.0.s8 %v2770
        %v2772 = vlaneseq
        %v2773 = vshrl.u32 %v2772, 7
        %v2774 = vsub.s32 %v2771, %v2773
        %v2775 = vrot.slane %v2747, %v2774
        %v2776 = vcombine.high %v2754, %v2754
        %v2777 = vcombine.high %v2761, %v2761
        %v2778 = vcombine.high %v2768, %v2768
        %v2779 = vcombine.high %v2775, %v2775
        %v2780 = vcombine.high %v2238, %v2238
        %v2782 = vunpack.c.l.s4 1966171168
        %v2783 = vunpack.c.0.s8 %v2782
        %v2784 = vlaneseq
        %v2785 = vshrl.u32 %v2784, 7
        %v2786 = vsub.s32 %v2783, %v2785
        %v2787 = vrot.slane %v2238, %v2786
        %v2789 = vunpack.c.l.s4 1966171168
        %v2790 = vunpack.c.0.s8 %v2789
        %v2791 = vlaneseq
        %v2792 = vshrl.u32 %v2791, 7
        %v2793 = vsub.s32 %v2790, %v2792
        %v2794 = vrot.slane %v2780, %v2793
        %v2795 = vcombine.high %v2787, %v2787
        %v2796 = vcombine.high %v2794, %v2794
        %v2798 = vunpack.c.l.s4 1966171168
        %v2799 = vunpack.c.0.s8 %v2798
        %v2800 = vlaneseq
        %v2801 = vshrl.u32 %v2800, 7
        %v2802 = vsub.s32 %v2799, %v2801
        %v2803 = vrot.slane %v2787, %v2802
        %v2805 = vunpack.c.l.s4 1966171168
        %v2806 = vunpack.c.0.s8 %v2805
        %v2807 = vlaneseq
        %v2808 = vshrl.u32 %v2807, 7
        %v2809 = vsub.s32 %v2806, %v2808
        %v2810 = vrot.slane %v2794, %v2809
        %v2812 = vunpack.c.l.s4 1966171168
        %v2813 = vunpack.c.0.s8 %v2812
        %v2814 = vlaneseq
        %v2815 = vshrl.u32 %v2814, 7
        %v2816 = vsub.s32 %v2813, %v2815
        %v2817 = vrot.slane %v2795, %v2816
        %v2819 = vunpack.c.l.s4 1966171168
        %v2820 = vunpack.c.0.s8 %v2819
        %v2821 = vlaneseq
        %v2822 = vshrl.u32 %v2821, 7
        %v2823 = vsub.s32 %v2820, %v2822
        %v2824 = vrot.slane %v2796, %v2823
        %v2825 = vcombine.high %v2803, %v2803
        %v2826 = vcombine.high %v2810, %v2810
        %v2827 = vcombine.high %v2817, %v2817
        %v2828 = vcombine.high %v2824, %v2824
        %v2829 = vcombine.high %v2243, %v2243
        %v2831 = vunpack.c.l.s4 1966171168
        %v2832 = vunpack.c.0.s8 %v2831
        %v2833 = vlaneseq
        %v2834 = vshrl.u32 %v2833, 7
        %v2835 = vsub.s32 %v2832, %v2834
        %v2836 = vrot.slane %v2243, %v2835
        %v2838 = vunpack.c.l.s4 1966171168
        %v2839 = vunpack.c.0.s8 %v2838
        %v2840 = vlaneseq
        %v2841 = vshrl.u32 %v2840, 7
        %v2842 = vsub.s32 %v2839, %v2841
        %v2843 = vrot.slane %v2829, %v2842
        %v2844 = vcombine.high %v2836, %v2836
        %v2845 = vcombine.high %v2843, %v2843
        %v2847 = vunpack.c.l.s4 1966171168
        %v2848 = vunpack.c.0.s8 %v2847
        %v2849 = vlaneseq
        %v2850 = vshrl.u32 %v2849, 7
        %v2851 = vsub.s32 %v2848, %v2850
        %v2852 = vrot.slane %v2836, %v2851
        %v2854 = vunpack.c.l.s4 1966171168
        %v2855 = vunpack.c.0.s8 %v2854
        %v2856 = vlaneseq
        %v2857 = vshrl.u32 %v2856, 7
        %v2858 = vsub.s32 %v2855, %v2857
        %v2859 = vrot.slane %v2843, %v2858
        %v2861 = vunpack.c.l.s4 1966171168
        %v2862 = vunpack.c.0.s8 %v2861
        %v2863 = vlaneseq
        %v2864 = vshrl.u32 %v2863, 7
        %v2865 = vsub.s32 %v2862, %v2864
        %v2866 = vrot.slane %v2844, %v2865
        %v2868 = vunpack.c.l.s4 1966171168
        %v2869 = vunpack.c.0.s8 %v2868
        %v2870 = vlaneseq
        %v2871 = vshrl.u32 %v2870, 7
        %v2872 = vsub.s32 %v2869, %v2871
        %v2873 = vrot.slane %v2845, %v2872
        %v2874 = vcombine.high %v2852, %v2852
        %v2875 = vcombine.high %v2859, %v2859
        %v2876 = vcombine.high %v2866, %v2866
        %v2877 = vcombine.high %v2873, %v2873
        %v2878 = vcombine.high %v2248, %v2248
        %v2880 = vunpack.c.l.s4 1966171168
        %v2881 = vunpack.c.0.s8 %v2880
        %v2882 = vlaneseq
        %v2883 = vshrl.u32 %v2882, 7
        %v2884 = vsub.s32 %v2881, %v2883
        %v2885 = vrot.slane %v2248, %v2884
        %v2887 = vunpack.c.l.s4 1966171168
        %v2888 = vunpack.c.0.s8 %v2887
        %v2889 = vlaneseq
        %v2890 = vshrl.u32 %v2889, 7
        %v2891 = vsub.s32 %v2888, %v2890
        %v2892 = vrot.slane %v2878, %v2891
        %v2893 = vcombine.high %v2885, %v2885
        %v2894 = vcombine.high %v2892, %v2892
        %v2896 = vunpack.c.l.s4 1966171168
        %v2897 = vunpack.c.0.s8 %v2896
        %v2898 = vlaneseq
        %v2899 = vshrl.u32 %v2898, 7
        %v2900 = vsub.s32 %v2897, %v2899
        %v2901 = vrot.slane %v2885, %v2900
        %v2903 = vunpack.c.l.s4 1966171168
        %v2904 = vunpack.c.0.s8 %v2903
        %v2905 = vlaneseq
        %v2906 = vshrl.u32 %v2905, 7
        %v2907 = vsub.s32 %v2904, %v2906
        %v2908 = vrot.slane %v2892, %v2907
        %v2910 = vunpack.c.l.s4 1966171168
        %v2911 = vunpack.c.0.s8 %v2910
        %v2912 = vlaneseq
        %v2913 = vshrl.u32 %v2912, 7
        %v2914 = vsub.s32 %v2911, %v2913
        %v2915 = vrot.slane %v2893, %v2914
        %v2917 = vunpack.c.l.s4 1966171168
        %v2918 = vunpack.c.0.s8 %v2917
        %v2919 = vlaneseq
        %v2920 = vshrl.u32 %v2919, 7
        %v2921 = vsub.s32 %v2918, %v2920
        %v2922 = vrot.slane %v2894, %v2921
        %v2923 = vcombine.high %v2901, %v2901
        %v2924 = vcombine.high %v2908, %v2908
        %v2925 = vcombine.high %v2915, %v2915
        %v2926 = vcombine.high %v2922, %v2922
        %v2927 = vcombine.high %v2253, %v2253
        %v2929 = vunpack.c.l.s4 1966171168
        %v2930 = vunpack.c.0.s8 %v2929
        %v2931 = vlaneseq
        %v2932 = vshrl.u32 %v2931, 7
        %v2933 = vsub.s32 %v2930, %v2932
        %v2934 = vrot.slane %v2253, %v2933
        %v2936 = vunpack.c.l.s4 1966171168
        %v2937 = vunpack.c.0.s8 %v2936
        %v2938 = vlaneseq
        %v2939 = vshrl.u32 %v2938, 7
        %v2940 = vsub.s32 %v2937, %v2939
        %v2941 = vrot.slane %v2927, %v2940
        %v2942 = vcombine.high %v2934, %v2934
        %v2943 = vcombine.high %v2941, %v2941
        %v2945 = vunpack.c.l.s4 1966171168
        %v2946 = vunpack.c.0.s8 %v2945
        %v2947 = vlaneseq
        %v2948 = vshrl.u32 %v2947, 7
        %v2949 = vsub.s32 %v2946, %v2948
        %v2950 = vrot.slane %v2934, %v2949
        %v2952 = vunpack.c.l.s4 1966171168
        %v2953 = vunpack.c.0.s8 %v2952
        %v2954 = vlaneseq
        %v2955 = vshrl.u32 %v2954, 7
        %v2956 = vsub.s32 %v2953, %v2955
        %v2957 = vrot.slane %v2941, %v2956
        %v2959 = vunpack.c.l.s4 1966171168
        %v2960 = vunpack.c.0.s8 %v2959
        %v2961 = vlaneseq
        %v2962 = vshrl.u32 %v2961, 7
        %v2963 = vsub.s32 %v2960, %v2962
        %v2964 = vrot.slane %v2942, %v2963
        %v2966 = vunpack.c.l.s4 1966171168
        %v2967 = vunpack.c.0.s8 %v2966
        %v2968 = vlaneseq
        %v2969 = vshrl.u32 %v2968, 7
        %v2970 = vsub.s32 %v2967, %v2969
        %v2971 = vrot.slane %v2943, %v2970
        %v2972 = vcombine.high %v2950, %v2950
        %v2973 = vcombine.high %v2957, %v2957
        %v2974 = vcombine.high %v2964, %v2964
        %v2975 = vcombine.high %v2971, %v2971
        %v2976 = vcombine.high %v2258, %v2258
        %v2978 = vunpack.c.l.s4 1966171168
        %v2979 = vunpack.c.0.s8 %v2978
        %v2980 = vlaneseq
        %v2981 = vshrl.u32 %v2980, 7
        %v2982 = vsub.s32 %v2979, %v2981
        %v2983 = vrot.slane %v2258, %v2982
        %v2985 = vunpack.c.l.s4 1966171168
        %v2986 = vunpack.c.0.s8 %v2985
        %v2987 = vlaneseq
        %v2988 = vshrl.u32 %v2987, 7
        %v2989 = vsub.s32 %v2986, %v2988
        %v2990 = vrot.slane %v2976, %v2989
        %v2991 = vcombine.high %v2983, %v2983
        %v2992 = vcombine.high %v2990, %v2990
        %v2994 = vunpack.c.l.s4 1966171168
        %v2995 = vunpack.c.0.s8 %v2994
        %v2996 = vlaneseq
        %v2997 = vshrl.u32 %v2996, 7
        %v2998 = vsub.s32 %v2995, %v2997
        %v2999 = vrot.slane %v2983, %v2998
        %v3001 = vunpack.c.l.s4 1966171168
        %v3002 = vunpack.c.0.s8 %v3001
        %v3003 = vlaneseq
        %v3004 = vshrl.u32 %v3003, 7
        %v3005 = vsub.s32 %v3002, %v3004
        %v3006 = vrot.slane %v2990, %v3005
        %v3008 = vunpack.c.l.s4 1966171168
        %v3009 = vunpack.c.0.s8 %v3008
        %v3010 = vlaneseq
        %v3011 = vshrl.u32 %v3010, 7
        %v3012 = vsub.s32 %v3009, %v3011
        %v3013 = vrot.slane %v2991, %v3012
        %v3015 = vunpack.c.l.s4 1966171168
        %v3016 = vunpack.c.0.s8 %v3015
        %v3017 = vlaneseq
        %v3018 = vshrl.u32 %v3017, 7
        %v3019 = vsub.s32 %v3016, %v3018
        %v3020 = vrot.slane %v2992, %v3019
        %v3021 = vcombine.high %v2999, %v2999
        %v3022 = vcombine.high %v3006, %v3006
        %v3023 = vcombine.high %v3013, %v3013
        %v3024 = vcombine.high %v3020, %v3020
        %v3025 = vcombine.high %v2263, %v2263
        %v3027 = vunpack.c.l.s4 1966171168
        %v3028 = vunpack.c.0.s8 %v3027
        %v3029 = vlaneseq
        %v3030 = vshrl.u32 %v3029, 7
        %v3031 = vsub.s32 %v3028, %v3030
        %v3032 = vrot.slane %v2263, %v3031
        %v3034 = vunpack.c.l.s4 1966171168
        %v3035 = vunpack.c.0.s8 %v3034
        %v3036 = vlaneseq
        %v3037 = vshrl.u32 %v3036, 7
        %v3038 = vsub.s32 %v3035, %v3037
        %v3039 = vrot.slane %v3025, %v3038
        %v3040 = vcombine.high %v3032, %v3032
        %v3041 = vcombine.high %v3039, %v3039
        %v3043 = vunpack.c.l.s4 1966171168
        %v3044 = vunpack.c.0.s8 %v3043
        %v3045 = vlaneseq
        %v3046 = vshrl.u32 %v3045, 7
        %v3047 = vsub.s32 %v3044, %v3046
        %v3048 = vrot.slane %v3032, %v3047
        %v3050 = vunpack.c.l.s4 1966171168
        %v3051 = vunpack.c.0.s8 %v3050
        %v3052 = vlaneseq
        %v3053 = vshrl.u32 %v3052, 7
        %v3054 = vsub.s32 %v3051, %v3053
        %v3055 = vrot.slane %v3039, %v3054
        %v3057 = vunpack.c.l.s4 1966171168
        %v3058 = vunpack.c.0.s8 %v3057
        %v3059 = vlaneseq
        %v3060 = vshrl.u32 %v3059, 7
        %v3061 = vsub.s32 %v3058, %v3060
        %v3062 = vrot.slane %v3040, %v3061
        %v3064 = vunpack.c.l.s4 1966171168
        %v3065 = vunpack.c.0.s8 %v3064
        %v3066 = vlaneseq
        %v3067 = vshrl.u32 %v3066, 7
        %v3068 = vsub.s32 %v3065, %v3067
        %v3069 = vrot.slane %v3041, %v3068
        %v3070 = vcombine.high %v3048, %v3048
        %v3071 = vcombine.high %v3055, %v3055
        %v3072 = vcombine.high %v3062, %v3062
        %v3073 = vcombine.high %v3069, %v3069
        %v3074 = vcombine.high %v2268, %v2268
        %v3076 = vunpack.c.l.s4 1966171168
        %v3077 = vunpack.c.0.s8 %v3076
        %v3078 = vlaneseq
        %v3079 = vshrl.u32 %v3078, 7
        %v3080 = vsub.s32 %v3077, %v3079
        %v3081 = vrot.slane %v2268, %v3080
        %v3083 = vunpack.c.l.s4 1966171168
        %v3084 = vunpack.c.0.s8 %v3083
        %v3085 = vlaneseq
        %v3086 = vshrl.u32 %v3085, 7
        %v3087 = vsub.s32 %v3084, %v3086
        %v3088 = vrot.slane %v3074, %v3087
        %v3089 = vcombine.high %v3081, %v3081
        %v3090 = vcombine.high %v3088, %v3088
        %v3092 = vunpack.c.l.s4 1966171168
        %v3093 = vunpack.c.0.s8 %v3092
        %v3094 = vlaneseq
        %v3095 = vshrl.u32 %v3094, 7
        %v3096 = vsub.s32 %v3093, %v3095
        %v3097 = vrot.slane %v3081, %v3096
        %v3099 = vunpack.c.l.s4 1966171168
        %v3100 = vunpack.c.0.s8 %v3099
        %v3101 = vlaneseq
        %v3102 = vshrl.u32 %v3101, 7
        %v3103 = vsub.s32 %v3100, %v3102
        %v3104 = vrot.slane %v3088, %v3103
        %v3106 = vunpack.c.l.s4 1966171168
        %v3107 = vunpack.c.0.s8 %v3106
        %v3108 = vlaneseq
        %v3109 = vshrl.u32 %v3108, 7
        %v3110 = vsub.s32 %v3107, %v3109
        %v3111 = vrot.slane %v3089, %v3110
        %v3113 = vunpack.c.l.s4 1966171168
        %v3114 = vunpack.c.0.s8 %v3113
        %v3115 = vlaneseq
        %v3116 = vshrl.u32 %v3115, 7
        %v3117 = vsub.s32 %v3114, %v3116
        %v3118 = vrot.slane %v3090, %v3117
        %v3119 = vcombine.high %v3097, %v3097
        %v3120 = vcombine.high %v3104, %v3104
        %v3121 = vcombine.high %v3111, %v3111
        %v3122 = vcombine.high %v3118, %v3118
        %v3123 = vcombine.high %v2273, %v2273
        %v3125 = vunpack.c.l.s4 1966171168
        %v3126 = vunpack.c.0.s8 %v3125
        %v3127 = vlaneseq
        %v3128 = vshrl.u32 %v3127, 7
        %v3129 = vsub.s32 %v3126, %v3128
        %v3130 = vrot.slane %v2273, %v3129
        %v3132 = vunpack.c.l.s4 1966171168
        %v3133 = vunpack.c.0.s8 %v3132
        %v3134 = vlaneseq
        %v3135 = vshrl.u32 %v3134, 7
        %v3136 = vsub.s32 %v3133, %v3135
        %v3137 = vrot.slane %v3123, %v3136
        %v3138 = vcombine.high %v3130, %v3130
        %v3139 = vcombine.high %v3137, %v3137
        %v3141 = vunpack.c.l.s4 1966171168
        %v3142 = vunpack.c.0.s8 %v3141
        %v3143 = vlaneseq
        %v3144 = vshrl.u32 %v3143, 7
        %v3145 = vsub.s32 %v3142, %v3144
        %v3146 = vrot.slane %v3130, %v3145
        %v3148 = vunpack.c.l.s4 1966171168
        %v3149 = vunpack.c.0.s8 %v3148
        %v3150 = vlaneseq
        %v3151 = vshrl.u32 %v3150, 7
        %v3152 = vsub.s32 %v3149, %v3151
        %v3153 = vrot.slane %v3137, %v3152
        %v3155 = vunpack.c.l.s4 1966171168
        %v3156 = vunpack.c.0.s8 %v3155
        %v3157 = vlaneseq
        %v3158 = vshrl.u32 %v3157, 7
        %v3159 = vsub.s32 %v3156, %v3158
        %v3160 = vrot.slane %v3138, %v3159
        %v3162 = vunpack.c.l.s4 1966171168
        %v3163 = vunpack.c.0.s8 %v3162
        %v3164 = vlaneseq
        %v3165 = vshrl.u32 %v3164, 7
        %v3166 = vsub.s32 %v3163, %v3165
        %v3167 = vrot.slane %v3139, %v3166
        %v3168 = vcombine.high %v3146, %v3146
        %v3169 = vcombine.high %v3153, %v3153
        %v3170 = vcombine.high %v3160, %v3160
        %v3171 = vcombine.high %v3167, %v3167
        %v3172 = vcombine.high %v2278, %v2278
        %v3174 = vunpack.c.l.s4 1966171168
        %v3175 = vunpack.c.0.s8 %v3174
        %v3176 = vlaneseq
        %v3177 = vshrl.u32 %v3176, 7
        %v3178 = vsub.s32 %v3175, %v3177
        %v3179 = vrot.slane %v2278, %v3178
        %v3181 = vunpack.c.l.s4 1966171168
        %v3182 = vunpack.c.0.s8 %v3181
        %v3183 = vlaneseq
        %v3184 = vshrl.u32 %v3183, 7
        %v3185 = vsub.s32 %v3182, %v3184
        %v3186 = vrot.slane %v3172, %v3185
        %v3187 = vcombine.high %v3179, %v3179
        %v3188 = vcombine.high %v3186, %v3186
        %v3190 = vunpack.c.l.s4 1966171168
        %v3191 = vunpack.c.0.s8 %v3190
        %v3192 = vlaneseq
        %v3193 = vshrl.u32 %v3192, 7
        %v3194 = vsub.s32 %v3191, %v3193
        %v3195 = vrot.slane %v3179, %v3194
        %v3197 = vunpack.c.l.s4 1966171168
        %v3198 = vunpack.c.0.s8 %v3197
        %v3199 = vlaneseq
        %v3200 = vshrl.u32 %v3199, 7
        %v3201 = vsub.s32 %v3198, %v3200
        %v3202 = vrot.slane %v3186, %v3201
        %v3204 = vunpack.c.l.s4 1966171168
        %v3205 = vunpack.c.0.s8 %v3204
        %v3206 = vlaneseq
        %v3207 = vshrl.u32 %v3206, 7
        %v3208 = vsub.s32 %v3205, %v3207
        %v3209 = vrot.slane %v3187, %v3208
        %v3211 = vunpack.c.l.s4 1966171168
        %v3212 = vunpack.c.0.s8 %v3211
        %v3213 = vlaneseq
        %v3214 = vshrl.u32 %v3213, 7
        %v3215 = vsub.s32 %v3212, %v3214
        %v3216 = vrot.slane %v3188, %v3215
        %v3217 = vcombine.high %v3195, %v3195
        %v3218 = vcombine.high %v3202, %v3202
        %v3219 = vcombine.high %v3209, %v3209
        %v3220 = vcombine.high %v3216, %v3216
        %v3221 = vcombine.high %v2283, %v2283
        %v3223 = vunpack.c.l.s4 1966171168
        %v3224 = vunpack.c.0.s8 %v3223
        %v3225 = vlaneseq
        %v3226 = vshrl.u32 %v3225, 7
        %v3227 = vsub.s32 %v3224, %v3226
        %v3228 = vrot.slane %v2283, %v3227
        %v3230 = vunpack.c.l.s4 1966171168
        %v3231 = vunpack.c.0.s8 %v3230
        %v3232 = vlaneseq
        %v3233 = vshrl.u32 %v3232, 7
        %v3234 = vsub.s32 %v3231, %v3233
        %v3235 = vrot.slane %v3221, %v3234
        %v3236 = vcombine.high %v3228, %v3228
        %v3237 = vcombine.high %v3235, %v3235
        %v3239 = vunpack.c.l.s4 1966171168
        %v3240 = vunpack.c.0.s8 %v3239
        %v3241 = vlaneseq
        %v3242 = vshrl.u32 %v3241, 7
        %v3243 = vsub.s32 %v3240, %v3242
        %v3244 = vrot.slane %v3228, %v3243
        %v3246 = vunpack.c.l.s4 1966171168
        %v3247 = vunpack.c.0.s8 %v3246
        %v3248 = vlaneseq
        %v3249 = vshrl.u32 %v3248, 7
        %v3250 = vsub.s32 %v3247, %v3249
        %v3251 = vrot.slane %v3235, %v3250
        %v3253 = vunpack.c.l.s4 1966171168
        %v3254 = vunpack.c.0.s8 %v3253
        %v3255 = vlaneseq
        %v3256 = vshrl.u32 %v3255, 7
        %v3257 = vsub.s32 %v3254, %v3256
        %v3258 = vrot.slane %v3236, %v3257
        %v3260 = vunpack.c.l.s4 1966171168
        %v3261 = vunpack.c.0.s8 %v3260
        %v3262 = vlaneseq
        %v3263 = vshrl.u32 %v3262, 7
        %v3264 = vsub.s32 %v3261, %v3263
        %v3265 = vrot.slane %v3237, %v3264
        %v3266 = vcombine.high %v3244, %v3244
        %v3267 = vcombine.high %v3251, %v3251
        %v3268 = vcombine.high %v3258, %v3258
        %v3269 = vcombine.high %v3265, %v3265
        %v3270 = vcombine.high %v2288, %v2288
        %v3272 = vunpack.c.l.s4 1966171168
        %v3273 = vunpack.c.0.s8 %v3272
        %v3274 = vlaneseq
        %v3275 = vshrl.u32 %v3274, 7
        %v3276 = vsub.s32 %v3273, %v3275
        %v3277 = vrot.slane %v2288, %v3276
        %v3279 = vunpack.c.l.s4 1966171168
        %v3280 = vunpack.c.0.s8 %v3279
        %v3281 = vlaneseq
        %v3282 = vshrl.u32 %v3281, 7
        %v3283 = vsub.s32 %v3280, %v3282
        %v3284 = vrot.slane %v3270, %v3283
        %v3285 = vcombine.high %v3277, %v3277
        %v3286 = vcombine.high %v3284, %v3284
        %v3288 = vunpack.c.l.s4 1966171168
        %v3289 = vunpack.c.0.s8 %v3288
        %v3290 = vlaneseq
        %v3291 = vshrl.u32 %v3290, 7
        %v3292 = vsub.s32 %v3289, %v3291
        %v3293 = vrot.slane %v3277, %v3292
        %v3295 = vunpack.c.l.s4 1966171168
        %v3296 = vunpack.c.0.s8 %v3295
        %v3297 = vlaneseq
        %v3298 = vshrl.u32 %v3297, 7
        %v3299 = vsub.s32 %v3296, %v3298
        %v3300 = vrot.slane %v3284, %v3299
        %v3302 = vunpack.c.l.s4 1966171168
        %v3303 = vunpack.c.0.s8 %v3302
        %v3304 = vlaneseq
        %v3305 = vshrl.u32 %v3304, 7
        %v3306 = vsub.s32 %v3303, %v3305
        %v3307 = vrot.slane %v3285, %v3306
        %v3309 = vunpack.c.l.s4 1966171168
        %v3310 = vunpack.c.0.s8 %v3309
        %v3311 = vlaneseq
        %v3312 = vshrl.u32 %v3311, 7
        %v3313 = vsub.s32 %v3310, %v3312
        %v3314 = vrot.slane %v3286, %v3313
        %v3315 = vcombine.high %v3293, %v3293
        %v3316 = vcombine.high %v3300, %v3300
        %v3317 = vcombine.high %v3307, %v3307
        %v3318 = vcombine.high %v3314, %v3314
        %v3319 = vcombine.high %v2293, %v2293
        %v3321 = vunpack.c.l.s4 1966171168
        %v3322 = vunpack.c.0.s8 %v3321
        %v3323 = vlaneseq
        %v3324 = vshrl.u32 %v3323, 7
        %v3325 = vsub.s32 %v3322, %v3324
        %v3326 = vrot.slane %v2293, %v3325
        %v3328 = vunpack.c.l.s4 1966171168
        %v3329 = vunpack.c.0.s8 %v3328
        %v3330 = vlaneseq
        %v3331 = vshrl.u32 %v3330, 7
        %v3332 = vsub.s32 %v3329, %v3331
        %v3333 = vrot.slane %v3319, %v3332
        %v3334 = vcombine.high %v3326, %v3326
        %v3335 = vcombine.high %v3333, %v3333
        %v3337 = vunpack.c.l.s4 1966171168
        %v3338 = vunpack.c.0.s8 %v3337
        %v3339 = vlaneseq
        %v3340 = vshrl.u32 %v3339, 7
        %v3341 = vsub.s32 %v3338, %v3340
        %v3342 = vrot.slane %v3326, %v3341
        %v3344 = vunpack.c.l.s4 1966171168
        %v3345 = vunpack.c.0.s8 %v3344
        %v3346 = vlaneseq
        %v3347 = vshrl.u32 %v3346, 7
        %v3348 = vsub.s32 %v3345, %v3347
        %v3349 = vrot.slane %v3333, %v3348
        %v3351 = vunpack.c.l.s4 1966171168
        %v3352 = vunpack.c.0.s8 %v3351
        %v3353 = vlaneseq
        %v3354 = vshrl.u32 %v3353, 7
        %v3355 = vsub.s32 %v3352, %v3354
        %v3356 = vrot.slane %v3334, %v3355
        %v3358 = vunpack.c.l.s4 1966171168
        %v3359 = vunpack.c.0.s8 %v3358
        %v3360 = vlaneseq
        %v3361 = vshrl.u32 %v3360, 7
        %v3362 = vsub.s32 %v3359, %v3361
        %v3363 = vrot.slane %v3335, %v3362
        %v3364 = vcombine.high %v3342, %v3342
        %v3365 = vcombine.high %v3349, %v3349
        %v3366 = vcombine.high %v3356, %v3356
        %v3367 = vcombine.high %v3363, %v3363
        %v3368 = vcombine.high %v2298, %v2298
        %v3370 = vunpack.c.l.s4 1966171168
        %v3371 = vunpack.c.0.s8 %v3370
        %v3372 = vlaneseq
        %v3373 = vshrl.u32 %v3372, 7
        %v3374 = vsub.s32 %v3371, %v3373
        %v3375 = vrot.slane %v2298, %v3374
        %v3377 = vunpack.c.l.s4 1966171168
        %v3378 = vunpack.c.0.s8 %v3377
        %v3379 = vlaneseq
        %v3380 = vshrl.u32 %v3379, 7
        %v3381 = vsub.s32 %v3378, %v3380
        %v3382 = vrot.slane %v3368, %v3381
        %v3383 = vcombine.high %v3375, %v3375
        %v3384 = vcombine.high %v3382, %v3382
        %v3386 = vunpack.c.l.s4 1966171168
        %v3387 = vunpack.c.0.s8 %v3386
        %v3388 = vlaneseq
        %v3389 = vshrl.u32 %v3388, 7
        %v3390 = vsub.s32 %v3387, %v3389
        %v3391 = vrot.slane %v3375, %v3390
        %v3393 = vunpack.c.l.s4 1966171168
        %v3394 = vunpack.c.0.s8 %v3393
        %v3395 = vlaneseq
        %v3396 = vshrl.u32 %v3395, 7
        %v3397 = vsub.s32 %v3394, %v3396
        %v3398 = vrot.slane %v3382, %v3397
        %v3400 = vunpack.c.l.s4 1966171168
        %v3401 = vunpack.c.0.s8 %v3400
        %v3402 = vlaneseq
        %v3403 = vshrl.u32 %v3402, 7
        %v3404 = vsub.s32 %v3401, %v3403
        %v3405 = vrot.slane %v3383, %v3404
        %v3407 = vunpack.c.l.s4 1966171168
        %v3408 = vunpack.c.0.s8 %v3407
        %v3409 = vlaneseq
        %v3410 = vshrl.u32 %v3409, 7
        %v3411 = vsub.s32 %v3408, %v3410
        %v3412 = vrot.slane %v3384, %v3411
        %v3413 = vcombine.high %v3391, %v3391
        %v3414 = vcombine.high %v3398, %v3398
        %v3415 = vcombine.high %v3405, %v3405
        %v3416 = vcombine.high %v3412, %v3412
        %v3417 = vcombine.high %v2303, %v2303
        %v3419 = vunpack.c.l.s4 1966171168
        %v3420 = vunpack.c.0.s8 %v3419
        %v3421 = vlaneseq
        %v3422 = vshrl.u32 %v3421, 7
        %v3423 = vsub.s32 %v3420, %v3422
        %v3424 = vrot.slane %v2303, %v3423
        %v3426 = vunpack.c.l.s4 1966171168
        %v3427 = vunpack.c.0.s8 %v3426
        %v3428 = vlaneseq
        %v3429 = vshrl.u32 %v3428, 7
        %v3430 = vsub.s32 %v3427, %v3429
        %v3431 = vrot.slane %v3417, %v3430
        %v3432 = vcombine.high %v3424, %v3424
        %v3433 = vcombine.high %v3431, %v3431
        %v3435 = vunpack.c.l.s4 1966171168
        %v3436 = vunpack.c.0.s8 %v3435
        %v3437 = vlaneseq
        %v3438 = vshrl.u32 %v3437, 7
        %v3439 = vsub.s32 %v3436, %v3438
        %v3440 = vrot.slane %v3424, %v3439
        %v3442 = vunpack.c.l.s4 1966171168
        %v3443 = vunpack.c.0.s8 %v3442
        %v3444 = vlaneseq
        %v3445 = vshrl.u32 %v3444, 7
        %v3446 = vsub.s32 %v3443, %v3445
        %v3447 = vrot.slane %v3431, %v3446
        %v3449 = vunpack.c.l.s4 1966171168
        %v3450 = vunpack.c.0.s8 %v3449
        %v3451 = vlaneseq
        %v3452 = vshrl.u32 %v3451, 7
        %v3453 = vsub.s32 %v3450, %v3452
        %v3454 = vrot.slane %v3432, %v3453
        %v3456 = vunpack.c.l.s4 1966171168
        %v3457 = vunpack.c.0.s8 %v3456
        %v3458 = vlaneseq
        %v3459 = vshrl.u32 %v3458, 7
        %v3460 = vsub.s32 %v3457, %v3459
        %v3461 = vrot.slane %v3433, %v3460
        %v3462 = vcombine.high %v3440, %v3440
        %v3463 = vcombine.high %v3447, %v3447
        %v3464 = vcombine.high %v3454, %v3454
        %v3465 = vcombine.high %v3461, %v3461
        %v3466 = vcombine.high %v2308, %v2308
        %v3468 = vunpack.c.l.s4 1966171168
        %v3469 = vunpack.c.0.s8 %v3468
        %v3470 = vlaneseq
        %v3471 = vshrl.u32 %v3470, 7
        %v3472 = vsub.s32 %v3469, %v3471
        %v3473 = vrot.slane %v2308, %v3472
        %v3475 = vunpack.c.l.s4 1966171168
        %v3476 = vunpack.c.0.s8 %v3475
        %v3477 = vlaneseq
        %v3478 = vshrl.u32 %v3477, 7
        %v3479 = vsub.s32 %v3476, %v3478
        %v3480 = vrot.slane %v3466, %v3479
        %v3481 = vcombine.high %v3473, %v3473
        %v3482 = vcombine.high %v3480, %v3480
        %v3484 = vunpack.c.l.s4 1966171168
        %v3485 = vunpack.c.0.s8 %v3484
        %v3486 = vlaneseq
        %v3487 = vshrl.u32 %v3486, 7
        %v3488 = vsub.s32 %v3485, %v3487
        %v3489 = vrot.slane %v3473, %v3488
        %v3491 = vunpack.c.l.s4 1966171168
        %v3492 = vunpack.c.0.s8 %v3491
        %v3493 = vlaneseq
        %v3494 = vshrl.u32 %v3493, 7
        %v3495 = vsub.s32 %v3492, %v3494
        %v3496 = vrot.slane %v3480, %v3495
        %v3498 = vunpack.c.l.s4 1966171168
        %v3499 = vunpack.c.0.s8 %v3498
        %v3500 = vlaneseq
        %v3501 = vshrl.u32 %v3500, 7
        %v3502 = vsub.s32 %v3499, %v3501
        %v3503 = vrot.slane %v3481, %v3502
        %v3505 = vunpack.c.l.s4 1966171168
        %v3506 = vunpack.c.0.s8 %v3505
        %v3507 = vlaneseq
        %v3508 = vshrl.u32 %v3507, 7
        %v3509 = vsub.s32 %v3506, %v3508
        %v3510 = vrot.slane %v3482, %v3509
        %v3511 = vcombine.high %v3489, %v3489
        %v3512 = vcombine.high %v3496, %v3496
        %v3513 = vcombine.high %v3503, %v3503
        %v3514 = vcombine.high %v3510, %v3510
        %v3515 = vcombine.high %v2313, %v2313
        %v3517 = vunpack.c.l.s4 1966171168
        %v3518 = vunpack.c.0.s8 %v3517
        %v3519 = vlaneseq
        %v3520 = vshrl.u32 %v3519, 7
        %v3521 = vsub.s32 %v3518, %v3520
        %v3522 = vrot.slane %v2313, %v3521
        %v3524 = vunpack.c.l.s4 1966171168
        %v3525 = vunpack.c.0.s8 %v3524
        %v3526 = vlaneseq
        %v3527 = vshrl.u32 %v3526, 7
        %v3528 = vsub.s32 %v3525, %v3527
        %v3529 = vrot.slane %v3515, %v3528
        %v3530 = vcombine.high %v3522, %v3522
        %v3531 = vcombine.high %v3529, %v3529
        %v3533 = vunpack.c.l.s4 1966171168
        %v3534 = vunpack.c.0.s8 %v3533
        %v3535 = vlaneseq
        %v3536 = vshrl.u32 %v3535, 7
        %v3537 = vsub.s32 %v3534, %v3536
        %v3538 = vrot.slane %v3522, %v3537
        %v3540 = vunpack.c.l.s4 1966171168
        %v3541 = vunpack.c.0.s8 %v3540
        %v3542 = vlaneseq
        %v3543 = vshrl.u32 %v3542, 7
        %v3544 = vsub.s32 %v3541, %v3543
        %v3545 = vrot.slane %v3529, %v3544
        %v3547 = vunpack.c.l.s4 1966171168
        %v3548 = vunpack.c.0.s8 %v3547
        %v3549 = vlaneseq
        %v3550 = vshrl.u32 %v3549, 7
        %v3551 = vsub.s32 %v3548, %v3550
        %v3552 = vrot.slane %v3530, %v3551
        %v3554 = vunpack.c.l.s4 1966171168
        %v3555 = vunpack.c.0.s8 %v3554
        %v3556 = vlaneseq
        %v3557 = vshrl.u32 %v3556, 7
        %v3558 = vsub.s32 %v3555, %v3557
        %v3559 = vrot.slane %v3531, %v3558
        %v3560 = vcombine.high %v3538, %v3538
        %v3561 = vcombine.high %v3545, %v3545
        %v3562 = vcombine.high %v3552, %v3552
        %v3563 = vcombine.high %v3559, %v3559
        %v3564 = vcombine.high %v2318, %v2318
        %v3566 = vunpack.c.l.s4 1966171168
        %v3567 = vunpack.c.0.s8 %v3566
        %v3568 = vlaneseq
        %v3569 = vshrl.u32 %v3568, 7
        %v3570 = vsub.s32 %v3567, %v3569
        %v3571 = vrot.slane %v2318, %v3570
        %v3573 = vunpack.c.l.s4 1966171168
        %v3574 = vunpack.c.0.s8 %v3573
        %v3575 = vlaneseq
        %v3576 = vshrl.u32 %v3575, 7
        %v3577 = vsub.s32 %v3574, %v3576
        %v3578 = vrot.slane %v3564, %v3577
        %v3579 = vcombine.high %v3571, %v3571
        %v3580 = vcombine.high %v3578, %v3578
        %v3582 = vunpack.c.l.s4 1966171168
        %v3583 = vunpack.c.0.s8 %v3582
        %v3584 = vlaneseq
        %v3585 = vshrl.u32 %v3584, 7
        %v3586 = vsub.s32 %v3583, %v3585
        %v3587 = vrot.slane %v3571, %v3586
        %v3589 = vunpack.c.l.s4 1966171168
        %v3590 = vunpack.c.0.s8 %v3589
        %v3591 = vlaneseq
        %v3592 = vshrl.u32 %v3591, 7
        %v3593 = vsub.s32 %v3590, %v3592
        %v3594 = vrot.slane %v3578, %v3593
        %v3596 = vunpack.c.l.s4 1966171168
        %v3597 = vunpack.c.0.s8 %v3596
        %v3598 = vlaneseq
        %v3599 = vshrl.u32 %v3598, 7
        %v3600 = vsub.s32 %v3597, %v3599
        %v3601 = vrot.slane %v3579, %v3600
        %v3603 = vunpack.c.l.s4 1966171168
        %v3604 = vunpack.c.0.s8 %v3603
        %v3605 = vlaneseq
        %v3606 = vshrl.u32 %v3605, 7
        %v3607 = vsub.s32 %v3604, %v3606
        %v3608 = vrot.slane %v3580, %v3607
        %v3609 = vcombine.high %v3587, %v3587
        %v3610 = vcombine.high %v3594, %v3594
        %v3611 = vcombine.high %v3601, %v3601
        %v3612 = vcombine.high %v3608, %v3608
        %v3613 = vcombine.high %v2323, %v2323
        %v3615 = vunpack.c.l.s4 1966171168
        %v3616 = vunpack.c.0.s8 %v3615
        %v3617 = vlaneseq
        %v3618 = vshrl.u32 %v3617, 7
        %v3619 = vsub.s32 %v3616, %v3618
        %v3620 = vrot.slane %v2323, %v3619
        %v3622 = vunpack.c.l.s4 1966171168
        %v3623 = vunpack.c.0.s8 %v3622
        %v3624 = vlaneseq
        %v3625 = vshrl.u32 %v3624, 7
        %v3626 = vsub.s32 %v3623, %v3625
        %v3627 = vrot.slane %v3613, %v3626
        %v3628 = vcombine.high %v3620, %v3620
        %v3629 = vcombine.high %v3627, %v3627
        %v3631 = vunpack.c.l.s4 1966171168
        %v3632 = vunpack.c.0.s8 %v3631
        %v3633 = vlaneseq
        %v3634 = vshrl.u32 %v3633, 7
        %v3635 = vsub.s32 %v3632, %v3634
        %v3636 = vrot.slane %v3620, %v3635
        %v3638 = vunpack.c.l.s4 1966171168
        %v3639 = vunpack.c.0.s8 %v3638
        %v3640 = vlaneseq
        %v3641 = vshrl.u32 %v3640, 7
        %v3642 = vsub.s32 %v3639, %v3641
        %v3643 = vrot.slane %v3627, %v3642
        %v3645 = vunpack.c.l.s4 1966171168
        %v3646 = vunpack.c.0.s8 %v3645
        %v3647 = vlaneseq
        %v3648 = vshrl.u32 %v3647, 7
        %v3649 = vsub.s32 %v3646, %v3648
        %v3650 = vrot.slane %v3628, %v3649
        %v3652 = vunpack.c.l.s4 1966171168
        %v3653 = vunpack.c.0.s8 %v3652
        %v3654 = vlaneseq
        %v3655 = vshrl.u32 %v3654, 7
        %v3656 = vsub.s32 %v3653, %v3655
        %v3657 = vrot.slane %v3629, %v3656
        %v3658 = vcombine.high %v3636, %v3636
        %v3659 = vcombine.high %v3643, %v3643
        %v3660 = vcombine.high %v3650, %v3650
        %v3661 = vcombine.high %v3657, %v3657
        %v3662 = vcombine.high %v2328, %v2328
        %v3664 = vunpack.c.l.s4 1966171168
        %v3665 = vunpack.c.0.s8 %v3664
        %v3666 = vlaneseq
        %v3667 = vshrl.u32 %v3666, 7
        %v3668 = vsub.s32 %v3665, %v3667
        %v3669 = vrot.slane %v2328, %v3668
        %v3671 = vunpack.c.l.s4 1966171168
        %v3672 = vunpack.c.0.s8 %v3671
        %v3673 = vlaneseq
        %v3674 = vshrl.u32 %v3673, 7
        %v3675 = vsub.s32 %v3672, %v3674
        %v3676 = vrot.slane %v3662, %v3675
        %v3677 = vcombine.high %v3669, %v3669
        %v3678 = vcombine.high %v3676, %v3676
        %v3680 = vunpack.c.l.s4 1966171168
        %v3681 = vunpack.c.0.s8 %v3680
        %v3682 = vlaneseq
        %v3683 = vshrl.u32 %v3682, 7
        %v3684 = vsub.s32 %v3681, %v3683
        %v3685 = vrot.slane %v3669, %v3684
        %v3687 = vunpack.c.l.s4 1966171168
        %v3688 = vunpack.c.0.s8 %v3687
        %v3689 = vlaneseq
        %v3690 = vshrl.u32 %v3689, 7
        %v3691 = vsub.s32 %v3688, %v3690
        %v3692 = vrot.slane %v3676, %v3691
        %v3694 = vunpack.c.l.s4 1966171168
        %v3695 = vunpack.c.0.s8 %v3694
        %v3696 = vlaneseq
        %v3697 = vshrl.u32 %v3696, 7
        %v3698 = vsub.s32 %v3695, %v3697
        %v3699 = vrot.slane %v3677, %v3698
        %v3701 = vunpack.c.l.s4 1966171168
        %v3702 = vunpack.c.0.s8 %v3701
        %v3703 = vlaneseq
        %v3704 = vshrl.u32 %v3703, 7
        %v3705 = vsub.s32 %v3702, %v3704
        %v3706 = vrot.slane %v3678, %v3705
        %v3707 = vcombine.high %v3685, %v3685
        %v3708 = vcombine.high %v3692, %v3692
        %v3709 = vcombine.high %v3699, %v3699
        %v3710 = vcombine.high %v3706, %v3706
        %v3711 = vcombine.high %v2333, %v2333
        %v3713 = vunpack.c.l.s4 1966171168
        %v3714 = vunpack.c.0.s8 %v3713
        %v3715 = vlaneseq
        %v3716 = vshrl.u32 %v3715, 7
        %v3717 = vsub.s32 %v3714, %v3716
        %v3718 = vrot.slane %v2333, %v3717
        %v3720 = vunpack.c.l.s4 1966171168
        %v3721 = vunpack.c.0.s8 %v3720
        %v3722 = vlaneseq
        %v3723 = vshrl.u32 %v3722, 7
        %v3724 = vsub.s32 %v3721, %v3723
        %v3725 = vrot.slane %v3711, %v3724
        %v3726 = vcombine.high %v3718, %v3718
        %v3727 = vcombine.high %v3725, %v3725
        %v3729 = vunpack.c.l.s4 1966171168
        %v3730 = vunpack.c.0.s8 %v3729
        %v3731 = vlaneseq
        %v3732 = vshrl.u32 %v3731, 7
        %v3733 = vsub.s32 %v3730, %v3732
        %v3734 = vrot.slane %v3718, %v3733
        %v3736 = vunpack.c.l.s4 1966171168
        %v3737 = vunpack.c.0.s8 %v3736
        %v3738 = vlaneseq
        %v3739 = vshrl.u32 %v3738, 7
        %v3740 = vsub.s32 %v3737, %v3739
        %v3741 = vrot.slane %v3725, %v3740
        %v3743 = vunpack.c.l.s4 1966171168
        %v3744 = vunpack.c.0.s8 %v3743
        %v3745 = vlaneseq
        %v3746 = vshrl.u32 %v3745, 7
        %v3747 = vsub.s32 %v3744, %v3746
        %v3748 = vrot.slane %v3726, %v3747
        %v3750 = vunpack.c.l.s4 1966171168
        %v3751 = vunpack.c.0.s8 %v3750
        %v3752 = vlaneseq
        %v3753 = vshrl.u32 %v3752, 7
        %v3754 = vsub.s32 %v3751, %v3753
        %v3755 = vrot.slane %v3727, %v3754
        %v3756 = vcombine.high %v3734, %v3734
        %v3757 = vcombine.high %v3741, %v3741
        %v3758 = vcombine.high %v3748, %v3748
        %v3759 = vcombine.high %v3755, %v3755
        %v3760 = vcombine.high %v2338, %v2338
        %v3762 = vunpack.c.l.s4 1966171168
        %v3763 = vunpack.c.0.s8 %v3762
        %v3764 = vlaneseq
        %v3765 = vshrl.u32 %v3764, 7
        %v3766 = vsub.s32 %v3763, %v3765
        %v3767 = vrot.slane %v2338, %v3766
        %v3769 = vunpack.c.l.s4 1966171168
        %v3770 = vunpack.c.0.s8 %v3769
        %v3771 = vlaneseq
        %v3772 = vshrl.u32 %v3771, 7
        %v3773 = vsub.s32 %v3770, %v3772
        %v3774 = vrot.slane %v3760, %v3773
        %v3775 = vcombine.high %v3767, %v3767
        %v3776 = vcombine.high %v3774, %v3774
        %v3778 = vunpack.c.l.s4 1966171168
        %v3779 = vunpack.c.0.s8 %v3778
        %v3780 = vlaneseq
        %v3781 = vshrl.u32 %v3780, 7
        %v3782 = vsub.s32 %v3779, %v3781
        %v3783 = vrot.slane %v3767, %v3782
        %v3785 = vunpack.c.l.s4 1966171168
        %v3786 = vunpack.c.0.s8 %v3785
        %v3787 = vlaneseq
        %v3788 = vshrl.u32 %v3787, 7
        %v3789 = vsub.s32 %v3786, %v3788
        %v3790 = vrot.slane %v3774, %v3789
        %v3792 = vunpack.c.l.s4 1966171168
        %v3793 = vunpack.c.0.s8 %v3792
        %v3794 = vlaneseq
        %v3795 = vshrl.u32 %v3794, 7
        %v3796 = vsub.s32 %v3793, %v3795
        %v3797 = vrot.slane %v3775, %v3796
        %v3799 = vunpack.c.l.s4 1966171168
        %v3800 = vunpack.c.0.s8 %v3799
        %v3801 = vlaneseq
        %v3802 = vshrl.u32 %v3801, 7
        %v3803 = vsub.s32 %v3800, %v3802
        %v3804 = vrot.slane %v3776, %v3803
        %v3805 = vcombine.high %v3783, %v3783
        %v3806 = vcombine.high %v3790, %v3790
        %v3807 = vcombine.high %v3797, %v3797
        %v3808 = vcombine.high %v3804, %v3804
        %v3809 = vcombine.high %v2343, %v2343
        %v3811 = vunpack.c.l.s4 1966171168
        %v3812 = vunpack.c.0.s8 %v3811
        %v3813 = vlaneseq
        %v3814 = vshrl.u32 %v3813, 7
        %v3815 = vsub.s32 %v3812, %v3814
        %v3816 = vrot.slane %v2343, %v3815
        %v3818 = vunpack.c.l.s4 1966171168
        %v3819 = vunpack.c.0.s8 %v3818
        %v3820 = vlaneseq
        %v3821 = vshrl.u32 %v3820, 7
        %v3822 = vsub.s32 %v3819, %v3821
        %v3823 = vrot.slane %v3809, %v3822
        %v3824 = vcombine.high %v3816, %v3816
        %v3825 = vcombine.high %v3823, %v3823
        %v3827 = vunpack.c.l.s4 1966171168
        %v3828 = vunpack.c.0.s8 %v3827
        %v3829 = vlaneseq
        %v3830 = vshrl.u32 %v3829, 7
        %v3831 = vsub.s32 %v3828, %v3830
        %v3832 = vrot.slane %v3816, %v3831
        %v3834 = vunpack.c.l.s4 1966171168
        %v3835 = vunpack.c.0.s8 %v3834
        %v3836 = vlaneseq
        %v3837 = vshrl.u32 %v3836, 7
        %v3838 = vsub.s32 %v3835, %v3837
        %v3839 = vrot.slane %v3823, %v3838
        %v3841 = vunpack.c.l.s4 1966171168
        %v3842 = vunpack.c.0.s8 %v3841
        %v3843 = vlaneseq
        %v3844 = vshrl.u32 %v3843, 7
        %v3845 = vsub.s32 %v3842, %v3844
        %v3846 = vrot.slane %v3824, %v3845
        %v3848 = vunpack.c.l.s4 1966171168
        %v3849 = vunpack.c.0.s8 %v3848
        %v3850 = vlaneseq
        %v3851 = vshrl.u32 %v3850, 7
        %v3852 = vsub.s32 %v3849, %v3851
        %v3853 = vrot.slane %v3825, %v3852
        %v3854 = vcombine.high %v3832, %v3832
        %v3855 = vcombine.high %v3839, %v3839
        %v3856 = vcombine.high %v3846, %v3846
        %v3857 = vcombine.high %v3853, %v3853
        %v3858 = vcombine.high %v2348, %v2348
        %v3860 = vunpack.c.l.s4 1966171168
        %v3861 = vunpack.c.0.s8 %v3860
        %v3862 = vlaneseq
        %v3863 = vshrl.u32 %v3862, 7
        %v3864 = vsub.s32 %v3861, %v3863
        %v3865 = vrot.slane %v2348, %v3864
        %v3867 = vunpack.c.l.s4 1966171168
        %v3868 = vunpack.c.0.s8 %v3867
        %v3869 = vlaneseq
        %v3870 = vshrl.u32 %v3869, 7
        %v3871 = vsub.s32 %v3868, %v3870
        %v3872 = vrot.slane %v3858, %v3871
        %v3873 = vcombine.high %v3865, %v3865
        %v3874 = vcombine.high %v3872, %v3872
        %v3876 = vunpack.c.l.s4 1966171168
        %v3877 = vunpack.c.0.s8 %v3876
        %v3878 = vlaneseq
        %v3879 = vshrl.u32 %v3878, 7
        %v3880 = vsub.s32 %v3877, %v3879
        %v3881 = vrot.slane %v3865, %v3880
        %v3883 = vunpack.c.l.s4 1966171168
        %v3884 = vunpack.c.0.s8 %v3883
        %v3885 = vlaneseq
        %v3886 = vshrl.u32 %v3885, 7
        %v3887 = vsub.s32 %v3884, %v3886
        %v3888 = vrot.slane %v3872, %v3887
        %v3890 = vunpack.c.l.s4 1966171168
        %v3891 = vunpack.c.0.s8 %v3890
        %v3892 = vlaneseq
        %v3893 = vshrl.u32 %v3892, 7
        %v3894 = vsub.s32 %v3891, %v3893
        %v3895 = vrot.slane %v3873, %v3894
        %v3897 = vunpack.c.l.s4 1966171168
        %v3898 = vunpack.c.0.s8 %v3897
        %v3899 = vlaneseq
        %v3900 = vshrl.u32 %v3899, 7
        %v3901 = vsub.s32 %v3898, %v3900
        %v3902 = vrot.slane %v3874, %v3901
        %v3903 = vcombine.high %v3881, %v3881
        %v3904 = vcombine.high %v3888, %v3888
        %v3905 = vcombine.high %v3895, %v3895
        %v3906 = vcombine.high %v3902, %v3902
        %v3907 = vcombine.high %v2353, %v2353
        %v3909 = vunpack.c.l.s4 1966171168
        %v3910 = vunpack.c.0.s8 %v3909
        %v3911 = vlaneseq
        %v3912 = vshrl.u32 %v3911, 7
        %v3913 = vsub.s32 %v3910, %v3912
        %v3914 = vrot.slane %v2353, %v3913
        %v3916 = vunpack.c.l.s4 1966171168
        %v3917 = vunpack.c.0.s8 %v3916
        %v3918 = vlaneseq
        %v3919 = vshrl.u32 %v3918, 7
        %v3920 = vsub.s32 %v3917, %v3919
        %v3921 = vrot.slane %v3907, %v3920
        %v3922 = vcombine.high %v3914, %v3914
        %v3923 = vcombine.high %v3921, %v3921
        %v3925 = vunpack.c.l.s4 1966171168
        %v3926 = vunpack.c.0.s8 %v3925
        %v3927 = vlaneseq
        %v3928 = vshrl.u32 %v3927, 7
        %v3929 = vsub.s32 %v3926, %v3928
        %v3930 = vrot.slane %v3914, %v3929
        %v3932 = vunpack.c.l.s4 1966171168
        %v3933 = vunpack.c.0.s8 %v3932
        %v3934 = vlaneseq
        %v3935 = vshrl.u32 %v3934, 7
        %v3936 = vsub.s32 %v3933, %v3935
        %v3937 = vrot.slane %v3921, %v3936
        %v3939 = vunpack.c.l.s4 1966171168
        %v3940 = vunpack.c.0.s8 %v3939
        %v3941 = vlaneseq
        %v3942 = vshrl.u32 %v3941, 7
        %v3943 = vsub.s32 %v3940, %v3942
        %v3944 = vrot.slane %v3922, %v3943
        %v3946 = vunpack.c.l.s4 1966171168
        %v3947 = vunpack.c.0.s8 %v3946
        %v3948 = vlaneseq
        %v3949 = vshrl.u32 %v3948, 7
        %v3950 = vsub.s32 %v3947, %v3949
        %v3951 = vrot.slane %v3923, %v3950
        %v3952 = vcombine.high %v3930, %v3930
        %v3953 = vcombine.high %v3937, %v3937
        %v3954 = vcombine.high %v3944, %v3944
        %v3955 = vcombine.high %v3951, %v3951
        %v4212 = vlaneseq
        %v4213 = vshrl.u32 %v4212, 7
        %v4214 = vsub.s32 0, %v4213
        %v4215 = vrot.slane %v2411, %v4214
        %v4216 = vlaneseq
        %v4217 = vshrl.u32 %v4216, 7
        %v4218 = vsub.s32 0, %v4217
        %v4219 = vrot.slane %v2425, %v4218
        %v4220 = vlaneseq
        %v4221 = vshrl.u32 %v4220, 7
        %v4222 = vsub.s32 0, %v4221
        %v4223 = vrot.slane %v2433, %v4222
        %v4224 = vlaneseq
        %v4225 = vshrl.u32 %v4224, 7
        %v4226 = vsub.s32 0, %v4225
        %v4227 = vrot.slane %v2435, %v4226
        %v4228 = vlaneseq
        %v4229 = vshrl.u32 %v4228, 7
        %v4230 = vsub.s32 0, %v4229
        %v4231 = vrot.slane %v2418, %v4230
        %v4232 = vlaneseq
        %v4233 = vshrl.u32 %v4232, 7
        %v4234 = vsub.s32 0, %v4233
        %v4235 = vrot.slane %v2432, %v4234
        %v4236 = vlaneseq
        %v4237 = vshrl.u32 %v4236, 7
        %v4238 = vsub.s32 0, %v4237
        %v4239 = vrot.slane %v2434, %v4238
        %v4240 = vlaneseq
        %v4241 = vshrl.u32 %v4240, 7
        %v4242 = vsub.s32 0, %v4241
        %v4243 = vrot.slane %v2436, %v4242
        %v4244 = vlaneseq
        %v4245 = vshrl.u32 %v4244, 7
        %v4246 = vsub.s32 0, %v4245
        %v4247 = vrot.slane %v2460, %v4246
        %v4248 = vlaneseq
        %v4249 = vshrl.u32 %v4248, 7
        %v4250 = vsub.s32 0, %v4249
        %v4251 = vrot.slane %v2474, %v4250
        %v4252 = vlaneseq
        %v4253 = vshrl.u32 %v4252, 7
        %v4254 = vsub.s32 0, %v4253
        %v4255 = vrot.slane %v2482, %v4254
        %v4256 = vlaneseq
        %v4257 = vshrl.u32 %v4256, 7
        %v4258 = vsub.s32 0, %v4257
        %v4259 = vrot.slane %v2484, %v4258
        %v4260 = vlaneseq
        %v4261 = vshrl.u32 %v4260, 7
        %v4262 = vsub.s32 0, %v4261
        %v4263 = vrot.slane %v2467, %v4262
        %v4264 = vlaneseq
        %v4265 = vshrl.u32 %v4264, 7
        %v4266 = vsub.s32 0, %v4265
        %v4267 = vrot.slane %v2481, %v4266
        %v4268 = vlaneseq
        %v4269 = vshrl.u32 %v4268, 7
        %v4270 = vsub.s32 0, %v4269
        %v4271 = vrot.slane %v2483, %v4270
        %v4272 = vlaneseq
        %v4273 = vshrl.u32 %v4272, 7
        %v4274 = vsub.s32 0, %v4273
        %v4275 = vrot.slane %v2485, %v4274
        %v4276 = vlaneseq
        %v4277 = vshrl.u32 %v4276, 7
        %v4278 = vsub.s32 0, %v4277
        %v4279 = vrot.slane %v2509, %v4278
        %v4280 = vlaneseq
        %v4281 = vshrl.u32 %v4280, 7
        %v4282 = vsub.s32 0, %v4281
        %v4283 = vrot.slane %v2523, %v4282
        %v4284 = vlaneseq
        %v4285 = vshrl.u32 %v4284, 7
        %v4286 = vsub.s32 0, %v4285
        %v4287 = vrot.slane %v2531, %v4286
        %v4288 = vlaneseq
        %v4289 = vshrl.u32 %v4288, 7
        %v4290 = vsub.s32 0, %v4289
        %v4291 = vrot.slane %v2533, %v4290
        %v4292 = vlaneseq
        %v4293 = vshrl.u32 %v4292, 7
        %v4294 = vsub.s32 0, %v4293
        %v4295 = vrot.slane %v2516, %v4294
        %v4296 = vlaneseq
        %v4297 = vshrl.u32 %v4296, 7
        %v4298 = vsub.s32 0, %v4297
        %v4299 = vrot.slane %v2530, %v4298
        %v4300 = vlaneseq
        %v4301 = vshrl.u32 %v4300, 7
        %v4302 = vsub.s32 0, %v4301
        %v4303 = vrot.slane %v2532, %v4302
        %v4304 = vlaneseq
        %v4305 = vshrl.u32 %v4304, 7
        %v4306 = vsub.s32 0, %v4305
        %v4307 = vrot.slane %v2534, %v4306
        %v4308 = vlaneseq
        %v4309 = vshrl.u32 %v4308, 7
        %v4310 = vsub.s32 0, %v4309
        %v4311 = vrot.slane %v2558, %v4310
        %v4312 = vlaneseq
        %v4313 = vshrl.u32 %v4312, 7
        %v4314 = vsub.s32 0, %v4313
        %v4315 = vrot.slane %v2572, %v4314
        %v4316 = vlaneseq
        %v4317 = vshrl.u32 %v4316, 7
        %v4318 = vsub.s32 0, %v4317
        %v4319 = vrot.slane %v2580, %v4318
        %v4320 = vlaneseq
        %v4321 = vshrl.u32 %v4320, 7
        %v4322 = vsub.s32 0, %v4321
        %v4323 = vrot.slane %v2582, %v4322
        %v4324 = vlaneseq
        %v4325 = vshrl.u32 %v4324, 7
        %v4326 = vsub.s32 0, %v4325
        %v4327 = vrot.slane %v2565, %v4326
        %v4328 = vlaneseq
        %v4329 = vshrl.u32 %v4328, 7
        %v4330 = vsub.s32 0, %v4329
        %v4331 = vrot.slane %v2579, %v4330
        %v4332 = vlaneseq
        %v4333 = vshrl.u32 %v4332, 7
        %v4334 = vsub.s32 0, %v4333
        %v4335 = vrot.slane %v2581, %v4334
        %v4336 = vlaneseq
        %v4337 = vshrl.u32 %v4336, 7
        %v4338 = vsub.s32 0, %v4337
        %v4339 = vrot.slane %v2583, %v4338
        %v4340 = vlaneseq
        %v4341 = vshrl.u32 %v4340, 7
        %v4342 = vsub.s32 0, %v4341
        %v4343 = vrot.slane %v2607, %v4342
        %v4344 = vlaneseq
        %v4345 = vshrl.u32 %v4344, 7
        %v4346 = vsub.s32 0, %v4345
        %v4347 = vrot.slane %v2621, %v4346
        %v4348 = vlaneseq
        %v4349 = vshrl.u32 %v4348, 7
        %v4350 = vsub.s32 0, %v4349
        %v4351 = vrot.slane %v2629, %v4350
        %v4352 = vlaneseq
        %v4353 = vshrl.u32 %v4352, 7
        %v4354 = vsub.s32 0, %v4353
        %v4355 = vrot.slane %v2631, %v4354
        %v4356 = vlaneseq
        %v4357 = vshrl.u32 %v4356, 7
        %v4358 = vsub.s32 0, %v4357
        %v4359 = vrot.slane %v2614, %v4358
        %v4360 = vlaneseq
        %v4361 = vshrl.u32 %v4360, 7
        %v4362 = vsub.s32 0, %v4361
        %v4363 = vrot.slane %v2628, %v4362
        %v4364 = vlaneseq
        %v4365 = vshrl.u32 %v4364, 7
        %v4366 = vsub.s32 0, %v4365
        %v4367 = vrot.slane %v2630, %v4366
        %v4368 = vlaneseq
        %v4369 = vshrl.u32 %v4368, 7
        %v4370 = vsub.s32 0, %v4369
        %v4371 = vrot.slane %v2632, %v4370
        %v4372 = vlaneseq
        %v4373 = vshrl.u32 %v4372, 7
        %v4374 = vsub.s32 0, %v4373
        %v4375 = vrot.slane %v2656, %v4374
        %v4376 = vlaneseq
        %v4377 = vshrl.u32 %v4376, 7
        %v4378 = vsub.s32 0, %v4377
        %v4379 = vrot.slane %v2670, %v4378
        %v4380 = vlaneseq
        %v4381 = vshrl.u32 %v4380, 7
        %v4382 = vsub.s32 0, %v4381
        %v4383 = vrot.slane %v2678, %v4382
        %v4384 = vlaneseq
        %v4385 = vshrl.u32 %v4384, 7
        %v4386 = vsub.s32 0, %v4385
        %v4387 = vrot.slane %v2680, %v4386
        %v4388 = vlaneseq
        %v4389 = vshrl.u32 %v4388, 7
        %v4390 = vsub.s32 0, %v4389
        %v4391 = vrot.slane %v2663, %v4390
        %v4392 = vlaneseq
        %v4393 = vshrl.u32 %v4392, 7
        %v4394 = vsub.s32 0, %v4393
        %v4395 = vrot.slane %v2677, %v4394
        %v4396 = vlaneseq
        %v4397 = vshrl.u32 %v4396, 7
        %v4398 = vsub.s32 0, %v4397
        %v4399 = vrot.slane %v2679, %v4398
        %v4400 = vlaneseq
        %v4401 = vshrl.u32 %v4400, 7
        %v4402 = vsub.s32 0, %v4401
        %v4403 = vrot.slane %v2681, %v4402
        %v4404 = vlaneseq
        %v4405 = vshrl.u32 %v4404, 7
        %v4406 = vsub.s32 0, %v4405
        %v4407 = vrot.slane %v2705, %v4406
        %v4408 = vlaneseq
        %v4409 = vshrl.u32 %v4408, 7
        %v4410 = vsub.s32 0, %v4409
        %v4411 = vrot.slane %v2719, %v4410
        %v4412 = vlaneseq
        %v4413 = vshrl.u32 %v4412, 7
        %v4414 = vsub.s32 0, %v4413
        %v4415 = vrot.slane %v2727, %v4414
        %v4416 = vlaneseq
        %v4417 = vshrl.u32 %v4416, 7
        %v4418 = vsub.s32 0, %v4417
        %v4419 = vrot.slane %v2729, %v4418
        %v4420 = vlaneseq
        %v4421 = vshrl.u32 %v4420, 7
        %v4422 = vsub.s32 0, %v4421
        %v4423 = vrot.slane %v2712, %v4422
        %v4424 = vlaneseq
        %v4425 = vshrl.u32 %v4424, 7
        %v4426 = vsub.s32 0, %v4425
        %v4427 = vrot.slane %v2726, %v4426
        %v4428 = vlaneseq
        %v4429 = vshrl.u32 %v4428, 7
        %v4430 = vsub.s32 0, %v4429
        %v4431 = vrot.slane %v2728, %v4430
        %v4432 = vlaneseq
        %v4433 = vshrl.u32 %v4432, 7
        %v4434 = vsub.s32 0, %v4433
        %v4435 = vrot.slane %v2730, %v4434
        %v4436 = vlaneseq
        %v4437 = vshrl.u32 %v4436, 7
        %v4438 = vsub.s32 0, %v4437
        %v4439 = vrot.slane %v2754, %v4438
        %v4440 = vlaneseq
        %v4441 = vshrl.u32 %v4440, 7
        %v4442 = vsub.s32 0, %v4441
        %v4443 = vrot.slane %v2768, %v4442
        %v4444 = vlaneseq
        %v4445 = vshrl.u32 %v4444, 7
        %v4446 = vsub.s32 0, %v4445
        %v4447 = vrot.slane %v2776, %v4446
        %v4448 = vlaneseq
        %v4449 = vshrl.u32 %v4448, 7
        %v4450 = vsub.s32 0, %v4449
        %v4451 = vrot.slane %v2778, %v4450
        %v4452 = vlaneseq
        %v4453 = vshrl.u32 %v4452, 7
        %v4454 = vsub.s32 0, %v4453
        %v4455 = vrot.slane %v2761, %v4454
        %v4456 = vlaneseq
        %v4457 = vshrl.u32 %v4456, 7
        %v4458 = vsub.s32 0, %v4457
        %v4459 = vrot.slane %v2775, %v4458
        %v4460 = vlaneseq
        %v4461 = vshrl.u32 %v4460, 7
        %v4462 = vsub.s32 0, %v4461
        %v4463 = vrot.slane %v2777, %v4462
        %v4464 = vlaneseq
        %v4465 = vshrl.u32 %v4464, 7
        %v4466 = vsub.s32 0, %v4465
        %v4467 = vrot.slane %v2779, %v4466
        %v4468 = vlaneseq
        %v4469 = vshrl.u32 %v4468, 7
        %v4470 = vsub.s32 0, %v4469
        %v4471 = vrot.slane %v2803, %v4470
        %v4472 = vlaneseq
        %v4473 = vshrl.u32 %v4472, 7
        %v4474 = vsub.s32 0, %v4473
        %v4475 = vrot.slane %v2817, %v4474
        %v4476 = vlaneseq
        %v4477 = vshrl.u32 %v4476, 7
        %v4478 = vsub.s32 0, %v4477
        %v4479 = vrot.slane %v2825, %v4478
        %v4480 = vlaneseq
        %v4481 = vshrl.u32 %v4480, 7
        %v4482 = vsub.s32 0, %v4481
        %v4483 = vrot.slane %v2827, %v4482
        %v4484 = vlaneseq
        %v4485 = vshrl.u32 %v4484, 7
        %v4486 = vsub.s32 0, %v4485
        %v4487 = vrot.slane %v2810, %v4486
        %v4488 = vlaneseq
        %v4489 = vshrl.u32 %v4488, 7
        %v4490 = vsub.s32 0, %v4489
        %v4491 = vrot.slane %v2824, %v4490
        %v4492 = vlaneseq
        %v4493 = vshrl.u32 %v4492, 7
        %v4494 = vsub.s32 0, %v4493
        %v4495 = vrot.slane %v2826, %v4494
        %v4496 = vlaneseq
        %v4497 = vshrl.u32 %v4496, 7
        %v4498 = vsub.s32 0, %v4497
        %v4499 = vrot.slane %v2828, %v4498
        %v4500 = vlaneseq
        %v4501 = vshrl.u32 %v4500, 7
        %v4502 = vsub.s32 0, %v4501
        %v4503 = vrot.slane %v2852, %v4502
        %v4504 = vlaneseq
        %v4505 = vshrl.u32 %v4504, 7
        %v4506 = vsub.s32 0, %v4505
        %v4507 = vrot.slane %v2866, %v4506
        %v4508 = vlaneseq
        %v4509 = vshrl.u32 %v4508, 7
        %v4510 = vsub.s32 0, %v4509
        %v4511 = vrot.slane %v2874, %v4510
        %v4512 = vlaneseq
        %v4513 = vshrl.u32 %v4512, 7
        %v4514 = vsub.s32 0, %v4513
        %v4515 = vrot.slane %v2876, %v4514
        %v4516 = vlaneseq
        %v4517 = vshrl.u32 %v4516, 7
        %v4518 = vsub.s32 0, %v4517
        %v4519 = vrot.slane %v2859, %v4518
        %v4520 = vlaneseq
        %v4521 = vshrl.u32 %v4520, 7
        %v4522 = vsub.s32 0, %v4521
        %v4523 = vrot.slane %v2873, %v4522
        %v4524 = vlaneseq
        %v4525 = vshrl.u32 %v4524, 7
        %v4526 = vsub.s32 0, %v4525
        %v4527 = vrot.slane %v2875, %v4526
        %v4528 = vlaneseq
        %v4529 = vshrl.u32 %v4528, 7
        %v4530 = vsub.s32 0, %v4529
        %v4531 = vrot.slane %v2877, %v4530
        %v4532 = vlaneseq
        %v4533 = vshrl.u32 %v4532, 7
        %v4534 = vsub.s32 0, %v4533
        %v4535 = vrot.slane %v2901, %v4534
        %v4536 = vlaneseq
        %v4537 = vshrl.u32 %v4536, 7
        %v4538 = vsub.s32 0, %v4537
        %v4539 = vrot.slane %v2915, %v4538
        %v4540 = vlaneseq
        %v4541 = vshrl.u32 %v4540, 7
        %v4542 = vsub.s32 0, %v4541
        %v4543 = vrot.slane %v2923, %v4542
        %v4544 = vlaneseq
        %v4545 = vshrl.u32 %v4544, 7
        %v4546 = vsub.s32 0, %v4545
        %v4547 = vrot.slane %v2925, %v4546
        %v4548 = vlaneseq
        %v4549 = vshrl.u32 %v4548, 7
        %v4550 = vsub.s32 0, %v4549
        %v4551 = vrot.slane %v2908, %v4550
        %v4552 = vlaneseq
        %v4553 = vshrl.u32 %v4552, 7
        %v4554 = vsub.s32 0, %v4553
        %v4555 = vrot.slane %v2922, %v4554
        %v4556 = vlaneseq
        %v4557 = vshrl.u32 %v4556, 7
        %v4558 = vsub.s32 0, %v4557
        %v4559 = vrot.slane %v2924, %v4558
        %v4560 = vlaneseq
        %v4561 = vshrl.u32 %v4560, 7
        %v4562 = vsub.s32 0, %v4561
        %v4563 = vrot.slane %v2926, %v4562
        %v4564 = vlaneseq
        %v4565 = vshrl.u32 %v4564, 7
        %v4566 = vsub.s32 0, %v4565
        %v4567 = vrot.slane %v2950, %v4566
        %v4568 = vlaneseq
        %v4569 = vshrl.u32 %v4568, 7
        %v4570 = vsub.s32 0, %v4569
        %v4571 = vrot.slane %v2964, %v4570
        %v4572 = vlaneseq
        %v4573 = vshrl.u32 %v4572, 7
        %v4574 = vsub.s32 0, %v4573
        %v4575 = vrot.slane %v2972, %v4574
        %v4576 = vlaneseq
        %v4577 = vshrl.u32 %v4576, 7
        %v4578 = vsub.s32 0, %v4577
        %v4579 = vrot.slane %v2974, %v4578
        %v4580 = vlaneseq
        %v4581 = vshrl.u32 %v4580, 7
        %v4582 = vsub.s32 0, %v4581
        %v4583 = vrot.slane %v2957, %v4582
        %v4584 = vlaneseq
        %v4585 = vshrl.u32 %v4584, 7
        %v4586 = vsub.s32 0, %v4585
        %v4587 = vrot.slane %v2971, %v4586
        %v4588 = vlaneseq
        %v4589 = vshrl.u32 %v4588, 7
        %v4590 = vsub.s32 0, %v4589
        %v4591 = vrot.slane %v2973, %v4590
        %v4592 = vlaneseq
        %v4593 = vshrl.u32 %v4592, 7
        %v4594 = vsub.s32 0, %v4593
        %v4595 = vrot.slane %v2975, %v4594
        %v4596 = vlaneseq
        %v4597 = vshrl.u32 %v4596, 7
        %v4598 = vsub.s32 0, %v4597
        %v4599 = vrot.slane %v2999, %v4598
        %v4600 = vlaneseq
        %v4601 = vshrl.u32 %v4600, 7
        %v4602 = vsub.s32 0, %v4601
        %v4603 = vrot.slane %v3013, %v4602
        %v4604 = vlaneseq
        %v4605 = vshrl.u32 %v4604, 7
        %v4606 = vsub.s32 0, %v4605
        %v4607 = vrot.slane %v3021, %v4606
        %v4608 = vlaneseq
        %v4609 = vshrl.u32 %v4608, 7
        %v4610 = vsub.s32 0, %v4609
        %v4611 = vrot.slane %v3023, %v4610
        %v4612 = vlaneseq
        %v4613 = vshrl.u32 %v4612, 7
        %v4614 = vsub.s32 0, %v4613
        %v4615 = vrot.slane %v3006, %v4614
        %v4616 = vlaneseq
        %v4617 = vshrl.u32 %v4616, 7
        %v4618 = vsub.s32 0, %v4617
        %v4619 = vrot.slane %v3020, %v4618
        %v4620 = vlaneseq
        %v4621 = vshrl.u32 %v4620, 7
        %v4622 = vsub.s32 0, %v4621
        %v4623 = vrot.slane %v3022, %v4622
        %v4624 = vlaneseq
        %v4625 = vshrl.u32 %v4624, 7
        %v4626 = vsub.s32 0, %v4625
        %v4627 = vrot.slane %v3024, %v4626
        %v4628 = vlaneseq
        %v4629 = vshrl.u32 %v4628, 7
        %v4630 = vsub.s32 0, %v4629
        %v4631 = vrot.slane %v3048, %v4630
        %v4632 = vlaneseq
        %v4633 = vshrl.u32 %v4632, 7
        %v4634 = vsub.s32 0, %v4633
        %v4635 = vrot.slane %v3062, %v4634
        %v4636 = vlaneseq
        %v4637 = vshrl.u32 %v4636, 7
        %v4638 = vsub.s32 0, %v4637
        %v4639 = vrot.slane %v3070, %v4638
        %v4640 = vlaneseq
        %v4641 = vshrl.u32 %v4640, 7
        %v4642 = vsub.s32 0, %v4641
        %v4643 = vrot.slane %v3072, %v4642
        %v4644 = vlaneseq
        %v4645 = vshrl.u32 %v4644, 7
        %v4646 = vsub.s32 0, %v4645
        %v4647 = vrot.slane %v3055, %v4646
        %v4648 = vlaneseq
        %v4649 = vshrl.u32 %v4648, 7
        %v4650 = vsub.s32 0, %v4649
        %v4651 = vrot.slane %v3069, %v4650
        %v4652 = vlaneseq
        %v4653 = vshrl.u32 %v4652, 7
        %v4654 = vsub.s32 0, %v4653
        %v4655 = vrot.slane %v3071, %v4654
        %v4656 = vlaneseq
        %v4657 = vshrl.u32 %v4656, 7
        %v4658 = vsub.s32 0, %v4657
        %v4659 = vrot.slane %v3073, %v4658
        %v4660 = vlaneseq
        %v4661 = vshrl.u32 %v4660, 7
        %v4662 = vsub.s32 0, %v4661
        %v4663 = vrot.slane %v3097, %v4662
        %v4664 = vlaneseq
        %v4665 = vshrl.u32 %v4664, 7
        %v4666 = vsub.s32 0, %v4665
        %v4667 = vrot.slane %v3111, %v4666
        %v4668 = vlaneseq
        %v4669 = vshrl.u32 %v4668, 7
        %v4670 = vsub.s32 0, %v4669
        %v4671 = vrot.slane %v3119, %v4670
        %v4672 = vlaneseq
        %v4673 = vshrl.u32 %v4672, 7
        %v4674 = vsub.s32 0, %v4673
        %v4675 = vrot.slane %v3121, %v4674
        %v4676 = vlaneseq
        %v4677 = vshrl.u32 %v4676, 7
        %v4678 = vsub.s32 0, %v4677
        %v4679 = vrot.slane %v3104, %v4678
        %v4680 = vlaneseq
        %v4681 = vshrl.u32 %v4680, 7
        %v4682 = vsub.s32 0, %v4681
        %v4683 = vrot.slane %v3118, %v4682
        %v4684 = vlaneseq
        %v4685 = vshrl.u32 %v4684, 7
        %v4686 = vsub.s32 0, %v4685
        %v4687 = vrot.slane %v3120, %v4686
        %v4688 = vlaneseq
        %v4689 = vshrl.u32 %v4688, 7
        %v4690 = vsub.s32 0, %v4689
        %v4691 = vrot.slane %v3122, %v4690
        %v4692 = vlaneseq
        %v4693 = vshrl.u32 %v4692, 7
        %v4694 = vsub.s32 0, %v4693
        %v4695 = vrot.slane %v3146, %v4694
        %v4696 = vlaneseq
        %v4697 = vshrl.u32 %v4696, 7
        %v4698 = vsub.s32 0, %v4697
        %v4699 = vrot.slane %v3160, %v4698
        %v4700 = vlaneseq
        %v4701 = vshrl.u32 %v4700, 7
        %v4702 = vsub.s32 0, %v4701
        %v4703 = vrot.slane %v3168, %v4702
        %v4704 = vlaneseq
        %v4705 = vshrl.u32 %v4704, 7
        %v4706 = vsub.s32 0, %v4705
        %v4707 = vrot.slane %v3170, %v4706
        %v4708 = vlaneseq
        %v4709 = vshrl.u32 %v4708, 7
        %v4710 = vsub.s32 0, %v4709
        %v4711 = vrot.slane %v3153, %v4710
        %v4712 = vlaneseq
        %v4713 = vshrl.u32 %v4712, 7
        %v4714 = vsub.s32 0, %v4713
        %v4715 = vrot.slane %v3167, %v4714
        %v4716 = vlaneseq
        %v4717 = vshrl.u32 %v4716, 7
        %v4718 = vsub.s32 0, %v4717
        %v4719 = vrot.slane %v3169, %v4718
        %v4720 = vlaneseq
        %v4721 = vshrl.u32 %v4720, 7
        %v4722 = vsub.s32 0, %v4721
        %v4723 = vrot.slane %v3171, %v4722
        %v4724 = vlaneseq
        %v4725 = vshrl.u32 %v4724, 7
        %v4726 = vsub.s32 0, %v4725
        %v4727 = vrot.slane %v3195, %v4726
        %v4728 = vlaneseq
        %v4729 = vshrl.u32 %v4728, 7
        %v4730 = vsub.s32 0, %v4729
        %v4731 = vrot.slane %v3209, %v4730
        %v4732 = vlaneseq
        %v4733 = vshrl.u32 %v4732, 7
        %v4734 = vsub.s32 0, %v4733
        %v4735 = vrot.slane %v3217, %v4734
        %v4736 = vlaneseq
        %v4737 = vshrl.u32 %v4736, 7
        %v4738 = vsub.s32 0, %v4737
        %v4739 = vrot.slane %v3219, %v4738
        %v4740 = vlaneseq
        %v4741 = vshrl.u32 %v4740, 7
        %v4742 = vsub.s32 0, %v4741
        %v4743 = vrot.slane %v3202, %v4742
        %v4744 = vlaneseq
        %v4745 = vshrl.u32 %v4744, 7
        %v4746 = vsub.s32 0, %v4745
        %v4747 = vrot.slane %v3216, %v4746
        %v4748 = vlaneseq
        %v4749 = vshrl.u32 %v4748, 7
        %v4750 = vsub.s32 0, %v4749
        %v4751 = vrot.slane %v3218, %v4750
        %v4752 = vlaneseq
        %v4753 = vshrl.u32 %v4752, 7
        %v4754 = vsub.s32 0, %v4753
        %v4755 = vrot.slane %v3220, %v4754
        %v4756 = vlaneseq
        %v4757 = vshrl.u32 %v4756, 7
        %v4758 = vsub.s32 0, %v4757
        %v4759 = vrot.slane %v3244, %v4758
        %v4760 = vlaneseq
        %v4761 = vshrl.u32 %v4760, 7
        %v4762 = vsub.s32 0, %v4761
        %v4763 = vrot.slane %v3258, %v4762
        %v4764 = vlaneseq
        %v4765 = vshrl.u32 %v4764, 7
        %v4766 = vsub.s32 0, %v4765
        %v4767 = vrot.slane %v3266, %v4766
        %v4768 = vlaneseq
        %v4769 = vshrl.u32 %v4768, 7
        %v4770 = vsub.s32 0, %v4769
        %v4771 = vrot.slane %v3268, %v4770
        %v4772 = vlaneseq
        %v4773 = vshrl.u32 %v4772, 7
        %v4774 = vsub.s32 0, %v4773
        %v4775 = vrot.slane %v3251, %v4774
        %v4776 = vlaneseq
        %v4777 = vshrl.u32 %v4776, 7
        %v4778 = vsub.s32 0, %v4777
        %v4779 = vrot.slane %v3265, %v4778
        %v4780 = vlaneseq
        %v4781 = vshrl.u32 %v4780, 7
        %v4782 = vsub.s32 0, %v4781
        %v4783 = vrot.slane %v3267, %v4782
        %v4784 = vlaneseq
        %v4785 = vshrl.u32 %v4784, 7
        %v4786 = vsub.s32 0, %v4785
        %v4787 = vrot.slane %v3269, %v4786
        %v4788 = vlaneseq
        %v4789 = vshrl.u32 %v4788, 7
        %v4790 = vsub.s32 0, %v4789
        %v4791 = vrot.slane %v3293, %v4790
        %v4792 = vlaneseq
        %v4793 = vshrl.u32 %v4792, 7
        %v4794 = vsub.s32 0, %v4793
        %v4795 = vrot.slane %v3307, %v4794
        %v4796 = vlaneseq
        %v4797 = vshrl.u32 %v4796, 7
        %v4798 = vsub.s32 0, %v4797
        %v4799 = vrot.slane %v3315, %v4798
        %v4800 = vlaneseq
        %v4801 = vshrl.u32 %v4800, 7
        %v4802 = vsub.s32 0, %v4801
        %v4803 = vrot.slane %v3317, %v4802
        %v4804 = vlaneseq
        %v4805 = vshrl.u32 %v4804, 7
        %v4806 = vsub.s32 0, %v4805
        %v4807 = vrot.slane %v3300, %v4806
        %v4808 = vlaneseq
        %v4809 = vshrl.u32 %v4808, 7
        %v4810 = vsub.s32 0, %v4809
        %v4811 = vrot.slane %v3314, %v4810
        %v4812 = vlaneseq
        %v4813 = vshrl.u32 %v4812, 7
        %v4814 = vsub.s32 0, %v4813
        %v4815 = vrot.slane %v3316, %v4814
        %v4816 = vlaneseq
        %v4817 = vshrl.u32 %v4816, 7
        %v4818 = vsub.s32 0, %v4817
        %v4819 = vrot.slane %v3318, %v4818
        %v4820 = vlaneseq
        %v4821 = vshrl.u32 %v4820, 7
        %v4822 = vsub.s32 0, %v4821
        %v4823 = vrot.slane %v3342, %v4822
        %v4824 = vlaneseq
        %v4825 = vshrl.u32 %v4824, 7
        %v4826 = vsub.s32 0, %v4825
        %v4827 = vrot.slane %v3356, %v4826
        %v4828 = vlaneseq
        %v4829 = vshrl.u32 %v4828, 7
        %v4830 = vsub.s32 0, %v4829
        %v4831 = vrot.slane %v3364, %v4830
        %v4832 = vlaneseq
        %v4833 = vshrl.u32 %v4832, 7
        %v4834 = vsub.s32 0, %v4833
        %v4835 = vrot.slane %v3366, %v4834
        %v4836 = vlaneseq
        %v4837 = vshrl.u32 %v4836, 7
        %v4838 = vsub.s32 0, %v4837
        %v4839 = vrot.slane %v3349, %v4838
        %v4840 = vlaneseq
        %v4841 = vshrl.u32 %v4840, 7
        %v4842 = vsub.s32 0, %v4841
        %v4843 = vrot.slane %v3363, %v4842
        %v4844 = vlaneseq
        %v4845 = vshrl.u32 %v4844, 7
        %v4846 = vsub.s32 0, %v4845
        %v4847 = vrot.slane %v3365, %v4846
        %v4848 = vlaneseq
        %v4849 = vshrl.u32 %v4848, 7
        %v4850 = vsub.s32 0, %v4849
        %v4851 = vrot.slane %v3367, %v4850
        %v4852 = vlaneseq
        %v4853 = vshrl.u32 %v4852, 7
        %v4854 = vsub.s32 0, %v4853
        %v4855 = vrot.slane %v3391, %v4854
        %v4856 = vlaneseq
        %v4857 = vshrl.u32 %v4856, 7
        %v4858 = vsub.s32 0, %v4857
        %v4859 = vrot.slane %v3405, %v4858
        %v4860 = vlaneseq
        %v4861 = vshrl.u32 %v4860, 7
        %v4862 = vsub.s32 0, %v4861
        %v4863 = vrot.slane %v3413, %v4862
        %v4864 = vlaneseq
        %v4865 = vshrl.u32 %v4864, 7
        %v4866 = vsub.s32 0, %v4865
        %v4867 = vrot.slane %v3415, %v4866
        %v4868 = vlaneseq
        %v4869 = vshrl.u32 %v4868, 7
        %v4870 = vsub.s32 0, %v4869
        %v4871 = vrot.slane %v3398, %v4870
        %v4872 = vlaneseq
        %v4873 = vshrl.u32 %v4872, 7
        %v4874 = vsub.s32 0, %v4873
        %v4875 = vrot.slane %v3412, %v4874
        %v4876 = vlaneseq
        %v4877 = vshrl.u32 %v4876, 7
        %v4878 = vsub.s32 0, %v4877
        %v4879 = vrot.slane %v3414, %v4878
        %v4880 = vlaneseq
        %v4881 = vshrl.u32 %v4880, 7
        %v4882 = vsub.s32 0, %v4881
        %v4883 = vrot.slane %v3416, %v4882
        %v4884 = vlaneseq
        %v4885 = vshrl.u32 %v4884, 7
        %v4886 = vsub.s32 0, %v4885
        %v4887 = vrot.slane %v3440, %v4886
        %v4888 = vlaneseq
        %v4889 = vshrl.u32 %v4888, 7
        %v4890 = vsub.s32 0, %v4889
        %v4891 = vrot.slane %v3454, %v4890
        %v4892 = vlaneseq
        %v4893 = vshrl.u32 %v4892, 7
        %v4894 = vsub.s32 0, %v4893
        %v4895 = vrot.slane %v3462, %v4894
        %v4896 = vlaneseq
        %v4897 = vshrl.u32 %v4896, 7
        %v4898 = vsub.s32 0, %v4897
        %v4899 = vrot.slane %v3464, %v4898
        %v4900 = vlaneseq
        %v4901 = vshrl.u32 %v4900, 7
        %v4902 = vsub.s32 0, %v4901
        %v4903 = vrot.slane %v3447, %v4902
        %v4904 = vlaneseq
        %v4905 = vshrl.u32 %v4904, 7
        %v4906 = vsub.s32 0, %v4905
        %v4907 = vrot.slane %v3461, %v4906
        %v4908 = vlaneseq
        %v4909 = vshrl.u32 %v4908, 7
        %v4910 = vsub.s32 0, %v4909
        %v4911 = vrot.slane %v3463, %v4910
        %v4912 = vlaneseq
        %v4913 = vshrl.u32 %v4912, 7
        %v4914 = vsub.s32 0, %v4913
        %v4915 = vrot.slane %v3465, %v4914
        %v4916 = vlaneseq
        %v4917 = vshrl.u32 %v4916, 7
        %v4918 = vsub.s32 0, %v4917
        %v4919 = vrot.slane %v3489, %v4918
        %v4920 = vlaneseq
        %v4921 = vshrl.u32 %v4920, 7
        %v4922 = vsub.s32 0, %v4921
        %v4923 = vrot.slane %v3503, %v4922
        %v4924 = vlaneseq
        %v4925 = vshrl.u32 %v4924, 7
        %v4926 = vsub.s32 0, %v4925
        %v4927 = vrot.slane %v3511, %v4926
        %v4928 = vlaneseq
        %v4929 = vshrl.u32 %v4928, 7
        %v4930 = vsub.s32 0, %v4929
        %v4931 = vrot.slane %v3513, %v4930
        %v4932 = vlaneseq
        %v4933 = vshrl.u32 %v4932, 7
        %v4934 = vsub.s32 0, %v4933
        %v4935 = vrot.slane %v3496, %v4934
        %v4936 = vlaneseq
        %v4937 = vshrl.u32 %v4936, 7
        %v4938 = vsub.s32 0, %v4937
        %v4939 = vrot.slane %v3510, %v4938
        %v4940 = vlaneseq
        %v4941 = vshrl.u32 %v4940, 7
        %v4942 = vsub.s32 0, %v4941
        %v4943 = vrot.slane %v3512, %v4942
        %v4944 = vlaneseq
        %v4945 = vshrl.u32 %v4944, 7
        %v4946 = vsub.s32 0, %v4945
        %v4947 = vrot.slane %v3514, %v4946
        %v4948 = vlaneseq
        %v4949 = vshrl.u32 %v4948, 7
        %v4950 = vsub.s32 0, %v4949
        %v4951 = vrot.slane %v3538, %v4950
        %v4952 = vlaneseq
        %v4953 = vshrl.u32 %v4952, 7
        %v4954 = vsub.s32 0, %v4953
        %v4955 = vrot.slane %v3552, %v4954
        %v4956 = vlaneseq
        %v4957 = vshrl.u32 %v4956, 7
        %v4958 = vsub.s32 0, %v4957
        %v4959 = vrot.slane %v3560, %v4958
        %v4960 = vlaneseq
        %v4961 = vshrl.u32 %v4960, 7
        %v4962 = vsub.s32 0, %v4961
        %v4963 = vrot.slane %v3562, %v4962
        %v4964 = vlaneseq
        %v4965 = vshrl.u32 %v4964, 7
        %v4966 = vsub.s32 0, %v4965
        %v4967 = vrot.slane %v3545, %v4966
        %v4968 = vlaneseq
        %v4969 = vshrl.u32 %v4968, 7
        %v4970 = vsub.s32 0, %v4969
        %v4971 = vrot.slane %v3559, %v4970
        %v4972 = vlaneseq
        %v4973 = vshrl.u32 %v4972, 7
        %v4974 = vsub.s32 0, %v4973
        %v4975 = vrot.slane %v3561, %v4974
        %v4976 = vlaneseq
        %v4977 = vshrl.u32 %v4976, 7
        %v4978 = vsub.s32 0, %v4977
        %v4979 = vrot.slane %v3563, %v4978
        %v4980 = vlaneseq
        %v4981 = vshrl.u32 %v4980, 7
        %v4982 = vsub.s32 0, %v4981
        %v4983 = vrot.slane %v3587, %v4982
        %v4984 = vlaneseq
        %v4985 = vshrl.u32 %v4984, 7
        %v4986 = vsub.s32 0, %v4985
        %v4987 = vrot.slane %v3601, %v4986
        %v4988 = vlaneseq
        %v4989 = vshrl.u32 %v4988, 7
        %v4990 = vsub.s32 0, %v4989
        %v4991 = vrot.slane %v3609, %v4990
        %v4992 = vlaneseq
        %v4993 = vshrl.u32 %v4992, 7
        %v4994 = vsub.s32 0, %v4993
        %v4995 = vrot.slane %v3611, %v4994
        %v4996 = vlaneseq
        %v4997 = vshrl.u32 %v4996, 7
        %v4998 = vsub.s32 0, %v4997
        %v4999 = vrot.slane %v3594, %v4998
        %v5000 = vlaneseq
        %v5001 = vshrl.u32 %v5000, 7
        %v5002 = vsub.s32 0, %v5001
        %v5003 = vrot.slane %v3608, %v5002
        %v5004 = vlaneseq
        %v5005 = vshrl.u32 %v5004, 7
        %v5006 = vsub.s32 0, %v5005
        %v5007 = vrot.slane %v3610, %v5006
        %v5008 = vlaneseq
        %v5009 = vshrl.u32 %v5008, 7
        %v5010 = vsub.s32 0, %v5009
        %v5011 = vrot.slane %v3612, %v5010
        %v5012 = vlaneseq
        %v5013 = vshrl.u32 %v5012, 7
        %v5014 = vsub.s32 0, %v5013
        %v5015 = vrot.slane %v3636, %v5014
        %v5016 = vlaneseq
        %v5017 = vshrl.u32 %v5016, 7
        %v5018 = vsub.s32 0, %v5017
        %v5019 = vrot.slane %v3650, %v5018
        %v5020 = vlaneseq
        %v5021 = vshrl.u32 %v5020, 7
        %v5022 = vsub.s32 0, %v5021
        %v5023 = vrot.slane %v3658, %v5022
        %v5024 = vlaneseq
        %v5025 = vshrl.u32 %v5024, 7
        %v5026 = vsub.s32 0, %v5025
        %v5027 = vrot.slane %v3660, %v5026
        %v5028 = vlaneseq
        %v5029 = vshrl.u32 %v5028, 7
        %v5030 = vsub.s32 0, %v5029
        %v5031 = vrot.slane %v3643, %v5030
        %v5032 = vlaneseq
        %v5033 = vshrl.u32 %v5032, 7
        %v5034 = vsub.s32 0, %v5033
        %v5035 = vrot.slane %v3657, %v5034
        %v5036 = vlaneseq
        %v5037 = vshrl.u32 %v5036, 7
        %v5038 = vsub.s32 0, %v5037
        %v5039 = vrot.slane %v3659, %v5038
        %v5040 = vlaneseq
        %v5041 = vshrl.u32 %v5040, 7
        %v5042 = vsub.s32 0, %v5041
        %v5043 = vrot.slane %v3661, %v5042
        %v5044 = vlaneseq
        %v5045 = vshrl.u32 %v5044, 7
        %v5046 = vsub.s32 0, %v5045
        %v5047 = vrot.slane %v3685, %v5046
        %v5048 = vlaneseq
        %v5049 = vshrl.u32 %v5048, 7
        %v5050 = vsub.s32 0, %v5049
        %v5051 = vrot.slane %v3699, %v5050
        %v5052 = vlaneseq
        %v5053 = vshrl.u32 %v5052, 7
        %v5054 = vsub.s32 0, %v5053
        %v5055 = vrot.slane %v3707, %v5054
        %v5056 = vlaneseq
        %v5057 = vshrl.u32 %v5056, 7
        %v5058 = vsub.s32 0, %v5057
        %v5059 = vrot.slane %v3709, %v5058
        %v5060 = vlaneseq
        %v5061 = vshrl.u32 %v5060, 7
        %v5062 = vsub.s32 0, %v5061
        %v5063 = vrot.slane %v3692, %v5062
        %v5064 = vlaneseq
        %v5065 = vshrl.u32 %v5064, 7
        %v5066 = vsub.s32 0, %v5065
        %v5067 = vrot.slane %v3706, %v5066
        %v5068 = vlaneseq
        %v5069 = vshrl.u32 %v5068, 7
        %v5070 = vsub.s32 0, %v5069
        %v5071 = vrot.slane %v3708, %v5070
        %v5072 = vlaneseq
        %v5073 = vshrl.u32 %v5072, 7
        %v5074 = vsub.s32 0, %v5073
        %v5075 = vrot.slane %v3710, %v5074
        %v5076 = vlaneseq
        %v5077 = vshrl.u32 %v5076, 7
        %v5078 = vsub.s32 0, %v5077
        %v5079 = vrot.slane %v3734, %v5078
        %v5080 = vlaneseq
        %v5081 = vshrl.u32 %v5080, 7
        %v5082 = vsub.s32 0, %v5081
        %v5083 = vrot.slane %v3748, %v5082
        %v5084 = vlaneseq
        %v5085 = vshrl.u32 %v5084, 7
        %v5086 = vsub.s32 0, %v5085
        %v5087 = vrot.slane %v3756, %v5086
        %v5088 = vlaneseq
        %v5089 = vshrl.u32 %v5088, 7
        %v5090 = vsub.s32 0, %v5089
        %v5091 = vrot.slane %v3758, %v5090
        %v5092 = vlaneseq
        %v5093 = vshrl.u32 %v5092, 7
        %v5094 = vsub.s32 0, %v5093
        %v5095 = vrot.slane %v3741, %v5094
        %v5096 = vlaneseq
        %v5097 = vshrl.u32 %v5096, 7
        %v5098 = vsub.s32 0, %v5097
        %v5099 = vrot.slane %v3755, %v5098
        %v5100 = vlaneseq
        %v5101 = vshrl.u32 %v5100, 7
        %v5102 = vsub.s32 0, %v5101
        %v5103 = vrot.slane %v3757, %v5102
        %v5104 = vlaneseq
        %v5105 = vshrl.u32 %v5104, 7
        %v5106 = vsub.s32 0, %v5105
        %v5107 = vrot.slane %v3759, %v5106
        %v5108 = vlaneseq
        %v5109 = vshrl.u32 %v5108, 7
        %v5110 = vsub.s32 0, %v5109
        %v5111 = vrot.slane %v3783, %v5110
        %v5112 = vlaneseq
        %v5113 = vshrl.u32 %v5112, 7
        %v5114 = vsub.s32 0, %v5113
        %v5115 = vrot.slane %v3797, %v5114
        %v5116 = vlaneseq
        %v5117 = vshrl.u32 %v5116, 7
        %v5118 = vsub.s32 0, %v5117
        %v5119 = vrot.slane %v3805, %v5118
        %v5120 = vlaneseq
        %v5121 = vshrl.u32 %v5120, 7
        %v5122 = vsub.s32 0, %v5121
        %v5123 = vrot.slane %v3807, %v5122
        %v5124 = vlaneseq
        %v5125 = vshrl.u32 %v5124, 7
        %v5126 = vsub.s32 0, %v5125
        %v5127 = vrot.slane %v3790, %v5126
        %v5128 = vlaneseq
        %v5129 = vshrl.u32 %v5128, 7
        %v5130 = vsub.s32 0, %v5129
        %v5131 = vrot.slane %v3804, %v5130
        %v5132 = vlaneseq
        %v5133 = vshrl.u32 %v5132, 7
        %v5134 = vsub.s32 0, %v5133
        %v5135 = vrot.slane %v3806, %v5134
        %v5136 = vlaneseq
        %v5137 = vshrl.u32 %v5136, 7
        %v5138 = vsub.s32 0, %v5137
        %v5139 = vrot.slane %v3808, %v5138
        %v5140 = vlaneseq
        %v5141 = vshrl.u32 %v5140, 7
        %v5142 = vsub.s32 0, %v5141
        %v5143 = vrot.slane %v3832, %v5142
        %v5144 = vlaneseq
        %v5145 = vshrl.u32 %v5144, 7
        %v5146 = vsub.s32 0, %v5145
        %v5147 = vrot.slane %v3846, %v5146
        %v5148 = vlaneseq
        %v5149 = vshrl.u32 %v5148, 7
        %v5150 = vsub.s32 0, %v5149
        %v5151 = vrot.slane %v3854, %v5150
        %v5152 = vlaneseq
        %v5153 = vshrl.u32 %v5152, 7
        %v5154 = vsub.s32 0, %v5153
        %v5155 = vrot.slane %v3856, %v5154
        %v5156 = vlaneseq
        %v5157 = vshrl.u32 %v5156, 7
        %v5158 = vsub.s32 0, %v5157
        %v5159 = vrot.slane %v3839, %v5158
        %v5160 = vlaneseq
        %v5161 = vshrl.u32 %v5160, 7
        %v5162 = vsub.s32 0, %v5161
        %v5163 = vrot.slane %v3853, %v5162
        %v5164 = vlaneseq
        %v5165 = vshrl.u32 %v5164, 7
        %v5166 = vsub.s32 0, %v5165
        %v5167 = vrot.slane %v3855, %v5166
        %v5168 = vlaneseq
        %v5169 = vshrl.u32 %v5168, 7
        %v5170 = vsub.s32 0, %v5169
        %v5171 = vrot.slane %v3857, %v5170
        %v5172 = vlaneseq
        %v5173 = vshrl.u32 %v5172, 7
        %v5174 = vsub.s32 0, %v5173
        %v5175 = vrot.slane %v3881, %v5174
        %v5176 = vlaneseq
        %v5177 = vshrl.u32 %v5176, 7
        %v5178 = vsub.s32 0, %v5177
        %v5179 = vrot.slane %v3895, %v5178
        %v5180 = vlaneseq
        %v5181 = vshrl.u32 %v5180, 7
        %v5182 = vsub.s32 0, %v5181
        %v5183 = vrot.slane %v3903, %v5182
        %v5184 = vlaneseq
        %v5185 = vshrl.u32 %v5184, 7
        %v5186 = vsub.s32 0, %v5185
        %v5187 = vrot.slane %v3905, %v5186
        %v5188 = vlaneseq
        %v5189 = vshrl.u32 %v5188, 7
        %v5190 = vsub.s32 0, %v5189
        %v5191 = vrot.slane %v3888, %v5190
        %v5192 = vlaneseq
        %v5193 = vshrl.u32 %v5192, 7
        %v5194 = vsub.s32 0, %v5193
        %v5195 = vrot.slane %v3902, %v5194
        %v5196 = vlaneseq
        %v5197 = vshrl.u32 %v5196, 7
        %v5198 = vsub.s32 0, %v5197
        %v5199 = vrot.slane %v3904, %v5198
        %v5200 = vlaneseq
        %v5201 = vshrl.u32 %v5200, 7
        %v5202 = vsub.s32 0, %v5201
        %v5203 = vrot.slane %v3906, %v5202
        %v5204 = vlaneseq
        %v5205 = vshrl.u32 %v5204, 7
        %v5206 = vsub.s32 0, %v5205
        %v5207 = vrot.slane %v3930, %v5206
        %v5208 = vlaneseq
        %v5209 = vshrl.u32 %v5208, 7
        %v5210 = vsub.s32 0, %v5209
        %v5211 = vrot.slane %v3944, %v5210
        %v5212 = vlaneseq
        %v5213 = vshrl.u32 %v5212, 7
        %v5214 = vsub.s32 0, %v5213
        %v5215 = vrot.slane %v3952, %v5214
        %v5216 = vlaneseq
        %v5217 = vshrl.u32 %v5216, 7
        %v5218 = vsub.s32 0, %v5217
        %v5219 = vrot.slane %v3954, %v5218
        %v5220 = vlaneseq
        %v5221 = vshrl.u32 %v5220, 7
        %v5222 = vsub.s32 0, %v5221
        %v5223 = vrot.slane %v3937, %v5222
        %v5224 = vlaneseq
        %v5225 = vshrl.u32 %v5224, 7
        %v5226 = vsub.s32 0, %v5225
        %v5227 = vrot.slane %v3951, %v5226
        %v5228 = vlaneseq
        %v5229 = vshrl.u32 %v5228, 7
        %v5230 = vsub.s32 0, %v5229
        %v5231 = vrot.slane %v3953, %v5230
        %v5232 = vlaneseq
        %v5233 = vshrl.u32 %v5232, 7
        %v5234 = vsub.s32 0, %v5233
        %v5235 = vrot.slane %v3955, %v5234
        %5236 = vrot.lane.b32.xlu0 %v4215, 126
        %v5237 = vpop.permute.xlu0 %5236
        %5238 = vrot.lane.b32.xlu0 %v4219, 126
        %v5239 = vpop.permute.xlu0 %5238
        %5240 = vrot.lane.b32.xlu0 %v4223, 126
        %v5241 = vpop.permute.xlu0 %5240
        %5242 = vrot.lane.b32.xlu0 %v4227, 126
        %v5243 = vpop.permute.xlu0 %5242
        %5244 = vrot.lane.b32.xlu0 %v4231, 126
        %v5245 = vpop.permute.xlu0 %5244
        %5246 = vrot.lane.b32.xlu0 %v4235, 126
        %v5247 = vpop.permute.xlu0 %5246
        %5248 = vrot.lane.b32.xlu0 %v4239, 126
        %v5249 = vpop.permute.xlu0 %5248
        %5250 = vrot.lane.b32.xlu0 %v4243, 126
        %v5251 = vpop.permute.xlu0 %5250
        %5252 = vrot.lane.b32.xlu0 %v4247, 126
        %v5253 = vpop.permute.xlu0 %5252
        %5254 = vrot.lane.b32.xlu0 %v4251, 126
        %v5255 = vpop.permute.xlu0 %5254
        %5256 = vrot.lane.b32.xlu0 %v4255, 126
        %v5257 = vpop.permute.xlu0 %5256
        %5258 = vrot.lane.b32.xlu0 %v4259, 126
        %v5259 = vpop.permute.xlu0 %5258
        %5260 = vrot.lane.b32.xlu0 %v4263, 126
        %v5261 = vpop.permute.xlu0 %5260
        %5262 = vrot.lane.b32.xlu0 %v4267, 126
        %v5263 = vpop.permute.xlu0 %5262
        %5264 = vrot.lane.b32.xlu0 %v4271, 126
        %v5265 = vpop.permute.xlu0 %5264
        %5266 = vrot.lane.b32.xlu0 %v4275, 126
        %v5267 = vpop.permute.xlu0 %5266
        %5268 = vrot.lane.b32.xlu0 %v4279, 126
        %v5269 = vpop.permute.xlu0 %5268
        %5270 = vrot.lane.b32.xlu0 %v4283, 126
        %v5271 = vpop.permute.xlu0 %5270
        %5272 = vrot.lane.b32.xlu0 %v4287, 126
        %v5273 = vpop.permute.xlu0 %5272
        %5274 = vrot.lane.b32.xlu0 %v4291, 126
        %v5275 = vpop.permute.xlu0 %5274
        %5276 = vrot.lane.b32.xlu0 %v4295, 126
        %v5277 = vpop.permute.xlu0 %5276
        %5278 = vrot.lane.b32.xlu0 %v4299, 126
        %v5279 = vpop.permute.xlu0 %5278
        %5280 = vrot.lane.b32.xlu0 %v4303, 126
        %v5281 = vpop.permute.xlu0 %5280
        %5282 = vrot.lane.b32.xlu0 %v4307, 126
        %v5283 = vpop.permute.xlu0 %5282
        %5284 = vrot.lane.b32.xlu0 %v4311, 126
        %v5285 = vpop.permute.xlu0 %5284
        %5286 = vrot.lane.b32.xlu0 %v4315, 126
        %v5287 = vpop.permute.xlu0 %5286
        %5288 = vrot.lane.b32.xlu0 %v4319, 126
        %v5289 = vpop.permute.xlu0 %5288
        %5290 = vrot.lane.b32.xlu0 %v4323, 126
        %v5291 = vpop.permute.xlu0 %5290
        %5292 = vrot.lane.b32.xlu0 %v4327, 126
        %v5293 = vpop.permute.xlu0 %5292
        %5294 = vrot.lane.b32.xlu0 %v4331, 126
        %v5295 = vpop.permute.xlu0 %5294
        %5296 = vrot.lane.b32.xlu0 %v4335, 126
        %v5297 = vpop.permute.xlu0 %5296
        %5298 = vrot.lane.b32.xlu0 %v4339, 126
        %v5299 = vpop.permute.xlu0 %5298
        %5300 = vrot.lane.b32.xlu0 %v4343, 126
        %v5301 = vpop.permute.xlu0 %5300
        %5302 = vrot.lane.b32.xlu0 %v4347, 126
        %v5303 = vpop.permute.xlu0 %5302
        %5304 = vrot.lane.b32.xlu0 %v4351, 126
        %v5305 = vpop.permute.xlu0 %5304
        %5306 = vrot.lane.b32.xlu0 %v4355, 126
        %v5307 = vpop.permute.xlu0 %5306
        %5308 = vrot.lane.b32.xlu0 %v4359, 126
        %v5309 = vpop.permute.xlu0 %5308
        %5310 = vrot.lane.b32.xlu0 %v4363, 126
        %v5311 = vpop.permute.xlu0 %5310
        %5312 = vrot.lane.b32.xlu0 %v4367, 126
        %v5313 = vpop.permute.xlu0 %5312
        %5314 = vrot.lane.b32.xlu0 %v4371, 126
        %v5315 = vpop.permute.xlu0 %5314
        %5316 = vrot.lane.b32.xlu0 %v4375, 126
        %v5317 = vpop.permute.xlu0 %5316
        %5318 = vrot.lane.b32.xlu0 %v4379, 126
        %v5319 = vpop.permute.xlu0 %5318
        %5320 = vrot.lane.b32.xlu0 %v4383, 126
        %v5321 = vpop.permute.xlu0 %5320
        %5322 = vrot.lane.b32.xlu0 %v4387, 126
        %v5323 = vpop.permute.xlu0 %5322
        %5324 = vrot.lane.b32.xlu0 %v4391, 126
        %v5325 = vpop.permute.xlu0 %5324
        %5326 = vrot.lane.b32.xlu0 %v4395, 126
        %v5327 = vpop.permute.xlu0 %5326
        %5328 = vrot.lane.b32.xlu0 %v4399, 126
        %v5329 = vpop.permute.xlu0 %5328
        %5330 = vrot.lane.b32.xlu0 %v4403, 126
        %v5331 = vpop.permute.xlu0 %5330
        %5332 = vrot.lane.b32.xlu0 %v4407, 126
        %v5333 = vpop.permute.xlu0 %5332
        %5334 = vrot.lane.b32.xlu0 %v4411, 126
        %v5335 = vpop.permute.xlu0 %5334
        %5336 = vrot.lane.b32.xlu0 %v4415, 126
        %v5337 = vpop.permute.xlu0 %5336
        %5338 = vrot.lane.b32.xlu0 %v4419, 126
        %v5339 = vpop.permute.xlu0 %5338
        %5340 = vrot.lane.b32.xlu0 %v4423, 126
        %v5341 = vpop.permute.xlu0 %5340
        %5342 = vrot.lane.b32.xlu0 %v4427, 126
        %v5343 = vpop.permute.xlu0 %5342
        %5344 = vrot.lane.b32.xlu0 %v4431, 126
        %v5345 = vpop.permute.xlu0 %5344
        %5346 = vrot.lane.b32.xlu0 %v4435, 126
        %v5347 = vpop.permute.xlu0 %5346
        %5348 = vrot.lane.b32.xlu0 %v4439, 126
        %v5349 = vpop.permute.xlu0 %5348
        %5350 = vrot.lane.b32.xlu0 %v4443, 126
        %v5351 = vpop.permute.xlu0 %5350
        %5352 = vrot.lane.b32.xlu0 %v4447, 126
        %v5353 = vpop.permute.xlu0 %5352
        %5354 = vrot.lane.b32.xlu0 %v4451, 126
        %v5355 = vpop.permute.xlu0 %5354
        %5356 = vrot.lane.b32.xlu0 %v4455, 126
        %v5357 = vpop.permute.xlu0 %5356
        %5358 = vrot.lane.b32.xlu0 %v4459, 126
        %v5359 = vpop.permute.xlu0 %5358
        %5360 = vrot.lane.b32.xlu0 %v4463, 126
        %v5361 = vpop.permute.xlu0 %5360
        %5362 = vrot.lane.b32.xlu0 %v4467, 126
        %v5363 = vpop.permute.xlu0 %5362
        %5364 = vrot.lane.b32.xlu0 %v4471, 126
        %v5365 = vpop.permute.xlu0 %5364
        %5366 = vrot.lane.b32.xlu0 %v4475, 126
        %v5367 = vpop.permute.xlu0 %5366
        %5368 = vrot.lane.b32.xlu0 %v4479, 126
        %v5369 = vpop.permute.xlu0 %5368
        %5370 = vrot.lane.b32.xlu0 %v4483, 126
        %v5371 = vpop.permute.xlu0 %5370
        %5372 = vrot.lane.b32.xlu0 %v4487, 126
        %v5373 = vpop.permute.xlu0 %5372
        %5374 = vrot.lane.b32.xlu0 %v4491, 126
        %v5375 = vpop.permute.xlu0 %5374
        %5376 = vrot.lane.b32.xlu0 %v4495, 126
        %v5377 = vpop.permute.xlu0 %5376
        %5378 = vrot.lane.b32.xlu0 %v4499, 126
        %v5379 = vpop.permute.xlu0 %5378
        %5380 = vrot.lane.b32.xlu0 %v4503, 126
        %v5381 = vpop.permute.xlu0 %5380
        %5382 = vrot.lane.b32.xlu0 %v4507, 126
        %v5383 = vpop.permute.xlu0 %5382
        %5384 = vrot.lane.b32.xlu0 %v4511, 126
        %v5385 = vpop.permute.xlu0 %5384
        %5386 = vrot.lane.b32.xlu0 %v4515, 126
        %v5387 = vpop.permute.xlu0 %5386
        %5388 = vrot.lane.b32.xlu0 %v4519, 126
        %v5389 = vpop.permute.xlu0 %5388
        %5390 = vrot.lane.b32.xlu0 %v4523, 126
        %v5391 = vpop.permute.xlu0 %5390
        %5392 = vrot.lane.b32.xlu0 %v4527, 126
        %v5393 = vpop.permute.xlu0 %5392
        %5394 = vrot.lane.b32.xlu0 %v4531, 126
        %v5395 = vpop.permute.xlu0 %5394
        %5396 = vrot.lane.b32.xlu0 %v4535, 126
        %v5397 = vpop.permute.xlu0 %5396
        %5398 = vrot.lane.b32.xlu0 %v4539, 126
        %v5399 = vpop.permute.xlu0 %5398
        %5400 = vrot.lane.b32.xlu0 %v4543, 126
        %v5401 = vpop.permute.xlu0 %5400
        %5402 = vrot.lane.b32.xlu0 %v4547, 126
        %v5403 = vpop.permute.xlu0 %5402
        %5404 = vrot.lane.b32.xlu0 %v4551, 126
        %v5405 = vpop.permute.xlu0 %5404
        %5406 = vrot.lane.b32.xlu0 %v4555, 126
        %v5407 = vpop.permute.xlu0 %5406
        %5408 = vrot.lane.b32.xlu0 %v4559, 126
        %v5409 = vpop.permute.xlu0 %5408
        %5410 = vrot.lane.b32.xlu0 %v4563, 126
        %v5411 = vpop.permute.xlu0 %5410
        %5412 = vrot.lane.b32.xlu0 %v4567, 126
        %v5413 = vpop.permute.xlu0 %5412
        %5414 = vrot.lane.b32.xlu0 %v4571, 126
        %v5415 = vpop.permute.xlu0 %5414
        %5416 = vrot.lane.b32.xlu0 %v4575, 126
        %v5417 = vpop.permute.xlu0 %5416
        %5418 = vrot.lane.b32.xlu0 %v4579, 126
        %v5419 = vpop.permute.xlu0 %5418
        %5420 = vrot.lane.b32.xlu0 %v4583, 126
        %v5421 = vpop.permute.xlu0 %5420
        %5422 = vrot.lane.b32.xlu0 %v4587, 126
        %v5423 = vpop.permute.xlu0 %5422
        %5424 = vrot.lane.b32.xlu0 %v4591, 126
        %v5425 = vpop.permute.xlu0 %5424
        %5426 = vrot.lane.b32.xlu0 %v4595, 126
        %v5427 = vpop.permute.xlu0 %5426
        %5428 = vrot.lane.b32.xlu0 %v4599, 126
        %v5429 = vpop.permute.xlu0 %5428
        %5430 = vrot.lane.b32.xlu0 %v4603, 126
        %v5431 = vpop.permute.xlu0 %5430
        %5432 = vrot.lane.b32.xlu0 %v4607, 126
        %v5433 = vpop.permute.xlu0 %5432
        %5434 = vrot.lane.b32.xlu0 %v4611, 126
        %v5435 = vpop.permute.xlu0 %5434
        %5436 = vrot.lane.b32.xlu0 %v4615, 126
        %v5437 = vpop.permute.xlu0 %5436
        %5438 = vrot.lane.b32.xlu0 %v4619, 126
        %v5439 = vpop.permute.xlu0 %5438
        %5440 = vrot.lane.b32.xlu0 %v4623, 126
        %v5441 = vpop.permute.xlu0 %5440
        %5442 = vrot.lane.b32.xlu0 %v4627, 126
        %v5443 = vpop.permute.xlu0 %5442
        %5444 = vrot.lane.b32.xlu0 %v4631, 126
        %v5445 = vpop.permute.xlu0 %5444
        %5446 = vrot.lane.b32.xlu0 %v4635, 126
        %v5447 = vpop.permute.xlu0 %5446
        %5448 = vrot.lane.b32.xlu0 %v4639, 126
        %v5449 = vpop.permute.xlu0 %5448
        %5450 = vrot.lane.b32.xlu0 %v4643, 126
        %v5451 = vpop.permute.xlu0 %5450
        %5452 = vrot.lane.b32.xlu0 %v4647, 126
        %v5453 = vpop.permute.xlu0 %5452
        %5454 = vrot.lane.b32.xlu0 %v4651, 126
        %v5455 = vpop.permute.xlu0 %5454
        %5456 = vrot.lane.b32.xlu0 %v4655, 126
        %v5457 = vpop.permute.xlu0 %5456
        %5458 = vrot.lane.b32.xlu0 %v4659, 126
        %v5459 = vpop.permute.xlu0 %5458
        %5460 = vrot.lane.b32.xlu0 %v4663, 126
        %v5461 = vpop.permute.xlu0 %5460
        %5462 = vrot.lane.b32.xlu0 %v4667, 126
        %v5463 = vpop.permute.xlu0 %5462
        %5464 = vrot.lane.b32.xlu0 %v4671, 126
        %v5465 = vpop.permute.xlu0 %5464
        %5466 = vrot.lane.b32.xlu0 %v4675, 126
        %v5467 = vpop.permute.xlu0 %5466
        %5468 = vrot.lane.b32.xlu0 %v4679, 126
        %v5469 = vpop.permute.xlu0 %5468
        %5470 = vrot.lane.b32.xlu0 %v4683, 126
        %v5471 = vpop.permute.xlu0 %5470
        %5472 = vrot.lane.b32.xlu0 %v4687, 126
        %v5473 = vpop.permute.xlu0 %5472
        %5474 = vrot.lane.b32.xlu0 %v4691, 126
        %v5475 = vpop.permute.xlu0 %5474
        %5476 = vrot.lane.b32.xlu0 %v4695, 126
        %v5477 = vpop.permute.xlu0 %5476
        %5478 = vrot.lane.b32.xlu0 %v4699, 126
        %v5479 = vpop.permute.xlu0 %5478
        %5480 = vrot.lane.b32.xlu0 %v4703, 126
        %v5481 = vpop.permute.xlu0 %5480
        %5482 = vrot.lane.b32.xlu0 %v4707, 126
        %v5483 = vpop.permute.xlu0 %5482
        %5484 = vrot.lane.b32.xlu0 %v4711, 126
        %v5485 = vpop.permute.xlu0 %5484
        %5486 = vrot.lane.b32.xlu0 %v4715, 126
        %v5487 = vpop.permute.xlu0 %5486
        %5488 = vrot.lane.b32.xlu0 %v4719, 126
        %v5489 = vpop.permute.xlu0 %5488
        %5490 = vrot.lane.b32.xlu0 %v4723, 126
        %v5491 = vpop.permute.xlu0 %5490
        %5492 = vrot.lane.b32.xlu0 %v4727, 126
        %v5493 = vpop.permute.xlu0 %5492
        %5494 = vrot.lane.b32.xlu0 %v4731, 126
        %v5495 = vpop.permute.xlu0 %5494
        %5496 = vrot.lane.b32.xlu0 %v4735, 126
        %v5497 = vpop.permute.xlu0 %5496
        %5498 = vrot.lane.b32.xlu0 %v4739, 126
        %v5499 = vpop.permute.xlu0 %5498
        %5500 = vrot.lane.b32.xlu0 %v4743, 126
        %v5501 = vpop.permute.xlu0 %5500
        %5502 = vrot.lane.b32.xlu0 %v4747, 126
        %v5503 = vpop.permute.xlu0 %5502
        %5504 = vrot.lane.b32.xlu0 %v4751, 126
        %v5505 = vpop.permute.xlu0 %5504
        %5506 = vrot.lane.b32.xlu0 %v4755, 126
        %v5507 = vpop.permute.xlu0 %5506
        %5508 = vrot.lane.b32.xlu0 %v4759, 126
        %v5509 = vpop.permute.xlu0 %5508
        %5510 = vrot.lane.b32.xlu0 %v4763, 126
        %v5511 = vpop.permute.xlu0 %5510
        %5512 = vrot.lane.b32.xlu0 %v4767, 126
        %v5513 = vpop.permute.xlu0 %5512
        %5514 = vrot.lane.b32.xlu0 %v4771, 126
        %v5515 = vpop.permute.xlu0 %5514
        %5516 = vrot.lane.b32.xlu0 %v4775, 126
        %v5517 = vpop.permute.xlu0 %5516
        %5518 = vrot.lane.b32.xlu0 %v4779, 126
        %v5519 = vpop.permute.xlu0 %5518
        %5520 = vrot.lane.b32.xlu0 %v4783, 126
        %v5521 = vpop.permute.xlu0 %5520
        %5522 = vrot.lane.b32.xlu0 %v4787, 126
        %v5523 = vpop.permute.xlu0 %5522
        %5524 = vrot.lane.b32.xlu0 %v4791, 126
        %v5525 = vpop.permute.xlu0 %5524
        %5526 = vrot.lane.b32.xlu0 %v4795, 126
        %v5527 = vpop.permute.xlu0 %5526
        %5528 = vrot.lane.b32.xlu0 %v4799, 126
        %v5529 = vpop.permute.xlu0 %5528
        %5530 = vrot.lane.b32.xlu0 %v4803, 126
        %v5531 = vpop.permute.xlu0 %5530
        %5532 = vrot.lane.b32.xlu0 %v4807, 126
        %v5533 = vpop.permute.xlu0 %5532
        %5534 = vrot.lane.b32.xlu0 %v4811, 126
        %v5535 = vpop.permute.xlu0 %5534
        %5536 = vrot.lane.b32.xlu0 %v4815, 126
        %v5537 = vpop.permute.xlu0 %5536
        %5538 = vrot.lane.b32.xlu0 %v4819, 126
        %v5539 = vpop.permute.xlu0 %5538
        %5540 = vrot.lane.b32.xlu0 %v4823, 126
        %v5541 = vpop.permute.xlu0 %5540
        %5542 = vrot.lane.b32.xlu0 %v4827, 126
        %v5543 = vpop.permute.xlu0 %5542
        %5544 = vrot.lane.b32.xlu0 %v4831, 126
        %v5545 = vpop.permute.xlu0 %5544
        %5546 = vrot.lane.b32.xlu0 %v4835, 126
        %v5547 = vpop.permute.xlu0 %5546
        %5548 = vrot.lane.b32.xlu0 %v4839, 126
        %v5549 = vpop.permute.xlu0 %5548
        %5550 = vrot.lane.b32.xlu0 %v4843, 126
        %v5551 = vpop.permute.xlu0 %5550
        %5552 = vrot.lane.b32.xlu0 %v4847, 126
        %v5553 = vpop.permute.xlu0 %5552
        %5554 = vrot.lane.b32.xlu0 %v4851, 126
        %v5555 = vpop.permute.xlu0 %5554
        %5556 = vrot.lane.b32.xlu0 %v4855, 126
        %v5557 = vpop.permute.xlu0 %5556
        %5558 = vrot.lane.b32.xlu0 %v4859, 126
        %v5559 = vpop.permute.xlu0 %5558
        %5560 = vrot.lane.b32.xlu0 %v4863, 126
        %v5561 = vpop.permute.xlu0 %5560
        %5562 = vrot.lane.b32.xlu0 %v4867, 126
        %v5563 = vpop.permute.xlu0 %5562
        %5564 = vrot.lane.b32.xlu0 %v4871, 126
        %v5565 = vpop.permute.xlu0 %5564
        %5566 = vrot.lane.b32.xlu0 %v4875, 126
        %v5567 = vpop.permute.xlu0 %5566
        %5568 = vrot.lane.b32.xlu0 %v4879, 126
        %v5569 = vpop.permute.xlu0 %5568
        %5570 = vrot.lane.b32.xlu0 %v4883, 126
        %v5571 = vpop.permute.xlu0 %5570
        %5572 = vrot.lane.b32.xlu0 %v4887, 126
        %v5573 = vpop.permute.xlu0 %5572
        %5574 = vrot.lane.b32.xlu0 %v4891, 126
        %v5575 = vpop.permute.xlu0 %5574
        %5576 = vrot.lane.b32.xlu0 %v4895, 126
        %v5577 = vpop.permute.xlu0 %5576
        %5578 = vrot.lane.b32.xlu0 %v4899, 126
        %v5579 = vpop.permute.xlu0 %5578
        %5580 = vrot.lane.b32.xlu0 %v4903, 126
        %v5581 = vpop.permute.xlu0 %5580
        %5582 = vrot.lane.b32.xlu0 %v4907, 126
        %v5583 = vpop.permute.xlu0 %5582
        %5584 = vrot.lane.b32.xlu0 %v4911, 126
        %v5585 = vpop.permute.xlu0 %5584
        %5586 = vrot.lane.b32.xlu0 %v4915, 126
        %v5587 = vpop.permute.xlu0 %5586
        %5588 = vrot.lane.b32.xlu0 %v4919, 126
        %v5589 = vpop.permute.xlu0 %5588
        %5590 = vrot.lane.b32.xlu0 %v4923, 126
        %v5591 = vpop.permute.xlu0 %5590
        %5592 = vrot.lane.b32.xlu0 %v4927, 126
        %v5593 = vpop.permute.xlu0 %5592
        %5594 = vrot.lane.b32.xlu0 %v4931, 126
        %v5595 = vpop.permute.xlu0 %5594
        %5596 = vrot.lane.b32.xlu0 %v4935, 126
        %v5597 = vpop.permute.xlu0 %5596
        %5598 = vrot.lane.b32.xlu0 %v4939, 126
        %v5599 = vpop.permute.xlu0 %5598
        %5600 = vrot.lane.b32.xlu0 %v4943, 126
        %v5601 = vpop.permute.xlu0 %5600
        %5602 = vrot.lane.b32.xlu0 %v4947, 126
        %v5603 = vpop.permute.xlu0 %5602
        %5604 = vrot.lane.b32.xlu0 %v4951, 126
        %v5605 = vpop.permute.xlu0 %5604
        %5606 = vrot.lane.b32.xlu0 %v4955, 126
        %v5607 = vpop.permute.xlu0 %5606
        %5608 = vrot.lane.b32.xlu0 %v4959, 126
        %v5609 = vpop.permute.xlu0 %5608
        %5610 = vrot.lane.b32.xlu0 %v4963, 126
        %v5611 = vpop.permute.xlu0 %5610
        %5612 = vrot.lane.b32.xlu0 %v4967, 126
        %v5613 = vpop.permute.xlu0 %5612
        %5614 = vrot.lane.b32.xlu0 %v4971, 126
        %v5615 = vpop.permute.xlu0 %5614
        %5616 = vrot.lane.b32.xlu0 %v4975, 126
        %v5617 = vpop.permute.xlu0 %5616
        %5618 = vrot.lane.b32.xlu0 %v4979, 126
        %v5619 = vpop.permute.xlu0 %5618
        %5620 = vrot.lane.b32.xlu0 %v4983, 126
        %v5621 = vpop.permute.xlu0 %5620
        %5622 = vrot.lane.b32.xlu0 %v4987, 126
        %v5623 = vpop.permute.xlu0 %5622
        %5624 = vrot.lane.b32.xlu0 %v4991, 126
        %v5625 = vpop.permute.xlu0 %5624
        %5626 = vrot.lane.b32.xlu0 %v4995, 126
        %v5627 = vpop.permute.xlu0 %5626
        %5628 = vrot.lane.b32.xlu0 %v4999, 126
        %v5629 = vpop.permute.xlu0 %5628
        %5630 = vrot.lane.b32.xlu0 %v5003, 126
        %v5631 = vpop.permute.xlu0 %5630
        %5632 = vrot.lane.b32.xlu0 %v5007, 126
        %v5633 = vpop.permute.xlu0 %5632
        %5634 = vrot.lane.b32.xlu0 %v5011, 126
        %v5635 = vpop.permute.xlu0 %5634
        %5636 = vrot.lane.b32.xlu0 %v5015, 126
        %v5637 = vpop.permute.xlu0 %5636
        %5638 = vrot.lane.b32.xlu0 %v5019, 126
        %v5639 = vpop.permute.xlu0 %5638
        %5640 = vrot.lane.b32.xlu0 %v5023, 126
        %v5641 = vpop.permute.xlu0 %5640
        %5642 = vrot.lane.b32.xlu0 %v5027, 126
        %v5643 = vpop.permute.xlu0 %5642
        %5644 = vrot.lane.b32.xlu0 %v5031, 126
        %v5645 = vpop.permute.xlu0 %5644
        %5646 = vrot.lane.b32.xlu0 %v5035, 126
        %v5647 = vpop.permute.xlu0 %5646
        %5648 = vrot.lane.b32.xlu0 %v5039, 126
        %v5649 = vpop.permute.xlu0 %5648
        %5650 = vrot.lane.b32.xlu0 %v5043, 126
        %v5651 = vpop.permute.xlu0 %5650
        %5652 = vrot.lane.b32.xlu0 %v5047, 126
        %v5653 = vpop.permute.xlu0 %5652
        %5654 = vrot.lane.b32.xlu0 %v5051, 126
        %v5655 = vpop.permute.xlu0 %5654
        %5656 = vrot.lane.b32.xlu0 %v5055, 126
        %v5657 = vpop.permute.xlu0 %5656
        %5658 = vrot.lane.b32.xlu0 %v5059, 126
        %v5659 = vpop.permute.xlu0 %5658
        %5660 = vrot.lane.b32.xlu0 %v5063, 126
        %v5661 = vpop.permute.xlu0 %5660
        %5662 = vrot.lane.b32.xlu0 %v5067, 126
        %v5663 = vpop.permute.xlu0 %5662
        %5664 = vrot.lane.b32.xlu0 %v5071, 126
        %v5665 = vpop.permute.xlu0 %5664
        %5666 = vrot.lane.b32.xlu0 %v5075, 126
        %v5667 = vpop.permute.xlu0 %5666
        %5668 = vrot.lane.b32.xlu0 %v5079, 126
        %v5669 = vpop.permute.xlu0 %5668
        %5670 = vrot.lane.b32.xlu0 %v5083, 126
        %v5671 = vpop.permute.xlu0 %5670
        %5672 = vrot.lane.b32.xlu0 %v5087, 126
        %v5673 = vpop.permute.xlu0 %5672
        %5674 = vrot.lane.b32.xlu0 %v5091, 126
        %v5675 = vpop.permute.xlu0 %5674
        %5676 = vrot.lane.b32.xlu0 %v5095, 126
        %v5677 = vpop.permute.xlu0 %5676
        %5678 = vrot.lane.b32.xlu0 %v5099, 126
        %v5679 = vpop.permute.xlu0 %5678
        %5680 = vrot.lane.b32.xlu0 %v5103, 126
        %v5681 = vpop.permute.xlu0 %5680
        %5682 = vrot.lane.b32.xlu0 %v5107, 126
        %v5683 = vpop.permute.xlu0 %5682
        %5684 = vrot.lane.b32.xlu0 %v5111, 126
        %v5685 = vpop.permute.xlu0 %5684
        %5686 = vrot.lane.b32.xlu0 %v5115, 126
        %v5687 = vpop.permute.xlu0 %5686
        %5688 = vrot.lane.b32.xlu0 %v5119, 126
        %v5689 = vpop.permute.xlu0 %5688
        %5690 = vrot.lane.b32.xlu0 %v5123, 126
        %v5691 = vpop.permute.xlu0 %5690
        %5692 = vrot.lane.b32.xlu0 %v5127, 126
        %v5693 = vpop.permute.xlu0 %5692
        %5694 = vrot.lane.b32.xlu0 %v5131, 126
        %v5695 = vpop.permute.xlu0 %5694
        %5696 = vrot.lane.b32.xlu0 %v5135, 126
        %v5697 = vpop.permute.xlu0 %5696
        %5698 = vrot.lane.b32.xlu0 %v5139, 126
        %v5699 = vpop.permute.xlu0 %5698
        %5700 = vrot.lane.b32.xlu0 %v5143, 126
        %v5701 = vpop.permute.xlu0 %5700
        %5702 = vrot.lane.b32.xlu0 %v5147, 126
        %v5703 = vpop.permute.xlu0 %5702
        %5704 = vrot.lane.b32.xlu0 %v5151, 126
        %v5705 = vpop.permute.xlu0 %5704
        %5706 = vrot.lane.b32.xlu0 %v5155, 126
        %v5707 = vpop.permute.xlu0 %5706
        %5708 = vrot.lane.b32.xlu0 %v5159, 126
        %v5709 = vpop.permute.xlu0 %5708
        %5710 = vrot.lane.b32.xlu0 %v5163, 126
        %v5711 = vpop.permute.xlu0 %5710
        %5712 = vrot.lane.b32.xlu0 %v5167, 126
        %v5713 = vpop.permute.xlu0 %5712
        %5714 = vrot.lane.b32.xlu0 %v5171, 126
        %v5715 = vpop.permute.xlu0 %5714
        %5716 = vrot.lane.b32.xlu0 %v5175, 126
        %v5717 = vpop.permute.xlu0 %5716
        %5718 = vrot.lane.b32.xlu0 %v5179, 126
        %v5719 = vpop.permute.xlu0 %5718
        %5720 = vrot.lane.b32.xlu0 %v5183, 126
        %v5721 = vpop.permute.xlu0 %5720
        %5722 = vrot.lane.b32.xlu0 %v5187, 126
        %v5723 = vpop.permute.xlu0 %5722
        %5724 = vrot.lane.b32.xlu0 %v5191, 126
        %v5725 = vpop.permute.xlu0 %5724
        %5726 = vrot.lane.b32.xlu0 %v5195, 126
        %v5727 = vpop.permute.xlu0 %5726
        %5728 = vrot.lane.b32.xlu0 %v5199, 126
        %v5729 = vpop.permute.xlu0 %5728
        %5730 = vrot.lane.b32.xlu0 %v5203, 126
        %v5731 = vpop.permute.xlu0 %5730
        %5732 = vrot.lane.b32.xlu0 %v5207, 126
        %v5733 = vpop.permute.xlu0 %5732
        %5734 = vrot.lane.b32.xlu0 %v5211, 126
        %v5735 = vpop.permute.xlu0 %5734
        %5736 = vrot.lane.b32.xlu0 %v5215, 126
        %v5737 = vpop.permute.xlu0 %5736
        %5738 = vrot.lane.b32.xlu0 %v5219, 126
        %v5739 = vpop.permute.xlu0 %5738
        %5740 = vrot.lane.b32.xlu0 %v5223, 126
        %v5741 = vpop.permute.xlu0 %5740
        %5742 = vrot.lane.b32.xlu0 %v5227, 126
        %v5743 = vpop.permute.xlu0 %5742
        %5744 = vrot.lane.b32.xlu0 %v5231, 126
        %v5745 = vpop.permute.xlu0 %5744
        %5746 = vrot.lane.b32.xlu0 %v5235, 126
        %v5747 = vpop.permute.xlu0 %5746
        %v6004 = vsel %vm632, %v2411, %v5237
        %v6005 = vsel %vm632, %v2425, %v5239
        %v6006 = vsel %vm632, %v2433, %v5241
        %v6007 = vsel %vm632, %v2435, %v5243
        %v6008 = vsel %vm632, %v2418, %v5245
        %v6009 = vsel %vm632, %v2432, %v5247
        %v6010 = vsel %vm632, %v2434, %v5249
        %v6011 = vsel %vm632, %v2436, %v5251
        %v6012 = vsel %vm632, %v2460, %v5253
        %v6013 = vsel %vm632, %v2474, %v5255
        %v6014 = vsel %vm632, %v2482, %v5257
        %v6015 = vsel %vm632, %v2484, %v5259
        %v6016 = vsel %vm632, %v2467, %v5261
        %v6017 = vsel %vm632, %v2481, %v5263
        %v6018 = vsel %vm632, %v2483, %v5265
        %v6019 = vsel %vm632, %v2485, %v5267
        %v6020 = vsel %vm632, %v2509, %v5269
        %v6021 = vsel %vm632, %v2523, %v5271
        %v6022 = vsel %vm632, %v2531, %v5273
        %v6023 = vsel %vm632, %v2533, %v5275
        %v6024 = vsel %vm632, %v2516, %v5277
        %v6025 = vsel %vm632, %v2530, %v5279
        %v6026 = vsel %vm632, %v2532, %v5281
        %v6027 = vsel %vm632, %v2534, %v5283
        %v6028 = vsel %vm632, %v2558, %v5285
        %v6029 = vsel %vm632, %v2572, %v5287
        %v6030 = vsel %vm632, %v2580, %v5289
        %v6031 = vsel %vm632, %v2582, %v5291
        %v6032 = vsel %vm632, %v2565, %v5293
        %v6033 = vsel %vm632, %v2579, %v5295
        %v6034 = vsel %vm632, %v2581, %v5297
        %v6035 = vsel %vm632, %v2583, %v5299
        %v6036 = vsel %vm632, %v2607, %v5301
        %v6037 = vsel %vm632, %v2621, %v5303
        %v6038 = vsel %vm632, %v2629, %v5305
        %v6039 = vsel %vm632, %v2631, %v5307
        %v6040 = vsel %vm632, %v2614, %v5309
        %v6041 = vsel %vm632, %v2628, %v5311
        %v6042 = vsel %vm632, %v2630, %v5313
        %v6043 = vsel %vm632, %v2632, %v5315
        %v6044 = vsel %vm632, %v2656, %v5317
        %v6045 = vsel %vm632, %v2670, %v5319
        %v6046 = vsel %vm632, %v2678, %v5321
        %v6047 = vsel %vm632, %v2680, %v5323
        %v6048 = vsel %vm632, %v2663, %v5325
        %v6049 = vsel %vm632, %v2677, %v5327
        %v6050 = vsel %vm632, %v2679, %v5329
        %v6051 = vsel %vm632, %v2681, %v5331
        %v6052 = vsel %vm632, %v2705, %v5333
        %v6053 = vsel %vm632, %v2719, %v5335
        %v6054 = vsel %vm632, %v2727, %v5337
        %v6055 = vsel %vm632, %v2729, %v5339
        %v6056 = vsel %vm632, %v2712, %v5341
        %v6057 = vsel %vm632, %v2726, %v5343
        %v6058 = vsel %vm632, %v2728, %v5345
        %v6059 = vsel %vm632, %v2730, %v5347
        %v6060 = vsel %vm632, %v2754, %v5349
        %v6061 = vsel %vm632, %v2768, %v5351
        %v6062 = vsel %vm632, %v2776, %v5353
        %v6063 = vsel %vm632, %v2778, %v5355
        %v6064 = vsel %vm632, %v2761, %v5357
        %v6065 = vsel %vm632, %v2775, %v5359
        %v6066 = vsel %vm632, %v2777, %v5361
        %v6067 = vsel %vm632, %v2779, %v5363
        %v6068 = vsel %vm632, %v2803, %v5365
        %v6069 = vsel %vm632, %v2817, %v5367
        %v6070 = vsel %vm632, %v2825, %v5369
        %v6071 = vsel %vm632, %v2827, %v5371
        %v6072 = vsel %vm632, %v2810, %v5373
        %v6073 = vsel %vm632, %v2824, %v5375
        %v6074 = vsel %vm632, %v2826, %v5377
        %v6075 = vsel %vm632, %v2828, %v5379
        %v6076 = vsel %vm632, %v2852, %v5381
        %v6077 = vsel %vm632, %v2866, %v5383
        %v6078 = vsel %vm632, %v2874, %v5385
        %v6079 = vsel %vm632, %v2876, %v5387
        %v6080 = vsel %vm632, %v2859, %v5389
        %v6081 = vsel %vm632, %v2873, %v5391
        %v6082 = vsel %vm632, %v2875, %v5393
        %v6083 = vsel %vm632, %v2877, %v5395
        %v6084 = vsel %vm632, %v2901, %v5397
        %v6085 = vsel %vm632, %v2915, %v5399
        %v6086 = vsel %vm632, %v2923, %v5401
        %v6087 = vsel %vm632, %v2925, %v5403
        %v6088 = vsel %vm632, %v2908, %v5405
        %v6089 = vsel %vm632, %v2922, %v5407
        %v6090 = vsel %vm632, %v2924, %v5409
        %v6091 = vsel %vm632, %v2926, %v5411
        %v6092 = vsel %vm632, %v2950, %v5413
        %v6093 = vsel %vm632, %v2964, %v5415
        %v6094 = vsel %vm632, %v2972, %v5417
        %v6095 = vsel %vm632, %v2974, %v5419
        %v6096 = vsel %vm632, %v2957, %v5421
        %v6097 = vsel %vm632, %v2971, %v5423
        %v6098 = vsel %vm632, %v2973, %v5425
        %v6099 = vsel %vm632, %v2975, %v5427
        %v6100 = vsel %vm632, %v2999, %v5429
        %v6101 = vsel %vm632, %v3013, %v5431
        %v6102 = vsel %vm632, %v3021, %v5433
        %v6103 = vsel %vm632, %v3023, %v5435
        %v6104 = vsel %vm632, %v3006, %v5437
        %v6105 = vsel %vm632, %v3020, %v5439
        %v6106 = vsel %vm632, %v3022, %v5441
        %v6107 = vsel %vm632, %v3024, %v5443
        %v6108 = vsel %vm632, %v3048, %v5445
        %v6109 = vsel %vm632, %v3062, %v5447
        %v6110 = vsel %vm632, %v3070, %v5449
        %v6111 = vsel %vm632, %v3072, %v5451
        %v6112 = vsel %vm632, %v3055, %v5453
        %v6113 = vsel %vm632, %v3069, %v5455
        %v6114 = vsel %vm632, %v3071, %v5457
        %v6115 = vsel %vm632, %v3073, %v5459
        %v6116 = vsel %vm632, %v3097, %v5461
        %v6117 = vsel %vm632, %v3111, %v5463
        %v6118 = vsel %vm632, %v3119, %v5465
        %v6119 = vsel %vm632, %v3121, %v5467
        %v6120 = vsel %vm632, %v3104, %v5469
        %v6121 = vsel %vm632, %v3118, %v5471
        %v6122 = vsel %vm632, %v3120, %v5473
        %v6123 = vsel %vm632, %v3122, %v5475
        %v6124 = vsel %vm632, %v3146, %v5477
        %v6125 = vsel %vm632, %v3160, %v5479
        %v6126 = vsel %vm632, %v3168, %v5481
        %v6127 = vsel %vm632, %v3170, %v5483
        %v6128 = vsel %vm632, %v3153, %v5485
        %v6129 = vsel %vm632, %v3167, %v5487
        %v6130 = vsel %vm632, %v3169, %v5489
        %v6131 = vsel %vm632, %v3171, %v5491
        %v6132 = vsel %vm632, %v3195, %v5493
        %v6133 = vsel %vm632, %v3209, %v5495
        %v6134 = vsel %vm632, %v3217, %v5497
        %v6135 = vsel %vm632, %v3219, %v5499
        %v6136 = vsel %vm632, %v3202, %v5501
        %v6137 = vsel %vm632, %v3216, %v5503
        %v6138 = vsel %vm632, %v3218, %v5505
        %v6139 = vsel %vm632, %v3220, %v5507
        %v6140 = vsel %vm632, %v3244, %v5509
        %v6141 = vsel %vm632, %v3258, %v5511
        %v6142 = vsel %vm632, %v3266, %v5513
        %v6143 = vsel %vm632, %v3268, %v5515
        %v6144 = vsel %vm632, %v3251, %v5517
        %v6145 = vsel %vm632, %v3265, %v5519
        %v6146 = vsel %vm632, %v3267, %v5521
        %v6147 = vsel %vm632, %v3269, %v5523
        %v6148 = vsel %vm632, %v3293, %v5525
        %v6149 = vsel %vm632, %v3307, %v5527
        %v6150 = vsel %vm632, %v3315, %v5529
        %v6151 = vsel %vm632, %v3317, %v5531
        %v6152 = vsel %vm632, %v3300, %v5533
        %v6153 = vsel %vm632, %v3314, %v5535
        %v6154 = vsel %vm632, %v3316, %v5537
        %v6155 = vsel %vm632, %v3318, %v5539
        %v6156 = vsel %vm632, %v3342, %v5541
        %v6157 = vsel %vm632, %v3356, %v5543
        %v6158 = vsel %vm632, %v3364, %v5545
        %v6159 = vsel %vm632, %v3366, %v5547
        %v6160 = vsel %vm632, %v3349, %v5549
        %v6161 = vsel %vm632, %v3363, %v5551
        %v6162 = vsel %vm632, %v3365, %v5553
        %v6163 = vsel %vm632, %v3367, %v5555
        %v6164 = vsel %vm632, %v3391, %v5557
        %v6165 = vsel %vm632, %v3405, %v5559
        %v6166 = vsel %vm632, %v3413, %v5561
        %v6167 = vsel %vm632, %v3415, %v5563
        %v6168 = vsel %vm632, %v3398, %v5565
        %v6169 = vsel %vm632, %v3412, %v5567
        %v6170 = vsel %vm632, %v3414, %v5569
        %v6171 = vsel %vm632, %v3416, %v5571
        %v6172 = vsel %vm632, %v3440, %v5573
        %v6173 = vsel %vm632, %v3454, %v5575
        %v6174 = vsel %vm632, %v3462, %v5577
        %v6175 = vsel %vm632, %v3464, %v5579
        %v6176 = vsel %vm632, %v3447, %v5581
        %v6177 = vsel %vm632, %v3461, %v5583
        %v6178 = vsel %vm632, %v3463, %v5585
        %v6179 = vsel %vm632, %v3465, %v5587
        %v6180 = vsel %vm632, %v3489, %v5589
        %v6181 = vsel %vm632, %v3503, %v5591
        %v6182 = vsel %vm632, %v3511, %v5593
        %v6183 = vsel %vm632, %v3513, %v5595
        %v6184 = vsel %vm632, %v3496, %v5597
        %v6185 = vsel %vm632, %v3510, %v5599
        %v6186 = vsel %vm632, %v3512, %v5601
        %v6187 = vsel %vm632, %v3514, %v5603
        %v6188 = vsel %vm632, %v3538, %v5605
        %v6189 = vsel %vm632, %v3552, %v5607
        %v6190 = vsel %vm632, %v3560, %v5609
        %v6191 = vsel %vm632, %v3562, %v5611
        %v6192 = vsel %vm632, %v3545, %v5613
        %v6193 = vsel %vm632, %v3559, %v5615
        %v6194 = vsel %vm632, %v3561, %v5617
        %v6195 = vsel %vm632, %v3563, %v5619
        %v6196 = vsel %vm632, %v3587, %v5621
        %v6197 = vsel %vm632, %v3601, %v5623
        %v6198 = vsel %vm632, %v3609, %v5625
        %v6199 = vsel %vm632, %v3611, %v5627
        %v6200 = vsel %vm632, %v3594, %v5629
        %v6201 = vsel %vm632, %v3608, %v5631
        %v6202 = vsel %vm632, %v3610, %v5633
        %v6203 = vsel %vm632, %v3612, %v5635
        %v6204 = vsel %vm632, %v3636, %v5637
        %v6205 = vsel %vm632, %v3650, %v5639
        %v6206 = vsel %vm632, %v3658, %v5641
        %v6207 = vsel %vm632, %v3660, %v5643
        %v6208 = vsel %vm632, %v3643, %v5645
        %v6209 = vsel %vm632, %v3657, %v5647
        %v6210 = vsel %vm632, %v3659, %v5649
        %v6211 = vsel %vm632, %v3661, %v5651
        %v6212 = vsel %vm632, %v3685, %v5653
        %v6213 = vsel %vm632, %v3699, %v5655
        %v6214 = vsel %vm632, %v3707, %v5657
        %v6215 = vsel %vm632, %v3709, %v5659
        %v6216 = vsel %vm632, %v3692, %v5661
        %v6217 = vsel %vm632, %v3706, %v5663
        %v6218 = vsel %vm632, %v3708, %v5665
        %v6219 = vsel %vm632, %v3710, %v5667
        %v6220 = vsel %vm632, %v3734, %v5669
        %v6221 = vsel %vm632, %v3748, %v5671
        %v6222 = vsel %vm632, %v3756, %v5673
        %v6223 = vsel %vm632, %v3758, %v5675
        %v6224 = vsel %vm632, %v3741, %v5677
        %v6225 = vsel %vm632, %v3755, %v5679
        %v6226 = vsel %vm632, %v3757, %v5681
        %v6227 = vsel %vm632, %v3759, %v5683
        %v6228 = vsel %vm632, %v3783, %v5685
        %v6229 = vsel %vm632, %v3797, %v5687
        %v6230 = vsel %vm632, %v3805, %v5689
        %v6231 = vsel %vm632, %v3807, %v5691
        %v6232 = vsel %vm632, %v3790, %v5693
        %v6233 = vsel %vm632, %v3804, %v5695
        %v6234 = vsel %vm632, %v3806, %v5697
        %v6235 = vsel %vm632, %v3808, %v5699
        %v6236 = vsel %vm632, %v3832, %v5701
        %v6237 = vsel %vm632, %v3846, %v5703
        %v6238 = vsel %vm632, %v3854, %v5705
        %v6239 = vsel %vm632, %v3856, %v5707
        %v6240 = vsel %vm632, %v3839, %v5709
        %v6241 = vsel %vm632, %v3853, %v5711
        %v6242 = vsel %vm632, %v3855, %v5713
        %v6243 = vsel %vm632, %v3857, %v5715
        %v6244 = vsel %vm632, %v3881, %v5717
        %v6245 = vsel %vm632, %v3895, %v5719
        %v6246 = vsel %vm632, %v3903, %v5721
        %v6247 = vsel %vm632, %v3905, %v5723
        %v6248 = vsel %vm632, %v3888, %v5725
        %v6249 = vsel %vm632, %v3902, %v5727
        %v6250 = vsel %vm632, %v3904, %v5729
        %v6251 = vsel %vm632, %v3906, %v5731
        %v6252 = vsel %vm632, %v3930, %v5733
        %v6253 = vsel %vm632, %v3944, %v5735
        %v6254 = vsel %vm632, %v3952, %v5737
        %v6255 = vsel %vm632, %v3954, %v5739
        %v6256 = vsel %vm632, %v3937, %v5741
        %v6257 = vsel %vm632, %v3951, %v5743
        %v6258 = vsel %vm632, %v3953, %v5745
        %v6259 = vsel %vm632, %v3955, %v5747
        %6516 = vrot.lane.b32.xlu0 %v6004, 124
        %v6517 = vpop.permute.xlu0 %6516
        %6518 = vrot.lane.b32.xlu0 %v6005, 124
        %v6519 = vpop.permute.xlu0 %6518
        %6520 = vrot.lane.b32.xlu0 %v6006, 124
        %v6521 = vpop.permute.xlu0 %6520
        %6522 = vrot.lane.b32.xlu0 %v6007, 124
        %v6523 = vpop.permute.xlu0 %6522
        %6524 = vrot.lane.b32.xlu0 %v6008, 124
        %v6525 = vpop.permute.xlu0 %6524
        %6526 = vrot.lane.b32.xlu0 %v6009, 124
        %v6527 = vpop.permute.xlu0 %6526
        %6528 = vrot.lane.b32.xlu0 %v6010, 124
        %v6529 = vpop.permute.xlu0 %6528
        %6530 = vrot.lane.b32.xlu0 %v6011, 124
        %v6531 = vpop.permute.xlu0 %6530
        %6532 = vrot.lane.b32.xlu0 %v6012, 124
        %v6533 = vpop.permute.xlu0 %6532
        %6534 = vrot.lane.b32.xlu0 %v6013, 124
        %v6535 = vpop.permute.xlu0 %6534
        %6536 = vrot.lane.b32.xlu0 %v6014, 124
        %v6537 = vpop.permute.xlu0 %6536
        %6538 = vrot.lane.b32.xlu0 %v6015, 124
        %v6539 = vpop.permute.xlu0 %6538
        %6540 = vrot.lane.b32.xlu0 %v6016, 124
        %v6541 = vpop.permute.xlu0 %6540
        %6542 = vrot.lane.b32.xlu0 %v6017, 124
        %v6543 = vpop.permute.xlu0 %6542
        %6544 = vrot.lane.b32.xlu0 %v6018, 124
        %v6545 = vpop.permute.xlu0 %6544
        %6546 = vrot.lane.b32.xlu0 %v6019, 124
        %v6547 = vpop.permute.xlu0 %6546
        %6548 = vrot.lane.b32.xlu0 %v6020, 124
        %v6549 = vpop.permute.xlu0 %6548
        %6550 = vrot.lane.b32.xlu0 %v6021, 124
        %v6551 = vpop.permute.xlu0 %6550
        %6552 = vrot.lane.b32.xlu0 %v6022, 124
        %v6553 = vpop.permute.xlu0 %6552
        %6554 = vrot.lane.b32.xlu0 %v6023, 124
        %v6555 = vpop.permute.xlu0 %6554
        %6556 = vrot.lane.b32.xlu0 %v6024, 124
        %v6557 = vpop.permute.xlu0 %6556
        %6558 = vrot.lane.b32.xlu0 %v6025, 124
        %v6559 = vpop.permute.xlu0 %6558
        %6560 = vrot.lane.b32.xlu0 %v6026, 124
        %v6561 = vpop.permute.xlu0 %6560
        %6562 = vrot.lane.b32.xlu0 %v6027, 124
        %v6563 = vpop.permute.xlu0 %6562
        %6564 = vrot.lane.b32.xlu0 %v6028, 124
        %v6565 = vpop.permute.xlu0 %6564
        %6566 = vrot.lane.b32.xlu0 %v6029, 124
        %v6567 = vpop.permute.xlu0 %6566
        %6568 = vrot.lane.b32.xlu0 %v6030, 124
        %v6569 = vpop.permute.xlu0 %6568
        %6570 = vrot.lane.b32.xlu0 %v6031, 124
        %v6571 = vpop.permute.xlu0 %6570
        %6572 = vrot.lane.b32.xlu0 %v6032, 124
        %v6573 = vpop.permute.xlu0 %6572
        %6574 = vrot.lane.b32.xlu0 %v6033, 124
        %v6575 = vpop.permute.xlu0 %6574
        %6576 = vrot.lane.b32.xlu0 %v6034, 124
        %v6577 = vpop.permute.xlu0 %6576
        %6578 = vrot.lane.b32.xlu0 %v6035, 124
        %v6579 = vpop.permute.xlu0 %6578
        %6580 = vrot.lane.b32.xlu0 %v6036, 124
        %v6581 = vpop.permute.xlu0 %6580
        %6582 = vrot.lane.b32.xlu0 %v6037, 124
        %v6583 = vpop.permute.xlu0 %6582
        %6584 = vrot.lane.b32.xlu0 %v6038, 124
        %v6585 = vpop.permute.xlu0 %6584
        %6586 = vrot.lane.b32.xlu0 %v6039, 124
        %v6587 = vpop.permute.xlu0 %6586
        %6588 = vrot.lane.b32.xlu0 %v6040, 124
        %v6589 = vpop.permute.xlu0 %6588
        %6590 = vrot.lane.b32.xlu0 %v6041, 124
        %v6591 = vpop.permute.xlu0 %6590
        %6592 = vrot.lane.b32.xlu0 %v6042, 124
        %v6593 = vpop.permute.xlu0 %6592
        %6594 = vrot.lane.b32.xlu0 %v6043, 124
        %v6595 = vpop.permute.xlu0 %6594
        %6596 = vrot.lane.b32.xlu0 %v6044, 124
        %v6597 = vpop.permute.xlu0 %6596
        %6598 = vrot.lane.b32.xlu0 %v6045, 124
        %v6599 = vpop.permute.xlu0 %6598
        %6600 = vrot.lane.b32.xlu0 %v6046, 124
        %v6601 = vpop.permute.xlu0 %6600
        %6602 = vrot.lane.b32.xlu0 %v6047, 124
        %v6603 = vpop.permute.xlu0 %6602
        %6604 = vrot.lane.b32.xlu0 %v6048, 124
        %v6605 = vpop.permute.xlu0 %6604
        %6606 = vrot.lane.b32.xlu0 %v6049, 124
        %v6607 = vpop.permute.xlu0 %6606
        %6608 = vrot.lane.b32.xlu0 %v6050, 124
        %v6609 = vpop.permute.xlu0 %6608
        %6610 = vrot.lane.b32.xlu0 %v6051, 124
        %v6611 = vpop.permute.xlu0 %6610
        %6612 = vrot.lane.b32.xlu0 %v6052, 124
        %v6613 = vpop.permute.xlu0 %6612
        %6614 = vrot.lane.b32.xlu0 %v6053, 124
        %v6615 = vpop.permute.xlu0 %6614
        %6616 = vrot.lane.b32.xlu0 %v6054, 124
        %v6617 = vpop.permute.xlu0 %6616
        %6618 = vrot.lane.b32.xlu0 %v6055, 124
        %v6619 = vpop.permute.xlu0 %6618
        %6620 = vrot.lane.b32.xlu0 %v6056, 124
        %v6621 = vpop.permute.xlu0 %6620
        %6622 = vrot.lane.b32.xlu0 %v6057, 124
        %v6623 = vpop.permute.xlu0 %6622
        %6624 = vrot.lane.b32.xlu0 %v6058, 124
        %v6625 = vpop.permute.xlu0 %6624
        %6626 = vrot.lane.b32.xlu0 %v6059, 124
        %v6627 = vpop.permute.xlu0 %6626
        %6628 = vrot.lane.b32.xlu0 %v6060, 124
        %v6629 = vpop.permute.xlu0 %6628
        %6630 = vrot.lane.b32.xlu0 %v6061, 124
        %v6631 = vpop.permute.xlu0 %6630
        %6632 = vrot.lane.b32.xlu0 %v6062, 124
        %v6633 = vpop.permute.xlu0 %6632
        %6634 = vrot.lane.b32.xlu0 %v6063, 124
        %v6635 = vpop.permute.xlu0 %6634
        %6636 = vrot.lane.b32.xlu0 %v6064, 124
        %v6637 = vpop.permute.xlu0 %6636
        %6638 = vrot.lane.b32.xlu0 %v6065, 124
        %v6639 = vpop.permute.xlu0 %6638
        %6640 = vrot.lane.b32.xlu0 %v6066, 124
        %v6641 = vpop.permute.xlu0 %6640
        %6642 = vrot.lane.b32.xlu0 %v6067, 124
        %v6643 = vpop.permute.xlu0 %6642
        %6644 = vrot.lane.b32.xlu0 %v6068, 124
        %v6645 = vpop.permute.xlu0 %6644
        %6646 = vrot.lane.b32.xlu0 %v6069, 124
        %v6647 = vpop.permute.xlu0 %6646
        %6648 = vrot.lane.b32.xlu0 %v6070, 124
        %v6649 = vpop.permute.xlu0 %6648
        %6650 = vrot.lane.b32.xlu0 %v6071, 124
        %v6651 = vpop.permute.xlu0 %6650
        %6652 = vrot.lane.b32.xlu0 %v6072, 124
        %v6653 = vpop.permute.xlu0 %6652
        %6654 = vrot.lane.b32.xlu0 %v6073, 124
        %v6655 = vpop.permute.xlu0 %6654
        %6656 = vrot.lane.b32.xlu0 %v6074, 124
        %v6657 = vpop.permute.xlu0 %6656
        %6658 = vrot.lane.b32.xlu0 %v6075, 124
        %v6659 = vpop.permute.xlu0 %6658
        %6660 = vrot.lane.b32.xlu0 %v6076, 124
        %v6661 = vpop.permute.xlu0 %6660
        %6662 = vrot.lane.b32.xlu0 %v6077, 124
        %v6663 = vpop.permute.xlu0 %6662
        %6664 = vrot.lane.b32.xlu0 %v6078, 124
        %v6665 = vpop.permute.xlu0 %6664
        %6666 = vrot.lane.b32.xlu0 %v6079, 124
        %v6667 = vpop.permute.xlu0 %6666
        %6668 = vrot.lane.b32.xlu0 %v6080, 124
        %v6669 = vpop.permute.xlu0 %6668
        %6670 = vrot.lane.b32.xlu0 %v6081, 124
        %v6671 = vpop.permute.xlu0 %6670
        %6672 = vrot.lane.b32.xlu0 %v6082, 124
        %v6673 = vpop.permute.xlu0 %6672
        %6674 = vrot.lane.b32.xlu0 %v6083, 124
        %v6675 = vpop.permute.xlu0 %6674
        %6676 = vrot.lane.b32.xlu0 %v6084, 124
        %v6677 = vpop.permute.xlu0 %6676
        %6678 = vrot.lane.b32.xlu0 %v6085, 124
        %v6679 = vpop.permute.xlu0 %6678
        %6680 = vrot.lane.b32.xlu0 %v6086, 124
        %v6681 = vpop.permute.xlu0 %6680
        %6682 = vrot.lane.b32.xlu0 %v6087, 124
        %v6683 = vpop.permute.xlu0 %6682
        %6684 = vrot.lane.b32.xlu0 %v6088, 124
        %v6685 = vpop.permute.xlu0 %6684
        %6686 = vrot.lane.b32.xlu0 %v6089, 124
        %v6687 = vpop.permute.xlu0 %6686
        %6688 = vrot.lane.b32.xlu0 %v6090, 124
        %v6689 = vpop.permute.xlu0 %6688
        %6690 = vrot.lane.b32.xlu0 %v6091, 124
        %v6691 = vpop.permute.xlu0 %6690
        %6692 = vrot.lane.b32.xlu0 %v6092, 124
        %v6693 = vpop.permute.xlu0 %6692
        %6694 = vrot.lane.b32.xlu0 %v6093, 124
        %v6695 = vpop.permute.xlu0 %6694
        %6696 = vrot.lane.b32.xlu0 %v6094, 124
        %v6697 = vpop.permute.xlu0 %6696
        %6698 = vrot.lane.b32.xlu0 %v6095, 124
        %v6699 = vpop.permute.xlu0 %6698
        %6700 = vrot.lane.b32.xlu0 %v6096, 124
        %v6701 = vpop.permute.xlu0 %6700
        %6702 = vrot.lane.b32.xlu0 %v6097, 124
        %v6703 = vpop.permute.xlu0 %6702
        %6704 = vrot.lane.b32.xlu0 %v6098, 124
        %v6705 = vpop.permute.xlu0 %6704
        %6706 = vrot.lane.b32.xlu0 %v6099, 124
        %v6707 = vpop.permute.xlu0 %6706
        %6708 = vrot.lane.b32.xlu0 %v6100, 124
        %v6709 = vpop.permute.xlu0 %6708
        %6710 = vrot.lane.b32.xlu0 %v6101, 124
        %v6711 = vpop.permute.xlu0 %6710
        %6712 = vrot.lane.b32.xlu0 %v6102, 124
        %v6713 = vpop.permute.xlu0 %6712
        %6714 = vrot.lane.b32.xlu0 %v6103, 124
        %v6715 = vpop.permute.xlu0 %6714
        %6716 = vrot.lane.b32.xlu0 %v6104, 124
        %v6717 = vpop.permute.xlu0 %6716
        %6718 = vrot.lane.b32.xlu0 %v6105, 124
        %v6719 = vpop.permute.xlu0 %6718
        %6720 = vrot.lane.b32.xlu0 %v6106, 124
        %v6721 = vpop.permute.xlu0 %6720
        %6722 = vrot.lane.b32.xlu0 %v6107, 124
        %v6723 = vpop.permute.xlu0 %6722
        %6724 = vrot.lane.b32.xlu0 %v6108, 124
        %v6725 = vpop.permute.xlu0 %6724
        %6726 = vrot.lane.b32.xlu0 %v6109, 124
        %v6727 = vpop.permute.xlu0 %6726
        %6728 = vrot.lane.b32.xlu0 %v6110, 124
        %v6729 = vpop.permute.xlu0 %6728
        %6730 = vrot.lane.b32.xlu0 %v6111, 124
        %v6731 = vpop.permute.xlu0 %6730
        %6732 = vrot.lane.b32.xlu0 %v6112, 124
        %v6733 = vpop.permute.xlu0 %6732
        %6734 = vrot.lane.b32.xlu0 %v6113, 124
        %v6735 = vpop.permute.xlu0 %6734
        %6736 = vrot.lane.b32.xlu0 %v6114, 124
        %v6737 = vpop.permute.xlu0 %6736
        %6738 = vrot.lane.b32.xlu0 %v6115, 124
        %v6739 = vpop.permute.xlu0 %6738
        %6740 = vrot.lane.b32.xlu0 %v6116, 124
        %v6741 = vpop.permute.xlu0 %6740
        %6742 = vrot.lane.b32.xlu0 %v6117, 124
        %v6743 = vpop.permute.xlu0 %6742
        %6744 = vrot.lane.b32.xlu0 %v6118, 124
        %v6745 = vpop.permute.xlu0 %6744
        %6746 = vrot.lane.b32.xlu0 %v6119, 124
        %v6747 = vpop.permute.xlu0 %6746
        %6748 = vrot.lane.b32.xlu0 %v6120, 124
        %v6749 = vpop.permute.xlu0 %6748
        %6750 = vrot.lane.b32.xlu0 %v6121, 124
        %v6751 = vpop.permute.xlu0 %6750
        %6752 = vrot.lane.b32.xlu0 %v6122, 124
        %v6753 = vpop.permute.xlu0 %6752
        %6754 = vrot.lane.b32.xlu0 %v6123, 124
        %v6755 = vpop.permute.xlu0 %6754
        %6756 = vrot.lane.b32.xlu0 %v6124, 124
        %v6757 = vpop.permute.xlu0 %6756
        %6758 = vrot.lane.b32.xlu0 %v6125, 124
        %v6759 = vpop.permute.xlu0 %6758
        %6760 = vrot.lane.b32.xlu0 %v6126, 124
        %v6761 = vpop.permute.xlu0 %6760
        %6762 = vrot.lane.b32.xlu0 %v6127, 124
        %v6763 = vpop.permute.xlu0 %6762
        %6764 = vrot.lane.b32.xlu0 %v6128, 124
        %v6765 = vpop.permute.xlu0 %6764
        %6766 = vrot.lane.b32.xlu0 %v6129, 124
        %v6767 = vpop.permute.xlu0 %6766
        %6768 = vrot.lane.b32.xlu0 %v6130, 124
        %v6769 = vpop.permute.xlu0 %6768
        %6770 = vrot.lane.b32.xlu0 %v6131, 124
        %v6771 = vpop.permute.xlu0 %6770
        %6772 = vrot.lane.b32.xlu0 %v6132, 124
        %v6773 = vpop.permute.xlu0 %6772
        %6774 = vrot.lane.b32.xlu0 %v6133, 124
        %v6775 = vpop.permute.xlu0 %6774
        %6776 = vrot.lane.b32.xlu0 %v6134, 124
        %v6777 = vpop.permute.xlu0 %6776
        %6778 = vrot.lane.b32.xlu0 %v6135, 124
        %v6779 = vpop.permute.xlu0 %6778
        %6780 = vrot.lane.b32.xlu0 %v6136, 124
        %v6781 = vpop.permute.xlu0 %6780
        %6782 = vrot.lane.b32.xlu0 %v6137, 124
        %v6783 = vpop.permute.xlu0 %6782
        %6784 = vrot.lane.b32.xlu0 %v6138, 124
        %v6785 = vpop.permute.xlu0 %6784
        %6786 = vrot.lane.b32.xlu0 %v6139, 124
        %v6787 = vpop.permute.xlu0 %6786
        %6788 = vrot.lane.b32.xlu0 %v6140, 124
        %v6789 = vpop.permute.xlu0 %6788
        %6790 = vrot.lane.b32.xlu0 %v6141, 124
        %v6791 = vpop.permute.xlu0 %6790
        %6792 = vrot.lane.b32.xlu0 %v6142, 124
        %v6793 = vpop.permute.xlu0 %6792
        %6794 = vrot.lane.b32.xlu0 %v6143, 124
        %v6795 = vpop.permute.xlu0 %6794
        %6796 = vrot.lane.b32.xlu0 %v6144, 124
        %v6797 = vpop.permute.xlu0 %6796
        %6798 = vrot.lane.b32.xlu0 %v6145, 124
        %v6799 = vpop.permute.xlu0 %6798
        %6800 = vrot.lane.b32.xlu0 %v6146, 124
        %v6801 = vpop.permute.xlu0 %6800
        %6802 = vrot.lane.b32.xlu0 %v6147, 124
        %v6803 = vpop.permute.xlu0 %6802
        %6804 = vrot.lane.b32.xlu0 %v6148, 124
        %v6805 = vpop.permute.xlu0 %6804
        %6806 = vrot.lane.b32.xlu0 %v6149, 124
        %v6807 = vpop.permute.xlu0 %6806
        %6808 = vrot.lane.b32.xlu0 %v6150, 124
        %v6809 = vpop.permute.xlu0 %6808
        %6810 = vrot.lane.b32.xlu0 %v6151, 124
        %v6811 = vpop.permute.xlu0 %6810
        %6812 = vrot.lane.b32.xlu0 %v6152, 124
        %v6813 = vpop.permute.xlu0 %6812
        %6814 = vrot.lane.b32.xlu0 %v6153, 124
        %v6815 = vpop.permute.xlu0 %6814
        %6816 = vrot.lane.b32.xlu0 %v6154, 124
        %v6817 = vpop.permute.xlu0 %6816
        %6818 = vrot.lane.b32.xlu0 %v6155, 124
        %v6819 = vpop.permute.xlu0 %6818
        %6820 = vrot.lane.b32.xlu0 %v6156, 124
        %v6821 = vpop.permute.xlu0 %6820
        %6822 = vrot.lane.b32.xlu0 %v6157, 124
        %v6823 = vpop.permute.xlu0 %6822
        %6824 = vrot.lane.b32.xlu0 %v6158, 124
        %v6825 = vpop.permute.xlu0 %6824
        %6826 = vrot.lane.b32.xlu0 %v6159, 124
        %v6827 = vpop.permute.xlu0 %6826
        %6828 = vrot.lane.b32.xlu0 %v6160, 124
        %v6829 = vpop.permute.xlu0 %6828
        %6830 = vrot.lane.b32.xlu0 %v6161, 124
        %v6831 = vpop.permute.xlu0 %6830
        %6832 = vrot.lane.b32.xlu0 %v6162, 124
        %v6833 = vpop.permute.xlu0 %6832
        %6834 = vrot.lane.b32.xlu0 %v6163, 124
        %v6835 = vpop.permute.xlu0 %6834
        %6836 = vrot.lane.b32.xlu0 %v6164, 124
        %v6837 = vpop.permute.xlu0 %6836
        %6838 = vrot.lane.b32.xlu0 %v6165, 124
        %v6839 = vpop.permute.xlu0 %6838
        %6840 = vrot.lane.b32.xlu0 %v6166, 124
        %v6841 = vpop.permute.xlu0 %6840
        %6842 = vrot.lane.b32.xlu0 %v6167, 124
        %v6843 = vpop.permute.xlu0 %6842
        %6844 = vrot.lane.b32.xlu0 %v6168, 124
        %v6845 = vpop.permute.xlu0 %6844
        %6846 = vrot.lane.b32.xlu0 %v6169, 124
        %v6847 = vpop.permute.xlu0 %6846
        %6848 = vrot.lane.b32.xlu0 %v6170, 124
        %v6849 = vpop.permute.xlu0 %6848
        %6850 = vrot.lane.b32.xlu0 %v6171, 124
        %v6851 = vpop.permute.xlu0 %6850
        %6852 = vrot.lane.b32.xlu0 %v6172, 124
        %v6853 = vpop.permute.xlu0 %6852
        %6854 = vrot.lane.b32.xlu0 %v6173, 124
        %v6855 = vpop.permute.xlu0 %6854
        %6856 = vrot.lane.b32.xlu0 %v6174, 124
        %v6857 = vpop.permute.xlu0 %6856
        %6858 = vrot.lane.b32.xlu0 %v6175, 124
        %v6859 = vpop.permute.xlu0 %6858
        %6860 = vrot.lane.b32.xlu0 %v6176, 124
        %v6861 = vpop.permute.xlu0 %6860
        %6862 = vrot.lane.b32.xlu0 %v6177, 124
        %v6863 = vpop.permute.xlu0 %6862
        %6864 = vrot.lane.b32.xlu0 %v6178, 124
        %v6865 = vpop.permute.xlu0 %6864
        %6866 = vrot.lane.b32.xlu0 %v6179, 124
        %v6867 = vpop.permute.xlu0 %6866
        %6868 = vrot.lane.b32.xlu0 %v6180, 124
        %v6869 = vpop.permute.xlu0 %6868
        %6870 = vrot.lane.b32.xlu0 %v6181, 124
        %v6871 = vpop.permute.xlu0 %6870
        %6872 = vrot.lane.b32.xlu0 %v6182, 124
        %v6873 = vpop.permute.xlu0 %6872
        %6874 = vrot.lane.b32.xlu0 %v6183, 124
        %v6875 = vpop.permute.xlu0 %6874
        %6876 = vrot.lane.b32.xlu0 %v6184, 124
        %v6877 = vpop.permute.xlu0 %6876
        %6878 = vrot.lane.b32.xlu0 %v6185, 124
        %v6879 = vpop.permute.xlu0 %6878
        %6880 = vrot.lane.b32.xlu0 %v6186, 124
        %v6881 = vpop.permute.xlu0 %6880
        %6882 = vrot.lane.b32.xlu0 %v6187, 124
        %v6883 = vpop.permute.xlu0 %6882
        %6884 = vrot.lane.b32.xlu0 %v6188, 124
        %v6885 = vpop.permute.xlu0 %6884
        %6886 = vrot.lane.b32.xlu0 %v6189, 124
        %v6887 = vpop.permute.xlu0 %6886
        %6888 = vrot.lane.b32.xlu0 %v6190, 124
        %v6889 = vpop.permute.xlu0 %6888
        %6890 = vrot.lane.b32.xlu0 %v6191, 124
        %v6891 = vpop.permute.xlu0 %6890
        %6892 = vrot.lane.b32.xlu0 %v6192, 124
        %v6893 = vpop.permute.xlu0 %6892
        %6894 = vrot.lane.b32.xlu0 %v6193, 124
        %v6895 = vpop.permute.xlu0 %6894
        %6896 = vrot.lane.b32.xlu0 %v6194, 124
        %v6897 = vpop.permute.xlu0 %6896
        %6898 = vrot.lane.b32.xlu0 %v6195, 124
        %v6899 = vpop.permute.xlu0 %6898
        %6900 = vrot.lane.b32.xlu0 %v6196, 124
        %v6901 = vpop.permute.xlu0 %6900
        %6902 = vrot.lane.b32.xlu0 %v6197, 124
        %v6903 = vpop.permute.xlu0 %6902
        %6904 = vrot.lane.b32.xlu0 %v6198, 124
        %v6905 = vpop.permute.xlu0 %6904
        %6906 = vrot.lane.b32.xlu0 %v6199, 124
        %v6907 = vpop.permute.xlu0 %6906
        %6908 = vrot.lane.b32.xlu0 %v6200, 124
        %v6909 = vpop.permute.xlu0 %6908
        %6910 = vrot.lane.b32.xlu0 %v6201, 124
        %v6911 = vpop.permute.xlu0 %6910
        %6912 = vrot.lane.b32.xlu0 %v6202, 124
        %v6913 = vpop.permute.xlu0 %6912
        %6914 = vrot.lane.b32.xlu0 %v6203, 124
        %v6915 = vpop.permute.xlu0 %6914
        %6916 = vrot.lane.b32.xlu0 %v6204, 124
        %v6917 = vpop.permute.xlu0 %6916
        %6918 = vrot.lane.b32.xlu0 %v6205, 124
        %v6919 = vpop.permute.xlu0 %6918
        %6920 = vrot.lane.b32.xlu0 %v6206, 124
        %v6921 = vpop.permute.xlu0 %6920
        %6922 = vrot.lane.b32.xlu0 %v6207, 124
        %v6923 = vpop.permute.xlu0 %6922
        %6924 = vrot.lane.b32.xlu0 %v6208, 124
        %v6925 = vpop.permute.xlu0 %6924
        %6926 = vrot.lane.b32.xlu0 %v6209, 124
        %v6927 = vpop.permute.xlu0 %6926
        %6928 = vrot.lane.b32.xlu0 %v6210, 124
        %v6929 = vpop.permute.xlu0 %6928
        %6930 = vrot.lane.b32.xlu0 %v6211, 124
        %v6931 = vpop.permute.xlu0 %6930
        %6932 = vrot.lane.b32.xlu0 %v6212, 124
        %v6933 = vpop.permute.xlu0 %6932
        %6934 = vrot.lane.b32.xlu0 %v6213, 124
        %v6935 = vpop.permute.xlu0 %6934
        %6936 = vrot.lane.b32.xlu0 %v6214, 124
        %v6937 = vpop.permute.xlu0 %6936
        %6938 = vrot.lane.b32.xlu0 %v6215, 124
        %v6939 = vpop.permute.xlu0 %6938
        %6940 = vrot.lane.b32.xlu0 %v6216, 124
        %v6941 = vpop.permute.xlu0 %6940
        %6942 = vrot.lane.b32.xlu0 %v6217, 124
        %v6943 = vpop.permute.xlu0 %6942
        %6944 = vrot.lane.b32.xlu0 %v6218, 124
        %v6945 = vpop.permute.xlu0 %6944
        %6946 = vrot.lane.b32.xlu0 %v6219, 124
        %v6947 = vpop.permute.xlu0 %6946
        %6948 = vrot.lane.b32.xlu0 %v6220, 124
        %v6949 = vpop.permute.xlu0 %6948
        %6950 = vrot.lane.b32.xlu0 %v6221, 124
        %v6951 = vpop.permute.xlu0 %6950
        %6952 = vrot.lane.b32.xlu0 %v6222, 124
        %v6953 = vpop.permute.xlu0 %6952
        %6954 = vrot.lane.b32.xlu0 %v6223, 124
        %v6955 = vpop.permute.xlu0 %6954
        %6956 = vrot.lane.b32.xlu0 %v6224, 124
        %v6957 = vpop.permute.xlu0 %6956
        %6958 = vrot.lane.b32.xlu0 %v6225, 124
        %v6959 = vpop.permute.xlu0 %6958
        %6960 = vrot.lane.b32.xlu0 %v6226, 124
        %v6961 = vpop.permute.xlu0 %6960
        %6962 = vrot.lane.b32.xlu0 %v6227, 124
        %v6963 = vpop.permute.xlu0 %6962
        %6964 = vrot.lane.b32.xlu0 %v6228, 124
        %v6965 = vpop.permute.xlu0 %6964
        %6966 = vrot.lane.b32.xlu0 %v6229, 124
        %v6967 = vpop.permute.xlu0 %6966
        %6968 = vrot.lane.b32.xlu0 %v6230, 124
        %v6969 = vpop.permute.xlu0 %6968
        %6970 = vrot.lane.b32.xlu0 %v6231, 124
        %v6971 = vpop.permute.xlu0 %6970
        %6972 = vrot.lane.b32.xlu0 %v6232, 124
        %v6973 = vpop.permute.xlu0 %6972
        %6974 = vrot.lane.b32.xlu0 %v6233, 124
        %v6975 = vpop.permute.xlu0 %6974
        %6976 = vrot.lane.b32.xlu0 %v6234, 124
        %v6977 = vpop.permute.xlu0 %6976
        %6978 = vrot.lane.b32.xlu0 %v6235, 124
        %v6979 = vpop.permute.xlu0 %6978
        %6980 = vrot.lane.b32.xlu0 %v6236, 124
        %v6981 = vpop.permute.xlu0 %6980
        %6982 = vrot.lane.b32.xlu0 %v6237, 124
        %v6983 = vpop.permute.xlu0 %6982
        %6984 = vrot.lane.b32.xlu0 %v6238, 124
        %v6985 = vpop.permute.xlu0 %6984
        %6986 = vrot.lane.b32.xlu0 %v6239, 124
        %v6987 = vpop.permute.xlu0 %6986
        %6988 = vrot.lane.b32.xlu0 %v6240, 124
        %v6989 = vpop.permute.xlu0 %6988
        %6990 = vrot.lane.b32.xlu0 %v6241, 124
        %v6991 = vpop.permute.xlu0 %6990
        %6992 = vrot.lane.b32.xlu0 %v6242, 124
        %v6993 = vpop.permute.xlu0 %6992
        %6994 = vrot.lane.b32.xlu0 %v6243, 124
        %v6995 = vpop.permute.xlu0 %6994
        %6996 = vrot.lane.b32.xlu0 %v6244, 124
        %v6997 = vpop.permute.xlu0 %6996
        %6998 = vrot.lane.b32.xlu0 %v6245, 124
        %v6999 = vpop.permute.xlu0 %6998
        %7000 = vrot.lane.b32.xlu0 %v6246, 124
        %v7001 = vpop.permute.xlu0 %7000
        %7002 = vrot.lane.b32.xlu0 %v6247, 124
        %v7003 = vpop.permute.xlu0 %7002
        %7004 = vrot.lane.b32.xlu0 %v6248, 124
        %v7005 = vpop.permute.xlu0 %7004
        %7006 = vrot.lane.b32.xlu0 %v6249, 124
        %v7007 = vpop.permute.xlu0 %7006
        %7008 = vrot.lane.b32.xlu0 %v6250, 124
        %v7009 = vpop.permute.xlu0 %7008
        %7010 = vrot.lane.b32.xlu0 %v6251, 124
        %v7011 = vpop.permute.xlu0 %7010
        %7012 = vrot.lane.b32.xlu0 %v6252, 124
        %v7013 = vpop.permute.xlu0 %7012
        %7014 = vrot.lane.b32.xlu0 %v6253, 124
        %v7015 = vpop.permute.xlu0 %7014
        %7016 = vrot.lane.b32.xlu0 %v6254, 124
        %v7017 = vpop.permute.xlu0 %7016
        %7018 = vrot.lane.b32.xlu0 %v6255, 124
        %v7019 = vpop.permute.xlu0 %7018
        %7020 = vrot.lane.b32.xlu0 %v6256, 124
        %v7021 = vpop.permute.xlu0 %7020
        %7022 = vrot.lane.b32.xlu0 %v6257, 124
        %v7023 = vpop.permute.xlu0 %7022
        %7024 = vrot.lane.b32.xlu0 %v6258, 124
        %v7025 = vpop.permute.xlu0 %7024
        %7026 = vrot.lane.b32.xlu0 %v6259, 124
        %v7027 = vpop.permute.xlu0 %7026
        %v7028 = vcombine.low %v6004, %v6005
        %v7029 = vcombine.low %v6006, %v6007
        %v7031 = vunpack.c.l.s4 1983009808
        %v7032 = vunpack.c.0.s8 %v7031
        %v7033 = vlaneseq
        %v7034 = vshrl.u32 %v7033, 7
        %v7035 = vsub.s32 %v7032, %v7034
        %v7036 = vrot.slane %v7028, %v7035
        %v7038 = vunpack.c.l.s4 1983009808
        %v7039 = vunpack.c.0.s8 %v7038
        %v7040 = vlaneseq
        %v7041 = vshrl.u32 %v7040, 7
        %v7042 = vsub.s32 %v7039, %v7041
        %v7043 = vrot.slane %v7029, %v7042
        %v7044 = vcombine.low %v7036, %v7043
        %v7045 = vcombine.low %v6008, %v6009
        %v7046 = vcombine.low %v6010, %v6011
        %v7048 = vunpack.c.l.s4 1983009808
        %v7049 = vunpack.c.0.s8 %v7048
        %v7050 = vlaneseq
        %v7051 = vshrl.u32 %v7050, 7
        %v7052 = vsub.s32 %v7049, %v7051
        %v7053 = vrot.slane %v7045, %v7052
        %v7055 = vunpack.c.l.s4 1983009808
        %v7056 = vunpack.c.0.s8 %v7055
        %v7057 = vlaneseq
        %v7058 = vshrl.u32 %v7057, 7
        %v7059 = vsub.s32 %v7056, %v7058
        %v7060 = vrot.slane %v7046, %v7059
        %v7061 = vcombine.low %v7053, %v7060
        %v7062 = vcombine.low %v6012, %v6013
        %v7063 = vcombine.low %v6014, %v6015
        %v7065 = vunpack.c.l.s4 1983009808
        %v7066 = vunpack.c.0.s8 %v7065
        %v7067 = vlaneseq
        %v7068 = vshrl.u32 %v7067, 7
        %v7069 = vsub.s32 %v7066, %v7068
        %v7070 = vrot.slane %v7062, %v7069
        %v7072 = vunpack.c.l.s4 1983009808
        %v7073 = vunpack.c.0.s8 %v7072
        %v7074 = vlaneseq
        %v7075 = vshrl.u32 %v7074, 7
        %v7076 = vsub.s32 %v7073, %v7075
        %v7077 = vrot.slane %v7063, %v7076
        %v7078 = vcombine.low %v7070, %v7077
        %v7079 = vcombine.low %v6016, %v6017
        %v7080 = vcombine.low %v6018, %v6019
        %v7082 = vunpack.c.l.s4 1983009808
        %v7083 = vunpack.c.0.s8 %v7082
        %v7084 = vlaneseq
        %v7085 = vshrl.u32 %v7084, 7
        %v7086 = vsub.s32 %v7083, %v7085
        %v7087 = vrot.slane %v7079, %v7086
        %v7089 = vunpack.c.l.s4 1983009808
        %v7090 = vunpack.c.0.s8 %v7089
        %v7091 = vlaneseq
        %v7092 = vshrl.u32 %v7091, 7
        %v7093 = vsub.s32 %v7090, %v7092
        %v7094 = vrot.slane %v7080, %v7093
        %v7095 = vcombine.low %v7087, %v7094
        %v7096 = vcombine.low %v6517, %v6519
        %v7097 = vcombine.low %v6521, %v6523
        %v7099 = vunpack.c.l.s4 1983009808
        %v7100 = vunpack.c.0.s8 %v7099
        %v7101 = vlaneseq
        %v7102 = vshrl.u32 %v7101, 7
        %v7103 = vsub.s32 %v7100, %v7102
        %v7104 = vrot.slane %v7096, %v7103
        %v7106 = vunpack.c.l.s4 1983009808
        %v7107 = vunpack.c.0.s8 %v7106
        %v7108 = vlaneseq
        %v7109 = vshrl.u32 %v7108, 7
        %v7110 = vsub.s32 %v7107, %v7109
        %v7111 = vrot.slane %v7097, %v7110
        %v7112 = vcombine.low %v7104, %v7111
        %v7113 = vcombine.low %v6525, %v6527
        %v7114 = vcombine.low %v6529, %v6531
        %v7116 = vunpack.c.l.s4 1983009808
        %v7117 = vunpack.c.0.s8 %v7116
        %v7118 = vlaneseq
        %v7119 = vshrl.u32 %v7118, 7
        %v7120 = vsub.s32 %v7117, %v7119
        %v7121 = vrot.slane %v7113, %v7120
        %v7123 = vunpack.c.l.s4 1983009808
        %v7124 = vunpack.c.0.s8 %v7123
        %v7125 = vlaneseq
        %v7126 = vshrl.u32 %v7125, 7
        %v7127 = vsub.s32 %v7124, %v7126
        %v7128 = vrot.slane %v7114, %v7127
        %v7129 = vcombine.low %v7121, %v7128
        %v7130 = vcombine.low %v6533, %v6535
        %v7131 = vcombine.low %v6537, %v6539
        %v7133 = vunpack.c.l.s4 1983009808
        %v7134 = vunpack.c.0.s8 %v7133
        %v7135 = vlaneseq
        %v7136 = vshrl.u32 %v7135, 7
        %v7137 = vsub.s32 %v7134, %v7136
        %v7138 = vrot.slane %v7130, %v7137
        %v7140 = vunpack.c.l.s4 1983009808
        %v7141 = vunpack.c.0.s8 %v7140
        %v7142 = vlaneseq
        %v7143 = vshrl.u32 %v7142, 7
        %v7144 = vsub.s32 %v7141, %v7143
        %v7145 = vrot.slane %v7131, %v7144
        %v7146 = vcombine.low %v7138, %v7145
        %v7147 = vcombine.low %v6541, %v6543
        %v7148 = vcombine.low %v6545, %v6547
        %v7150 = vunpack.c.l.s4 1983009808
        %v7151 = vunpack.c.0.s8 %v7150
        %v7152 = vlaneseq
        %v7153 = vshrl.u32 %v7152, 7
        %v7154 = vsub.s32 %v7151, %v7153
        %v7155 = vrot.slane %v7147, %v7154
        %v7157 = vunpack.c.l.s4 1983009808
        %v7158 = vunpack.c.0.s8 %v7157
        %v7159 = vlaneseq
        %v7160 = vshrl.u32 %v7159, 7
        %v7161 = vsub.s32 %v7158, %v7160
        %v7162 = vrot.slane %v7148, %v7161
        %v7163 = vcombine.low %v7155, %v7162
        %v7164 = vcombine.low %v6020, %v6021
        %v7165 = vcombine.low %v6022, %v6023
        %v7167 = vunpack.c.l.s4 1983009808
        %v7168 = vunpack.c.0.s8 %v7167
        %v7169 = vlaneseq
        %v7170 = vshrl.u32 %v7169, 7
        %v7171 = vsub.s32 %v7168, %v7170
        %v7172 = vrot.slane %v7164, %v7171
        %v7174 = vunpack.c.l.s4 1983009808
        %v7175 = vunpack.c.0.s8 %v7174
        %v7176 = vlaneseq
        %v7177 = vshrl.u32 %v7176, 7
        %v7178 = vsub.s32 %v7175, %v7177
        %v7179 = vrot.slane %v7165, %v7178
        %v7180 = vcombine.low %v7172, %v7179
        %v7181 = vcombine.low %v6024, %v6025
        %v7182 = vcombine.low %v6026, %v6027
        %v7184 = vunpack.c.l.s4 1983009808
        %v7185 = vunpack.c.0.s8 %v7184
        %v7186 = vlaneseq
        %v7187 = vshrl.u32 %v7186, 7
        %v7188 = vsub.s32 %v7185, %v7187
        %v7189 = vrot.slane %v7181, %v7188
        %v7191 = vunpack.c.l.s4 1983009808
        %v7192 = vunpack.c.0.s8 %v7191
        %v7193 = vlaneseq
        %v7194 = vshrl.u32 %v7193, 7
        %v7195 = vsub.s32 %v7192, %v7194
        %v7196 = vrot.slane %v7182, %v7195
        %v7197 = vcombine.low %v7189, %v7196
        %v7198 = vcombine.low %v6028, %v6029
        %v7199 = vcombine.low %v6030, %v6031
        %v7201 = vunpack.c.l.s4 1983009808
        %v7202 = vunpack.c.0.s8 %v7201
        %v7203 = vlaneseq
        %v7204 = vshrl.u32 %v7203, 7
        %v7205 = vsub.s32 %v7202, %v7204
        %v7206 = vrot.slane %v7198, %v7205
        %v7208 = vunpack.c.l.s4 1983009808
        %v7209 = vunpack.c.0.s8 %v7208
        %v7210 = vlaneseq
        %v7211 = vshrl.u32 %v7210, 7
        %v7212 = vsub.s32 %v7209, %v7211
        %v7213 = vrot.slane %v7199, %v7212
        %v7214 = vcombine.low %v7206, %v7213
        %v7215 = vcombine.low %v6032, %v6033
        %v7216 = vcombine.low %v6034, %v6035
        %v7218 = vunpack.c.l.s4 1983009808
        %v7219 = vunpack.c.0.s8 %v7218
        %v7220 = vlaneseq
        %v7221 = vshrl.u32 %v7220, 7
        %v7222 = vsub.s32 %v7219, %v7221
        %v7223 = vrot.slane %v7215, %v7222
        %v7225 = vunpack.c.l.s4 1983009808
        %v7226 = vunpack.c.0.s8 %v7225
        %v7227 = vlaneseq
        %v7228 = vshrl.u32 %v7227, 7
        %v7229 = vsub.s32 %v7226, %v7228
        %v7230 = vrot.slane %v7216, %v7229
        %v7231 = vcombine.low %v7223, %v7230
        %v7232 = vcombine.low %v6549, %v6551
        %v7233 = vcombine.low %v6553, %v6555
        %v7235 = vunpack.c.l.s4 1983009808
        %v7236 = vunpack.c.0.s8 %v7235
        %v7237 = vlaneseq
        %v7238 = vshrl.u32 %v7237, 7
        %v7239 = vsub.s32 %v7236, %v7238
        %v7240 = vrot.slane %v7232, %v7239
        %v7242 = vunpack.c.l.s4 1983009808
        %v7243 = vunpack.c.0.s8 %v7242
        %v7244 = vlaneseq
        %v7245 = vshrl.u32 %v7244, 7
        %v7246 = vsub.s32 %v7243, %v7245
        %v7247 = vrot.slane %v7233, %v7246
        %v7248 = vcombine.low %v7240, %v7247
        %v7249 = vcombine.low %v6557, %v6559
        %v7250 = vcombine.low %v6561, %v6563
        %v7252 = vunpack.c.l.s4 1983009808
        %v7253 = vunpack.c.0.s8 %v7252
        %v7254 = vlaneseq
        %v7255 = vshrl.u32 %v7254, 7
        %v7256 = vsub.s32 %v7253, %v7255
        %v7257 = vrot.slane %v7249, %v7256
        %v7259 = vunpack.c.l.s4 1983009808
        %v7260 = vunpack.c.0.s8 %v7259
        %v7261 = vlaneseq
        %v7262 = vshrl.u32 %v7261, 7
        %v7263 = vsub.s32 %v7260, %v7262
        %v7264 = vrot.slane %v7250, %v7263
        %v7265 = vcombine.low %v7257, %v7264
        %v7266 = vcombine.low %v6565, %v6567
        %v7267 = vcombine.low %v6569, %v6571
        %v7269 = vunpack.c.l.s4 1983009808
        %v7270 = vunpack.c.0.s8 %v7269
        %v7271 = vlaneseq
        %v7272 = vshrl.u32 %v7271, 7
        %v7273 = vsub.s32 %v7270, %v7272
        %v7274 = vrot.slane %v7266, %v7273
        %v7276 = vunpack.c.l.s4 1983009808
        %v7277 = vunpack.c.0.s8 %v7276
        %v7278 = vlaneseq
        %v7279 = vshrl.u32 %v7278, 7
        %v7280 = vsub.s32 %v7277, %v7279
        %v7281 = vrot.slane %v7267, %v7280
        %v7282 = vcombine.low %v7274, %v7281
        %v7283 = vcombine.low %v6573, %v6575
        %v7284 = vcombine.low %v6577, %v6579
        %v7286 = vunpack.c.l.s4 1983009808
        %v7287 = vunpack.c.0.s8 %v7286
        %v7288 = vlaneseq
        %v7289 = vshrl.u32 %v7288, 7
        %v7290 = vsub.s32 %v7287, %v7289
        %v7291 = vrot.slane %v7283, %v7290
        %v7293 = vunpack.c.l.s4 1983009808
        %v7294 = vunpack.c.0.s8 %v7293
        %v7295 = vlaneseq
        %v7296 = vshrl.u32 %v7295, 7
        %v7297 = vsub.s32 %v7294, %v7296
        %v7298 = vrot.slane %v7284, %v7297
        %v7299 = vcombine.low %v7291, %v7298
        %v7300 = vcombine.low %v6036, %v6037
        %v7301 = vcombine.low %v6038, %v6039
        %v7303 = vunpack.c.l.s4 1983009808
        %v7304 = vunpack.c.0.s8 %v7303
        %v7305 = vlaneseq
        %v7306 = vshrl.u32 %v7305, 7
        %v7307 = vsub.s32 %v7304, %v7306
        %v7308 = vrot.slane %v7300, %v7307
        %v7310 = vunpack.c.l.s4 1983009808
        %v7311 = vunpack.c.0.s8 %v7310
        %v7312 = vlaneseq
        %v7313 = vshrl.u32 %v7312, 7
        %v7314 = vsub.s32 %v7311, %v7313
        %v7315 = vrot.slane %v7301, %v7314
        %v7316 = vcombine.low %v7308, %v7315
        %v7317 = vcombine.low %v6040, %v6041
        %v7318 = vcombine.low %v6042, %v6043
        %v7320 = vunpack.c.l.s4 1983009808
        %v7321 = vunpack.c.0.s8 %v7320
        %v7322 = vlaneseq
        %v7323 = vshrl.u32 %v7322, 7
        %v7324 = vsub.s32 %v7321, %v7323
        %v7325 = vrot.slane %v7317, %v7324
        %v7327 = vunpack.c.l.s4 1983009808
        %v7328 = vunpack.c.0.s8 %v7327
        %v7329 = vlaneseq
        %v7330 = vshrl.u32 %v7329, 7
        %v7331 = vsub.s32 %v7328, %v7330
        %v7332 = vrot.slane %v7318, %v7331
        %v7333 = vcombine.low %v7325, %v7332
        %v7334 = vcombine.low %v6044, %v6045
        %v7335 = vcombine.low %v6046, %v6047
        %v7337 = vunpack.c.l.s4 1983009808
        %v7338 = vunpack.c.0.s8 %v7337
        %v7339 = vlaneseq
        %v7340 = vshrl.u32 %v7339, 7
        %v7341 = vsub.s32 %v7338, %v7340
        %v7342 = vrot.slane %v7334, %v7341
        %v7344 = vunpack.c.l.s4 1983009808
        %v7345 = vunpack.c.0.s8 %v7344
        %v7346 = vlaneseq
        %v7347 = vshrl.u32 %v7346, 7
        %v7348 = vsub.s32 %v7345, %v7347
        %v7349 = vrot.slane %v7335, %v7348
        %v7350 = vcombine.low %v7342, %v7349
        %v7351 = vcombine.low %v6048, %v6049
        %v7352 = vcombine.low %v6050, %v6051
        %v7354 = vunpack.c.l.s4 1983009808
        %v7355 = vunpack.c.0.s8 %v7354
        %v7356 = vlaneseq
        %v7357 = vshrl.u32 %v7356, 7
        %v7358 = vsub.s32 %v7355, %v7357
        %v7359 = vrot.slane %v7351, %v7358
        %v7361 = vunpack.c.l.s4 1983009808
        %v7362 = vunpack.c.0.s8 %v7361
        %v7363 = vlaneseq
        %v7364 = vshrl.u32 %v7363, 7
        %v7365 = vsub.s32 %v7362, %v7364
        %v7366 = vrot.slane %v7352, %v7365
        %v7367 = vcombine.low %v7359, %v7366
        %v7368 = vcombine.low %v6581, %v6583
        %v7369 = vcombine.low %v6585, %v6587
        %v7371 = vunpack.c.l.s4 1983009808
        %v7372 = vunpack.c.0.s8 %v7371
        %v7373 = vlaneseq
        %v7374 = vshrl.u32 %v7373, 7
        %v7375 = vsub.s32 %v7372, %v7374
        %v7376 = vrot.slane %v7368, %v7375
        %v7378 = vunpack.c.l.s4 1983009808
        %v7379 = vunpack.c.0.s8 %v7378
        %v7380 = vlaneseq
        %v7381 = vshrl.u32 %v7380, 7
        %v7382 = vsub.s32 %v7379, %v7381
        %v7383 = vrot.slane %v7369, %v7382
        %v7384 = vcombine.low %v7376, %v7383
        %v7385 = vcombine.low %v6589, %v6591
        %v7386 = vcombine.low %v6593, %v6595
        %v7388 = vunpack.c.l.s4 1983009808
        %v7389 = vunpack.c.0.s8 %v7388
        %v7390 = vlaneseq
        %v7391 = vshrl.u32 %v7390, 7
        %v7392 = vsub.s32 %v7389, %v7391
        %v7393 = vrot.slane %v7385, %v7392
        %v7395 = vunpack.c.l.s4 1983009808
        %v7396 = vunpack.c.0.s8 %v7395
        %v7397 = vlaneseq
        %v7398 = vshrl.u32 %v7397, 7
        %v7399 = vsub.s32 %v7396, %v7398
        %v7400 = vrot.slane %v7386, %v7399
        %v7401 = vcombine.low %v7393, %v7400
        %v7402 = vcombine.low %v6597, %v6599
        %v7403 = vcombine.low %v6601, %v6603
        %v7405 = vunpack.c.l.s4 1983009808
        %v7406 = vunpack.c.0.s8 %v7405
        %v7407 = vlaneseq
        %v7408 = vshrl.u32 %v7407, 7
        %v7409 = vsub.s32 %v7406, %v7408
        %v7410 = vrot.slane %v7402, %v7409
        %v7412 = vunpack.c.l.s4 1983009808
        %v7413 = vunpack.c.0.s8 %v7412
        %v7414 = vlaneseq
        %v7415 = vshrl.u32 %v7414, 7
        %v7416 = vsub.s32 %v7413, %v7415
        %v7417 = vrot.slane %v7403, %v7416
        %v7418 = vcombine.low %v7410, %v7417
        %v7419 = vcombine.low %v6605, %v6607
        %v7420 = vcombine.low %v6609, %v6611
        %v7422 = vunpack.c.l.s4 1983009808
        %v7423 = vunpack.c.0.s8 %v7422
        %v7424 = vlaneseq
        %v7425 = vshrl.u32 %v7424, 7
        %v7426 = vsub.s32 %v7423, %v7425
        %v7427 = vrot.slane %v7419, %v7426
        %v7429 = vunpack.c.l.s4 1983009808
        %v7430 = vunpack.c.0.s8 %v7429
        %v7431 = vlaneseq
        %v7432 = vshrl.u32 %v7431, 7
        %v7433 = vsub.s32 %v7430, %v7432
        %v7434 = vrot.slane %v7420, %v7433
        %v7435 = vcombine.low %v7427, %v7434
        %v7436 = vcombine.low %v6052, %v6053
        %v7437 = vcombine.low %v6054, %v6055
        %v7439 = vunpack.c.l.s4 1983009808
        %v7440 = vunpack.c.0.s8 %v7439
        %v7441 = vlaneseq
        %v7442 = vshrl.u32 %v7441, 7
        %v7443 = vsub.s32 %v7440, %v7442
        %v7444 = vrot.slane %v7436, %v7443
        %v7446 = vunpack.c.l.s4 1983009808
        %v7447 = vunpack.c.0.s8 %v7446
        %v7448 = vlaneseq
        %v7449 = vshrl.u32 %v7448, 7
        %v7450 = vsub.s32 %v7447, %v7449
        %v7451 = vrot.slane %v7437, %v7450
        %v7452 = vcombine.low %v7444, %v7451
        %v7453 = vcombine.low %v6056, %v6057
        %v7454 = vcombine.low %v6058, %v6059
        %v7456 = vunpack.c.l.s4 1983009808
        %v7457 = vunpack.c.0.s8 %v7456
        %v7458 = vlaneseq
        %v7459 = vshrl.u32 %v7458, 7
        %v7460 = vsub.s32 %v7457, %v7459
        %v7461 = vrot.slane %v7453, %v7460
        %v7463 = vunpack.c.l.s4 1983009808
        %v7464 = vunpack.c.0.s8 %v7463
        %v7465 = vlaneseq
        %v7466 = vshrl.u32 %v7465, 7
        %v7467 = vsub.s32 %v7464, %v7466
        %v7468 = vrot.slane %v7454, %v7467
        %v7469 = vcombine.low %v7461, %v7468
        %v7470 = vcombine.low %v6060, %v6061
        %v7471 = vcombine.low %v6062, %v6063
        %v7473 = vunpack.c.l.s4 1983009808
        %v7474 = vunpack.c.0.s8 %v7473
        %v7475 = vlaneseq
        %v7476 = vshrl.u32 %v7475, 7
        %v7477 = vsub.s32 %v7474, %v7476
        %v7478 = vrot.slane %v7470, %v7477
        %v7480 = vunpack.c.l.s4 1983009808
        %v7481 = vunpack.c.0.s8 %v7480
        %v7482 = vlaneseq
        %v7483 = vshrl.u32 %v7482, 7
        %v7484 = vsub.s32 %v7481, %v7483
        %v7485 = vrot.slane %v7471, %v7484
        %v7486 = vcombine.low %v7478, %v7485
        %v7487 = vcombine.low %v6064, %v6065
        %v7488 = vcombine.low %v6066, %v6067
        %v7490 = vunpack.c.l.s4 1983009808
        %v7491 = vunpack.c.0.s8 %v7490
        %v7492 = vlaneseq
        %v7493 = vshrl.u32 %v7492, 7
        %v7494 = vsub.s32 %v7491, %v7493
        %v7495 = vrot.slane %v7487, %v7494
        %v7497 = vunpack.c.l.s4 1983009808
        %v7498 = vunpack.c.0.s8 %v7497
        %v7499 = vlaneseq
        %v7500 = vshrl.u32 %v7499, 7
        %v7501 = vsub.s32 %v7498, %v7500
        %v7502 = vrot.slane %v7488, %v7501
        %v7503 = vcombine.low %v7495, %v7502
        %v7504 = vcombine.low %v6613, %v6615
        %v7505 = vcombine.low %v6617, %v6619
        %v7507 = vunpack.c.l.s4 1983009808
        %v7508 = vunpack.c.0.s8 %v7507
        %v7509 = vlaneseq
        %v7510 = vshrl.u32 %v7509, 7
        %v7511 = vsub.s32 %v7508, %v7510
        %v7512 = vrot.slane %v7504, %v7511
        %v7514 = vunpack.c.l.s4 1983009808
        %v7515 = vunpack.c.0.s8 %v7514
        %v7516 = vlaneseq
        %v7517 = vshrl.u32 %v7516, 7
        %v7518 = vsub.s32 %v7515, %v7517
        %v7519 = vrot.slane %v7505, %v7518
        %v7520 = vcombine.low %v7512, %v7519
        %v7521 = vcombine.low %v6621, %v6623
        %v7522 = vcombine.low %v6625, %v6627
        %v7524 = vunpack.c.l.s4 1983009808
        %v7525 = vunpack.c.0.s8 %v7524
        %v7526 = vlaneseq
        %v7527 = vshrl.u32 %v7526, 7
        %v7528 = vsub.s32 %v7525, %v7527
        %v7529 = vrot.slane %v7521, %v7528
        %v7531 = vunpack.c.l.s4 1983009808
        %v7532 = vunpack.c.0.s8 %v7531
        %v7533 = vlaneseq
        %v7534 = vshrl.u32 %v7533, 7
        %v7535 = vsub.s32 %v7532, %v7534
        %v7536 = vrot.slane %v7522, %v7535
        %v7537 = vcombine.low %v7529, %v7536
        %v7538 = vcombine.low %v6629, %v6631
        %v7539 = vcombine.low %v6633, %v6635
        %v7541 = vunpack.c.l.s4 1983009808
        %v7542 = vunpack.c.0.s8 %v7541
        %v7543 = vlaneseq
        %v7544 = vshrl.u32 %v7543, 7
        %v7545 = vsub.s32 %v7542, %v7544
        %v7546 = vrot.slane %v7538, %v7545
        %v7548 = vunpack.c.l.s4 1983009808
        %v7549 = vunpack.c.0.s8 %v7548
        %v7550 = vlaneseq
        %v7551 = vshrl.u32 %v7550, 7
        %v7552 = vsub.s32 %v7549, %v7551
        %v7553 = vrot.slane %v7539, %v7552
        %v7554 = vcombine.low %v7546, %v7553
        %v7555 = vcombine.low %v6637, %v6639
        %v7556 = vcombine.low %v6641, %v6643
        %v7558 = vunpack.c.l.s4 1983009808
        %v7559 = vunpack.c.0.s8 %v7558
        %v7560 = vlaneseq
        %v7561 = vshrl.u32 %v7560, 7
        %v7562 = vsub.s32 %v7559, %v7561
        %v7563 = vrot.slane %v7555, %v7562
        %v7565 = vunpack.c.l.s4 1983009808
        %v7566 = vunpack.c.0.s8 %v7565
        %v7567 = vlaneseq
        %v7568 = vshrl.u32 %v7567, 7
        %v7569 = vsub.s32 %v7566, %v7568
        %v7570 = vrot.slane %v7556, %v7569
        %v7571 = vcombine.low %v7563, %v7570
        %v7572 = vcombine.low %v6068, %v6069
        %v7573 = vcombine.low %v6070, %v6071
        %v7575 = vunpack.c.l.s4 1983009808
        %v7576 = vunpack.c.0.s8 %v7575
        %v7577 = vlaneseq
        %v7578 = vshrl.u32 %v7577, 7
        %v7579 = vsub.s32 %v7576, %v7578
        %v7580 = vrot.slane %v7572, %v7579
        %v7582 = vunpack.c.l.s4 1983009808
        %v7583 = vunpack.c.0.s8 %v7582
        %v7584 = vlaneseq
        %v7585 = vshrl.u32 %v7584, 7
        %v7586 = vsub.s32 %v7583, %v7585
        %v7587 = vrot.slane %v7573, %v7586
        %v7588 = vcombine.low %v7580, %v7587
        %v7589 = vcombine.low %v6072, %v6073
        %v7590 = vcombine.low %v6074, %v6075
        %v7592 = vunpack.c.l.s4 1983009808
        %v7593 = vunpack.c.0.s8 %v7592
        %v7594 = vlaneseq
        %v7595 = vshrl.u32 %v7594, 7
        %v7596 = vsub.s32 %v7593, %v7595
        %v7597 = vrot.slane %v7589, %v7596
        %v7599 = vunpack.c.l.s4 1983009808
        %v7600 = vunpack.c.0.s8 %v7599
        %v7601 = vlaneseq
        %v7602 = vshrl.u32 %v7601, 7
        %v7603 = vsub.s32 %v7600, %v7602
        %v7604 = vrot.slane %v7590, %v7603
        %v7605 = vcombine.low %v7597, %v7604
        %v7606 = vcombine.low %v6076, %v6077
        %v7607 = vcombine.low %v6078, %v6079
        %v7609 = vunpack.c.l.s4 1983009808
        %v7610 = vunpack.c.0.s8 %v7609
        %v7611 = vlaneseq
        %v7612 = vshrl.u32 %v7611, 7
        %v7613 = vsub.s32 %v7610, %v7612
        %v7614 = vrot.slane %v7606, %v7613
        %v7616 = vunpack.c.l.s4 1983009808
        %v7617 = vunpack.c.0.s8 %v7616
        %v7618 = vlaneseq
        %v7619 = vshrl.u32 %v7618, 7
        %v7620 = vsub.s32 %v7617, %v7619
        %v7621 = vrot.slane %v7607, %v7620
        %v7622 = vcombine.low %v7614, %v7621
        %v7623 = vcombine.low %v6080, %v6081
        %v7624 = vcombine.low %v6082, %v6083
        %v7626 = vunpack.c.l.s4 1983009808
        %v7627 = vunpack.c.0.s8 %v7626
        %v7628 = vlaneseq
        %v7629 = vshrl.u32 %v7628, 7
        %v7630 = vsub.s32 %v7627, %v7629
        %v7631 = vrot.slane %v7623, %v7630
        %v7633 = vunpack.c.l.s4 1983009808
        %v7634 = vunpack.c.0.s8 %v7633
        %v7635 = vlaneseq
        %v7636 = vshrl.u32 %v7635, 7
        %v7637 = vsub.s32 %v7634, %v7636
        %v7638 = vrot.slane %v7624, %v7637
        %v7639 = vcombine.low %v7631, %v7638
        %v7640 = vcombine.low %v6645, %v6647
        %v7641 = vcombine.low %v6649, %v6651
        %v7643 = vunpack.c.l.s4 1983009808
        %v7644 = vunpack.c.0.s8 %v7643
        %v7645 = vlaneseq
        %v7646 = vshrl.u32 %v7645, 7
        %v7647 = vsub.s32 %v7644, %v7646
        %v7648 = vrot.slane %v7640, %v7647
        %v7650 = vunpack.c.l.s4 1983009808
        %v7651 = vunpack.c.0.s8 %v7650
        %v7652 = vlaneseq
        %v7653 = vshrl.u32 %v7652, 7
        %v7654 = vsub.s32 %v7651, %v7653
        %v7655 = vrot.slane %v7641, %v7654
        %v7656 = vcombine.low %v7648, %v7655
        %v7657 = vcombine.low %v6653, %v6655
        %v7658 = vcombine.low %v6657, %v6659
        %v7660 = vunpack.c.l.s4 1983009808
        %v7661 = vunpack.c.0.s8 %v7660
        %v7662 = vlaneseq
        %v7663 = vshrl.u32 %v7662, 7
        %v7664 = vsub.s32 %v7661, %v7663
        %v7665 = vrot.slane %v7657, %v7664
        %v7667 = vunpack.c.l.s4 1983009808
        %v7668 = vunpack.c.0.s8 %v7667
        %v7669 = vlaneseq
        %v7670 = vshrl.u32 %v7669, 7
        %v7671 = vsub.s32 %v7668, %v7670
        %v7672 = vrot.slane %v7658, %v7671
        %v7673 = vcombine.low %v7665, %v7672
        %v7674 = vcombine.low %v6661, %v6663
        %v7675 = vcombine.low %v6665, %v6667
        %v7677 = vunpack.c.l.s4 1983009808
        %v7678 = vunpack.c.0.s8 %v7677
        %v7679 = vlaneseq
        %v7680 = vshrl.u32 %v7679, 7
        %v7681 = vsub.s32 %v7678, %v7680
        %v7682 = vrot.slane %v7674, %v7681
        %v7684 = vunpack.c.l.s4 1983009808
        %v7685 = vunpack.c.0.s8 %v7684
        %v7686 = vlaneseq
        %v7687 = vshrl.u32 %v7686, 7
        %v7688 = vsub.s32 %v7685, %v7687
        %v7689 = vrot.slane %v7675, %v7688
        %v7690 = vcombine.low %v7682, %v7689
        %v7691 = vcombine.low %v6669, %v6671
        %v7692 = vcombine.low %v6673, %v6675
        %v7694 = vunpack.c.l.s4 1983009808
        %v7695 = vunpack.c.0.s8 %v7694
        %v7696 = vlaneseq
        %v7697 = vshrl.u32 %v7696, 7
        %v7698 = vsub.s32 %v7695, %v7697
        %v7699 = vrot.slane %v7691, %v7698
        %v7701 = vunpack.c.l.s4 1983009808
        %v7702 = vunpack.c.0.s8 %v7701
        %v7703 = vlaneseq
        %v7704 = vshrl.u32 %v7703, 7
        %v7705 = vsub.s32 %v7702, %v7704
        %v7706 = vrot.slane %v7692, %v7705
        %v7707 = vcombine.low %v7699, %v7706
        %v7708 = vcombine.low %v6084, %v6085
        %v7709 = vcombine.low %v6086, %v6087
        %v7711 = vunpack.c.l.s4 1983009808
        %v7712 = vunpack.c.0.s8 %v7711
        %v7713 = vlaneseq
        %v7714 = vshrl.u32 %v7713, 7
        %v7715 = vsub.s32 %v7712, %v7714
        %v7716 = vrot.slane %v7708, %v7715
        %v7718 = vunpack.c.l.s4 1983009808
        %v7719 = vunpack.c.0.s8 %v7718
        %v7720 = vlaneseq
        %v7721 = vshrl.u32 %v7720, 7
        %v7722 = vsub.s32 %v7719, %v7721
        %v7723 = vrot.slane %v7709, %v7722
        %v7724 = vcombine.low %v7716, %v7723
        %v7725 = vcombine.low %v6088, %v6089
        %v7726 = vcombine.low %v6090, %v6091
        %v7728 = vunpack.c.l.s4 1983009808
        %v7729 = vunpack.c.0.s8 %v7728
        %v7730 = vlaneseq
        %v7731 = vshrl.u32 %v7730, 7
        %v7732 = vsub.s32 %v7729, %v7731
        %v7733 = vrot.slane %v7725, %v7732
        %v7735 = vunpack.c.l.s4 1983009808
        %v7736 = vunpack.c.0.s8 %v7735
        %v7737 = vlaneseq
        %v7738 = vshrl.u32 %v7737, 7
        %v7739 = vsub.s32 %v7736, %v7738
        %v7740 = vrot.slane %v7726, %v7739
        %v7741 = vcombine.low %v7733, %v7740
        %v7742 = vcombine.low %v6092, %v6093
        %v7743 = vcombine.low %v6094, %v6095
        %v7745 = vunpack.c.l.s4 1983009808
        %v7746 = vunpack.c.0.s8 %v7745
        %v7747 = vlaneseq
        %v7748 = vshrl.u32 %v7747, 7
        %v7749 = vsub.s32 %v7746, %v7748
        %v7750 = vrot.slane %v7742, %v7749
        %v7752 = vunpack.c.l.s4 1983009808
        %v7753 = vunpack.c.0.s8 %v7752
        %v7754 = vlaneseq
        %v7755 = vshrl.u32 %v7754, 7
        %v7756 = vsub.s32 %v7753, %v7755
        %v7757 = vrot.slane %v7743, %v7756
        %v7758 = vcombine.low %v7750, %v7757
        %v7759 = vcombine.low %v6096, %v6097
        %v7760 = vcombine.low %v6098, %v6099
        %v7762 = vunpack.c.l.s4 1983009808
        %v7763 = vunpack.c.0.s8 %v7762
        %v7764 = vlaneseq
        %v7765 = vshrl.u32 %v7764, 7
        %v7766 = vsub.s32 %v7763, %v7765
        %v7767 = vrot.slane %v7759, %v7766
        %v7769 = vunpack.c.l.s4 1983009808
        %v7770 = vunpack.c.0.s8 %v7769
        %v7771 = vlaneseq
        %v7772 = vshrl.u32 %v7771, 7
        %v7773 = vsub.s32 %v7770, %v7772
        %v7774 = vrot.slane %v7760, %v7773
        %v7775 = vcombine.low %v7767, %v7774
        %v7776 = vcombine.low %v6677, %v6679
        %v7777 = vcombine.low %v6681, %v6683
        %v7779 = vunpack.c.l.s4 1983009808
        %v7780 = vunpack.c.0.s8 %v7779
        %v7781 = vlaneseq
        %v7782 = vshrl.u32 %v7781, 7
        %v7783 = vsub.s32 %v7780, %v7782
        %v7784 = vrot.slane %v7776, %v7783
        %v7786 = vunpack.c.l.s4 1983009808
        %v7787 = vunpack.c.0.s8 %v7786
        %v7788 = vlaneseq
        %v7789 = vshrl.u32 %v7788, 7
        %v7790 = vsub.s32 %v7787, %v7789
        %v7791 = vrot.slane %v7777, %v7790
        %v7792 = vcombine.low %v7784, %v7791
        %v7793 = vcombine.low %v6685, %v6687
        %v7794 = vcombine.low %v6689, %v6691
        %v7796 = vunpack.c.l.s4 1983009808
        %v7797 = vunpack.c.0.s8 %v7796
        %v7798 = vlaneseq
        %v7799 = vshrl.u32 %v7798, 7
        %v7800 = vsub.s32 %v7797, %v7799
        %v7801 = vrot.slane %v7793, %v7800
        %v7803 = vunpack.c.l.s4 1983009808
        %v7804 = vunpack.c.0.s8 %v7803
        %v7805 = vlaneseq
        %v7806 = vshrl.u32 %v7805, 7
        %v7807 = vsub.s32 %v7804, %v7806
        %v7808 = vrot.slane %v7794, %v7807
        %v7809 = vcombine.low %v7801, %v7808
        %v7810 = vcombine.low %v6693, %v6695
        %v7811 = vcombine.low %v6697, %v6699
        %v7813 = vunpack.c.l.s4 1983009808
        %v7814 = vunpack.c.0.s8 %v7813
        %v7815 = vlaneseq
        %v7816 = vshrl.u32 %v7815, 7
        %v7817 = vsub.s32 %v7814, %v7816
        %v7818 = vrot.slane %v7810, %v7817
        %v7820 = vunpack.c.l.s4 1983009808
        %v7821 = vunpack.c.0.s8 %v7820
        %v7822 = vlaneseq
        %v7823 = vshrl.u32 %v7822, 7
        %v7824 = vsub.s32 %v7821, %v7823
        %v7825 = vrot.slane %v7811, %v7824
        %v7826 = vcombine.low %v7818, %v7825
        %v7827 = vcombine.low %v6701, %v6703
        %v7828 = vcombine.low %v6705, %v6707
        %v7830 = vunpack.c.l.s4 1983009808
        %v7831 = vunpack.c.0.s8 %v7830
        %v7832 = vlaneseq
        %v7833 = vshrl.u32 %v7832, 7
        %v7834 = vsub.s32 %v7831, %v7833
        %v7835 = vrot.slane %v7827, %v7834
        %v7837 = vunpack.c.l.s4 1983009808
        %v7838 = vunpack.c.0.s8 %v7837
        %v7839 = vlaneseq
        %v7840 = vshrl.u32 %v7839, 7
        %v7841 = vsub.s32 %v7838, %v7840
        %v7842 = vrot.slane %v7828, %v7841
        %v7843 = vcombine.low %v7835, %v7842
        %v7844 = vcombine.low %v6100, %v6101
        %v7845 = vcombine.low %v6102, %v6103
        %v7847 = vunpack.c.l.s4 1983009808
        %v7848 = vunpack.c.0.s8 %v7847
        %v7849 = vlaneseq
        %v7850 = vshrl.u32 %v7849, 7
        %v7851 = vsub.s32 %v7848, %v7850
        %v7852 = vrot.slane %v7844, %v7851
        %v7854 = vunpack.c.l.s4 1983009808
        %v7855 = vunpack.c.0.s8 %v7854
        %v7856 = vlaneseq
        %v7857 = vshrl.u32 %v7856, 7
        %v7858 = vsub.s32 %v7855, %v7857
        %v7859 = vrot.slane %v7845, %v7858
        %v7860 = vcombine.low %v7852, %v7859
        %v7861 = vcombine.low %v6104, %v6105
        %v7862 = vcombine.low %v6106, %v6107
        %v7864 = vunpack.c.l.s4 1983009808
        %v7865 = vunpack.c.0.s8 %v7864
        %v7866 = vlaneseq
        %v7867 = vshrl.u32 %v7866, 7
        %v7868 = vsub.s32 %v7865, %v7867
        %v7869 = vrot.slane %v7861, %v7868
        %v7871 = vunpack.c.l.s4 1983009808
        %v7872 = vunpack.c.0.s8 %v7871
        %v7873 = vlaneseq
        %v7874 = vshrl.u32 %v7873, 7
        %v7875 = vsub.s32 %v7872, %v7874
        %v7876 = vrot.slane %v7862, %v7875
        %v7877 = vcombine.low %v7869, %v7876
        %v7878 = vcombine.low %v6108, %v6109
        %v7879 = vcombine.low %v6110, %v6111
        %v7881 = vunpack.c.l.s4 1983009808
        %v7882 = vunpack.c.0.s8 %v7881
        %v7883 = vlaneseq
        %v7884 = vshrl.u32 %v7883, 7
        %v7885 = vsub.s32 %v7882, %v7884
        %v7886 = vrot.slane %v7878, %v7885
        %v7888 = vunpack.c.l.s4 1983009808
        %v7889 = vunpack.c.0.s8 %v7888
        %v7890 = vlaneseq
        %v7891 = vshrl.u32 %v7890, 7
        %v7892 = vsub.s32 %v7889, %v7891
        %v7893 = vrot.slane %v7879, %v7892
        %v7894 = vcombine.low %v7886, %v7893
        %v7895 = vcombine.low %v6112, %v6113
        %v7896 = vcombine.low %v6114, %v6115
        %v7898 = vunpack.c.l.s4 1983009808
        %v7899 = vunpack.c.0.s8 %v7898
        %v7900 = vlaneseq
        %v7901 = vshrl.u32 %v7900, 7
        %v7902 = vsub.s32 %v7899, %v7901
        %v7903 = vrot.slane %v7895, %v7902
        %v7905 = vunpack.c.l.s4 1983009808
        %v7906 = vunpack.c.0.s8 %v7905
        %v7907 = vlaneseq
        %v7908 = vshrl.u32 %v7907, 7
        %v7909 = vsub.s32 %v7906, %v7908
        %v7910 = vrot.slane %v7896, %v7909
        %v7911 = vcombine.low %v7903, %v7910
        %v7912 = vcombine.low %v6709, %v6711
        %v7913 = vcombine.low %v6713, %v6715
        %v7915 = vunpack.c.l.s4 1983009808
        %v7916 = vunpack.c.0.s8 %v7915
        %v7917 = vlaneseq
        %v7918 = vshrl.u32 %v7917, 7
        %v7919 = vsub.s32 %v7916, %v7918
        %v7920 = vrot.slane %v7912, %v7919
        %v7922 = vunpack.c.l.s4 1983009808
        %v7923 = vunpack.c.0.s8 %v7922
        %v7924 = vlaneseq
        %v7925 = vshrl.u32 %v7924, 7
        %v7926 = vsub.s32 %v7923, %v7925
        %v7927 = vrot.slane %v7913, %v7926
        %v7928 = vcombine.low %v7920, %v7927
        %v7929 = vcombine.low %v6717, %v6719
        %v7930 = vcombine.low %v6721, %v6723
        %v7932 = vunpack.c.l.s4 1983009808
        %v7933 = vunpack.c.0.s8 %v7932
        %v7934 = vlaneseq
        %v7935 = vshrl.u32 %v7934, 7
        %v7936 = vsub.s32 %v7933, %v7935
        %v7937 = vrot.slane %v7929, %v7936
        %v7939 = vunpack.c.l.s4 1983009808
        %v7940 = vunpack.c.0.s8 %v7939
        %v7941 = vlaneseq
        %v7942 = vshrl.u32 %v7941, 7
        %v7943 = vsub.s32 %v7940, %v7942
        %v7944 = vrot.slane %v7930, %v7943
        %v7945 = vcombine.low %v7937, %v7944
        %v7946 = vcombine.low %v6725, %v6727
        %v7947 = vcombine.low %v6729, %v6731
        %v7949 = vunpack.c.l.s4 1983009808
        %v7950 = vunpack.c.0.s8 %v7949
        %v7951 = vlaneseq
        %v7952 = vshrl.u32 %v7951, 7
        %v7953 = vsub.s32 %v7950, %v7952
        %v7954 = vrot.slane %v7946, %v7953
        %v7956 = vunpack.c.l.s4 1983009808
        %v7957 = vunpack.c.0.s8 %v7956
        %v7958 = vlaneseq
        %v7959 = vshrl.u32 %v7958, 7
        %v7960 = vsub.s32 %v7957, %v7959
        %v7961 = vrot.slane %v7947, %v7960
        %v7962 = vcombine.low %v7954, %v7961
        %v7963 = vcombine.low %v6733, %v6735
        %v7964 = vcombine.low %v6737, %v6739
        %v7966 = vunpack.c.l.s4 1983009808
        %v7967 = vunpack.c.0.s8 %v7966
        %v7968 = vlaneseq
        %v7969 = vshrl.u32 %v7968, 7
        %v7970 = vsub.s32 %v7967, %v7969
        %v7971 = vrot.slane %v7963, %v7970
        %v7973 = vunpack.c.l.s4 1983009808
        %v7974 = vunpack.c.0.s8 %v7973
        %v7975 = vlaneseq
        %v7976 = vshrl.u32 %v7975, 7
        %v7977 = vsub.s32 %v7974, %v7976
        %v7978 = vrot.slane %v7964, %v7977
        %v7979 = vcombine.low %v7971, %v7978
        %v7980 = vcombine.low %v6116, %v6117
        %v7981 = vcombine.low %v6118, %v6119
        %v7983 = vunpack.c.l.s4 1983009808
        %v7984 = vunpack.c.0.s8 %v7983
        %v7985 = vlaneseq
        %v7986 = vshrl.u32 %v7985, 7
        %v7987 = vsub.s32 %v7984, %v7986
        %v7988 = vrot.slane %v7980, %v7987
        %v7990 = vunpack.c.l.s4 1983009808
        %v7991 = vunpack.c.0.s8 %v7990
        %v7992 = vlaneseq
        %v7993 = vshrl.u32 %v7992, 7
        %v7994 = vsub.s32 %v7991, %v7993
        %v7995 = vrot.slane %v7981, %v7994
        %v7996 = vcombine.low %v7988, %v7995
        %v7997 = vcombine.low %v6120, %v6121
        %v7998 = vcombine.low %v6122, %v6123
        %v8000 = vunpack.c.l.s4 1983009808
        %v8001 = vunpack.c.0.s8 %v8000
        %v8002 = vlaneseq
        %v8003 = vshrl.u32 %v8002, 7
        %v8004 = vsub.s32 %v8001, %v8003
        %v8005 = vrot.slane %v7997, %v8004
        %v8007 = vunpack.c.l.s4 1983009808
        %v8008 = vunpack.c.0.s8 %v8007
        %v8009 = vlaneseq
        %v8010 = vshrl.u32 %v8009, 7
        %v8011 = vsub.s32 %v8008, %v8010
        %v8012 = vrot.slane %v7998, %v8011
        %v8013 = vcombine.low %v8005, %v8012
        %v8014 = vcombine.low %v6124, %v6125
        %v8015 = vcombine.low %v6126, %v6127
        %v8017 = vunpack.c.l.s4 1983009808
        %v8018 = vunpack.c.0.s8 %v8017
        %v8019 = vlaneseq
        %v8020 = vshrl.u32 %v8019, 7
        %v8021 = vsub.s32 %v8018, %v8020
        %v8022 = vrot.slane %v8014, %v8021
        %v8024 = vunpack.c.l.s4 1983009808
        %v8025 = vunpack.c.0.s8 %v8024
        %v8026 = vlaneseq
        %v8027 = vshrl.u32 %v8026, 7
        %v8028 = vsub.s32 %v8025, %v8027
        %v8029 = vrot.slane %v8015, %v8028
        %v8030 = vcombine.low %v8022, %v8029
        %v8031 = vcombine.low %v6128, %v6129
        %v8032 = vcombine.low %v6130, %v6131
        %v8034 = vunpack.c.l.s4 1983009808
        %v8035 = vunpack.c.0.s8 %v8034
        %v8036 = vlaneseq
        %v8037 = vshrl.u32 %v8036, 7
        %v8038 = vsub.s32 %v8035, %v8037
        %v8039 = vrot.slane %v8031, %v8038
        %v8041 = vunpack.c.l.s4 1983009808
        %v8042 = vunpack.c.0.s8 %v8041
        %v8043 = vlaneseq
        %v8044 = vshrl.u32 %v8043, 7
        %v8045 = vsub.s32 %v8042, %v8044
        %v8046 = vrot.slane %v8032, %v8045
        %v8047 = vcombine.low %v8039, %v8046
        %v8048 = vcombine.low %v6741, %v6743
        %v8049 = vcombine.low %v6745, %v6747
        %v8051 = vunpack.c.l.s4 1983009808
        %v8052 = vunpack.c.0.s8 %v8051
        %v8053 = vlaneseq
        %v8054 = vshrl.u32 %v8053, 7
        %v8055 = vsub.s32 %v8052, %v8054
        %v8056 = vrot.slane %v8048, %v8055
        %v8058 = vunpack.c.l.s4 1983009808
        %v8059 = vunpack.c.0.s8 %v8058
        %v8060 = vlaneseq
        %v8061 = vshrl.u32 %v8060, 7
        %v8062 = vsub.s32 %v8059, %v8061
        %v8063 = vrot.slane %v8049, %v8062
        %v8064 = vcombine.low %v8056, %v8063
        %v8065 = vcombine.low %v6749, %v6751
        %v8066 = vcombine.low %v6753, %v6755
        %v8068 = vunpack.c.l.s4 1983009808
        %v8069 = vunpack.c.0.s8 %v8068
        %v8070 = vlaneseq
        %v8071 = vshrl.u32 %v8070, 7
        %v8072 = vsub.s32 %v8069, %v8071
        %v8073 = vrot.slane %v8065, %v8072
        %v8075 = vunpack.c.l.s4 1983009808
        %v8076 = vunpack.c.0.s8 %v8075
        %v8077 = vlaneseq
        %v8078 = vshrl.u32 %v8077, 7
        %v8079 = vsub.s32 %v8076, %v8078
        %v8080 = vrot.slane %v8066, %v8079
        %v8081 = vcombine.low %v8073, %v8080
        %v8082 = vcombine.low %v6757, %v6759
        %v8083 = vcombine.low %v6761, %v6763
        %v8085 = vunpack.c.l.s4 1983009808
        %v8086 = vunpack.c.0.s8 %v8085
        %v8087 = vlaneseq
        %v8088 = vshrl.u32 %v8087, 7
        %v8089 = vsub.s32 %v8086, %v8088
        %v8090 = vrot.slane %v8082, %v8089
        %v8092 = vunpack.c.l.s4 1983009808
        %v8093 = vunpack.c.0.s8 %v8092
        %v8094 = vlaneseq
        %v8095 = vshrl.u32 %v8094, 7
        %v8096 = vsub.s32 %v8093, %v8095
        %v8097 = vrot.slane %v8083, %v8096
        %v8098 = vcombine.low %v8090, %v8097
        %v8099 = vcombine.low %v6765, %v6767
        %v8100 = vcombine.low %v6769, %v6771
        %v8102 = vunpack.c.l.s4 1983009808
        %v8103 = vunpack.c.0.s8 %v8102
        %v8104 = vlaneseq
        %v8105 = vshrl.u32 %v8104, 7
        %v8106 = vsub.s32 %v8103, %v8105
        %v8107 = vrot.slane %v8099, %v8106
        %v8109 = vunpack.c.l.s4 1983009808
        %v8110 = vunpack.c.0.s8 %v8109
        %v8111 = vlaneseq
        %v8112 = vshrl.u32 %v8111, 7
        %v8113 = vsub.s32 %v8110, %v8112
        %v8114 = vrot.slane %v8100, %v8113
        %v8115 = vcombine.low %v8107, %v8114
        %v8116 = vcombine.low %v6132, %v6133
        %v8117 = vcombine.low %v6134, %v6135
        %v8119 = vunpack.c.l.s4 1983009808
        %v8120 = vunpack.c.0.s8 %v8119
        %v8121 = vlaneseq
        %v8122 = vshrl.u32 %v8121, 7
        %v8123 = vsub.s32 %v8120, %v8122
        %v8124 = vrot.slane %v8116, %v8123
        %v8126 = vunpack.c.l.s4 1983009808
        %v8127 = vunpack.c.0.s8 %v8126
        %v8128 = vlaneseq
        %v8129 = vshrl.u32 %v8128, 7
        %v8130 = vsub.s32 %v8127, %v8129
        %v8131 = vrot.slane %v8117, %v8130
        %v8132 = vcombine.low %v8124, %v8131
        %v8133 = vcombine.low %v6136, %v6137
        %v8134 = vcombine.low %v6138, %v6139
        %v8136 = vunpack.c.l.s4 1983009808
        %v8137 = vunpack.c.0.s8 %v8136
        %v8138 = vlaneseq
        %v8139 = vshrl.u32 %v8138, 7
        %v8140 = vsub.s32 %v8137, %v8139
        %v8141 = vrot.slane %v8133, %v8140
        %v8143 = vunpack.c.l.s4 1983009808
        %v8144 = vunpack.c.0.s8 %v8143
        %v8145 = vlaneseq
        %v8146 = vshrl.u32 %v8145, 7
        %v8147 = vsub.s32 %v8144, %v8146
        %v8148 = vrot.slane %v8134, %v8147
        %v8149 = vcombine.low %v8141, %v8148
        %v8150 = vcombine.low %v6140, %v6141
        %v8151 = vcombine.low %v6142, %v6143
        %v8153 = vunpack.c.l.s4 1983009808
        %v8154 = vunpack.c.0.s8 %v8153
        %v8155 = vlaneseq
        %v8156 = vshrl.u32 %v8155, 7
        %v8157 = vsub.s32 %v8154, %v8156
        %v8158 = vrot.slane %v8150, %v8157
        %v8160 = vunpack.c.l.s4 1983009808
        %v8161 = vunpack.c.0.s8 %v8160
        %v8162 = vlaneseq
        %v8163 = vshrl.u32 %v8162, 7
        %v8164 = vsub.s32 %v8161, %v8163
        %v8165 = vrot.slane %v8151, %v8164
        %v8166 = vcombine.low %v8158, %v8165
        %v8167 = vcombine.low %v6144, %v6145
        %v8168 = vcombine.low %v6146, %v6147
        %v8170 = vunpack.c.l.s4 1983009808
        %v8171 = vunpack.c.0.s8 %v8170
        %v8172 = vlaneseq
        %v8173 = vshrl.u32 %v8172, 7
        %v8174 = vsub.s32 %v8171, %v8173
        %v8175 = vrot.slane %v8167, %v8174
        %v8177 = vunpack.c.l.s4 1983009808
        %v8178 = vunpack.c.0.s8 %v8177
        %v8179 = vlaneseq
        %v8180 = vshrl.u32 %v8179, 7
        %v8181 = vsub.s32 %v8178, %v8180
        %v8182 = vrot.slane %v8168, %v8181
        %v8183 = vcombine.low %v8175, %v8182
        %v8184 = vcombine.low %v6773, %v6775
        %v8185 = vcombine.low %v6777, %v6779
        %v8187 = vunpack.c.l.s4 1983009808
        %v8188 = vunpack.c.0.s8 %v8187
        %v8189 = vlaneseq
        %v8190 = vshrl.u32 %v8189, 7
        %v8191 = vsub.s32 %v8188, %v8190
        %v8192 = vrot.slane %v8184, %v8191
        %v8194 = vunpack.c.l.s4 1983009808
        %v8195 = vunpack.c.0.s8 %v8194
        %v8196 = vlaneseq
        %v8197 = vshrl.u32 %v8196, 7
        %v8198 = vsub.s32 %v8195, %v8197
        %v8199 = vrot.slane %v8185, %v8198
        %v8200 = vcombine.low %v8192, %v8199
        %v8201 = vcombine.low %v6781, %v6783
        %v8202 = vcombine.low %v6785, %v6787
        %v8204 = vunpack.c.l.s4 1983009808
        %v8205 = vunpack.c.0.s8 %v8204
        %v8206 = vlaneseq
        %v8207 = vshrl.u32 %v8206, 7
        %v8208 = vsub.s32 %v8205, %v8207
        %v8209 = vrot.slane %v8201, %v8208
        %v8211 = vunpack.c.l.s4 1983009808
        %v8212 = vunpack.c.0.s8 %v8211
        %v8213 = vlaneseq
        %v8214 = vshrl.u32 %v8213, 7
        %v8215 = vsub.s32 %v8212, %v8214
        %v8216 = vrot.slane %v8202, %v8215
        %v8217 = vcombine.low %v8209, %v8216
        %v8218 = vcombine.low %v6789, %v6791
        %v8219 = vcombine.low %v6793, %v6795
        %v8221 = vunpack.c.l.s4 1983009808
        %v8222 = vunpack.c.0.s8 %v8221
        %v8223 = vlaneseq
        %v8224 = vshrl.u32 %v8223, 7
        %v8225 = vsub.s32 %v8222, %v8224
        %v8226 = vrot.slane %v8218, %v8225
        %v8228 = vunpack.c.l.s4 1983009808
        %v8229 = vunpack.c.0.s8 %v8228
        %v8230 = vlaneseq
        %v8231 = vshrl.u32 %v8230, 7
        %v8232 = vsub.s32 %v8229, %v8231
        %v8233 = vrot.slane %v8219, %v8232
        %v8234 = vcombine.low %v8226, %v8233
        %v8235 = vcombine.low %v6797, %v6799
        %v8236 = vcombine.low %v6801, %v6803
        %v8238 = vunpack.c.l.s4 1983009808
        %v8239 = vunpack.c.0.s8 %v8238
        %v8240 = vlaneseq
        %v8241 = vshrl.u32 %v8240, 7
        %v8242 = vsub.s32 %v8239, %v8241
        %v8243 = vrot.slane %v8235, %v8242
        %v8245 = vunpack.c.l.s4 1983009808
        %v8246 = vunpack.c.0.s8 %v8245
        %v8247 = vlaneseq
        %v8248 = vshrl.u32 %v8247, 7
        %v8249 = vsub.s32 %v8246, %v8248
        %v8250 = vrot.slane %v8236, %v8249
        %v8251 = vcombine.low %v8243, %v8250
        %v8252 = vcombine.low %v6148, %v6149
        %v8253 = vcombine.low %v6150, %v6151
        %v8255 = vunpack.c.l.s4 1983009808
        %v8256 = vunpack.c.0.s8 %v8255
        %v8257 = vlaneseq
        %v8258 = vshrl.u32 %v8257, 7
        %v8259 = vsub.s32 %v8256, %v8258
        %v8260 = vrot.slane %v8252, %v8259
        %v8262 = vunpack.c.l.s4 1983009808
        %v8263 = vunpack.c.0.s8 %v8262
        %v8264 = vlaneseq
        %v8265 = vshrl.u32 %v8264, 7
        %v8266 = vsub.s32 %v8263, %v8265
        %v8267 = vrot.slane %v8253, %v8266
        %v8268 = vcombine.low %v8260, %v8267
        %v8269 = vcombine.low %v6152, %v6153
        %v8270 = vcombine.low %v6154, %v6155
        %v8272 = vunpack.c.l.s4 1983009808
        %v8273 = vunpack.c.0.s8 %v8272
        %v8274 = vlaneseq
        %v8275 = vshrl.u32 %v8274, 7
        %v8276 = vsub.s32 %v8273, %v8275
        %v8277 = vrot.slane %v8269, %v8276
        %v8279 = vunpack.c.l.s4 1983009808
        %v8280 = vunpack.c.0.s8 %v8279
        %v8281 = vlaneseq
        %v8282 = vshrl.u32 %v8281, 7
        %v8283 = vsub.s32 %v8280, %v8282
        %v8284 = vrot.slane %v8270, %v8283
        %v8285 = vcombine.low %v8277, %v8284
        %v8286 = vcombine.low %v6156, %v6157
        %v8287 = vcombine.low %v6158, %v6159
        %v8289 = vunpack.c.l.s4 1983009808
        %v8290 = vunpack.c.0.s8 %v8289
        %v8291 = vlaneseq
        %v8292 = vshrl.u32 %v8291, 7
        %v8293 = vsub.s32 %v8290, %v8292
        %v8294 = vrot.slane %v8286, %v8293
        %v8296 = vunpack.c.l.s4 1983009808
        %v8297 = vunpack.c.0.s8 %v8296
        %v8298 = vlaneseq
        %v8299 = vshrl.u32 %v8298, 7
        %v8300 = vsub.s32 %v8297, %v8299
        %v8301 = vrot.slane %v8287, %v8300
        %v8302 = vcombine.low %v8294, %v8301
        %v8303 = vcombine.low %v6160, %v6161
        %v8304 = vcombine.low %v6162, %v6163
        %v8306 = vunpack.c.l.s4 1983009808
        %v8307 = vunpack.c.0.s8 %v8306
        %v8308 = vlaneseq
        %v8309 = vshrl.u32 %v8308, 7
        %v8310 = vsub.s32 %v8307, %v8309
        %v8311 = vrot.slane %v8303, %v8310
        %v8313 = vunpack.c.l.s4 1983009808
        %v8314 = vunpack.c.0.s8 %v8313
        %v8315 = vlaneseq
        %v8316 = vshrl.u32 %v8315, 7
        %v8317 = vsub.s32 %v8314, %v8316
        %v8318 = vrot.slane %v8304, %v8317
        %v8319 = vcombine.low %v8311, %v8318
        %v8320 = vcombine.low %v6805, %v6807
        %v8321 = vcombine.low %v6809, %v6811
        %v8323 = vunpack.c.l.s4 1983009808
        %v8324 = vunpack.c.0.s8 %v8323
        %v8325 = vlaneseq
        %v8326 = vshrl.u32 %v8325, 7
        %v8327 = vsub.s32 %v8324, %v8326
        %v8328 = vrot.slane %v8320, %v8327
        %v8330 = vunpack.c.l.s4 1983009808
        %v8331 = vunpack.c.0.s8 %v8330
        %v8332 = vlaneseq
        %v8333 = vshrl.u32 %v8332, 7
        %v8334 = vsub.s32 %v8331, %v8333
        %v8335 = vrot.slane %v8321, %v8334
        %v8336 = vcombine.low %v8328, %v8335
        %v8337 = vcombine.low %v6813, %v6815
        %v8338 = vcombine.low %v6817, %v6819
        %v8340 = vunpack.c.l.s4 1983009808
        %v8341 = vunpack.c.0.s8 %v8340
        %v8342 = vlaneseq
        %v8343 = vshrl.u32 %v8342, 7
        %v8344 = vsub.s32 %v8341, %v8343
        %v8345 = vrot.slane %v8337, %v8344
        %v8347 = vunpack.c.l.s4 1983009808
        %v8348 = vunpack.c.0.s8 %v8347
        %v8349 = vlaneseq
        %v8350 = vshrl.u32 %v8349, 7
        %v8351 = vsub.s32 %v8348, %v8350
        %v8352 = vrot.slane %v8338, %v8351
        %v8353 = vcombine.low %v8345, %v8352
        %v8354 = vcombine.low %v6821, %v6823
        %v8355 = vcombine.low %v6825, %v6827
        %v8357 = vunpack.c.l.s4 1983009808
        %v8358 = vunpack.c.0.s8 %v8357
        %v8359 = vlaneseq
        %v8360 = vshrl.u32 %v8359, 7
        %v8361 = vsub.s32 %v8358, %v8360
        %v8362 = vrot.slane %v8354, %v8361
        %v8364 = vunpack.c.l.s4 1983009808
        %v8365 = vunpack.c.0.s8 %v8364
        %v8366 = vlaneseq
        %v8367 = vshrl.u32 %v8366, 7
        %v8368 = vsub.s32 %v8365, %v8367
        %v8369 = vrot.slane %v8355, %v8368
        %v8370 = vcombine.low %v8362, %v8369
        %v8371 = vcombine.low %v6829, %v6831
        %v8372 = vcombine.low %v6833, %v6835
        %v8374 = vunpack.c.l.s4 1983009808
        %v8375 = vunpack.c.0.s8 %v8374
        %v8376 = vlaneseq
        %v8377 = vshrl.u32 %v8376, 7
        %v8378 = vsub.s32 %v8375, %v8377
        %v8379 = vrot.slane %v8371, %v8378
        %v8381 = vunpack.c.l.s4 1983009808
        %v8382 = vunpack.c.0.s8 %v8381
        %v8383 = vlaneseq
        %v8384 = vshrl.u32 %v8383, 7
        %v8385 = vsub.s32 %v8382, %v8384
        %v8386 = vrot.slane %v8372, %v8385
        %v8387 = vcombine.low %v8379, %v8386
        %v8388 = vcombine.low %v6164, %v6165
        %v8389 = vcombine.low %v6166, %v6167
        %v8391 = vunpack.c.l.s4 1983009808
        %v8392 = vunpack.c.0.s8 %v8391
        %v8393 = vlaneseq
        %v8394 = vshrl.u32 %v8393, 7
        %v8395 = vsub.s32 %v8392, %v8394
        %v8396 = vrot.slane %v8388, %v8395
        %v8398 = vunpack.c.l.s4 1983009808
        %v8399 = vunpack.c.0.s8 %v8398
        %v8400 = vlaneseq
        %v8401 = vshrl.u32 %v8400, 7
        %v8402 = vsub.s32 %v8399, %v8401
        %v8403 = vrot.slane %v8389, %v8402
        %v8404 = vcombine.low %v8396, %v8403
        %v8405 = vcombine.low %v6168, %v6169
        %v8406 = vcombine.low %v6170, %v6171
        %v8408 = vunpack.c.l.s4 1983009808
        %v8409 = vunpack.c.0.s8 %v8408
        %v8410 = vlaneseq
        %v8411 = vshrl.u32 %v8410, 7
        %v8412 = vsub.s32 %v8409, %v8411
        %v8413 = vrot.slane %v8405, %v8412
        %v8415 = vunpack.c.l.s4 1983009808
        %v8416 = vunpack.c.0.s8 %v8415
        %v8417 = vlaneseq
        %v8418 = vshrl.u32 %v8417, 7
        %v8419 = vsub.s32 %v8416, %v8418
        %v8420 = vrot.slane %v8406, %v8419
        %v8421 = vcombine.low %v8413, %v8420
        %v8422 = vcombine.low %v6172, %v6173
        %v8423 = vcombine.low %v6174, %v6175
        %v8425 = vunpack.c.l.s4 1983009808
        %v8426 = vunpack.c.0.s8 %v8425
        %v8427 = vlaneseq
        %v8428 = vshrl.u32 %v8427, 7
        %v8429 = vsub.s32 %v8426, %v8428
        %v8430 = vrot.slane %v8422, %v8429
        %v8432 = vunpack.c.l.s4 1983009808
        %v8433 = vunpack.c.0.s8 %v8432
        %v8434 = vlaneseq
        %v8435 = vshrl.u32 %v8434, 7
        %v8436 = vsub.s32 %v8433, %v8435
        %v8437 = vrot.slane %v8423, %v8436
        %v8438 = vcombine.low %v8430, %v8437
        %v8439 = vcombine.low %v6176, %v6177
        %v8440 = vcombine.low %v6178, %v6179
        %v8442 = vunpack.c.l.s4 1983009808
        %v8443 = vunpack.c.0.s8 %v8442
        %v8444 = vlaneseq
        %v8445 = vshrl.u32 %v8444, 7
        %v8446 = vsub.s32 %v8443, %v8445
        %v8447 = vrot.slane %v8439, %v8446
        %v8449 = vunpack.c.l.s4 1983009808
        %v8450 = vunpack.c.0.s8 %v8449
        %v8451 = vlaneseq
        %v8452 = vshrl.u32 %v8451, 7
        %v8453 = vsub.s32 %v8450, %v8452
        %v8454 = vrot.slane %v8440, %v8453
        %v8455 = vcombine.low %v8447, %v8454
        %v8456 = vcombine.low %v6837, %v6839
        %v8457 = vcombine.low %v6841, %v6843
        %v8459 = vunpack.c.l.s4 1983009808
        %v8460 = vunpack.c.0.s8 %v8459
        %v8461 = vlaneseq
        %v8462 = vshrl.u32 %v8461, 7
        %v8463 = vsub.s32 %v8460, %v8462
        %v8464 = vrot.slane %v8456, %v8463
        %v8466 = vunpack.c.l.s4 1983009808
        %v8467 = vunpack.c.0.s8 %v8466
        %v8468 = vlaneseq
        %v8469 = vshrl.u32 %v8468, 7
        %v8470 = vsub.s32 %v8467, %v8469
        %v8471 = vrot.slane %v8457, %v8470
        %v8472 = vcombine.low %v8464, %v8471
        %v8473 = vcombine.low %v6845, %v6847
        %v8474 = vcombine.low %v6849, %v6851
        %v8476 = vunpack.c.l.s4 1983009808
        %v8477 = vunpack.c.0.s8 %v8476
        %v8478 = vlaneseq
        %v8479 = vshrl.u32 %v8478, 7
        %v8480 = vsub.s32 %v8477, %v8479
        %v8481 = vrot.slane %v8473, %v8480
        %v8483 = vunpack.c.l.s4 1983009808
        %v8484 = vunpack.c.0.s8 %v8483
        %v8485 = vlaneseq
        %v8486 = vshrl.u32 %v8485, 7
        %v8487 = vsub.s32 %v8484, %v8486
        %v8488 = vrot.slane %v8474, %v8487
        %v8489 = vcombine.low %v8481, %v8488
        %v8490 = vcombine.low %v6853, %v6855
        %v8491 = vcombine.low %v6857, %v6859
        %v8493 = vunpack.c.l.s4 1983009808
        %v8494 = vunpack.c.0.s8 %v8493
        %v8495 = vlaneseq
        %v8496 = vshrl.u32 %v8495, 7
        %v8497 = vsub.s32 %v8494, %v8496
        %v8498 = vrot.slane %v8490, %v8497
        %v8500 = vunpack.c.l.s4 1983009808
        %v8501 = vunpack.c.0.s8 %v8500
        %v8502 = vlaneseq
        %v8503 = vshrl.u32 %v8502, 7
        %v8504 = vsub.s32 %v8501, %v8503
        %v8505 = vrot.slane %v8491, %v8504
        %v8506 = vcombine.low %v8498, %v8505
        %v8507 = vcombine.low %v6861, %v6863
        %v8508 = vcombine.low %v6865, %v6867
        %v8510 = vunpack.c.l.s4 1983009808
        %v8511 = vunpack.c.0.s8 %v8510
        %v8512 = vlaneseq
        %v8513 = vshrl.u32 %v8512, 7
        %v8514 = vsub.s32 %v8511, %v8513
        %v8515 = vrot.slane %v8507, %v8514
        %v8517 = vunpack.c.l.s4 1983009808
        %v8518 = vunpack.c.0.s8 %v8517
        %v8519 = vlaneseq
        %v8520 = vshrl.u32 %v8519, 7
        %v8521 = vsub.s32 %v8518, %v8520
        %v8522 = vrot.slane %v8508, %v8521
        %v8523 = vcombine.low %v8515, %v8522
        %v8524 = vcombine.low %v6180, %v6181
        %v8525 = vcombine.low %v6182, %v6183
        %v8527 = vunpack.c.l.s4 1983009808
        %v8528 = vunpack.c.0.s8 %v8527
        %v8529 = vlaneseq
        %v8530 = vshrl.u32 %v8529, 7
        %v8531 = vsub.s32 %v8528, %v8530
        %v8532 = vrot.slane %v8524, %v8531
        %v8534 = vunpack.c.l.s4 1983009808
        %v8535 = vunpack.c.0.s8 %v8534
        %v8536 = vlaneseq
        %v8537 = vshrl.u32 %v8536, 7
        %v8538 = vsub.s32 %v8535, %v8537
        %v8539 = vrot.slane %v8525, %v8538
        %v8540 = vcombine.low %v8532, %v8539
        %v8541 = vcombine.low %v6184, %v6185
        %v8542 = vcombine.low %v6186, %v6187
        %v8544 = vunpack.c.l.s4 1983009808
        %v8545 = vunpack.c.0.s8 %v8544
        %v8546 = vlaneseq
        %v8547 = vshrl.u32 %v8546, 7
        %v8548 = vsub.s32 %v8545, %v8547
        %v8549 = vrot.slane %v8541, %v8548
        %v8551 = vunpack.c.l.s4 1983009808
        %v8552 = vunpack.c.0.s8 %v8551
        %v8553 = vlaneseq
        %v8554 = vshrl.u32 %v8553, 7
        %v8555 = vsub.s32 %v8552, %v8554
        %v8556 = vrot.slane %v8542, %v8555
        %v8557 = vcombine.low %v8549, %v8556
        %v8558 = vcombine.low %v6188, %v6189
        %v8559 = vcombine.low %v6190, %v6191
        %v8561 = vunpack.c.l.s4 1983009808
        %v8562 = vunpack.c.0.s8 %v8561
        %v8563 = vlaneseq
        %v8564 = vshrl.u32 %v8563, 7
        %v8565 = vsub.s32 %v8562, %v8564
        %v8566 = vrot.slane %v8558, %v8565
        %v8568 = vunpack.c.l.s4 1983009808
        %v8569 = vunpack.c.0.s8 %v8568
        %v8570 = vlaneseq
        %v8571 = vshrl.u32 %v8570, 7
        %v8572 = vsub.s32 %v8569, %v8571
        %v8573 = vrot.slane %v8559, %v8572
        %v8574 = vcombine.low %v8566, %v8573
        %v8575 = vcombine.low %v6192, %v6193
        %v8576 = vcombine.low %v6194, %v6195
        %v8578 = vunpack.c.l.s4 1983009808
        %v8579 = vunpack.c.0.s8 %v8578
        %v8580 = vlaneseq
        %v8581 = vshrl.u32 %v8580, 7
        %v8582 = vsub.s32 %v8579, %v8581
        %v8583 = vrot.slane %v8575, %v8582
        %v8585 = vunpack.c.l.s4 1983009808
        %v8586 = vunpack.c.0.s8 %v8585
        %v8587 = vlaneseq
        %v8588 = vshrl.u32 %v8587, 7
        %v8589 = vsub.s32 %v8586, %v8588
        %v8590 = vrot.slane %v8576, %v8589
        %v8591 = vcombine.low %v8583, %v8590
        %v8592 = vcombine.low %v6869, %v6871
        %v8593 = vcombine.low %v6873, %v6875
        %v8595 = vunpack.c.l.s4 1983009808
        %v8596 = vunpack.c.0.s8 %v8595
        %v8597 = vlaneseq
        %v8598 = vshrl.u32 %v8597, 7
        %v8599 = vsub.s32 %v8596, %v8598
        %v8600 = vrot.slane %v8592, %v8599
        %v8602 = vunpack.c.l.s4 1983009808
        %v8603 = vunpack.c.0.s8 %v8602
        %v8604 = vlaneseq
        %v8605 = vshrl.u32 %v8604, 7
        %v8606 = vsub.s32 %v8603, %v8605
        %v8607 = vrot.slane %v8593, %v8606
        %v8608 = vcombine.low %v8600, %v8607
        %v8609 = vcombine.low %v6877, %v6879
        %v8610 = vcombine.low %v6881, %v6883
        %v8612 = vunpack.c.l.s4 1983009808
        %v8613 = vunpack.c.0.s8 %v8612
        %v8614 = vlaneseq
        %v8615 = vshrl.u32 %v8614, 7
        %v8616 = vsub.s32 %v8613, %v8615
        %v8617 = vrot.slane %v8609, %v8616
        %v8619 = vunpack.c.l.s4 1983009808
        %v8620 = vunpack.c.0.s8 %v8619
        %v8621 = vlaneseq
        %v8622 = vshrl.u32 %v8621, 7
        %v8623 = vsub.s32 %v8620, %v8622
        %v8624 = vrot.slane %v8610, %v8623
        %v8625 = vcombine.low %v8617, %v8624
        %v8626 = vcombine.low %v6885, %v6887
        %v8627 = vcombine.low %v6889, %v6891
        %v8629 = vunpack.c.l.s4 1983009808
        %v8630 = vunpack.c.0.s8 %v8629
        %v8631 = vlaneseq
        %v8632 = vshrl.u32 %v8631, 7
        %v8633 = vsub.s32 %v8630, %v8632
        %v8634 = vrot.slane %v8626, %v8633
        %v8636 = vunpack.c.l.s4 1983009808
        %v8637 = vunpack.c.0.s8 %v8636
        %v8638 = vlaneseq
        %v8639 = vshrl.u32 %v8638, 7
        %v8640 = vsub.s32 %v8637, %v8639
        %v8641 = vrot.slane %v8627, %v8640
        %v8642 = vcombine.low %v8634, %v8641
        %v8643 = vcombine.low %v6893, %v6895
        %v8644 = vcombine.low %v6897, %v6899
        %v8646 = vunpack.c.l.s4 1983009808
        %v8647 = vunpack.c.0.s8 %v8646
        %v8648 = vlaneseq
        %v8649 = vshrl.u32 %v8648, 7
        %v8650 = vsub.s32 %v8647, %v8649
        %v8651 = vrot.slane %v8643, %v8650
        %v8653 = vunpack.c.l.s4 1983009808
        %v8654 = vunpack.c.0.s8 %v8653
        %v8655 = vlaneseq
        %v8656 = vshrl.u32 %v8655, 7
        %v8657 = vsub.s32 %v8654, %v8656
        %v8658 = vrot.slane %v8644, %v8657
        %v8659 = vcombine.low %v8651, %v8658
        %v8660 = vcombine.low %v6196, %v6197
        %v8661 = vcombine.low %v6198, %v6199
        %v8663 = vunpack.c.l.s4 1983009808
        %v8664 = vunpack.c.0.s8 %v8663
        %v8665 = vlaneseq
        %v8666 = vshrl.u32 %v8665, 7
        %v8667 = vsub.s32 %v8664, %v8666
        %v8668 = vrot.slane %v8660, %v8667
        %v8670 = vunpack.c.l.s4 1983009808
        %v8671 = vunpack.c.0.s8 %v8670
        %v8672 = vlaneseq
        %v8673 = vshrl.u32 %v8672, 7
        %v8674 = vsub.s32 %v8671, %v8673
        %v8675 = vrot.slane %v8661, %v8674
        %v8676 = vcombine.low %v8668, %v8675
        %v8677 = vcombine.low %v6200, %v6201
        %v8678 = vcombine.low %v6202, %v6203
        %v8680 = vunpack.c.l.s4 1983009808
        %v8681 = vunpack.c.0.s8 %v8680
        %v8682 = vlaneseq
        %v8683 = vshrl.u32 %v8682, 7
        %v8684 = vsub.s32 %v8681, %v8683
        %v8685 = vrot.slane %v8677, %v8684
        %v8687 = vunpack.c.l.s4 1983009808
        %v8688 = vunpack.c.0.s8 %v8687
        %v8689 = vlaneseq
        %v8690 = vshrl.u32 %v8689, 7
        %v8691 = vsub.s32 %v8688, %v8690
        %v8692 = vrot.slane %v8678, %v8691
        %v8693 = vcombine.low %v8685, %v8692
        %v8694 = vcombine.low %v6204, %v6205
        %v8695 = vcombine.low %v6206, %v6207
        %v8697 = vunpack.c.l.s4 1983009808
        %v8698 = vunpack.c.0.s8 %v8697
        %v8699 = vlaneseq
        %v8700 = vshrl.u32 %v8699, 7
        %v8701 = vsub.s32 %v8698, %v8700
        %v8702 = vrot.slane %v8694, %v8701
        %v8704 = vunpack.c.l.s4 1983009808
        %v8705 = vunpack.c.0.s8 %v8704
        %v8706 = vlaneseq
        %v8707 = vshrl.u32 %v8706, 7
        %v8708 = vsub.s32 %v8705, %v8707
        %v8709 = vrot.slane %v8695, %v8708
        %v8710 = vcombine.low %v8702, %v8709
        %v8711 = vcombine.low %v6208, %v6209
        %v8712 = vcombine.low %v6210, %v6211
        %v8714 = vunpack.c.l.s4 1983009808
        %v8715 = vunpack.c.0.s8 %v8714
        %v8716 = vlaneseq
        %v8717 = vshrl.u32 %v8716, 7
        %v8718 = vsub.s32 %v8715, %v8717
        %v8719 = vrot.slane %v8711, %v8718
        %v8721 = vunpack.c.l.s4 1983009808
        %v8722 = vunpack.c.0.s8 %v8721
        %v8723 = vlaneseq
        %v8724 = vshrl.u32 %v8723, 7
        %v8725 = vsub.s32 %v8722, %v8724
        %v8726 = vrot.slane %v8712, %v8725
        %v8727 = vcombine.low %v8719, %v8726
        %v8728 = vcombine.low %v6901, %v6903
        %v8729 = vcombine.low %v6905, %v6907
        %v8731 = vunpack.c.l.s4 1983009808
        %v8732 = vunpack.c.0.s8 %v8731
        %v8733 = vlaneseq
        %v8734 = vshrl.u32 %v8733, 7
        %v8735 = vsub.s32 %v8732, %v8734
        %v8736 = vrot.slane %v8728, %v8735
        %v8738 = vunpack.c.l.s4 1983009808
        %v8739 = vunpack.c.0.s8 %v8738
        %v8740 = vlaneseq
        %v8741 = vshrl.u32 %v8740, 7
        %v8742 = vsub.s32 %v8739, %v8741
        %v8743 = vrot.slane %v8729, %v8742
        %v8744 = vcombine.low %v8736, %v8743
        %v8745 = vcombine.low %v6909, %v6911
        %v8746 = vcombine.low %v6913, %v6915
        %v8748 = vunpack.c.l.s4 1983009808
        %v8749 = vunpack.c.0.s8 %v8748
        %v8750 = vlaneseq
        %v8751 = vshrl.u32 %v8750, 7
        %v8752 = vsub.s32 %v8749, %v8751
        %v8753 = vrot.slane %v8745, %v8752
        %v8755 = vunpack.c.l.s4 1983009808
        %v8756 = vunpack.c.0.s8 %v8755
        %v8757 = vlaneseq
        %v8758 = vshrl.u32 %v8757, 7
        %v8759 = vsub.s32 %v8756, %v8758
        %v8760 = vrot.slane %v8746, %v8759
        %v8761 = vcombine.low %v8753, %v8760
        %v8762 = vcombine.low %v6917, %v6919
        %v8763 = vcombine.low %v6921, %v6923
        %v8765 = vunpack.c.l.s4 1983009808
        %v8766 = vunpack.c.0.s8 %v8765
        %v8767 = vlaneseq
        %v8768 = vshrl.u32 %v8767, 7
        %v8769 = vsub.s32 %v8766, %v8768
        %v8770 = vrot.slane %v8762, %v8769
        %v8772 = vunpack.c.l.s4 1983009808
        %v8773 = vunpack.c.0.s8 %v8772
        %v8774 = vlaneseq
        %v8775 = vshrl.u32 %v8774, 7
        %v8776 = vsub.s32 %v8773, %v8775
        %v8777 = vrot.slane %v8763, %v8776
        %v8778 = vcombine.low %v8770, %v8777
        %v8779 = vcombine.low %v6925, %v6927
        %v8780 = vcombine.low %v6929, %v6931
        %v8782 = vunpack.c.l.s4 1983009808
        %v8783 = vunpack.c.0.s8 %v8782
        %v8784 = vlaneseq
        %v8785 = vshrl.u32 %v8784, 7
        %v8786 = vsub.s32 %v8783, %v8785
        %v8787 = vrot.slane %v8779, %v8786
        %v8789 = vunpack.c.l.s4 1983009808
        %v8790 = vunpack.c.0.s8 %v8789
        %v8791 = vlaneseq
        %v8792 = vshrl.u32 %v8791, 7
        %v8793 = vsub.s32 %v8790, %v8792
        %v8794 = vrot.slane %v8780, %v8793
        %v8795 = vcombine.low %v8787, %v8794
        %v8796 = vcombine.low %v6212, %v6213
        %v8797 = vcombine.low %v6214, %v6215
        %v8799 = vunpack.c.l.s4 1983009808
        %v8800 = vunpack.c.0.s8 %v8799
        %v8801 = vlaneseq
        %v8802 = vshrl.u32 %v8801, 7
        %v8803 = vsub.s32 %v8800, %v8802
        %v8804 = vrot.slane %v8796, %v8803
        %v8806 = vunpack.c.l.s4 1983009808
        %v8807 = vunpack.c.0.s8 %v8806
        %v8808 = vlaneseq
        %v8809 = vshrl.u32 %v8808, 7
        %v8810 = vsub.s32 %v8807, %v8809
        %v8811 = vrot.slane %v8797, %v8810
        %v8812 = vcombine.low %v8804, %v8811
        %v8813 = vcombine.low %v6216, %v6217
        %v8814 = vcombine.low %v6218, %v6219
        %v8816 = vunpack.c.l.s4 1983009808
        %v8817 = vunpack.c.0.s8 %v8816
        %v8818 = vlaneseq
        %v8819 = vshrl.u32 %v8818, 7
        %v8820 = vsub.s32 %v8817, %v8819
        %v8821 = vrot.slane %v8813, %v8820
        %v8823 = vunpack.c.l.s4 1983009808
        %v8824 = vunpack.c.0.s8 %v8823
        %v8825 = vlaneseq
        %v8826 = vshrl.u32 %v8825, 7
        %v8827 = vsub.s32 %v8824, %v8826
        %v8828 = vrot.slane %v8814, %v8827
        %v8829 = vcombine.low %v8821, %v8828
        %v8830 = vcombine.low %v6220, %v6221
        %v8831 = vcombine.low %v6222, %v6223
        %v8833 = vunpack.c.l.s4 1983009808
        %v8834 = vunpack.c.0.s8 %v8833
        %v8835 = vlaneseq
        %v8836 = vshrl.u32 %v8835, 7
        %v8837 = vsub.s32 %v8834, %v8836
        %v8838 = vrot.slane %v8830, %v8837
        %v8840 = vunpack.c.l.s4 1983009808
        %v8841 = vunpack.c.0.s8 %v8840
        %v8842 = vlaneseq
        %v8843 = vshrl.u32 %v8842, 7
        %v8844 = vsub.s32 %v8841, %v8843
        %v8845 = vrot.slane %v8831, %v8844
        %v8846 = vcombine.low %v8838, %v8845
        %v8847 = vcombine.low %v6224, %v6225
        %v8848 = vcombine.low %v6226, %v6227
        %v8850 = vunpack.c.l.s4 1983009808
        %v8851 = vunpack.c.0.s8 %v8850
        %v8852 = vlaneseq
        %v8853 = vshrl.u32 %v8852, 7
        %v8854 = vsub.s32 %v8851, %v8853
        %v8855 = vrot.slane %v8847, %v8854
        %v8857 = vunpack.c.l.s4 1983009808
        %v8858 = vunpack.c.0.s8 %v8857
        %v8859 = vlaneseq
        %v8860 = vshrl.u32 %v8859, 7
        %v8861 = vsub.s32 %v8858, %v8860
        %v8862 = vrot.slane %v8848, %v8861
        %v8863 = vcombine.low %v8855, %v8862
        %v8864 = vcombine.low %v6933, %v6935
        %v8865 = vcombine.low %v6937, %v6939
        %v8867 = vunpack.c.l.s4 1983009808
        %v8868 = vunpack.c.0.s8 %v8867
        %v8869 = vlaneseq
        %v8870 = vshrl.u32 %v8869, 7
        %v8871 = vsub.s32 %v8868, %v8870
        %v8872 = vrot.slane %v8864, %v8871
        %v8874 = vunpack.c.l.s4 1983009808
        %v8875 = vunpack.c.0.s8 %v8874
        %v8876 = vlaneseq
        %v8877 = vshrl.u32 %v8876, 7
        %v8878 = vsub.s32 %v8875, %v8877
        %v8879 = vrot.slane %v8865, %v8878
        %v8880 = vcombine.low %v8872, %v8879
        %v8881 = vcombine.low %v6941, %v6943
        %v8882 = vcombine.low %v6945, %v6947
        %v8884 = vunpack.c.l.s4 1983009808
        %v8885 = vunpack.c.0.s8 %v8884
        %v8886 = vlaneseq
        %v8887 = vshrl.u32 %v8886, 7
        %v8888 = vsub.s32 %v8885, %v8887
        %v8889 = vrot.slane %v8881, %v8888
        %v8891 = vunpack.c.l.s4 1983009808
        %v8892 = vunpack.c.0.s8 %v8891
        %v8893 = vlaneseq
        %v8894 = vshrl.u32 %v8893, 7
        %v8895 = vsub.s32 %v8892, %v8894
        %v8896 = vrot.slane %v8882, %v8895
        %v8897 = vcombine.low %v8889, %v8896
        %v8898 = vcombine.low %v6949, %v6951
        %v8899 = vcombine.low %v6953, %v6955
        %v8901 = vunpack.c.l.s4 1983009808
        %v8902 = vunpack.c.0.s8 %v8901
        %v8903 = vlaneseq
        %v8904 = vshrl.u32 %v8903, 7
        %v8905 = vsub.s32 %v8902, %v8904
        %v8906 = vrot.slane %v8898, %v8905
        %v8908 = vunpack.c.l.s4 1983009808
        %v8909 = vunpack.c.0.s8 %v8908
        %v8910 = vlaneseq
        %v8911 = vshrl.u32 %v8910, 7
        %v8912 = vsub.s32 %v8909, %v8911
        %v8913 = vrot.slane %v8899, %v8912
        %v8914 = vcombine.low %v8906, %v8913
        %v8915 = vcombine.low %v6957, %v6959
        %v8916 = vcombine.low %v6961, %v6963
        %v8918 = vunpack.c.l.s4 1983009808
        %v8919 = vunpack.c.0.s8 %v8918
        %v8920 = vlaneseq
        %v8921 = vshrl.u32 %v8920, 7
        %v8922 = vsub.s32 %v8919, %v8921
        %v8923 = vrot.slane %v8915, %v8922
        %v8925 = vunpack.c.l.s4 1983009808
        %v8926 = vunpack.c.0.s8 %v8925
        %v8927 = vlaneseq
        %v8928 = vshrl.u32 %v8927, 7
        %v8929 = vsub.s32 %v8926, %v8928
        %v8930 = vrot.slane %v8916, %v8929
        %v8931 = vcombine.low %v8923, %v8930
        %v8932 = vcombine.low %v6228, %v6229
        %v8933 = vcombine.low %v6230, %v6231
        %v8935 = vunpack.c.l.s4 1983009808
        %v8936 = vunpack.c.0.s8 %v8935
        %v8937 = vlaneseq
        %v8938 = vshrl.u32 %v8937, 7
        %v8939 = vsub.s32 %v8936, %v8938
        %v8940 = vrot.slane %v8932, %v8939
        %v8942 = vunpack.c.l.s4 1983009808
        %v8943 = vunpack.c.0.s8 %v8942
        %v8944 = vlaneseq
        %v8945 = vshrl.u32 %v8944, 7
        %v8946 = vsub.s32 %v8943, %v8945
        %v8947 = vrot.slane %v8933, %v8946
        %v8948 = vcombine.low %v8940, %v8947
        %v8949 = vcombine.low %v6232, %v6233
        %v8950 = vcombine.low %v6234, %v6235
        %v8952 = vunpack.c.l.s4 1983009808
        %v8953 = vunpack.c.0.s8 %v8952
        %v8954 = vlaneseq
        %v8955 = vshrl.u32 %v8954, 7
        %v8956 = vsub.s32 %v8953, %v8955
        %v8957 = vrot.slane %v8949, %v8956
        %v8959 = vunpack.c.l.s4 1983009808
        %v8960 = vunpack.c.0.s8 %v8959
        %v8961 = vlaneseq
        %v8962 = vshrl.u32 %v8961, 7
        %v8963 = vsub.s32 %v8960, %v8962
        %v8964 = vrot.slane %v8950, %v8963
        %v8965 = vcombine.low %v8957, %v8964
        %v8966 = vcombine.low %v6236, %v6237
        %v8967 = vcombine.low %v6238, %v6239
        %v8969 = vunpack.c.l.s4 1983009808
        %v8970 = vunpack.c.0.s8 %v8969
        %v8971 = vlaneseq
        %v8972 = vshrl.u32 %v8971, 7
        %v8973 = vsub.s32 %v8970, %v8972
        %v8974 = vrot.slane %v8966, %v8973
        %v8976 = vunpack.c.l.s4 1983009808
        %v8977 = vunpack.c.0.s8 %v8976
        %v8978 = vlaneseq
        %v8979 = vshrl.u32 %v8978, 7
        %v8980 = vsub.s32 %v8977, %v8979
        %v8981 = vrot.slane %v8967, %v8980
        %v8982 = vcombine.low %v8974, %v8981
        %v8983 = vcombine.low %v6240, %v6241
        %v8984 = vcombine.low %v6242, %v6243
        %v8986 = vunpack.c.l.s4 1983009808
        %v8987 = vunpack.c.0.s8 %v8986
        %v8988 = vlaneseq
        %v8989 = vshrl.u32 %v8988, 7
        %v8990 = vsub.s32 %v8987, %v8989
        %v8991 = vrot.slane %v8983, %v8990
        %v8993 = vunpack.c.l.s4 1983009808
        %v8994 = vunpack.c.0.s8 %v8993
        %v8995 = vlaneseq
        %v8996 = vshrl.u32 %v8995, 7
        %v8997 = vsub.s32 %v8994, %v8996
        %v8998 = vrot.slane %v8984, %v8997
        %v8999 = vcombine.low %v8991, %v8998
        %v9000 = vcombine.low %v6965, %v6967
        %v9001 = vcombine.low %v6969, %v6971
        %v9003 = vunpack.c.l.s4 1983009808
        %v9004 = vunpack.c.0.s8 %v9003
        %v9005 = vlaneseq
        %v9006 = vshrl.u32 %v9005, 7
        %v9007 = vsub.s32 %v9004, %v9006
        %v9008 = vrot.slane %v9000, %v9007
        %v9010 = vunpack.c.l.s4 1983009808
        %v9011 = vunpack.c.0.s8 %v9010
        %v9012 = vlaneseq
        %v9013 = vshrl.u32 %v9012, 7
        %v9014 = vsub.s32 %v9011, %v9013
        %v9015 = vrot.slane %v9001, %v9014
        %v9016 = vcombine.low %v9008, %v9015
        %v9017 = vcombine.low %v6973, %v6975
        %v9018 = vcombine.low %v6977, %v6979
        %v9020 = vunpack.c.l.s4 1983009808
        %v9021 = vunpack.c.0.s8 %v9020
        %v9022 = vlaneseq
        %v9023 = vshrl.u32 %v9022, 7
        %v9024 = vsub.s32 %v9021, %v9023
        %v9025 = vrot.slane %v9017, %v9024
        %v9027 = vunpack.c.l.s4 1983009808
        %v9028 = vunpack.c.0.s8 %v9027
        %v9029 = vlaneseq
        %v9030 = vshrl.u32 %v9029, 7
        %v9031 = vsub.s32 %v9028, %v9030
        %v9032 = vrot.slane %v9018, %v9031
        %v9033 = vcombine.low %v9025, %v9032
        %v9034 = vcombine.low %v6981, %v6983
        %v9035 = vcombine.low %v6985, %v6987
        %v9037 = vunpack.c.l.s4 1983009808
        %v9038 = vunpack.c.0.s8 %v9037
        %v9039 = vlaneseq
        %v9040 = vshrl.u32 %v9039, 7
        %v9041 = vsub.s32 %v9038, %v9040
        %v9042 = vrot.slane %v9034, %v9041
        %v9044 = vunpack.c.l.s4 1983009808
        %v9045 = vunpack.c.0.s8 %v9044
        %v9046 = vlaneseq
        %v9047 = vshrl.u32 %v9046, 7
        %v9048 = vsub.s32 %v9045, %v9047
        %v9049 = vrot.slane %v9035, %v9048
        %v9050 = vcombine.low %v9042, %v9049
        %v9051 = vcombine.low %v6989, %v6991
        %v9052 = vcombine.low %v6993, %v6995
        %v9054 = vunpack.c.l.s4 1983009808
        %v9055 = vunpack.c.0.s8 %v9054
        %v9056 = vlaneseq
        %v9057 = vshrl.u32 %v9056, 7
        %v9058 = vsub.s32 %v9055, %v9057
        %v9059 = vrot.slane %v9051, %v9058
        %v9061 = vunpack.c.l.s4 1983009808
        %v9062 = vunpack.c.0.s8 %v9061
        %v9063 = vlaneseq
        %v9064 = vshrl.u32 %v9063, 7
        %v9065 = vsub.s32 %v9062, %v9064
        %v9066 = vrot.slane %v9052, %v9065
        %v9067 = vcombine.low %v9059, %v9066
        %v9068 = vcombine.low %v6244, %v6245
        %v9069 = vcombine.low %v6246, %v6247
        %v9071 = vunpack.c.l.s4 1983009808
        %v9072 = vunpack.c.0.s8 %v9071
        %v9073 = vlaneseq
        %v9074 = vshrl.u32 %v9073, 7
        %v9075 = vsub.s32 %v9072, %v9074
        %v9076 = vrot.slane %v9068, %v9075
        %v9078 = vunpack.c.l.s4 1983009808
        %v9079 = vunpack.c.0.s8 %v9078
        %v9080 = vlaneseq
        %v9081 = vshrl.u32 %v9080, 7
        %v9082 = vsub.s32 %v9079, %v9081
        %v9083 = vrot.slane %v9069, %v9082
        %v9084 = vcombine.low %v9076, %v9083
        %v9085 = vcombine.low %v6248, %v6249
        %v9086 = vcombine.low %v6250, %v6251
        %v9088 = vunpack.c.l.s4 1983009808
        %v9089 = vunpack.c.0.s8 %v9088
        %v9090 = vlaneseq
        %v9091 = vshrl.u32 %v9090, 7
        %v9092 = vsub.s32 %v9089, %v9091
        %v9093 = vrot.slane %v9085, %v9092
        %v9095 = vunpack.c.l.s4 1983009808
        %v9096 = vunpack.c.0.s8 %v9095
        %v9097 = vlaneseq
        %v9098 = vshrl.u32 %v9097, 7
        %v9099 = vsub.s32 %v9096, %v9098
        %v9100 = vrot.slane %v9086, %v9099
        %v9101 = vcombine.low %v9093, %v9100
        %v9102 = vcombine.low %v6252, %v6253
        %v9103 = vcombine.low %v6254, %v6255
        %v9105 = vunpack.c.l.s4 1983009808
        %v9106 = vunpack.c.0.s8 %v9105
        %v9107 = vlaneseq
        %v9108 = vshrl.u32 %v9107, 7
        %v9109 = vsub.s32 %v9106, %v9108
        %v9110 = vrot.slane %v9102, %v9109
        %v9112 = vunpack.c.l.s4 1983009808
        %v9113 = vunpack.c.0.s8 %v9112
        %v9114 = vlaneseq
        %v9115 = vshrl.u32 %v9114, 7
        %v9116 = vsub.s32 %v9113, %v9115
        %v9117 = vrot.slane %v9103, %v9116
        %v9118 = vcombine.low %v9110, %v9117
        %v9119 = vcombine.low %v6256, %v6257
        %v9120 = vcombine.low %v6258, %v6259
        %v9122 = vunpack.c.l.s4 1983009808
        %v9123 = vunpack.c.0.s8 %v9122
        %v9124 = vlaneseq
        %v9125 = vshrl.u32 %v9124, 7
        %v9126 = vsub.s32 %v9123, %v9125
        %v9127 = vrot.slane %v9119, %v9126
        %v9129 = vunpack.c.l.s4 1983009808
        %v9130 = vunpack.c.0.s8 %v9129
        %v9131 = vlaneseq
        %v9132 = vshrl.u32 %v9131, 7
        %v9133 = vsub.s32 %v9130, %v9132
        %v9134 = vrot.slane %v9120, %v9133
        %v9135 = vcombine.low %v9127, %v9134
        %v9136 = vcombine.low %v6997, %v6999
        %v9137 = vcombine.low %v7001, %v7003
        %v9139 = vunpack.c.l.s4 1983009808
        %v9140 = vunpack.c.0.s8 %v9139
        %v9141 = vlaneseq
        %v9142 = vshrl.u32 %v9141, 7
        %v9143 = vsub.s32 %v9140, %v9142
        %v9144 = vrot.slane %v9136, %v9143
        %v9146 = vunpack.c.l.s4 1983009808
        %v9147 = vunpack.c.0.s8 %v9146
        %v9148 = vlaneseq
        %v9149 = vshrl.u32 %v9148, 7
        %v9150 = vsub.s32 %v9147, %v9149
        %v9151 = vrot.slane %v9137, %v9150
        %v9152 = vcombine.low %v9144, %v9151
        %v9153 = vcombine.low %v7005, %v7007
        %v9154 = vcombine.low %v7009, %v7011
        %v9156 = vunpack.c.l.s4 1983009808
        %v9157 = vunpack.c.0.s8 %v9156
        %v9158 = vlaneseq
        %v9159 = vshrl.u32 %v9158, 7
        %v9160 = vsub.s32 %v9157, %v9159
        %v9161 = vrot.slane %v9153, %v9160
        %v9163 = vunpack.c.l.s4 1983009808
        %v9164 = vunpack.c.0.s8 %v9163
        %v9165 = vlaneseq
        %v9166 = vshrl.u32 %v9165, 7
        %v9167 = vsub.s32 %v9164, %v9166
        %v9168 = vrot.slane %v9154, %v9167
        %v9169 = vcombine.low %v9161, %v9168
        %v9170 = vcombine.low %v7013, %v7015
        %v9171 = vcombine.low %v7017, %v7019
        %v9173 = vunpack.c.l.s4 1983009808
        %v9174 = vunpack.c.0.s8 %v9173
        %v9175 = vlaneseq
        %v9176 = vshrl.u32 %v9175, 7
        %v9177 = vsub.s32 %v9174, %v9176
        %v9178 = vrot.slane %v9170, %v9177
        %v9180 = vunpack.c.l.s4 1983009808
        %v9181 = vunpack.c.0.s8 %v9180
        %v9182 = vlaneseq
        %v9183 = vshrl.u32 %v9182, 7
        %v9184 = vsub.s32 %v9181, %v9183
        %v9185 = vrot.slane %v9171, %v9184
        %v9186 = vcombine.low %v9178, %v9185
        %v9187 = vcombine.low %v7021, %v7023
        %v9188 = vcombine.low %v7025, %v7027
        %v9190 = vunpack.c.l.s4 1983009808
        %v9191 = vunpack.c.0.s8 %v9190
        %v9192 = vlaneseq
        %v9193 = vshrl.u32 %v9192, 7
        %v9194 = vsub.s32 %v9191, %v9193
        %v9195 = vrot.slane %v9187, %v9194
        %v9197 = vunpack.c.l.s4 1983009808
        %v9198 = vunpack.c.0.s8 %v9197
        %v9199 = vlaneseq
        %v9200 = vshrl.u32 %v9199, 7
        %v9201 = vsub.s32 %v9198, %v9200
        %v9202 = vrot.slane %v9188, %v9201
        %v9203 = vcombine.low %v9195, %v9202
        %9332 = vxpose.xlu0.b32.start [1/16] %v7044, 128
        %9333 = vxpose.xlu0.b32.cont [2/16] %v7061, 128
        %9334 = vxpose.xlu0.b32.cont [3/16] %v7078, 128
        %9335 = vxpose.xlu0.b32.cont [4/16] %v7095, 128
        %9336 = vxpose.xlu0.b32.cont [5/16] %v7112, 128
        %9337 = vxpose.xlu0.b32.cont [6/16] %v7129, 128
        %9338 = vxpose.xlu0.b32.cont [7/16] %v7146, 128
        %9339 = vxpose.xlu0.b32.cont [8/16] %v7163, 128
        %9340 = vxpose.xlu0.b32.cont [9/16] %v7180, 128
        %9341 = vxpose.xlu0.b32.cont [10/16] %v7197, 128
        %9342 = vxpose.xlu0.b32.cont [11/16] %v7214, 128
        %9343 = vxpose.xlu0.b32.cont [12/16] %v7231, 128
        %9344 = vxpose.xlu0.b32.cont [13/16] %v7248, 128
        %9345 = vxpose.xlu0.b32.cont [14/16] %v7265, 128
        %9346 = vxpose.xlu0.b32.cont [15/16] %v7282, 128
        %9347 = vxpose.xlu0.b32.end [16/16] %v7299, 128
        %v9348 = vpop.trf.xlu0
        %v9349 = vpop.trf.xlu0
        %v9350 = vpop.trf.xlu0
        %v9351 = vpop.trf.xlu0
        %v9352 = vpop.trf.xlu0
        %v9353 = vpop.trf.xlu0
        %v9354 = vpop.trf.xlu0
        %v9355 = vpop.trf.xlu0
        %v9356 = vpop.trf.xlu0
        %v9357 = vpop.trf.xlu0
        %v9358 = vpop.trf.xlu0
        %v9359 = vpop.trf.xlu0
        %v9360 = vpop.trf.xlu0
        %v9361 = vpop.trf.xlu0
        %v9362 = vpop.trf.xlu0
        %v9363 = vpop.trf.xlu0
        %9364 = vxpose.xlu0.b32.start [1/16] %v7316, 128
        %9365 = vxpose.xlu0.b32.cont [2/16] %v7333, 128
        %9366 = vxpose.xlu0.b32.cont [3/16] %v7350, 128
        %9367 = vxpose.xlu0.b32.cont [4/16] %v7367, 128
        %9368 = vxpose.xlu0.b32.cont [5/16] %v7384, 128
        %9369 = vxpose.xlu0.b32.cont [6/16] %v7401, 128
        %9370 = vxpose.xlu0.b32.cont [7/16] %v7418, 128
        %9371 = vxpose.xlu0.b32.cont [8/16] %v7435, 128
        %9372 = vxpose.xlu0.b32.cont [9/16] %v7452, 128
        %9373 = vxpose.xlu0.b32.cont [10/16] %v7469, 128
        %9374 = vxpose.xlu0.b32.cont [11/16] %v7486, 128
        %9375 = vxpose.xlu0.b32.cont [12/16] %v7503, 128
        %9376 = vxpose.xlu0.b32.cont [13/16] %v7520, 128
        %9377 = vxpose.xlu0.b32.cont [14/16] %v7537, 128
        %9378 = vxpose.xlu0.b32.cont [15/16] %v7554, 128
        %9379 = vxpose.xlu0.b32.end [16/16] %v7571, 128
        %v9380 = vpop.trf.xlu0
        %v9381 = vpop.trf.xlu0
        %v9382 = vpop.trf.xlu0
        %v9383 = vpop.trf.xlu0
        %v9384 = vpop.trf.xlu0
        %v9385 = vpop.trf.xlu0
        %v9386 = vpop.trf.xlu0
        %v9387 = vpop.trf.xlu0
        %v9388 = vpop.trf.xlu0
        %v9389 = vpop.trf.xlu0
        %v9390 = vpop.trf.xlu0
        %v9391 = vpop.trf.xlu0
        %v9392 = vpop.trf.xlu0
        %v9393 = vpop.trf.xlu0
        %v9394 = vpop.trf.xlu0
        %v9395 = vpop.trf.xlu0
        %9396 = vxpose.xlu0.b32.start [1/16] %v7588, 128
        %9397 = vxpose.xlu0.b32.cont [2/16] %v7605, 128
        %9398 = vxpose.xlu0.b32.cont [3/16] %v7622, 128
        %9399 = vxpose.xlu0.b32.cont [4/16] %v7639, 128
        %9400 = vxpose.xlu0.b32.cont [5/16] %v7656, 128
        %9401 = vxpose.xlu0.b32.cont [6/16] %v7673, 128
        %9402 = vxpose.xlu0.b32.cont [7/16] %v7690, 128
        %9403 = vxpose.xlu0.b32.cont [8/16] %v7707, 128
        %9404 = vxpose.xlu0.b32.cont [9/16] %v7724, 128
        %9405 = vxpose.xlu0.b32.cont [10/16] %v7741, 128
        %9406 = vxpose.xlu0.b32.cont [11/16] %v7758, 128
        %9407 = vxpose.xlu0.b32.cont [12/16] %v7775, 128
        %9408 = vxpose.xlu0.b32.cont [13/16] %v7792, 128
        %9409 = vxpose.xlu0.b32.cont [14/16] %v7809, 128
        %9410 = vxpose.xlu0.b32.cont [15/16] %v7826, 128
        %9411 = vxpose.xlu0.b32.end [16/16] %v7843, 128
        %v9412 = vpop.trf.xlu0
        %v9413 = vpop.trf.xlu0
        %v9414 = vpop.trf.xlu0
        %v9415 = vpop.trf.xlu0
        %v9416 = vpop.trf.xlu0
        %v9417 = vpop.trf.xlu0
        %v9418 = vpop.trf.xlu0
        %v9419 = vpop.trf.xlu0
        %v9420 = vpop.trf.xlu0
        %v9421 = vpop.trf.xlu0
        %v9422 = vpop.trf.xlu0
        %v9423 = vpop.trf.xlu0
        %v9424 = vpop.trf.xlu0
        %v9425 = vpop.trf.xlu0
        %v9426 = vpop.trf.xlu0
        %v9427 = vpop.trf.xlu0
        %9428 = vxpose.xlu0.b32.start [1/16] %v7860, 128
        %9429 = vxpose.xlu0.b32.cont [2/16] %v7877, 128
        %9430 = vxpose.xlu0.b32.cont [3/16] %v7894, 128
        %9431 = vxpose.xlu0.b32.cont [4/16] %v7911, 128
        %9432 = vxpose.xlu0.b32.cont [5/16] %v7928, 128
        %9433 = vxpose.xlu0.b32.cont [6/16] %v7945, 128
        %9434 = vxpose.xlu0.b32.cont [7/16] %v7962, 128
        %9435 = vxpose.xlu0.b32.cont [8/16] %v7979, 128
        %9436 = vxpose.xlu0.b32.cont [9/16] %v7996, 128
        %9437 = vxpose.xlu0.b32.cont [10/16] %v8013, 128
        %9438 = vxpose.xlu0.b32.cont [11/16] %v8030, 128
        %9439 = vxpose.xlu0.b32.cont [12/16] %v8047, 128
        %9440 = vxpose.xlu0.b32.cont [13/16] %v8064, 128
        %9441 = vxpose.xlu0.b32.cont [14/16] %v8081, 128
        %9442 = vxpose.xlu0.b32.cont [15/16] %v8098, 128
        %9443 = vxpose.xlu0.b32.end [16/16] %v8115, 128
        %v9444 = vpop.trf.xlu0
        %v9445 = vpop.trf.xlu0
        %v9446 = vpop.trf.xlu0
        %v9447 = vpop.trf.xlu0
        %v9448 = vpop.trf.xlu0
        %v9449 = vpop.trf.xlu0
        %v9450 = vpop.trf.xlu0
        %v9451 = vpop.trf.xlu0
        %v9452 = vpop.trf.xlu0
        %v9453 = vpop.trf.xlu0
        %v9454 = vpop.trf.xlu0
        %v9455 = vpop.trf.xlu0
        %v9456 = vpop.trf.xlu0
        %v9457 = vpop.trf.xlu0
        %v9458 = vpop.trf.xlu0
        %v9459 = vpop.trf.xlu0
        %9460 = vxpose.xlu0.b32.start [1/16] %v8132, 128
        %9461 = vxpose.xlu0.b32.cont [2/16] %v8149, 128
        %9462 = vxpose.xlu0.b32.cont [3/16] %v8166, 128
        %9463 = vxpose.xlu0.b32.cont [4/16] %v8183, 128
        %9464 = vxpose.xlu0.b32.cont [5/16] %v8200, 128
        %9465 = vxpose.xlu0.b32.cont [6/16] %v8217, 128
        %9466 = vxpose.xlu0.b32.cont [7/16] %v8234, 128
        %9467 = vxpose.xlu0.b32.cont [8/16] %v8251, 128
        %9468 = vxpose.xlu0.b32.cont [9/16] %v8268, 128
        %9469 = vxpose.xlu0.b32.cont [10/16] %v8285, 128
        %9470 = vxpose.xlu0.b32.cont [11/16] %v8302, 128
        %9471 = vxpose.xlu0.b32.cont [12/16] %v8319, 128
        %9472 = vxpose.xlu0.b32.cont [13/16] %v8336, 128
        %9473 = vxpose.xlu0.b32.cont [14/16] %v8353, 128
        %9474 = vxpose.xlu0.b32.cont [15/16] %v8370, 128
        %9475 = vxpose.xlu0.b32.end [16/16] %v8387, 128
        %v9476 = vpop.trf.xlu0
        %v9477 = vpop.trf.xlu0
        %v9478 = vpop.trf.xlu0
        %v9479 = vpop.trf.xlu0
        %v9480 = vpop.trf.xlu0
        %v9481 = vpop.trf.xlu0
        %v9482 = vpop.trf.xlu0
        %v9483 = vpop.trf.xlu0
        %v9484 = vpop.trf.xlu0
        %v9485 = vpop.trf.xlu0
        %v9486 = vpop.trf.xlu0
        %v9487 = vpop.trf.xlu0
        %v9488 = vpop.trf.xlu0
        %v9489 = vpop.trf.xlu0
        %v9490 = vpop.trf.xlu0
        %v9491 = vpop.trf.xlu0
        %9492 = vxpose.xlu0.b32.start [1/16] %v8404, 128
        %9493 = vxpose.xlu0.b32.cont [2/16] %v8421, 128
        %9494 = vxpose.xlu0.b32.cont [3/16] %v8438, 128
        %9495 = vxpose.xlu0.b32.cont [4/16] %v8455, 128
        %9496 = vxpose.xlu0.b32.cont [5/16] %v8472, 128
        %9497 = vxpose.xlu0.b32.cont [6/16] %v8489, 128
        %9498 = vxpose.xlu0.b32.cont [7/16] %v8506, 128
        %9499 = vxpose.xlu0.b32.cont [8/16] %v8523, 128
        %9500 = vxpose.xlu0.b32.cont [9/16] %v8540, 128
        %9501 = vxpose.xlu0.b32.cont [10/16] %v8557, 128
        %9502 = vxpose.xlu0.b32.cont [11/16] %v8574, 128
        %9503 = vxpose.xlu0.b32.cont [12/16] %v8591, 128
        %9504 = vxpose.xlu0.b32.cont [13/16] %v8608, 128
        %9505 = vxpose.xlu0.b32.cont [14/16] %v8625, 128
        %9506 = vxpose.xlu0.b32.cont [15/16] %v8642, 128
        %9507 = vxpose.xlu0.b32.end [16/16] %v8659, 128
        %v9508 = vpop.trf.xlu0
        %v9509 = vpop.trf.xlu0
        %v9510 = vpop.trf.xlu0
        %v9511 = vpop.trf.xlu0
        %v9512 = vpop.trf.xlu0
        %v9513 = vpop.trf.xlu0
        %v9514 = vpop.trf.xlu0
        %v9515 = vpop.trf.xlu0
        %v9516 = vpop.trf.xlu0
        %v9517 = vpop.trf.xlu0
        %v9518 = vpop.trf.xlu0
        %v9519 = vpop.trf.xlu0
        %v9520 = vpop.trf.xlu0
        %v9521 = vpop.trf.xlu0
        %v9522 = vpop.trf.xlu0
        %v9523 = vpop.trf.xlu0
        %9524 = vxpose.xlu0.b32.start [1/16] %v8676, 128
        %9525 = vxpose.xlu0.b32.cont [2/16] %v8693, 128
        %9526 = vxpose.xlu0.b32.cont [3/16] %v8710, 128
        %9527 = vxpose.xlu0.b32.cont [4/16] %v8727, 128
        %9528 = vxpose.xlu0.b32.cont [5/16] %v8744, 128
        %9529 = vxpose.xlu0.b32.cont [6/16] %v8761, 128
        %9530 = vxpose.xlu0.b32.cont [7/16] %v8778, 128
        %9531 = vxpose.xlu0.b32.cont [8/16] %v8795, 128
        %9532 = vxpose.xlu0.b32.cont [9/16] %v8812, 128
        %9533 = vxpose.xlu0.b32.cont [10/16] %v8829, 128
        %9534 = vxpose.xlu0.b32.cont [11/16] %v8846, 128
        %9535 = vxpose.xlu0.b32.cont [12/16] %v8863, 128
        %9536 = vxpose.xlu0.b32.cont [13/16] %v8880, 128
        %9537 = vxpose.xlu0.b32.cont [14/16] %v8897, 128
        %9538 = vxpose.xlu0.b32.cont [15/16] %v8914, 128
        %9539 = vxpose.xlu0.b32.end [16/16] %v8931, 128
        %v9540 = vpop.trf.xlu0
        %v9541 = vpop.trf.xlu0
        %v9542 = vpop.trf.xlu0
        %v9543 = vpop.trf.xlu0
        %v9544 = vpop.trf.xlu0
        %v9545 = vpop.trf.xlu0
        %v9546 = vpop.trf.xlu0
        %v9547 = vpop.trf.xlu0
        %v9548 = vpop.trf.xlu0
        %v9549 = vpop.trf.xlu0
        %v9550 = vpop.trf.xlu0
        %v9551 = vpop.trf.xlu0
        %v9552 = vpop.trf.xlu0
        %v9553 = vpop.trf.xlu0
        %v9554 = vpop.trf.xlu0
        %v9555 = vpop.trf.xlu0
        %9556 = vxpose.xlu0.b32.start [1/16] %v8948, 128
        %9557 = vxpose.xlu0.b32.cont [2/16] %v8965, 128
        %9558 = vxpose.xlu0.b32.cont [3/16] %v8982, 128
        %9559 = vxpose.xlu0.b32.cont [4/16] %v8999, 128
        %9560 = vxpose.xlu0.b32.cont [5/16] %v9016, 128
        %9561 = vxpose.xlu0.b32.cont [6/16] %v9033, 128
        %9562 = vxpose.xlu0.b32.cont [7/16] %v9050, 128
        %9563 = vxpose.xlu0.b32.cont [8/16] %v9067, 128
        %9564 = vxpose.xlu0.b32.cont [9/16] %v9084, 128
        %9565 = vxpose.xlu0.b32.cont [10/16] %v9101, 128
        %9566 = vxpose.xlu0.b32.cont [11/16] %v9118, 128
        %9567 = vxpose.xlu0.b32.cont [12/16] %v9135, 128
        %9568 = vxpose.xlu0.b32.cont [13/16] %v9152, 128
        %9569 = vxpose.xlu0.b32.cont [14/16] %v9169, 128
        %9570 = vxpose.xlu0.b32.cont [15/16] %v9186, 128
        %9571 = vxpose.xlu0.b32.end [16/16] %v9203, 128
        %v9572 = vpop.trf.xlu0
        %v9573 = vpop.trf.xlu0
        %v9574 = vpop.trf.xlu0
        %v9575 = vpop.trf.xlu0
        %v9576 = vpop.trf.xlu0
        %v9577 = vpop.trf.xlu0
        %v9578 = vpop.trf.xlu0
        %v9579 = vpop.trf.xlu0
        %v9580 = vpop.trf.xlu0
        %v9581 = vpop.trf.xlu0
        %v9582 = vpop.trf.xlu0
        %v9583 = vpop.trf.xlu0
        %v9584 = vpop.trf.xlu0
        %v9585 = vpop.trf.xlu0
        %v9586 = vpop.trf.xlu0
        %v9587 = vpop.trf.xlu0
        %v9596 = vcombine.low %v9348, %v9380
        %v9597 = vcombine.low %v9412, %v9444
        %v9599 = vunpack.c.l.s4 1983009808
        %v9600 = vunpack.c.0.s8 %v9599
        %v9601 = vlaneseq
        %v9602 = vshrl.u32 %v9601, 7
        %v9603 = vsub.s32 %v9600, %v9602
        %v9604 = vrot.slane %v9596, %v9603
        %v9606 = vunpack.c.l.s4 1983009808
        %v9607 = vunpack.c.0.s8 %v9606
        %v9608 = vlaneseq
        %v9609 = vshrl.u32 %v9608, 7
        %v9610 = vsub.s32 %v9607, %v9609
        %v9611 = vrot.slane %v9597, %v9610
        %v9612 = vcombine.low %v9604, %v9611
        %v9613 = vcombine.low %v9476, %v9508
        %v9614 = vcombine.low %v9540, %v9572
        %v9616 = vunpack.c.l.s4 1983009808
        %v9617 = vunpack.c.0.s8 %v9616
        %v9618 = vlaneseq
        %v9619 = vshrl.u32 %v9618, 7
        %v9620 = vsub.s32 %v9617, %v9619
        %v9621 = vrot.slane %v9613, %v9620
        %v9623 = vunpack.c.l.s4 1983009808
        %v9624 = vunpack.c.0.s8 %v9623
        %v9625 = vlaneseq
        %v9626 = vshrl.u32 %v9625, 7
        %v9627 = vsub.s32 %v9624, %v9626
        %v9628 = vrot.slane %v9614, %v9627
        %v9629 = vcombine.low %v9621, %v9628
        %9632 = vst [vmem:[%s417] sm:$0xff] %v9612
        %9633 = vst [vmem:[%s417 + $0x8] sm:$0xff] %v9629
        %s9634 = smul.u32 8, %s20
        %p9635 = scmp.lt.s32.totalorder %s19, 1
        %s9636 = scalar_select %p9635, %s19, 1
        %p9637 = scmp.lt.s32.totalorder %s9634, 7
        %s9638 = scalar_select %p9637, %s9634, 7
        %s9639 = smul.addr %s9636, 8
        %s9640 = sadd.s32 %s9638, %s9639
        %s9641 = smul.addr %s9640, 2
        %s9642 = scalar_lea.vmem %s4, %s9641
        // Predicated region
        $region113: #{upsample_forward.1} parent=103 // pred_check
          %p9643 = pneg %p172
        $region114: #{upsample_forward.1} parent=103 // pred_check_branch
          %9645 = sbr.rel (%p9643) target = $region116
        $region115: #{upsample_forward.1} parent=103 // pred_region
          %s9646 = smul.u32 8, %s20
        $region116: #{upsample_forward.1} parent=103 // pred_fallthru
          _
      $region104: #{upsample_forward.1} parent=5 // pred_fallthru
        _
      %p9647 = scmp.le.s32.totalorder 2, %s10
      // Predicated region
      $region117: #{upsample_forward.1} parent=5 // pred_check
        %p9648 = pneg %p9647
      $region118: #{upsample_forward.1} parent=5 // pred_check_branch
        %9650 = sbr.rel (%p9648) target = $region120
      $region119: #{upsample_forward.1} parent=5 // pred_region
        %s9651 = ssub.s32 %s10, 2
        // Predicated region
        $region121: #{upsample_forward.1} parent=119 // pred_check
          %p9652 = pneg %p178
        $region122: #{upsample_forward.1} parent=119 // pred_check_branch
          %9654 = sbr.rel (%p9652) target = $region124
        $region123: #{upsample_forward.1} parent=119 // pred_region
          %s9655 = smul.u32 8, %s22
          %p9656 = scmp.lt.s32.totalorder %s21, 1
          %s9657 = scalar_select %p9656, %s21, 1
          %p9658 = scmp.lt.s32.totalorder %s9655, 7
          %s9659 = scalar_select %p9658, %s9655, 7
          %s9660 = smul.addr %s9657, 8
          %s9661 = sadd.s32 %s9659, %s9660
          %s9662 = smul.addr %s9661, 2
          %s9663 = scalar_lea.vmem %s4, %s9662
        $region124: #{upsample_forward.1} parent=119 // pred_fallthru
          _
      $region120: #{upsample_forward.1} parent=5 // pred_fallthru
        _
    $region6: #{upsample_forward.1} parent=1 // loop_footer
      %s14 = sadd.s32 1, %s10
    $region7: #{upsample_forward.1} parent=1 // loop_footer_branch
      %9 = sbr.rel target = $region3
    $region8: #{upsample_forward.1} parent=1 // loop_exit
      _

</llo_original>
